<compile_context>
chip_gen: v7x
topology: tpu7x:2x2x1
jax: 0.10.0
libtpu: 0.0.40
codegen_flags: <defaults>
</compile_context>

<pallas_src>
import functools

import numpy as np

import jax
import jax.numpy as jnp
from jax.experimental import pallas as pl
from jax.experimental.pallas import tpu as pltpu


_STAGE_CHANNELS = (128, 256, 512)               # cnn.get_feature_map_channels()
_DOWNSAMPLE_RATIO = 2 ** len(_STAGE_CHANNELS)   # cnn.get_downsample_ratio() == 8
_KSIZE = 3
_SMALL_CIN = 32                                  # below this, use the im2col path


# ----------------------------------------------------------------------------
# Generation-aware budgets
# ----------------------------------------------------------------------------
def _tpu_vmem_bytes():
    try:
        return pltpu.get_tpu_info().vmem_capacity_bytes
    except Exception:
        return 64 * 1024 * 1024                  # conservative (v7x-sized) fallback


def _budgets():
    """(per-grid-step working-set budget, scoped vmem_limit_bytes)."""
    if _tpu_vmem_bytes() >= 96 * 1024 * 1024:    # v5e / v6e / v4: 128 MiB physical
        return 8 * 1024 * 1024, 64 * 1024 * 1024
    return 4 * 1024 * 1024, 40 * 1024 * 1024     # v7x: 64 MiB physical


# ----------------------------------------------------------------------------
# Kernels
# ----------------------------------------------------------------------------
def _matmul_bias_relu_kernel(p_ref, w_ref, b_ref, o_ref):
    """Fused (rows, K) @ (K, Cout) + bias + ReLU tile (stage-1 im2col path)."""
    acc = jnp.dot(p_ref[...], w_ref[...], preferred_element_type=jnp.float32)
    o_ref[...] = jnp.maximum(acc + b_ref[...], 0.0).astype(o_ref.dtype)


def _conv3x3_s2_kernel(xee_ref, xeo_ref, xoe_ref, xoo_ref, w_ref, b_ref, o_ref,
                       *, tr, wo):
    """Fused stride-2 3x3 conv + bias + ReLU for one (image, row-block) step.

    Each of the 9 taps is a contiguous unit-stride (tr, wo, Cin) window of one
    parity array.  The taps are concatenated along the channel axis in VMEM and
    contracted against the (9*Cin, Cout) weight matrix with ONE large-K MXU dot,
    so accumulation stays inside the MXU (no per-tap f32 acc read-modify-write).
    """
    cin = xee_ref.shape[-1]
    parity = ((xee_ref, xeo_ref), (xoe_ref, xoo_ref))
    row0 = pl.multiple_of(pl.program_id(1) * tr, tr)

    taps = []
    for kh in range(3):
        for kw in range(3):
            src = parity[kh % 2][kw % 2]
            taps.append(src[pl.ds(row0 + kh // 2, tr), pl.ds(kw // 2, wo), :])
    lhs = jnp.concatenate(taps, axis=-1).reshape(tr * wo, 9 * cin)   # (rows, 9*Cin)

    acc = jnp.dot(lhs, w_ref[...], preferred_element_type=jnp.float32)
    # Lane-dense (Cout % 128 == 0), flattened, unmasked store.
    o_ref[...] = jnp.maximum(acc + b_ref[...], 0.0).astype(o_ref.dtype)


# ----------------------------------------------------------------------------
# Tile pickers (keep block extents sublane-legal: multiple of 8 or full extent)
# ----------------------------------------------------------------------------
def _pick_row_tile(ho, wo, row_bytes, target_bytes):
    cap = max(1, target_bytes // max(row_bytes, 1))
    best = None
    for tr in range(1, ho + 1):
        if ho % tr == 0 and tr <= cap and ((tr * wo) % 8 == 0 or tr == ho):
            best = tr
    return best if best is not None else ho


def _pick_flat_tile(m, row_bytes, target_bytes):
    cap = max(1, target_bytes // max(row_bytes, 1))
    best = None
    for d in range(1, m + 1):
        if m % d == 0 and d <= cap and (d % 8 == 0 or d == m):
            best = d
    return best if best is not None else m


# ----------------------------------------------------------------------------
# Stage wrappers
# ----------------------------------------------------------------------------
def _conv_s2_im2col(x, w_flat, b2d, *, out_dtype):
    """Small-Cin path (stage 1): im2col in the wrapper + one K=9*Cin MXU dot."""
    n, h, w_, cin = x.shape
    ho, wo = h // 2, w_ // 2
    k, cout = w_flat.shape
    out_isz = np.dtype(out_dtype).itemsize

    xp = jnp.pad(x, ((0, 0), (1, 1), (1, 1), (0, 0)))
    patches = [xp[:, kh:kh + 2 * ho:2, kw:kw + 2 * wo:2, :]
               for kh in range(3) for kw in range(3)]          # tap-major order
    p = jnp.concatenate(patches, axis=-1).reshape(n, ho * wo, k)

    step_budget, vmem_limit = _budgets()
    row_bytes = max(k, 128) * 2 + cout * (4 + out_isz)
    br = _pick_flat_tile(ho * wo, row_bytes, step_budget)

    cost = pl.CostEstimate(
        flops=2 * n * ho * wo * k * cout, transcendentals=0,
        bytes_accessed=(n * ho * wo * k * 2 + k * cout * 2 + cout * 4
                        + n * ho * wo * cout * out_isz))

    out = pl.pallas_call(
        _matmul_bias_relu_kernel,
        out_shape=jax.ShapeDtypeStruct((n, ho * wo, cout), out_dtype),
        grid_spec=pltpu.PrefetchScalarGridSpec(
            num_scalar_prefetch=0,
            grid=(n, (ho * wo) // br),
            in_specs=[
                pl.BlockSpec((None, br, k), lambda i, r: (i, r, 0)),
                pl.BlockSpec((k, cout), lambda i, r: (0, 0),
                             pipeline_mode=pl.Buffered(1)),
                pl.BlockSpec((1, cout), lambda i, r: (0, 0),
                             pipeline_mode=pl.Buffered(1)),
            ],
            out_specs=pl.BlockSpec((None, br, cout), lambda i, r: (i, r, 0)),
        ),
        compiler_params=pltpu.CompilerParams(
            dimension_semantics=("parallel", "parallel"),
            vmem_limit_bytes=vmem_limit),
        cost_estimate=cost,
    )(p, w_flat, b2d)
    return out.reshape(n, ho, wo, cout)


def _conv_s2_parity(x, w_flat, b2d, *, out_dtype):
    """Main path (Cin >= 32): space-to-depth parity split + fused big-K conv."""
    n, h, w_, cin = x.shape
    ho, wo = h // 2, w_ // 2
    cout = w_flat.shape[-1]
    out_isz = np.dtype(out_dtype).itemsize

    # Pad once (bf16 activations) and parity-split: 4 arrays, ~1x input bytes.
    xp = jnp.pad(x, ((0, 0), (1, 1), (1, 1), (0, 0)))
    xee = xp[:, 0::2, 0::2, :]
    xeo = xp[:, 0::2, 1::2, :]
    xoe = xp[:, 1::2, 0::2, :]
    xoo = xp[:, 1::2, 1::2, :]

    step_budget, vmem_limit = _budgets()
    # per-output-row working bytes: concatenated bf16 lhs + f32 acc + out tile
    row_bytes = wo * (9 * cin * 2 + cout * (4 + out_isz))
    tr = _pick_row_tile(ho, wo, row_bytes, step_budget)

    parity_bytes = 4 * (ho + 1) * (wo + 1) * cin * 2
    weight_bytes = 9 * cin * cout * 2
    if parity_bytes + weight_bytes + tr * row_bytes > vmem_limit:
        # TODO(synk): halo row-blocking of the parity inputs (1-row overlap via
        # element-offset blocks / manual DMA) is required for this resolution.
        raise ValueError("per-image working set exceeds the scoped VMEM budget")

    kern = functools.partial(_conv3x3_s2_kernel, tr=tr, wo=wo)
    parity_spec = pl.BlockSpec((None, ho + 1, wo + 1, cin),
                               lambda i, r: (i, 0, 0, 0),
                               pipeline_mode=pl.Buffered(1))
    cost = pl.CostEstimate(
        flops=2 * n * ho * wo * 9 * cin * cout, transcendentals=0,
        bytes_accessed=(4 * n * (ho + 1) * (wo + 1) * cin * 2
                        + 9 * cin * cout * 2 + cout * 4
                        + n * ho * wo * cout * out_isz))

    out = pl.pallas_call(
        kern,
        out_shape=jax.ShapeDtypeStruct((n, ho * wo, cout), out_dtype),
        grid_spec=pltpu.PrefetchScalarGridSpec(
            num_scalar_prefetch=0,
            grid=(n, ho // tr),
            in_specs=[parity_spec, parity_spec, parity_spec, parity_spec,
                      pl.BlockSpec((9 * cin, cout), lambda i, r: (0, 0),
                                   pipeline_mode=pl.Buffered(1)),
                      pl.BlockSpec((1, cout), lambda i, r: (0, 0),
                                   pipeline_mode=pl.Buffered(1))],
            out_specs=pl.BlockSpec((None, tr * wo, cout), lambda i, r: (i, r, 0)),
        ),
        compiler_params=pltpu.CompilerParams(
            # Megacore-shard the batch axis only: splitting the row axis would
            # duplicate the whole-image-resident parity working set per core.
            dimension_semantics=("parallel", "arbitrary"),
            vmem_limit_bytes=vmem_limit),
        cost_estimate=cost,
    )(xee, xeo, xoe, xoo, w_flat, b2d)
    return out.reshape(n, ho, wo, cout)


def _conv_stage(x_nhwc, w_flat, b2d):
    n, h, w_, cin = x_nhwc.shape
    if h % 2 or w_ % 2:
        # TODO(synk): odd spatial sizes (legal for stride-2/pad-1 conv) would
        # need asymmetric parity arrays; SparK-style inputs are pow2 multiples.
        raise ValueError(f"even spatial dims required, got {(h, w_)}")
    if cin < _SMALL_CIN:
        return _conv_s2_im2col(x_nhwc, w_flat, b2d, out_dtype=jnp.bfloat16)
    return _conv_s2_parity(x_nhwc, w_flat, b2d, out_dtype=jnp.bfloat16)


# ----------------------------------------------------------------------------
# Synthetic hierarchical backbone params + DenseEncoder forward
# ----------------------------------------------------------------------------
def init_params(key, in_channels):
    """PyTorch-layout params: per stage (w: (Cout,Cin,3,3) f32, b: (Cout,) f32)."""
    params = []
    cin = in_channels
    for cout in _STAGE_CHANNELS:
        key, kw_, kb_ = jax.random.split(key, 3)
        fan_in = cin * _KSIZE * _KSIZE
        std = (2.0 / fan_in) ** 0.5
        w = jax.random.normal(kw_, (cout, cin, _KSIZE, _KSIZE), jnp.float32) * std
        b = jax.random.normal(kb_, (cout,), jnp.float32) * 0.01
        params.append((w, b))
        cin = cout
    return params


def prepare_params(params):
    """One-time conversion to kernel layout: ((9*Cin, Cout) bf16, (1, Cout) f32)."""
    prepped = []
    for w, b in params:
        cout, cin, k, _ = w.shape
        # tap-major (kh, kw, cin) rows to match the in-kernel channel concat order
        w_flat = jnp.transpose(w, (2, 3, 1, 0)).reshape(k * k * cin, cout)
        prepped.append((w_flat.astype(jnp.bfloat16), b.reshape(1, cout)))
    return prepped


@jax.jit
def dense_encoder_forward(x_nchw, kernel_params):
    """DenseEncoder.forward(x) == cnn(x, hierarchical=True).

    Returns the list of hierarchical feature maps in PyTorch NCHW convention
    (bf16 activations; matmuls accumulate in f32 on the MXU).
    """
    x = jnp.transpose(x_nchw, (0, 2, 3, 1)).astype(jnp.bfloat16)   # NHWC on lanes
    feats = []
    for w_flat, b2d in kernel_params:
        x = _conv_stage(x, w_flat, b2d)            # (N, Ho, Wo, Cout) bf16
        feats.append(jnp.transpose(x, (0, 3, 1, 2)))   # returned hierarchy: NCHW
    return feats


# ----------------------------------------------------------------------------
# Reference (XLA conv on the SAME bf16 stage input, f32 accumulate)
# ----------------------------------------------------------------------------
def _stage_reference(x_nhwc_bf16, w, b):
    w_hwio = jnp.transpose(w, (2, 3, 1, 0)).astype(jnp.bfloat16)
    y = jax.lax.conv_general_dilated(
        x_nhwc_bf16, w_hwio, window_strides=(2, 2), padding=((1, 1), (1, 1)),
        dimension_numbers=("NHWC", "HWIO", "NHWC"),
        preferred_element_type=jnp.float32)
    y = jnp.maximum(y + b[None, None, None, :].astype(jnp.float32), 0.0)
    return y.astype(jnp.bfloat16)


if __name__ == "__main__":
    key = jax.random.PRNGKey(0)
    k_x, k_p = jax.random.split(key)

    # small deterministic input, NCHW like PyTorch
    x = jax.random.normal(k_x, (2, 4, 16, 16), jnp.float32)
    params = init_params(k_p, in_channels=4)
    kernel_params = prepare_params(params)

    feats = dense_encoder_forward(x, kernel_params)
    feats = [jax.block_until_ready(f) for f in feats]

    # Per-stage check: each kernel stage vs. an XLA conv fed the SAME bf16
    # stage input (the kernel's previous output), so only single-conv
    # accumulation-order / bf16-rounding differences are measured.
    cur = jnp.transpose(x, (0, 2, 3, 1)).astype(jnp.bfloat16)
    hh = x.shape[-1]
    for si, ((w, b), f) in enumerate(zip(params, feats)):
        hh //= 2
        assert f.shape == (x.shape[0], w.shape[0], hh, hh), (si, f.shape)
        ref = _stage_reference(cur, w, b)
        got = jnp.transpose(f, (0, 2, 3, 1))
        diff = jnp.abs(got.astype(jnp.float32) - ref.astype(jnp.float32))
        max_err = float(jnp.max(diff))
        mean_err = float(jnp.mean(diff))
        assert max_err < 1e-1 and mean_err < 1e-2, (si, max_err, mean_err)
        cur = got

    print("KERNEL_OK")
</pallas_src>

<mosaic_0001>
module attributes {stable_mosaic.version = 11 : i64} {
  func.func @_matmul_bias_relu_kernel(%arg0: i32, %arg1: i32, %arg2: memref<1x64x36xbf16, #tpu.memory_space<vmem>>, %arg3: memref<36x128xbf16, #tpu.memory_space<vmem>>, %arg4: memref<1x128xf32, #tpu.memory_space<vmem>>, %arg5: memref<1x64x128xbf16, #tpu.memory_space<vmem>>) attributes {dimension_semantics = [#tpu.dimension_semantics<parallel>, #tpu.dimension_semantics<parallel>], iteration_bounds = array<i64: 2, 1>, scalar_prefetch = 0 : i64, scratch_operands = 0 : i64, tpu.core_type = #tpu.core_type<tc>, window_params = [{transform_indices = @transform_0, window_bounds = array<i64: 1, 64, 36>}, {pipeline_mode = #tpu.pipeline_mode<synchronous>, transform_indices = @transform_1, window_bounds = array<i64: 36, 128>}, {pipeline_mode = #tpu.pipeline_mode<synchronous>, transform_indices = @transform_2, window_bounds = array<i64: 1, 128>}, {transform_indices = @transform_3, window_bounds = array<i64: 1, 64, 128>}]} {
    %c0 = arith.constant 0 : index
    %c0_0 = arith.constant 0 : index
    %c0_1 = arith.constant 0 : index
    %0 = vector.load %arg2[%c0, %c0_0, %c0_1] : memref<1x64x36xbf16, #tpu.memory_space<vmem>>, vector<1x64x36xbf16>
    %1 = vector.shape_cast %0 : vector<1x64x36xbf16> to vector<64x36xbf16>
    %c0_2 = arith.constant 0 : index
    %c0_3 = arith.constant 0 : index
    %2 = vector.load %arg3[%c0_2, %c0_3] : memref<36x128xbf16, #tpu.memory_space<vmem>>, vector<36x128xbf16>
    %cst = arith.constant dense<0.000000e+00> : vector<64x128xf32>
    %3 = tpu.matmul %1, %2, %cst {dimension_numbers = #tpu.dot_dimension_numbers<[1], [0], [0], [1], [0, 0, 1, 1], [], []>} : vector<64x36xbf16>, vector<36x128xbf16>, vector<64x128xf32> -> vector<64x128xf32>
    %c0_4 = arith.constant 0 : index
    %c0_5 = arith.constant 0 : index
    %4 = vector.load %arg4[%c0_4, %c0_5] : memref<1x128xf32, #tpu.memory_space<vmem>>, vector<1x128xf32>
    %5 = vector.broadcast %4 : vector<1x128xf32> to vector<64x128xf32>
    %6 = arith.addf %3, %5 : vector<64x128xf32>
    %cst_6 = arith.constant 0.000000e+00 : f32
    %7 = vector.broadcast %cst_6 : f32 to vector<64x128xf32>
    %8 = arith.maximumf %6, %7 : vector<64x128xf32>
    %9 = arith.truncf %8 : vector<64x128xf32> to vector<64x128xbf16>
    %c0_7 = arith.constant 0 : index
    %c0_8 = arith.constant 0 : index
    %c0_9 = arith.constant 0 : index
    %10 = vector.load %arg5[%c0_7, %c0_8, %c0_9] : memref<1x64x128xbf16, #tpu.memory_space<vmem>>, vector<1x64x128xbf16>
    %11 = vector.shape_cast %10 : vector<1x64x128xbf16> to vector<64x128xbf16>
    %12 = vector.shape_cast %9 : vector<64x128xbf16> to vector<1x64x128xbf16>
    tpu.vector_store %arg5[%c0_7, %c0_8, %c0_9], %12 {strides = array<i32>} : memref<1x64x128xbf16, #tpu.memory_space<vmem>>, vector<1x64x128xbf16>,
    return
  }
  func.func @transform_0(%arg0: i32, %arg1: i32) -> (i32, i32, i32) {
    %c0_i32 = arith.constant 0 : i32
    %c0_i32_0 = arith.constant 0 : i32
    return %arg0, %arg1, %c0_i32 : i32, i32, i32
  }
  func.func @transform_1(%arg0: i32, %arg1: i32) -> (i32, i32) {
    %c0_i32 = arith.constant 0 : i32
    %c0_i32_0 = arith.constant 0 : i32
    %c0_i32_1 = arith.constant 0 : i32
    return %c0_i32, %c0_i32_0 : i32, i32
  }
  func.func @transform_2(%arg0: i32, %arg1: i32) -> (i32, i32) {
    %c0_i32 = arith.constant 0 : i32
    %c0_i32_0 = arith.constant 0 : i32
    %c0_i32_1 = arith.constant 0 : i32
    return %c0_i32, %c0_i32_0 : i32, i32
  }
  func.func @transform_3(%arg0: i32, %arg1: i32) -> (i32, i32, i32) {
    %c0_i32 = arith.constant 0 : i32
    %c0_i32_0 = arith.constant 0 : i32
    return %arg0, %arg1, %c0_i32 : i32, i32, i32
  }
}

module attributes {stable_mosaic.version = 11 : i64} {
  func.func @_conv3x3_s2_kernel(%arg0: i32, %arg1: i32, %arg2: memref<1x5x5x128xbf16, #tpu.memory_space<vmem>>, %arg3: memref<1x5x5x128xbf16, #tpu.memory_space<vmem>>, %arg4: memref<1x5x5x128xbf16, #tpu.memory_space<vmem>>, %arg5: memref<1x5x5x128xbf16, #tpu.memory_space<vmem>>, %arg6: memref<1152x256xbf16, #tpu.memory_space<vmem>>, %arg7: memref<1x256xf32, #tpu.memory_space<vmem>>, %arg8: memref<1x16x256xbf16, #tpu.memory_space<vmem>>) attributes {dimension_semantics = [#tpu.dimension_semantics<parallel>, #tpu.dimension_semantics<arbitrary>], iteration_bounds = array<i64: 2, 1>, scalar_prefetch = 0 : i64, scratch_operands = 0 : i64, tpu.core_type = #tpu.core_type<tc>, window_params = [{pipeline_mode = #tpu.pipeline_mode<synchronous>, transform_indices = @transform_0, window_bounds = array<i64: 1, 5, 5, 128>}, {pipeline_mode = #tpu.pipeline_mode<synchronous>, transform_indices = @transform_1, window_bounds = array<i64: 1, 5, 5, 128>}, {pipeline_mode = #tpu.pipeline_mode<synchronous>, transform_indices = @transform_2, window_bounds = array<i64: 1, 5, 5, 128>}, {pipeline_mode = #tpu.pipeline_mode<synchronous>, transform_indices = @transform_3, window_bounds = array<i64: 1, 5, 5, 128>}, {pipeline_mode = #tpu.pipeline_mode<synchronous>, transform_indices = @transform_4, window_bounds = array<i64: 1152, 256>}, {pipeline_mode = #tpu.pipeline_mode<synchronous>, transform_indices = @transform_5, window_bounds = array<i64: 1, 256>}, {transform_indices = @transform_6, window_bounds = array<i64: 1, 16, 256>}]} {
    %c4_i32 = arith.constant 4 : i32
    %0 = arith.muli %arg1, %c4_i32 : i32
    %1 = tpu.assume_multiple %0, 4 : i32
    %c0_i32 = arith.constant 0 : i32
    %2 = arith.addi %1, %c0_i32 : i32
    %c0 = arith.constant 0 : index
    %3 = arith.index_cast %2 : i32 to index
    %c0_0 = arith.constant 0 : index
    %c0_1 = arith.constant 0 : index
    %4 = vector.load %arg2[%c0, %3, %c0_0, %c0_1] : memref<1x5x5x128xbf16, #tpu.memory_space<vmem>>, vector<1x4x4x128xbf16>
    %5 = vector.shape_cast %4 : vector<1x4x4x128xbf16> to vector<4x4x128xbf16>
    %c0_i32_2 = arith.constant 0 : i32
    %6 = arith.addi %1, %c0_i32_2 : i32
    %c0_3 = arith.constant 0 : index
    %7 = arith.index_cast %6 : i32 to index
    %c0_4 = arith.constant 0 : index
    %c0_5 = arith.constant 0 : index
    %8 = vector.load %arg3[%c0_3, %7, %c0_4, %c0_5] : memref<1x5x5x128xbf16, #tpu.memory_space<vmem>>, vector<1x4x4x128xbf16>
    %9 = vector.shape_cast %8 : vector<1x4x4x128xbf16> to vector<4x4x128xbf16>
    %c0_i32_6 = arith.constant 0 : i32
    %10 = arith.addi %1, %c0_i32_6 : i32
    %c0_7 = arith.constant 0 : index
    %11 = arith.index_cast %10 : i32 to index
    %c1 = arith.constant 1 : index
    %c0_8 = arith.constant 0 : index
    %12 = vector.load %arg2[%c0_7, %11, %c1, %c0_8] : memref<1x5x5x128xbf16, #tpu.memory_space<vmem>>, vector<1x4x4x128xbf16>
    %13 = vector.shape_cast %12 : vector<1x4x4x128xbf16> to vector<4x4x128xbf16>
    %c0_i32_9 = arith.constant 0 : i32
    %14 = arith.addi %1, %c0_i32_9 : i32
    %c0_10 = arith.constant 0 : index
    %15 = arith.index_cast %14 : i32 to index
    %c0_11 = arith.constant 0 : index
    %c0_12 = arith.constant 0 : index
    %16 = vector.load %arg4[%c0_10, %15, %c0_11, %c0_12] : memref<1x5x5x128xbf16, #tpu.memory_space<vmem>>, vector<1x4x4x128xbf16>
    %17 = vector.shape_cast %16 : vector<1x4x4x128xbf16> to vector<4x4x128xbf16>
    %c0_i32_13 = arith.constant 0 : i32
    %18 = arith.addi %1, %c0_i32_13 : i32
    %c0_14 = arith.constant 0 : index
    %19 = arith.index_cast %18 : i32 to index
    %c0_15 = arith.constant 0 : index
    %c0_16 = arith.constant 0 : index
    %20 = vector.load %arg5[%c0_14, %19, %c0_15, %c0_16] : memref<1x5x5x128xbf16, #tpu.memory_space<vmem>>, vector<1x4x4x128xbf16>
    %21 = vector.shape_cast %20 : vector<1x4x4x128xbf16> to vector<4x4x128xbf16>
    %c0_i32_17 = arith.constant 0 : i32
    %22 = arith.addi %1, %c0_i32_17 : i32
    %c0_18 = arith.constant 0 : index
    %23 = arith.index_cast %22 : i32 to index
    %c1_19 = arith.constant 1 : index
    %c0_20 = arith.constant 0 : index
    %24 = vector.load %arg4[%c0_18, %23, %c1_19, %c0_20] : memref<1x5x5x128xbf16, #tpu.memory_space<vmem>>, vector<1x4x4x128xbf16>
    %25 = vector.shape_cast %24 : vector<1x4x4x128xbf16> to vector<4x4x128xbf16>
    %c1_i32 = arith.constant 1 : i32
    %26 = arith.addi %1, %c1_i32 : i32
    %c0_21 = arith.constant 0 : index
    %27 = arith.index_cast %26 : i32 to index
    %c0_22 = arith.constant 0 : index
    %c0_23 = arith.constant 0 : index
    %28 = vector.load %arg2[%c0_21, %27, %c0_22, %c0_23] : memref<1x5x5x128xbf16, #tpu.memory_space<vmem>>, vector<1x4x4x128xbf16>
    %29 = vector.shape_cast %28 : vector<1x4x4x128xbf16> to vector<4x4x128xbf16>
    %c1_i32_24 = arith.constant 1 : i32
    %30 = arith.addi %1, %c1_i32_24 : i32
    %c0_25 = arith.constant 0 : index
    %31 = arith.index_cast %30 : i32 to index
    %c0_26 = arith.constant 0 : index
    %c0_27 = arith.constant 0 : index
    %32 = vector.load %arg3[%c0_25, %31, %c0_26, %c0_27] : memref<1x5x5x128xbf16, #tpu.memory_space<vmem>>, vector<1x4x4x128xbf16>
    %33 = vector.shape_cast %32 : vector<1x4x4x128xbf16> to vector<4x4x128xbf16>
    %c1_i32_28 = arith.constant 1 : i32
    %34 = arith.addi %1, %c1_i32_28 : i32
    %c0_29 = arith.constant 0 : index
    %35 = arith.index_cast %34 : i32 to index
    %c1_30 = arith.constant 1 : index
    %c0_31 = arith.constant 0 : index
    %36 = vector.load %arg2[%c0_29, %35, %c1_30, %c0_31] : memref<1x5x5x128xbf16, #tpu.memory_space<vmem>>, vector<1x4x4x128xbf16>
    %37 = vector.shape_cast %36 : vector<1x4x4x128xbf16> to vector<4x4x128xbf16>
    %38 = tpu.concatenate %5, %9, %13, %17, %21, %25, %29, %33, %37 in 2 : vector<4x4x128xbf16>, vector<4x4x128xbf16>, vector<4x4x128xbf16>, vector<4x4x128xbf16>, vector<4x4x128xbf16>, vector<4x4x128xbf16>, vector<4x4x128xbf16>, vector<4x4x128xbf16>, vector<4x4x128xbf16> -> vector<4x4x1152xbf16>
    %39 = vector.shape_cast %38 : vector<4x4x1152xbf16> to vector<16x1152xbf16>
    %c0_32 = arith.constant 0 : index
    %c0_33 = arith.constant 0 : index
    %40 = vector.load %arg6[%c0_32, %c0_33] : memref<1152x256xbf16, #tpu.memory_space<vmem>>, vector<1152x256xbf16>
    %cst = arith.constant dense<0.000000e+00> : vector<16x256xf32>
    %41 = tpu.matmul %39, %40, %cst {dimension_numbers = #tpu.dot_dimension_numbers<[1], [0], [0], [1], [0, 0, 1, 1], [], []>} : vector<16x1152xbf16>, vector<1152x256xbf16>, vector<16x256xf32> -> vector<16x256xf32>
    %c0_34 = arith.constant 0 : index
    %c0_35 = arith.constant 0 : index
    %42 = vector.load %arg7[%c0_34, %c0_35] : memref<1x256xf32, #tpu.memory_space<vmem>>, vector<1x256xf32>
    %43 = vector.broadcast %42 : vector<1x256xf32> to vector<16x256xf32>
    %44 = arith.addf %41, %43 : vector<16x256xf32>
    %cst_36 = arith.constant 0.000000e+00 : f32
    %45 = vector.broadcast %cst_36 : f32 to vector<16x256xf32>
    %46 = arith.maximumf %44, %45 : vector<16x256xf32>
    %47 = arith.truncf %46 : vector<16x256xf32> to vector<16x256xbf16>
    %c0_37 = arith.constant 0 : index
    %c0_38 = arith.constant 0 : index
    %c0_39 = arith.constant 0 : index
    %48 = vector.load %arg8[%c0_37, %c0_38, %c0_39] : memref<1x16x256xbf16, #tpu.memory_space<vmem>>, vector<1x16x256xbf16>
    %49 = vector.shape_cast %48 : vector<1x16x256xbf16> to vector<16x256xbf16>
    %50 = vector.shape_cast %47 : vector<16x256xbf16> to vector<1x16x256xbf16>
    tpu.vector_store %arg8[%c0_37, %c0_38, %c0_39], %50 {strides = array<i32>} : memref<1x16x256xbf16, #tpu.memory_space<vmem>>, vector<1x16x256xbf16>,
    return
  }
  func.func @transform_0(%arg0: i32, %arg1: i32) -> (i32, i32, i32, i32) {
    %c0_i32 = arith.constant 0 : i32
    %c0_i32_0 = arith.constant 0 : i32
    %c0_i32_1 = arith.constant 0 : i32
    %c0_i32_2 = arith.constant 0 : i32
    return %arg0, %c0_i32, %c0_i32_0, %c0_i32_1 : i32, i32, i32, i32
  }
  func.func @transform_1(%arg0: i32, %arg1: i32) -> (i32, i32, i32, i32) {
    %c0_i32 = arith.constant 0 : i32
    %c0_i32_0 = arith.constant 0 : i32
    %c0_i32_1 = arith.constant 0 : i32
    %c0_i32_2 = arith.constant 0 : i32
    return %arg0, %c0_i32, %c0_i32_0, %c0_i32_1 : i32, i32, i32, i32
  }
  func.func @transform_2(%arg0: i32, %arg1: i32) -> (i32, i32, i32, i32) {
    %c0_i32 = arith.constant 0 : i32
    %c0_i32_0 = arith.constant 0 : i32
    %c0_i32_1 = arith.constant 0 : i32
    %c0_i32_2 = arith.constant 0 : i32
    return %arg0, %c0_i32, %c0_i32_0, %c0_i32_1 : i32, i32, i32, i32
  }
  func.func @transform_3(%arg0: i32, %arg1: i32) -> (i32, i32, i32, i32) {
    %c0_i32 = arith.constant 0 : i32
    %c0_i32_0 = arith.constant 0 : i32
    %c0_i32_1 = arith.constant 0 : i32
    %c0_i32_2 = arith.constant 0 : i32
    return %arg0, %c0_i32, %c0_i32_0, %c0_i32_1 : i32, i32, i32, i32
  }
  func.func @transform_4(%arg0: i32, %arg1: i32) -> (i32, i32) {
    %c0_i32 = arith.constant 0 : i32
    %c0_i32_0 = arith.constant 0 : i32
    %c0_i32_1 = arith.constant 0 : i32
    return %c0_i32, %c0_i32_0 : i32, i32
  }
  func.func @transform_5(%arg0: i32, %arg1: i32) -> (i32, i32) {
    %c0_i32 = arith.constant 0 : i32
    %c0_i32_0 = arith.constant 0 : i32
    %c0_i32_1 = arith.constant 0 : i32
    return %c0_i32, %c0_i32_0 : i32, i32
  }
  func.func @transform_6(%arg0: i32, %arg1: i32) -> (i32, i32, i32) {
    %c0_i32 = arith.constant 0 : i32
    %c0_i32_0 = arith.constant 0 : i32
    return %arg0, %arg1, %c0_i32 : i32, i32, i32
  }
}

module attributes {stable_mosaic.version = 11 : i64} {
  func.func @_conv3x3_s2_kernel(%arg0: i32, %arg1: i32, %arg2: memref<1x3x3x256xbf16, #tpu.memory_space<vmem>>, %arg3: memref<1x3x3x256xbf16, #tpu.memory_space<vmem>>, %arg4: memref<1x3x3x256xbf16, #tpu.memory_space<vmem>>, %arg5: memref<1x3x3x256xbf16, #tpu.memory_space<vmem>>, %arg6: memref<2304x512xbf16, #tpu.memory_space<vmem>>, %arg7: memref<1x512xf32, #tpu.memory_space<vmem>>, %arg8: memref<1x4x512xbf16, #tpu.memory_space<vmem>>) attributes {dimension_semantics = [#tpu.dimension_semantics<parallel>, #tpu.dimension_semantics<arbitrary>], iteration_bounds = array<i64: 2, 1>, scalar_prefetch = 0 : i64, scratch_operands = 0 : i64, tpu.core_type = #tpu.core_type<tc>, window_params = [{pipeline_mode = #tpu.pipeline_mode<synchronous>, transform_indices = @transform_0, window_bounds = array<i64: 1, 3, 3, 256>}, {pipeline_mode = #tpu.pipeline_mode<synchronous>, transform_indices = @transform_1, window_bounds = array<i64: 1, 3, 3, 256>}, {pipeline_mode = #tpu.pipeline_mode<synchronous>, transform_indices = @transform_2, window_bounds = array<i64: 1, 3, 3, 256>}, {pipeline_mode = #tpu.pipeline_mode<synchronous>, transform_indices = @transform_3, window_bounds = array<i64: 1, 3, 3, 256>}, {pipeline_mode = #tpu.pipeline_mode<synchronous>, transform_indices = @transform_4, window_bounds = array<i64: 2304, 512>}, {pipeline_mode = #tpu.pipeline_mode<synchronous>, transform_indices = @transform_5, window_bounds = array<i64: 1, 512>}, {transform_indices = @transform_6, window_bounds = array<i64: 1, 4, 512>}]} {
    %c2_i32 = arith.constant 2 : i32
    %0 = arith.muli %arg1, %c2_i32 : i32
    %1 = tpu.assume_multiple %0, 2 : i32
    %c0_i32 = arith.constant 0 : i32
    %2 = arith.addi %1, %c0_i32 : i32
    %c0 = arith.constant 0 : index
    %3 = arith.index_cast %2 : i32 to index
    %c0_0 = arith.constant 0 : index
    %c0_1 = arith.constant 0 : index
    %4 = vector.load %arg2[%c0, %3, %c0_0, %c0_1] : memref<1x3x3x256xbf16, #tpu.memory_space<vmem>>, vector<1x2x2x256xbf16>
    %5 = vector.shape_cast %4 : vector<1x2x2x256xbf16> to vector<2x2x256xbf16>
    %c0_i32_2 = arith.constant 0 : i32
    %6 = arith.addi %1, %c0_i32_2 : i32
    %c0_3 = arith.constant 0 : index
    %7 = arith.index_cast %6 : i32 to index
    %c0_4 = arith.constant 0 : index
    %c0_5 = arith.constant 0 : index
    %8 = vector.load %arg3[%c0_3, %7, %c0_4, %c0_5] : memref<1x3x3x256xbf16, #tpu.memory_space<vmem>>, vector<1x2x2x256xbf16>
    %9 = vector.shape_cast %8 : vector<1x2x2x256xbf16> to vector<2x2x256xbf16>
    %c0_i32_6 = arith.constant 0 : i32
    %10 = arith.addi %1, %c0_i32_6 : i32
    %c0_7 = arith.constant 0 : index
    %11 = arith.index_cast %10 : i32 to index
    %c1 = arith.constant 1 : index
    %c0_8 = arith.constant 0 : index
    %12 = vector.load %arg2[%c0_7, %11, %c1, %c0_8] : memref<1x3x3x256xbf16, #tpu.memory_space<vmem>>, vector<1x2x2x256xbf16>
    %13 = vector.shape_cast %12 : vector<1x2x2x256xbf16> to vector<2x2x256xbf16>
    %c0_i32_9 = arith.constant 0 : i32
    %14 = arith.addi %1, %c0_i32_9 : i32
    %c0_10 = arith.constant 0 : index
    %15 = arith.index_cast %14 : i32 to index
    %c0_11 = arith.constant 0 : index
    %c0_12 = arith.constant 0 : index
    %16 = vector.load %arg4[%c0_10, %15, %c0_11, %c0_12] : memref<1x3x3x256xbf16, #tpu.memory_space<vmem>>, vector<1x2x2x256xbf16>
    %17 = vector.shape_cast %16 : vector<1x2x2x256xbf16> to vector<2x2x256xbf16>
    %c0_i32_13 = arith.constant 0 : i32
    %18 = arith.addi %1, %c0_i32_13 : i32
    %c0_14 = arith.constant 0 : index
    %19 = arith.index_cast %18 : i32 to index
    %c0_15 = arith.constant 0 : index
    %c0_16 = arith.constant 0 : index
    %20 = vector.load %arg5[%c0_14, %19, %c0_15, %c0_16] : memref<1x3x3x256xbf16, #tpu.memory_space<vmem>>, vector<1x2x2x256xbf16>
    %21 = vector.shape_cast %20 : vector<1x2x2x256xbf16> to vector<2x2x256xbf16>
    %c0_i32_17 = arith.constant 0 : i32
    %22 = arith.addi %1, %c0_i32_17 : i32
    %c0_18 = arith.constant 0 : index
    %23 = arith.index_cast %22 : i32 to index
    %c1_19 = arith.constant 1 : index
    %c0_20 = arith.constant 0 : index
    %24 = vector.load %arg4[%c0_18, %23, %c1_19, %c0_20] : memref<1x3x3x256xbf16, #tpu.memory_space<vmem>>, vector<1x2x2x256xbf16>
    %25 = vector.shape_cast %24 : vector<1x2x2x256xbf16> to vector<2x2x256xbf16>
    %c1_i32 = arith.constant 1 : i32
    %26 = arith.addi %1, %c1_i32 : i32
    %c0_21 = arith.constant 0 : index
    %27 = arith.index_cast %26 : i32 to index
    %c0_22 = arith.constant 0 : index
    %c0_23 = arith.constant 0 : index
    %28 = vector.load %arg2[%c0_21, %27, %c0_22, %c0_23] : memref<1x3x3x256xbf16, #tpu.memory_space<vmem>>, vector<1x2x2x256xbf16>
    %29 = vector.shape_cast %28 : vector<1x2x2x256xbf16> to vector<2x2x256xbf16>
    %c1_i32_24 = arith.constant 1 : i32
    %30 = arith.addi %1, %c1_i32_24 : i32
    %c0_25 = arith.constant 0 : index
    %31 = arith.index_cast %30 : i32 to index
    %c0_26 = arith.constant 0 : index
    %c0_27 = arith.constant 0 : index
    %32 = vector.load %arg3[%c0_25, %31, %c0_26, %c0_27] : memref<1x3x3x256xbf16, #tpu.memory_space<vmem>>, vector<1x2x2x256xbf16>
    %33 = vector.shape_cast %32 : vector<1x2x2x256xbf16> to vector<2x2x256xbf16>
    %c1_i32_28 = arith.constant 1 : i32
    %34 = arith.addi %1, %c1_i32_28 : i32
    %c0_29 = arith.constant 0 : index
    %35 = arith.index_cast %34 : i32 to index
    %c1_30 = arith.constant 1 : index
    %c0_31 = arith.constant 0 : index
    %36 = vector.load %arg2[%c0_29, %35, %c1_30, %c0_31] : memref<1x3x3x256xbf16, #tpu.memory_space<vmem>>, vector<1x2x2x256xbf16>
    %37 = vector.shape_cast %36 : vector<1x2x2x256xbf16> to vector<2x2x256xbf16>
    %38 = tpu.concatenate %5, %9, %13, %17, %21, %25, %29, %33, %37 in 2 : vector<2x2x256xbf16>, vector<2x2x256xbf16>, vector<2x2x256xbf16>, vector<2x2x256xbf16>, vector<2x2x256xbf16>, vector<2x2x256xbf16>, vector<2x2x256xbf16>, vector<2x2x256xbf16>, vector<2x2x256xbf16> -> vector<2x2x2304xbf16>
    %39 = vector.shape_cast %38 : vector<2x2x2304xbf16> to vector<4x2304xbf16>
    %c0_32 = arith.constant 0 : index
    %c0_33 = arith.constant 0 : index
    %40 = vector.load %arg6[%c0_32, %c0_33] : memref<2304x512xbf16, #tpu.memory_space<vmem>>, vector<2304x512xbf16>
    %cst = arith.constant dense<0.000000e+00> : vector<4x512xf32>
    %41 = tpu.matmul %39, %40, %cst {dimension_numbers = #tpu.dot_dimension_numbers<[1], [0], [0], [1], [0, 0, 1, 1], [], []>} : vector<4x2304xbf16>, vector<2304x512xbf16>, vector<4x512xf32> -> vector<4x512xf32>
    %c0_34 = arith.constant 0 : index
    %c0_35 = arith.constant 0 : index
    %42 = vector.load %arg7[%c0_34, %c0_35] : memref<1x512xf32, #tpu.memory_space<vmem>>, vector<1x512xf32>
    %43 = vector.broadcast %42 : vector<1x512xf32> to vector<4x512xf32>
    %44 = arith.addf %41, %43 : vector<4x512xf32>
    %cst_36 = arith.constant 0.000000e+00 : f32
    %45 = vector.broadcast %cst_36 : f32 to vector<4x512xf32>
    %46 = arith.maximumf %44, %45 : vector<4x512xf32>
    %47 = arith.truncf %46 : vector<4x512xf32> to vector<4x512xbf16>
    %c0_37 = arith.constant 0 : index
    %c0_38 = arith.constant 0 : index
    %c0_39 = arith.constant 0 : index
    %48 = vector.load %arg8[%c0_37, %c0_38, %c0_39] : memref<1x4x512xbf16, #tpu.memory_space<vmem>>, vector<1x4x512xbf16>
    %49 = vector.shape_cast %48 : vector<1x4x512xbf16> to vector<4x512xbf16>
    %50 = vector.shape_cast %47 : vector<4x512xbf16> to vector<1x4x512xbf16>
    tpu.vector_store %arg8[%c0_37, %c0_38, %c0_39], %50 {strides = array<i32>} : memref<1x4x512xbf16, #tpu.memory_space<vmem>>, vector<1x4x512xbf16>,
    return
  }
  func.func @transform_0(%arg0: i32, %arg1: i32) -> (i32, i32, i32, i32) {
    %c0_i32 = arith.constant 0 : i32
    %c0_i32_0 = arith.constant 0 : i32
    %c0_i32_1 = arith.constant 0 : i32
    %c0_i32_2 = arith.constant 0 : i32
    return %arg0, %c0_i32, %c0_i32_0, %c0_i32_1 : i32, i32, i32, i32
  }
  func.func @transform_1(%arg0: i32, %arg1: i32) -> (i32, i32, i32, i32) {
    %c0_i32 = arith.constant 0 : i32
    %c0_i32_0 = arith.constant 0 : i32
    %c0_i32_1 = arith.constant 0 : i32
    %c0_i32_2 = arith.constant 0 : i32
    return %arg0, %c0_i32, %c0_i32_0, %c0_i32_1 : i32, i32, i32, i32
  }
  func.func @transform_2(%arg0: i32, %arg1: i32) -> (i32, i32, i32, i32) {
    %c0_i32 = arith.constant 0 : i32
    %c0_i32_0 = arith.constant 0 : i32
    %c0_i32_1 = arith.constant 0 : i32
    %c0_i32_2 = arith.constant 0 : i32
    return %arg0, %c0_i32, %c0_i32_0, %c0_i32_1 : i32, i32, i32, i32
  }
  func.func @transform_3(%arg0: i32, %arg1: i32) -> (i32, i32, i32, i32) {
    %c0_i32 = arith.constant 0 : i32
    %c0_i32_0 = arith.constant 0 : i32
    %c0_i32_1 = arith.constant 0 : i32
    %c0_i32_2 = arith.constant 0 : i32
    return %arg0, %c0_i32, %c0_i32_0, %c0_i32_1 : i32, i32, i32, i32
  }
  func.func @transform_4(%arg0: i32, %arg1: i32) -> (i32, i32) {
    %c0_i32 = arith.constant 0 : i32
    %c0_i32_0 = arith.constant 0 : i32
    %c0_i32_1 = arith.constant 0 : i32
    return %c0_i32, %c0_i32_0 : i32, i32
  }
  func.func @transform_5(%arg0: i32, %arg1: i32) -> (i32, i32) {
    %c0_i32 = arith.constant 0 : i32
    %c0_i32_0 = arith.constant 0 : i32
    %c0_i32_1 = arith.constant 0 : i32
    return %c0_i32, %c0_i32_0 : i32, i32
  }
  func.func @transform_6(%arg0: i32, %arg1: i32) -> (i32, i32, i32) {
    %c0_i32 = arith.constant 0 : i32
    %c0_i32_0 = arith.constant 0 : i32
    return %arg0, %arg1, %c0_i32 : i32, i32, i32
  }
}

</mosaic_0001>

<llo_original>
// kernel: dense_encoder_forward.3
$region0: #{dense_encoder_forward.3}
  #allocation0 [shape = 'u32[]', space=smem, size = 0x4, offset = 0x4, fixed_abs, tag = 'smem constant byte address 0x4 - core index']
  #allocation1 [shape = 'u32[144,128]{1,0:T(1,128)}', space=vmem, size = 0x12000, scoped, tag = 'internal scratch']
  %s0 = inlined_call_operand.vmem [shape: bf16[2,64,36], index: 0, kind: input, shape index: {}]
  %s1 = inlined_call_operand.hbm [shape: bf16[36,128], index: 1, kind: input, shape index: {}]
  %s2 = inlined_call_operand.hbm [shape: f32[1,128], index: 2, kind: input, shape index: {}]
  %s3 = inlined_call_operand.vmem [shape: bf16[2,64,128], index: 3, kind: output, shape index: {}]
  %s4 = sld [smem:[#allocation0]]
  $region53: #{dense_encoder_forward.3} parent=0
    _
  %s6 = ssub.s32 1, %s4
  %s7 = scalar_select 0, %s6, %s4
  $region1: #{dense_encoder_forward.3} parent=0
    #allocation2 [shape = 'u8[10240]{0}', space=vmem, size = 0x2800, scoped, tag = 'input window, operand 1, single buffered']
    #allocation3 [shape = 's32[2]{0}', space=sflag, size = 0x8, scoped, tag = 'scoped memory for dense_encoder_forward.3']
    #allocation4 [shape = 'u8[512]{0}', space=vmem, size = 0x400, scoped, tag = 'input window, operand 2, single buffered']
    #allocation5 [shape = 's32[1]{0}', space=sflag, size = 0x4, scoped, tag = 'scoped memory for dense_encoder_forward.3']
    %8 = vsyncpa [#allocation3], 0
    %9 = vsyncpa [#allocation5], 0
    loop: start=0, step=1, limit=4
    $region2: #{dense_encoder_forward.3} parent=1 // loop_pre_header
      _
    $region3: #{dense_encoder_forward.3} parent=1 // loop_header
      %s11 = sphi 0, %s15
      %p12 = scmp.ge.s32.totalorder %s11, 4
      %s18 = sphi 0, %s30
      %s19 = sphi 0, %s26
      %s20 = sphi 0, %s18
      %s21 = sphi 0, %s19
      %s22 = sphi 0, %s20
      %s23 = sphi 0, %s21
      %s35 = sphi 0, %s37
      %s38 = sphi 0, %s35
      %s39 = sphi 0, %s38
      %s55 = sphi 0, %s39
      %s59 = sphi 0, %s59
      %s61 = sphi 0, %s59
      %s62 = sphi 0, %s61
      %s76 = sphi 0, %s62
      %s80 = sphi 0, %s80
      %s82 = sphi 0, %s80
      %s83 = sphi 0, %s82
      %s97 = sphi 0, %s83
      %s105 = sphi 0, %s107
      %s108 = sphi 0, %s105
      %s109 = sphi 0, %s108
      %s125 = sphi 0, %s109
    $region4: #{dense_encoder_forward.3} parent=1 // loop_header_branch
      %14 = sbr.rel (%p12) target = $region8
    $region5: #{dense_encoder_forward.3} parent=1 // loop_body
      %s16 = ssub.s32 %s11, 1
      %s17 = ssub.s32 %s11, 2
      %s24 = sadd.s32 1, %s19
      %p25 = scmp.ge.s32.totalorder %s24, 1
      %s26 = scalar_select %p25, 0, %s24
      %s27 = sadd.s32 1, %s18
      %s28 = scalar_select %p25, %s27, %s18
      %p29 = scmp.ge.s32.totalorder %s28, 2
      %s30 = scalar_select %p29, 0, %s28
      %s31 = ssub.s32 %s18, %s30
      %s32 = ssub.s32 %s19, %s26
      %s33 = sor.u32 %s31, %s32
      %p34 = scmp.eq.s32.totalorder %s33, 0
      %s36 = sadd.s32 %s35, 1
      %s37 = scalar_select %p34, %s35, %s36
      %p40 = pneg %p34
      %p41 = scmp.eq.s32.totalorder %s11, 1
      %p42 = por %p40, %p41
      %p43 = scmp.ne.s32.totalorder %s35, %s38
      %p44 = scmp.eq.s32.totalorder %s11, 0
      %p45 = por %p43, %p44
      %p46 = scmp.ne.s32.totalorder %s35, %s38
      %p47 = scmp.eq.s32.totalorder %s16, 1
      %p48 = por %p46, %p47
      %p49 = scmp.ne.s32.totalorder %s38, %s39
      %p50 = scmp.eq.s32.totalorder %s16, 0
      %p51 = por %p49, %p50
      %p52 = scmp.ne.s32.totalorder %s38, %s39
      %p53 = scmp.eq.s32.totalorder %s17, 1
      %p54 = por %p52, %p53
      %p56 = scmp.ne.s32.totalorder %s39, %s55
      %p57 = scmp.eq.s32.totalorder %s17, 0
      %p58 = por %p56, %p57
      %s60 = sadd.s32 %s59, 1
      %p63 = scmp.eq.s32.totalorder %s11, 1
      %p64 = scmp.ne.s32.totalorder %s59, %s61
      %p65 = scmp.eq.s32.totalorder %s11, 0
      %p66 = por %p64, %p65
      %p67 = scmp.ne.s32.totalorder %s59, %s61
      %p68 = scmp.eq.s32.totalorder %s16, 1
      %p69 = por %p67, %p68
      %p70 = scmp.ne.s32.totalorder %s61, %s62
      %p71 = scmp.eq.s32.totalorder %s16, 0
      %p72 = por %p70, %p71
      %p73 = scmp.ne.s32.totalorder %s61, %s62
      %p74 = scmp.eq.s32.totalorder %s17, 1
      %p75 = por %p73, %p74
      %p77 = scmp.ne.s32.totalorder %s62, %s76
      %p78 = scmp.eq.s32.totalorder %s17, 0
      %p79 = por %p77, %p78
      %s81 = sadd.s32 %s80, 1
      %p84 = scmp.eq.s32.totalorder %s11, 1
      %p85 = scmp.ne.s32.totalorder %s80, %s82
      %p86 = scmp.eq.s32.totalorder %s11, 0
      %p87 = por %p85, %p86
      %p88 = scmp.ne.s32.totalorder %s80, %s82
      %p89 = scmp.eq.s32.totalorder %s16, 1
      %p90 = por %p88, %p89
      %p91 = scmp.ne.s32.totalorder %s82, %s83
      %p92 = scmp.eq.s32.totalorder %s16, 0
      %p93 = por %p91, %p92
      %p94 = scmp.ne.s32.totalorder %s82, %s83
      %p95 = scmp.eq.s32.totalorder %s17, 1
      %p96 = por %p94, %p95
      %p98 = scmp.ne.s32.totalorder %s83, %s97
      %p99 = scmp.eq.s32.totalorder %s17, 0
      %p100 = por %p98, %p99
      %s101 = ssub.s32 %s18, %s30
      %s102 = ssub.s32 %s19, %s26
      %s103 = sor.u32 %s101, %s102
      %p104 = scmp.eq.s32.totalorder %s103, 0
      %s106 = sadd.s32 %s105, 1
      %s107 = scalar_select %p104, %s105, %s106
      %p110 = pneg %p104
      %p111 = scmp.eq.s32.totalorder %s11, 1
      %p112 = por %p110, %p111
      %p113 = scmp.ne.s32.totalorder %s105, %s108
      %p114 = scmp.eq.s32.totalorder %s11, 0
      %p115 = por %p113, %p114
      %p116 = scmp.ne.s32.totalorder %s105, %s108
      %p117 = scmp.eq.s32.totalorder %s16, 1
      %p118 = por %p116, %p117
      %p119 = scmp.ne.s32.totalorder %s108, %s109
      %p120 = scmp.eq.s32.totalorder %s16, 0
      %p121 = por %p119, %p120
      %p122 = scmp.ne.s32.totalorder %s108, %s109
      %p123 = scmp.eq.s32.totalorder %s17, 1
      %p124 = por %p122, %p123
      %p126 = scmp.ne.s32.totalorder %s109, %s125
      %p127 = scmp.eq.s32.totalorder %s17, 0
      %p128 = por %p126, %p127
      %p129 = scmp.le.s32.totalorder 1, %s11
      %p130 = scmp.lt.s32.totalorder %s11, 3
      %p131 = pnand %p129, %p130
      %p132 = pneg %p131
      // Predicated region
      $region9: #{dense_encoder_forward.3} parent=5 // pred_check
        _
      $region10: #{dense_encoder_forward.3} parent=5 // pred_check_branch
        %134 = sbr.rel (%p131) target = $region12
      $region11: #{dense_encoder_forward.3} parent=5 // pred_region
        %s135 = ssub.s32 %s11, 1
        // Predicated region
        $region13: #{dense_encoder_forward.3} parent=11 // pred_check
          %p136 = pneg %p72
        $region14: #{dense_encoder_forward.3} parent=11 // pred_check_branch
          %138 = sbr.rel (%p136) target = $region16
        $region15: #{dense_encoder_forward.3} parent=11 // pred_region
          %s140 = ssub.s32 320, 320
          %141 = vsyncadd [#allocation3], %s140
          %s142 = sshll.u32 [#allocation2], 4
          %s143 = int_to_ptr.vmem [resolvable:$true] %s142
          %148 = dma.hbm_to_vmem [thread:$0]  %s1, 320, %s143, [#allocation3], 64, 64, 4
        $region16: #{dense_encoder_forward.3} parent=11 // pred_fallthru
          _
        // Predicated region
        $region17: #{dense_encoder_forward.3} parent=11 // pred_check
          %p149 = pneg %p93
        $region18: #{dense_encoder_forward.3} parent=11 // pred_check_branch
          %151 = sbr.rel (%p149) target = $region20
        $region19: #{dense_encoder_forward.3} parent=11 // pred_region
          %s153 = ssub.s32 16, 16
          %154 = vsyncadd [#allocation5], %s153
          %s156 = sshll.u32 [#allocation4], 4
          %s157 = int_to_ptr.vmem [resolvable:$true] %s156
          %159 = dma.hbm_to_vmem [thread:$0]  %s2, 16, %s157, [#allocation5]
        $region20: #{dense_encoder_forward.3} parent=11 // pred_fallthru
          _
      $region12: #{dense_encoder_forward.3} parent=5 // pred_fallthru
        _
      %p160 = scmp.lt.s32.totalorder %s11, 2
      // Predicated region
      $region21: #{dense_encoder_forward.3} parent=5 // pred_check
        %p161 = pneg %p160
      $region22: #{dense_encoder_forward.3} parent=5 // pred_check_branch
        %163 = sbr.rel (%p161) target = $region24
      $region23: #{dense_encoder_forward.3} parent=5 // pred_region
        // Predicated region
        $region25: #{dense_encoder_forward.3} parent=23 // pred_check
          %p164 = pneg %p45
        $region26: #{dense_encoder_forward.3} parent=23 // pred_check_branch
          %166 = sbr.rel (%p164) target = $region28
        $region27: #{dense_encoder_forward.3} parent=23 // pred_region
          %s167 = smul.u32 8, %s19
          %p168 = scmp.lt.s32.totalorder %s18, 1
          %s169 = scalar_select %p168, %s18, 1
          %p170 = scmp.lt.s32.totalorder %s167, 7
          %s171 = scalar_select %p170, %s167, 7
          %s172 = smul.addr %s169, 8
          %s173 = sadd.s32 %s171, %s172
          %s174 = smul.addr %s173, 4
          %s175 = scalar_lea.vmem %s0, %s174
          %s176 = smul.u32 8, %s19
        $region28: #{dense_encoder_forward.3} parent=23 // pred_fallthru
          _
      $region24: #{dense_encoder_forward.3} parent=5 // pred_fallthru
        _
      %p177 = scmp.le.s32.totalorder 1, %s11
      %p178 = scmp.lt.s32.totalorder %s11, 3
      %p179 = pnand %p177, %p178
      %p180 = pneg %p179
      // Predicated region
      $region29: #{dense_encoder_forward.3} parent=5 // pred_check
        _
      $region30: #{dense_encoder_forward.3} parent=5 // pred_check_branch
        %182 = sbr.rel (%p179) target = $region32
      $region31: #{dense_encoder_forward.3} parent=5 // pred_region
        %s183 = ssub.s32 %s11, 1
        // Predicated region
        $region33: #{dense_encoder_forward.3} parent=31 // pred_check
          %p184 = pneg %p72
        $region34: #{dense_encoder_forward.3} parent=31 // pred_check_branch
          %186 = sbr.rel (%p184) target = $region36
        $region35: #{dense_encoder_forward.3} parent=31 // pred_region
          %187 = dma.done [#allocation3], 320
        $region36: #{dense_encoder_forward.3} parent=31 // pred_fallthru
          _
        // Predicated region
        $region37: #{dense_encoder_forward.3} parent=31 // pred_check
          %p188 = pneg %p93
        $region38: #{dense_encoder_forward.3} parent=31 // pred_check_branch
          %190 = sbr.rel (%p188) target = $region40
        $region39: #{dense_encoder_forward.3} parent=31 // pred_region
          %191 = dma.done [#allocation5], 16
        $region40: #{dense_encoder_forward.3} parent=31 // pred_fallthru
          _
        %s192 = smul.u32 8, %s21
        %p193 = scmp.lt.s32.totalorder %s20, 1
        %s194 = scalar_select %p193, %s20, 1
        %p195 = scmp.lt.s32.totalorder %s192, 7
        %s196 = scalar_select %p195, %s192, 7
        %s197 = smul.addr %s194, 8
        %s198 = sadd.s32 %s196, %s197
        %s199 = smul.addr %s198, 4
        %s200 = scalar_lea.vmem %s0, %s199
        %p201 = pneg %p51
        %p202 = pneg %p48
        %p203 = pneg %p72
        %p204 = pneg %p69
        %p205 = pneg %p93
        %p206 = pneg %p90
        %p207 = pneg %p121
        %p208 = pneg %p118
        %s209 = smul.u32 8, %s21
        %p210 = scmp.lt.s32.totalorder %s20, 1
        %s211 = scalar_select %p210, %s20, 1
        %p212 = scmp.lt.s32.totalorder %s209, 7
        %s213 = scalar_select %p212, %s209, 7
        %s214 = smul.addr %s211, 8
        %s215 = sadd.s32 %s213, %s214
        %s216 = smul.addr %s215, 4
        %s217 = scalar_lea.vmem %s3, %s216
        %s218 = smul.u32 8, %s21
        %p219 = scmp.lt.s32.totalorder %s20, 1
        %s220 = scalar_select %p219, %s20, 1
        %p221 = scmp.lt.s32.totalorder %s218, 7
        %s222 = scalar_select %p221, %s218, 7
        %s223 = smul.addr %s220, 8
        %s224 = sadd.s32 %s222, %s223
        %s225 = smul.addr %s224, 4
        %s226 = scalar_lea.vmem %s0, %s225
        %s227 = smul.u32 8, %s21
        %s228 = smul.u32 8, %s21
        %p229 = scmp.lt.s32.totalorder %s20, 1
        %s230 = scalar_select %p229, %s20, 1
        %p231 = scmp.lt.s32.totalorder %s228, 7
        %s232 = scalar_select %p231, %s228, 7
        %s233 = smul.addr %s230, 8
        %s234 = sadd.s32 %s232, %s233
        %s235 = smul.addr %s234, 4
        %s236 = scalar_lea.vmem %s3, %s235
        %s237 = smul.u32 8, %s21
        %v239 = vld [vmem:[%s226] sm:$0xf]
        %v240 = vld [vmem:[%s226 + $0x4] sm:$0xf]
        %v241 = vld [vmem:[%s226 + $0x8] sm:$0xf]
        %v242 = vld [vmem:[%s226 + $0xc] sm:$0xf]
        %v243 = vld [vmem:[%s226 + $0x10] sm:$0xf]
        %v244 = vld [vmem:[%s226 + $0x14] sm:$0xf]
        %v245 = vld [vmem:[%s226 + $0x18] sm:$0xf]
        %v246 = vld [vmem:[%s226 + $0x1c] sm:$0xf]
        %v247 = vld [vmem:[#allocation2] sm:$0xf]
        %v248 = vld [vmem:[#allocation2 + $0x4] sm:$0xf]
        %v249 = vld [vmem:[#allocation2 + $0x8] sm:$0xf]
        %v250 = vld [vmem:[#allocation2 + $0xc] sm:$0xf]
        %v251 = vld [vmem:[#allocation2 + $0x10] sm:$0x3]
        %v252 = vld [vmem:[#allocation4] sm:$0x1]
        %v254 = vlaneseq
        %v255 = vshrl.u32 %v254, 7
        %v256 = vsub.s32 0, %v255
        %v257 = vrot.slane %v252, %v256
        %v267 = vunpack.c.l.b16 %v239
        %v268 = vunpack.c.l.b16 %v240
        %v269 = vunpack.c.l.b16 %v241
        %v270 = vunpack.c.l.b16 %v242
        %v271 = vunpack.c.l.b16 %v243
        %v272 = vunpack.c.l.b16 %v244
        %v273 = vunpack.c.l.b16 %v245
        %v274 = vunpack.c.l.b16 %v246
        %v275 = vpack.c.b16 %v268, %v267
        %v276 = vpack.c.b16 %v270, %v269
        %v277 = vpack.c.b16 %v272, %v271
        %v278 = vpack.c.b16 %v274, %v273
        %v284 = vunpack.c.l.b16 %v247
        %v285 = vunpack.c.l.b16 %v248
        %v286 = vunpack.c.l.b16 %v249
        %v287 = vunpack.c.l.b16 %v250
        %v288 = vunpack.c.l.b16 %v251
        %v289 = vpack.c.b16 %v285, %v284
        %v290 = vpack.c.b16 %v287, %v286
        %v291 = vpack.c.b16 %v288, %v288
        %vm294 = vcmask 293888
        %v296 = vsel %vm294, %v275, 0
        %v299 = vsel %vm294, %v276, 0
        %v302 = vsel %vm294, %v277, 0
        %v305 = vsel %vm294, %v278, 0
        %vm307 = vcmask 1041408
        %v309 = vsel %vm307, %v291, 0
        %311 = vmatprep.subr.bf16.mxu0 0
        %312 = vmatpush1.bf16.msra.mxu0 %v289
        %313 = vmatprep.subr.bf16.mxu0 0
        %314 = vmatpush1.bf16.msra.mxu0 %v290
        %315 = vmatprep.subr.bf16.mxu0 0
        %316 = vmatpush1.bf16.msra.mxu0 %v309
        %317 = vmatprep.subr.bf16.mxu0 0
        %318 = vmatpush1.bf16.msra.mxu0 0
        %319 = vmatprep.subr.bf16.mxu0 0
        %320 = vmatpush1.bf16.msra.mxu0 0
        %321 = vmatprep.subr.bf16.mxu0 0
        %322 = vmatpush1.bf16.msra.mxu0 0
        %323 = vmatprep.subr.bf16.mxu0 0
        %324 = vmatpush1.bf16.msra.mxu0 0
        %325 = vmatprep.subr.bf16.mxu0 0
        %326 = vmatpush1.bf16.msra.mxu0 0
        %327 = vmatprep.subr.bf16.mxu0 0
        %328 = vmatpush1.bf16.msra.mxu0 0
        %329 = vmatprep.subr.bf16.mxu0 0
        %330 = vmatpush1.bf16.msra.mxu0 0
        %331 = vmatprep.subr.bf16.mxu0 0
        %332 = vmatpush1.bf16.msra.mxu0 0
        %333 = vmatprep.subr.bf16.mxu0 0
        %334 = vmatpush1.bf16.msra.mxu0 0
        %335 = vmatprep.subr.bf16.mxu0 0
        %336 = vmatpush1.bf16.msra.mxu0 0
        %337 = vmatprep.subr.bf16.mxu0 0
        %338 = vmatpush1.bf16.msra.mxu0 0
        %339 = vmatprep.subr.bf16.mxu0 0
        %340 = vmatpush1.bf16.msra.mxu0 0
        %341 = vmatprep.subr.bf16.mxu0 0
        %342 = vmatpush1.bf16.msra.mxu0 0
        %343 = vmatprep.mubr.bf16.mxu0 0
        %344 = vmatmul.mubr.bf16.gmra.mrb[0].mxu0 %v296
        %v345 = vpop.f32.mrb[0].mxu0
        %v346 = vadd.f32 %v257, %v345
        %v347 = vpop.f32.mrb[0].mxu0
        %v348 = vpop.f32.mrb[0].mxu0
        %v349 = vadd.f32 %v257, %v348
        %v350 = vpop.f32.mrb[0].mxu0
        %351 = vmatprep.mubr.bf16.mxu0 0
        %352 = vmatmul.mubr.bf16.gmra.mrb[0].mxu0 %v299
        %v353 = vpop.f32.mrb[0].mxu0
        %v354 = vadd.f32 %v257, %v353
        %v355 = vpop.f32.mrb[0].mxu0
        %v356 = vpop.f32.mrb[0].mxu0
        %v357 = vadd.f32 %v257, %v356
        %v358 = vpop.f32.mrb[0].mxu0
        %359 = vmatprep.mubr.bf16.mxu0 0
        %360 = vmatmul.mubr.bf16.gmra.mrb[0].mxu0 %v302
        %v361 = vpop.f32.mrb[0].mxu0
        %v362 = vadd.f32 %v257, %v361
        %v363 = vpop.f32.mrb[0].mxu0
        %v364 = vpop.f32.mrb[0].mxu0
        %v365 = vadd.f32 %v257, %v364
        %v366 = vpop.f32.mrb[0].mxu0
        %367 = vmatprep.mubr.bf16.mxu0 0
        %368 = vmatmul.mubr.bf16.gmra.mrb[0].mxu0 %v305
        %v369 = vpop.f32.mrb[0].mxu0
        %v370 = vadd.f32 %v257, %v369
        %v371 = vpop.f32.mrb[0].mxu0
        %v372 = vpop.f32.mrb[0].mxu0
        %v373 = vadd.f32 %v257, %v372
        %v374 = vpop.f32.mrb[0].mxu0
        %375 = vdwg.mxu0
        %v376 = vmax.f32 %v346, 0.0
        %v377 = vmax.f32 %v349, 0.0
        %v378 = vmax.f32 %v354, 0.0
        %v379 = vmax.f32 %v357, 0.0
        %v380 = vmax.f32 %v362, 0.0
        %v381 = vmax.f32 %v365, 0.0
        %v382 = vmax.f32 %v370, 0.0
        %v383 = vmax.f32 %v373, 0.0
        %v384 = vpack.c.bf16 %v377, %v376
        %v385 = vpack.c.bf16 %v379, %v378
        %v386 = vpack.c.bf16 %v381, %v380
        %v387 = vpack.c.bf16 %v383, %v382
        %v392 = vunpack.c.l.b16 %v384
        %v393 = vunpack.c.h.b16 %v384
        %v394 = vunpack.c.l.b16 %v385
        %v395 = vunpack.c.h.b16 %v385
        %v396 = vunpack.c.l.b16 %v386
        %v397 = vunpack.c.h.b16 %v386
        %v398 = vunpack.c.l.b16 %v387
        %v399 = vunpack.c.h.b16 %v387
        %v400 = vpack.c.b16 %v392, %v392
        %v401 = vpack.c.b16 %v393, %v393
        %v402 = vpack.c.b16 %v394, %v394
        %v403 = vpack.c.b16 %v395, %v395
        %v404 = vpack.c.b16 %v396, %v396
        %v405 = vpack.c.b16 %v397, %v397
        %v406 = vpack.c.b16 %v398, %v398
        %v407 = vpack.c.b16 %v399, %v399
        %416 = vst [vmem:[%s236] sm:$0xf] %v400
        %417 = vst [vmem:[%s236 + $0x4] sm:$0xf] %v401
        %418 = vst [vmem:[%s236 + $0x8] sm:$0xf] %v402
        %419 = vst [vmem:[%s236 + $0xc] sm:$0xf] %v403
        %420 = vst [vmem:[%s236 + $0x10] sm:$0xf] %v404
        %421 = vst [vmem:[%s236 + $0x14] sm:$0xf] %v405
        %422 = vst [vmem:[%s236 + $0x18] sm:$0xf] %v406
        %423 = vst [vmem:[%s236 + $0x1c] sm:$0xf] %v407
        %s424 = smul.u32 8, %s21
        %p425 = scmp.lt.s32.totalorder %s20, 1
        %s426 = scalar_select %p425, %s20, 1
        %p427 = scmp.lt.s32.totalorder %s424, 7
        %s428 = scalar_select %p427, %s424, 7
        %s429 = smul.addr %s426, 8
        %s430 = sadd.s32 %s428, %s429
        %s431 = smul.addr %s430, 4
        %s432 = scalar_lea.vmem %s3, %s431
        // Predicated region
        $region41: #{dense_encoder_forward.3} parent=31 // pred_check
          %p433 = pneg %p118
        $region42: #{dense_encoder_forward.3} parent=31 // pred_check_branch
          %435 = sbr.rel (%p433) target = $region44
        $region43: #{dense_encoder_forward.3} parent=31 // pred_region
          %s436 = smul.u32 8, %s21
        $region44: #{dense_encoder_forward.3} parent=31 // pred_fallthru
          _
      $region32: #{dense_encoder_forward.3} parent=5 // pred_fallthru
        _
      %p437 = scmp.le.s32.totalorder 2, %s11
      // Predicated region
      $region45: #{dense_encoder_forward.3} parent=5 // pred_check
        %p438 = pneg %p437
      $region46: #{dense_encoder_forward.3} parent=5 // pred_check_branch
        %440 = sbr.rel (%p438) target = $region48
      $region47: #{dense_encoder_forward.3} parent=5 // pred_region
        %s441 = ssub.s32 %s11, 2
        // Predicated region
        $region49: #{dense_encoder_forward.3} parent=47 // pred_check
          %p442 = pneg %p124
        $region50: #{dense_encoder_forward.3} parent=47 // pred_check_branch
          %444 = sbr.rel (%p442) target = $region52
        $region51: #{dense_encoder_forward.3} parent=47 // pred_region
          %s445 = smul.u32 8, %s23
          %p446 = scmp.lt.s32.totalorder %s22, 1
          %s447 = scalar_select %p446, %s22, 1
          %p448 = scmp.lt.s32.totalorder %s445, 7
          %s449 = scalar_select %p448, %s445, 7
          %s450 = smul.addr %s447, 8
          %s451 = sadd.s32 %s449, %s450
          %s452 = smul.addr %s451, 4
          %s453 = scalar_lea.vmem %s3, %s452
        $region52: #{dense_encoder_forward.3} parent=47 // pred_fallthru
          _
      $region48: #{dense_encoder_forward.3} parent=5 // pred_fallthru
        _
    $region6: #{dense_encoder_forward.3} parent=1 // loop_footer
      %s15 = sadd.s32 1, %s11
    $region7: #{dense_encoder_forward.3} parent=1 // loop_footer_branch
      %10 = sbr.rel target = $region3
    $region8: #{dense_encoder_forward.3} parent=1 // loop_exit
      _
    %454 = vsyncpa [#allocation3], 1
    %s455 = scalar_lea.sflag [#allocation3], 1
    %456 = vsyncpa %s455, 1
    %457 = vsyncpa [#allocation5], 1

// kernel: dense_encoder_forward.4
$region0: #{dense_encoder_forward.4}
  #allocation0 [shape = 'u32[]', space=smem, size = 0x4, offset = 0x4, fixed_abs, tag = 'smem constant byte address 0x4 - core index']
  #allocation1 [shape = 'u32[144,128]{1,0:T(1,128)}', space=vmem, size = 0x12000, scoped, tag = 'internal scratch']
  %s0 = inlined_call_operand.vmem [shape: bf16[2,5,5,128], index: 0, kind: input, shape index: {}]
  %s1 = inlined_call_operand.vmem [shape: bf16[2,5,5,128], index: 1, kind: input, shape index: {}]
  %s2 = inlined_call_operand.vmem [shape: bf16[2,5,5,128], index: 2, kind: input, shape index: {}]
  %s3 = inlined_call_operand.vmem [shape: bf16[2,5,5,128], index: 3, kind: input, shape index: {}]
  %s4 = inlined_call_operand.hbm [shape: bf16[1152,256], index: 4, kind: input, shape index: {}]
  %s5 = inlined_call_operand.hbm [shape: f32[1,256], index: 5, kind: input, shape index: {}]
  %s6 = inlined_call_operand.vmem [shape: bf16[2,16,256], index: 6, kind: output, shape index: {}]
  %s7 = sld [smem:[#allocation0]]
  $region65: #{dense_encoder_forward.4} parent=0
    _
  %s9 = ssub.s32 1, %s7
  %s10 = scalar_select 0, %s9, %s7
  $region1: #{dense_encoder_forward.4} parent=0
    #allocation2 [shape = 'u8[589824]{0}', space=vmem, size = 0x90000, scoped, tag = 'input window, operand 4, single buffered']
    #allocation3 [shape = 's32[2]{0}', space=sflag, size = 0x8, scoped, tag = 'scoped memory for dense_encoder_forward.4']
    #allocation4 [shape = 'u8[1024]{0}', space=vmem, size = 0x400, scoped, tag = 'input window, operand 5, single buffered']
    #allocation5 [shape = 's32[1]{0}', space=sflag, size = 0x4, scoped, tag = 'scoped memory for dense_encoder_forward.4']
    %11 = vsyncpa [#allocation3], 0
    %12 = vsyncpa [#allocation5], 0
    loop: start=0, step=1, limit=4
    $region2: #{dense_encoder_forward.4} parent=1 // loop_pre_header
      _
    $region3: #{dense_encoder_forward.4} parent=1 // loop_header
      %s14 = sphi 0, %s18
      %p15 = scmp.ge.s32.totalorder %s14, 4
      %s21 = sphi 0, %s33
      %s22 = sphi 0, %s29
      %s23 = sphi 0, %s21
      %s24 = sphi 0, %s22
      %s25 = sphi 0, %s23
      %s26 = sphi 0, %s24
      %s36 = sphi 0, %s38
      %s39 = sphi 0, %s36
      %s40 = sphi 0, %s39
      %s56 = sphi 0, %s40
      %s62 = sphi 0, %s64
      %s65 = sphi 0, %s62
      %s66 = sphi 0, %s65
      %s82 = sphi 0, %s66
      %s88 = sphi 0, %s90
      %s91 = sphi 0, %s88
      %s92 = sphi 0, %s91
      %s108 = sphi 0, %s92
      %s114 = sphi 0, %s116
      %s117 = sphi 0, %s114
      %s118 = sphi 0, %s117
      %s134 = sphi 0, %s118
      %s138 = sphi 0, %s138
      %s140 = sphi 0, %s138
      %s141 = sphi 0, %s140
      %s155 = sphi 0, %s141
      %s159 = sphi 0, %s159
      %s161 = sphi 0, %s159
      %s162 = sphi 0, %s161
      %s176 = sphi 0, %s162
      %s184 = sphi 0, %s186
      %s187 = sphi 0, %s184
      %s188 = sphi 0, %s187
      %s204 = sphi 0, %s188
    $region4: #{dense_encoder_forward.4} parent=1 // loop_header_branch
      %17 = sbr.rel (%p15) target = $region8
    $region5: #{dense_encoder_forward.4} parent=1 // loop_body
      %s19 = ssub.s32 %s14, 1
      %s20 = ssub.s32 %s14, 2
      %s27 = sadd.s32 1, %s22
      %p28 = scmp.ge.s32.totalorder %s27, 1
      %s29 = scalar_select %p28, 0, %s27
      %s30 = sadd.s32 1, %s21
      %s31 = scalar_select %p28, %s30, %s21
      %p32 = scmp.ge.s32.totalorder %s31, 2
      %s33 = scalar_select %p32, 0, %s31
      %s34 = ssub.s32 %s21, %s33
      %p35 = scmp.eq.s32.totalorder %s34, 0
      %s37 = sadd.s32 %s36, 1
      %s38 = scalar_select %p35, %s36, %s37
      %p41 = pneg %p35
      %p42 = scmp.eq.s32.totalorder %s14, 1
      %p43 = por %p41, %p42
      %p44 = scmp.ne.s32.totalorder %s36, %s39
      %p45 = scmp.eq.s32.totalorder %s14, 0
      %p46 = por %p44, %p45
      %p47 = scmp.ne.s32.totalorder %s36, %s39
      %p48 = scmp.eq.s32.totalorder %s19, 1
      %p49 = por %p47, %p48
      %p50 = scmp.ne.s32.totalorder %s39, %s40
      %p51 = scmp.eq.s32.totalorder %s19, 0
      %p52 = por %p50, %p51
      %p53 = scmp.ne.s32.totalorder %s39, %s40
      %p54 = scmp.eq.s32.totalorder %s20, 1
      %p55 = por %p53, %p54
      %p57 = scmp.ne.s32.totalorder %s40, %s56
      %p58 = scmp.eq.s32.totalorder %s20, 0
      %p59 = por %p57, %p58
      %s60 = ssub.s32 %s21, %s33
      %p61 = scmp.eq.s32.totalorder %s60, 0
      %s63 = sadd.s32 %s62, 1
      %s64 = scalar_select %p61, %s62, %s63
      %p67 = pneg %p61
      %p68 = scmp.eq.s32.totalorder %s14, 1
      %p69 = por %p67, %p68
      %p70 = scmp.ne.s32.totalorder %s62, %s65
      %p71 = scmp.eq.s32.totalorder %s14, 0
      %p72 = por %p70, %p71
      %p73 = scmp.ne.s32.totalorder %s62, %s65
      %p74 = scmp.eq.s32.totalorder %s19, 1
      %p75 = por %p73, %p74
      %p76 = scmp.ne.s32.totalorder %s65, %s66
      %p77 = scmp.eq.s32.totalorder %s19, 0
      %p78 = por %p76, %p77
      %p79 = scmp.ne.s32.totalorder %s65, %s66
      %p80 = scmp.eq.s32.totalorder %s20, 1
      %p81 = por %p79, %p80
      %p83 = scmp.ne.s32.totalorder %s66, %s82
      %p84 = scmp.eq.s32.totalorder %s20, 0
      %p85 = por %p83, %p84
      %s86 = ssub.s32 %s21, %s33
      %p87 = scmp.eq.s32.totalorder %s86, 0
      %s89 = sadd.s32 %s88, 1
      %s90 = scalar_select %p87, %s88, %s89
      %p93 = pneg %p87
      %p94 = scmp.eq.s32.totalorder %s14, 1
      %p95 = por %p93, %p94
      %p96 = scmp.ne.s32.totalorder %s88, %s91
      %p97 = scmp.eq.s32.totalorder %s14, 0
      %p98 = por %p96, %p97
      %p99 = scmp.ne.s32.totalorder %s88, %s91
      %p100 = scmp.eq.s32.totalorder %s19, 1
      %p101 = por %p99, %p100
      %p102 = scmp.ne.s32.totalorder %s91, %s92
      %p103 = scmp.eq.s32.totalorder %s19, 0
      %p104 = por %p102, %p103
      %p105 = scmp.ne.s32.totalorder %s91, %s92
      %p106 = scmp.eq.s32.totalorder %s20, 1
      %p107 = por %p105, %p106
      %p109 = scmp.ne.s32.totalorder %s92, %s108
      %p110 = scmp.eq.s32.totalorder %s20, 0
      %p111 = por %p109, %p110
      %s112 = ssub.s32 %s21, %s33
      %p113 = scmp.eq.s32.totalorder %s112, 0
      %s115 = sadd.s32 %s114, 1
      %s116 = scalar_select %p113, %s114, %s115
      %p119 = pneg %p113
      %p120 = scmp.eq.s32.totalorder %s14, 1
      %p121 = por %p119, %p120
      %p122 = scmp.ne.s32.totalorder %s114, %s117
      %p123 = scmp.eq.s32.totalorder %s14, 0
      %p124 = por %p122, %p123
      %p125 = scmp.ne.s32.totalorder %s114, %s117
      %p126 = scmp.eq.s32.totalorder %s19, 1
      %p127 = por %p125, %p126
      %p128 = scmp.ne.s32.totalorder %s117, %s118
      %p129 = scmp.eq.s32.totalorder %s19, 0
      %p130 = por %p128, %p129
      %p131 = scmp.ne.s32.totalorder %s117, %s118
      %p132 = scmp.eq.s32.totalorder %s20, 1
      %p133 = por %p131, %p132
      %p135 = scmp.ne.s32.totalorder %s118, %s134
      %p136 = scmp.eq.s32.totalorder %s20, 0
      %p137 = por %p135, %p136
      %s139 = sadd.s32 %s138, 1
      %p142 = scmp.eq.s32.totalorder %s14, 1
      %p143 = scmp.ne.s32.totalorder %s138, %s140
      %p144 = scmp.eq.s32.totalorder %s14, 0
      %p145 = por %p143, %p144
      %p146 = scmp.ne.s32.totalorder %s138, %s140
      %p147 = scmp.eq.s32.totalorder %s19, 1
      %p148 = por %p146, %p147
      %p149 = scmp.ne.s32.totalorder %s140, %s141
      %p150 = scmp.eq.s32.totalorder %s19, 0
      %p151 = por %p149, %p150
      %p152 = scmp.ne.s32.totalorder %s140, %s141
      %p153 = scmp.eq.s32.totalorder %s20, 1
      %p154 = por %p152, %p153
      %p156 = scmp.ne.s32.totalorder %s141, %s155
      %p157 = scmp.eq.s32.totalorder %s20, 0
      %p158 = por %p156, %p157
      %s160 = sadd.s32 %s159, 1
      %p163 = scmp.eq.s32.totalorder %s14, 1
      %p164 = scmp.ne.s32.totalorder %s159, %s161
      %p165 = scmp.eq.s32.totalorder %s14, 0
      %p166 = por %p164, %p165
      %p167 = scmp.ne.s32.totalorder %s159, %s161
      %p168 = scmp.eq.s32.totalorder %s19, 1
      %p169 = por %p167, %p168
      %p170 = scmp.ne.s32.totalorder %s161, %s162
      %p171 = scmp.eq.s32.totalorder %s19, 0
      %p172 = por %p170, %p171
      %p173 = scmp.ne.s32.totalorder %s161, %s162
      %p174 = scmp.eq.s32.totalorder %s20, 1
      %p175 = por %p173, %p174
      %p177 = scmp.ne.s32.totalorder %s162, %s176
      %p178 = scmp.eq.s32.totalorder %s20, 0
      %p179 = por %p177, %p178
      %s180 = ssub.s32 %s21, %s33
      %s181 = ssub.s32 %s22, %s29
      %s182 = sor.u32 %s180, %s181
      %p183 = scmp.eq.s32.totalorder %s182, 0
      %s185 = sadd.s32 %s184, 1
      %s186 = scalar_select %p183, %s184, %s185
      %p189 = pneg %p183
      %p190 = scmp.eq.s32.totalorder %s14, 1
      %p191 = por %p189, %p190
      %p192 = scmp.ne.s32.totalorder %s184, %s187
      %p193 = scmp.eq.s32.totalorder %s14, 0
      %p194 = por %p192, %p193
      %p195 = scmp.ne.s32.totalorder %s184, %s187
      %p196 = scmp.eq.s32.totalorder %s19, 1
      %p197 = por %p195, %p196
      %p198 = scmp.ne.s32.totalorder %s187, %s188
      %p199 = scmp.eq.s32.totalorder %s19, 0
      %p200 = por %p198, %p199
      %p201 = scmp.ne.s32.totalorder %s187, %s188
      %p202 = scmp.eq.s32.totalorder %s20, 1
      %p203 = por %p201, %p202
      %p205 = scmp.ne.s32.totalorder %s188, %s204
      %p206 = scmp.eq.s32.totalorder %s20, 0
      %p207 = por %p205, %p206
      %p208 = scmp.le.s32.totalorder 1, %s14
      %p209 = scmp.lt.s32.totalorder %s14, 3
      %p210 = pnand %p208, %p209
      %p211 = pneg %p210
      // Predicated region
      $region9: #{dense_encoder_forward.4} parent=5 // pred_check
        _
      $region10: #{dense_encoder_forward.4} parent=5 // pred_check_branch
        %213 = sbr.rel (%p210) target = $region12
      $region11: #{dense_encoder_forward.4} parent=5 // pred_region
        %s214 = ssub.s32 %s14, 1
        // Predicated region
        $region13: #{dense_encoder_forward.4} parent=11 // pred_check
          %p215 = pneg %p52
        $region14: #{dense_encoder_forward.4} parent=11 // pred_check_branch
          %217 = sbr.rel (%p215) target = $region16
        $region15: #{dense_encoder_forward.4} parent=11 // pred_region
          %p218 = scmp.lt.s32.totalorder %s23, 1
          %s219 = scalar_select %p218, %s23, 1
          %s220 = smul.addr %s219, 5
          %s221 = smul.addr %s220, 4
          %s222 = scalar_lea.vmem %s0, %s221
        $region16: #{dense_encoder_forward.4} parent=11 // pred_fallthru
          _
        // Predicated region
        $region17: #{dense_encoder_forward.4} parent=11 // pred_check
          %p223 = pneg %p78
        $region18: #{dense_encoder_forward.4} parent=11 // pred_check_branch
          %225 = sbr.rel (%p223) target = $region20
        $region19: #{dense_encoder_forward.4} parent=11 // pred_region
          %p226 = scmp.lt.s32.totalorder %s23, 1
          %s227 = scalar_select %p226, %s23, 1
          %s228 = smul.addr %s227, 5
          %s229 = smul.addr %s228, 4
          %s230 = scalar_lea.vmem %s1, %s229
        $region20: #{dense_encoder_forward.4} parent=11 // pred_fallthru
          _
        // Predicated region
        $region21: #{dense_encoder_forward.4} parent=11 // pred_check
          %p231 = pneg %p104
        $region22: #{dense_encoder_forward.4} parent=11 // pred_check_branch
          %233 = sbr.rel (%p231) target = $region24
        $region23: #{dense_encoder_forward.4} parent=11 // pred_region
          %p234 = scmp.lt.s32.totalorder %s23, 1
          %s235 = scalar_select %p234, %s23, 1
          %s236 = smul.addr %s235, 5
          %s237 = smul.addr %s236, 4
          %s238 = scalar_lea.vmem %s2, %s237
        $region24: #{dense_encoder_forward.4} parent=11 // pred_fallthru
          _
        // Predicated region
        $region25: #{dense_encoder_forward.4} parent=11 // pred_check
          %p239 = pneg %p130
        $region26: #{dense_encoder_forward.4} parent=11 // pred_check_branch
          %241 = sbr.rel (%p239) target = $region28
        $region27: #{dense_encoder_forward.4} parent=11 // pred_region
          %p242 = scmp.lt.s32.totalorder %s23, 1
          %s243 = scalar_select %p242, %s23, 1
          %s244 = smul.addr %s243, 5
          %s245 = smul.addr %s244, 4
          %s246 = scalar_lea.vmem %s3, %s245
        $region28: #{dense_encoder_forward.4} parent=11 // pred_fallthru
          _
        // Predicated region
        $region29: #{dense_encoder_forward.4} parent=11 // pred_check
          %p247 = pneg %p151
        $region30: #{dense_encoder_forward.4} parent=11 // pred_check_branch
          %249 = sbr.rel (%p247) target = $region32
        $region31: #{dense_encoder_forward.4} parent=11 // pred_region
          %s251 = ssub.s32 18432, 18432
          %252 = vsyncadd [#allocation3], %s251
          %s253 = sshll.u32 [#allocation2], 4
          %s254 = int_to_ptr.vmem [resolvable:$true] %s253
          %259 = dma.hbm_to_vmem [thread:$0]  %s4, 18432, %s254, [#allocation3], 128, 128, 8
        $region32: #{dense_encoder_forward.4} parent=11 // pred_fallthru
          _
        // Predicated region
        $region33: #{dense_encoder_forward.4} parent=11 // pred_check
          %p260 = pneg %p172
        $region34: #{dense_encoder_forward.4} parent=11 // pred_check_branch
          %262 = sbr.rel (%p260) target = $region36
        $region35: #{dense_encoder_forward.4} parent=11 // pred_region
          %s264 = ssub.s32 32, 32
          %265 = vsyncadd [#allocation5], %s264
          %s267 = sshll.u32 [#allocation4], 4
          %s268 = int_to_ptr.vmem [resolvable:$true] %s267
          %270 = dma.hbm_to_vmem [thread:$0]  %s5, 32, %s268, [#allocation5]
        $region36: #{dense_encoder_forward.4} parent=11 // pred_fallthru
          _
      $region12: #{dense_encoder_forward.4} parent=5 // pred_fallthru
        _
      %p271 = scmp.lt.s32.totalorder %s14, 2
      // Predicated region
      $region37: #{dense_encoder_forward.4} parent=5 // pred_check
        %p272 = pneg %p271
      $region38: #{dense_encoder_forward.4} parent=5 // pred_check_branch
        %274 = sbr.rel (%p272) target = $region40
      $region39: #{dense_encoder_forward.4} parent=5 // pred_region
        _
      $region40: #{dense_encoder_forward.4} parent=5 // pred_fallthru
        _
      %p275 = scmp.le.s32.totalorder 1, %s14
      %p276 = scmp.lt.s32.totalorder %s14, 3
      %p277 = pnand %p275, %p276
      %p278 = pneg %p277
      // Predicated region
      $region41: #{dense_encoder_forward.4} parent=5 // pred_check
        _
      $region42: #{dense_encoder_forward.4} parent=5 // pred_check_branch
        %280 = sbr.rel (%p277) target = $region44
      $region43: #{dense_encoder_forward.4} parent=5 // pred_region
        %s281 = ssub.s32 %s14, 1
        // Predicated region
        $region45: #{dense_encoder_forward.4} parent=43 // pred_check
          %p282 = pneg %p151
        $region46: #{dense_encoder_forward.4} parent=43 // pred_check_branch
          %284 = sbr.rel (%p282) target = $region48
        $region47: #{dense_encoder_forward.4} parent=43 // pred_region
          %285 = dma.done [#allocation3], 18432
        $region48: #{dense_encoder_forward.4} parent=43 // pred_fallthru
          _
        // Predicated region
        $region49: #{dense_encoder_forward.4} parent=43 // pred_check
          %p286 = pneg %p172
        $region50: #{dense_encoder_forward.4} parent=43 // pred_check_branch
          %288 = sbr.rel (%p286) target = $region52
        $region51: #{dense_encoder_forward.4} parent=43 // pred_region
          %289 = dma.done [#allocation5], 32
        $region52: #{dense_encoder_forward.4} parent=43 // pred_fallthru
          _
        %p290 = scmp.lt.s32.totalorder %s23, 1
        %s291 = scalar_select %p290, %s23, 1
        %s292 = smul.addr %s291, 5
        %s293 = smul.addr %s292, 4
        %s294 = scalar_lea.vmem %s0, %s293
        %p295 = pneg %p52
        %p296 = pneg %p49
        %p297 = scmp.lt.s32.totalorder %s23, 1
        %s298 = scalar_select %p297, %s23, 1
        %s299 = smul.addr %s298, 5
        %s300 = smul.addr %s299, 4
        %s301 = scalar_lea.vmem %s1, %s300
        %p302 = pneg %p78
        %p303 = pneg %p75
        %p304 = scmp.lt.s32.totalorder %s23, 1
        %s305 = scalar_select %p304, %s23, 1
        %s306 = smul.addr %s305, 5
        %s307 = smul.addr %s306, 4
        %s308 = scalar_lea.vmem %s2, %s307
        %p309 = pneg %p104
        %p310 = pneg %p101
        %p311 = scmp.lt.s32.totalorder %s23, 1
        %s312 = scalar_select %p311, %s23, 1
        %s313 = smul.addr %s312, 5
        %s314 = smul.addr %s313, 4
        %s315 = scalar_lea.vmem %s3, %s314
        %p316 = pneg %p130
        %p317 = pneg %p127
        %p318 = pneg %p151
        %p319 = pneg %p148
        %p320 = pneg %p172
        %p321 = pneg %p169
        %p322 = pneg %p200
        %p323 = pneg %p197
        %s324 = smul.u32 2, %s24
        %p325 = scmp.lt.s32.totalorder %s23, 1
        %s326 = scalar_select %p325, %s23, 1
        %p327 = scmp.lt.s32.totalorder %s324, 1
        %s328 = scalar_select %p327, %s324, 1
        %s329 = smul.addr %s328, 2
        %s330 = smul.addr %s326, 4
        %s331 = sadd.s32 %s329, %s330
        %s332 = smul.addr %s331, 4
        %s333 = scalar_lea.vmem %s6, %s332
        %p334 = scmp.lt.s32.totalorder %s23, 1
        %s335 = scalar_select %p334, %s23, 1
        %s336 = smul.addr %s335, 5
        %s337 = smul.addr %s336, 4
        %s338 = scalar_lea.vmem %s0, %s337
        %p339 = scmp.lt.s32.totalorder %s23, 1
        %s340 = scalar_select %p339, %s23, 1
        %s341 = smul.addr %s340, 5
        %s342 = smul.addr %s341, 4
        %s343 = scalar_lea.vmem %s1, %s342
        %p344 = scmp.lt.s32.totalorder %s23, 1
        %s345 = scalar_select %p344, %s23, 1
        %s346 = smul.addr %s345, 5
        %s347 = smul.addr %s346, 4
        %s348 = scalar_lea.vmem %s2, %s347
        %p349 = scmp.lt.s32.totalorder %s23, 1
        %s350 = scalar_select %p349, %s23, 1
        %s351 = smul.addr %s350, 5
        %s352 = smul.addr %s351, 4
        %s353 = scalar_lea.vmem %s3, %s352
        %s354 = smul.u32 2, %s24
        %p355 = scmp.lt.s32.totalorder %s23, 1
        %s356 = scalar_select %p355, %s23, 1
        %p357 = scmp.lt.s32.totalorder %s354, 1
        %s358 = scalar_select %p357, %s354, 1
        %s359 = smul.addr %s358, 2
        %s360 = smul.addr %s356, 4
        %s361 = sadd.s32 %s359, %s360
        %s362 = smul.addr %s361, 4
        %s363 = scalar_lea.vmem %s6, %s362
        %s364 = smul.u32 2, %s24
        %s366 = smul.u32 %s24, 4
        %s367 = smul.addr %s366, 4
        %s368 = scalar_lea.vmem %s338, %s367
        %v369 = vld [vmem:[%s368] sm:$0x3]
        %v370 = vld [vmem:[%s368 + $0x4] sm:$0x3]
        %v371 = vld [vmem:[%s368 + $0x8] sm:$0x3]
        %v372 = vld [vmem:[%s368 + $0xc] sm:$0x3]
        %s373 = smul.addr %s366, 4
        %s374 = scalar_lea.vmem %s343, %s373
        %v375 = vld [vmem:[%s374] sm:$0x3]
        %v376 = vld [vmem:[%s374 + $0x4] sm:$0x3]
        %v377 = vld [vmem:[%s374 + $0x8] sm:$0x3]
        %v378 = vld [vmem:[%s374 + $0xc] sm:$0x3]
        %v379 = vld [vmem:[%s368] sm:$0x7]
        %v380 = vld [vmem:[%s368 + $0x4] sm:$0x7]
        %v381 = vld [vmem:[%s368 + $0x8] sm:$0x7]
        %v382 = vld [vmem:[%s368 + $0xc] sm:$0x7]
        %s383 = smul.addr %s366, 4
        %s384 = scalar_lea.vmem %s348, %s383
        %v385 = vld [vmem:[%s384] sm:$0x3]
        %v386 = vld [vmem:[%s384 + $0x4] sm:$0x3]
        %v387 = vld [vmem:[%s384 + $0x8] sm:$0x3]
        %v388 = vld [vmem:[%s384 + $0xc] sm:$0x3]
        %s389 = smul.addr %s366, 4
        %s390 = scalar_lea.vmem %s353, %s389
        %v391 = vld [vmem:[%s390] sm:$0x3]
        %v392 = vld [vmem:[%s390 + $0x4] sm:$0x3]
        %v393 = vld [vmem:[%s390 + $0x8] sm:$0x3]
        %v394 = vld [vmem:[%s390 + $0xc] sm:$0x3]
        %v395 = vld [vmem:[%s384] sm:$0x7]
        %v396 = vld [vmem:[%s384 + $0x4] sm:$0x7]
        %v397 = vld [vmem:[%s384 + $0x8] sm:$0x7]
        %v398 = vld [vmem:[%s384 + $0xc] sm:$0x7]
        %s399 = sadd.s32 %s366, 1
        %s400 = smul.addr %s399, 4
        %s401 = scalar_lea.vmem %s338, %s400
        %v402 = vld [vmem:[%s401] sm:$0x3]
        %v403 = vld [vmem:[%s401 + $0x4] sm:$0x3]
        %v404 = vld [vmem:[%s401 + $0x8] sm:$0x3]
        %v405 = vld [vmem:[%s401 + $0xc] sm:$0x3]
        %s406 = smul.addr %s399, 4
        %s407 = scalar_lea.vmem %s343, %s406
        %v408 = vld [vmem:[%s407] sm:$0x3]
        %v409 = vld [vmem:[%s407 + $0x4] sm:$0x3]
        %v410 = vld [vmem:[%s407 + $0x8] sm:$0x3]
        %v411 = vld [vmem:[%s407 + $0xc] sm:$0x3]
        %v412 = vld [vmem:[%s401] sm:$0x7]
        %v413 = vld [vmem:[%s401 + $0x4] sm:$0x7]
        %v414 = vld [vmem:[%s401 + $0x8] sm:$0x7]
        %v415 = vld [vmem:[%s401 + $0xc] sm:$0x7]
        %v420 = vunpack.c.l.b16 %v379
        %v421 = vunpack.c.l.b16 %v380
        %v422 = vunpack.c.l.b16 %v381
        %v423 = vunpack.c.l.b16 %v382
        %v424 = vpack.c.b16 %v420, %v420
        %v425 = vpack.c.b16 %v421, %v421
        %v426 = vpack.c.b16 %v422, %v422
        %v427 = vpack.c.b16 %v423, %v423
        %v429 = vshrl.u32 %v424, 16
        %v431 = vshll.u32 %v424, 16
        %v433 = vrot.slane %v431, 1
        %v434 = vor.u32 %v429, %v433
        %v436 = vshrl.u32 %v425, 16
        %v438 = vshll.u32 %v425, 16
        %v440 = vrot.slane %v438, 1
        %v441 = vor.u32 %v436, %v440
        %v443 = vshrl.u32 %v426, 16
        %v445 = vshll.u32 %v426, 16
        %v447 = vrot.slane %v445, 1
        %v448 = vor.u32 %v443, %v447
        %v450 = vshrl.u32 %v427, 16
        %v452 = vshll.u32 %v427, 16
        %v454 = vrot.slane %v452, 1
        %v455 = vor.u32 %v450, %v454
        %v460 = vunpack.c.l.b16 %v395
        %v461 = vunpack.c.l.b16 %v396
        %v462 = vunpack.c.l.b16 %v397
        %v463 = vunpack.c.l.b16 %v398
        %v464 = vpack.c.b16 %v460, %v460
        %v465 = vpack.c.b16 %v461, %v461
        %v466 = vpack.c.b16 %v462, %v462
        %v467 = vpack.c.b16 %v463, %v463
        %v469 = vshrl.u32 %v464, 16
        %v471 = vshll.u32 %v464, 16
        %v473 = vrot.slane %v471, 1
        %v474 = vor.u32 %v469, %v473
        %v476 = vshrl.u32 %v465, 16
        %v478 = vshll.u32 %v465, 16
        %v480 = vrot.slane %v478, 1
        %v481 = vor.u32 %v476, %v480
        %v483 = vshrl.u32 %v466, 16
        %v485 = vshll.u32 %v466, 16
        %v487 = vrot.slane %v485, 1
        %v488 = vor.u32 %v483, %v487
        %v490 = vshrl.u32 %v467, 16
        %v492 = vshll.u32 %v467, 16
        %v494 = vrot.slane %v492, 1
        %v495 = vor.u32 %v490, %v494
        %v500 = vunpack.c.l.b16 %v412
        %v501 = vunpack.c.l.b16 %v413
        %v502 = vunpack.c.l.b16 %v414
        %v503 = vunpack.c.l.b16 %v415
        %v504 = vpack.c.b16 %v500, %v500
        %v505 = vpack.c.b16 %v501, %v501
        %v506 = vpack.c.b16 %v502, %v502
        %v507 = vpack.c.b16 %v503, %v503
        %v509 = vshrl.u32 %v504, 16
        %v511 = vshll.u32 %v504, 16
        %v513 = vrot.slane %v511, 1
        %v514 = vor.u32 %v509, %v513
        %v516 = vshrl.u32 %v505, 16
        %v518 = vshll.u32 %v505, 16
        %v520 = vrot.slane %v518, 1
        %v521 = vor.u32 %v516, %v520
        %v523 = vshrl.u32 %v506, 16
        %v525 = vshll.u32 %v506, 16
        %v527 = vrot.slane %v525, 1
        %v528 = vor.u32 %v523, %v527
        %v530 = vshrl.u32 %v507, 16
        %v532 = vshll.u32 %v507, 16
        %v534 = vrot.slane %v532, 1
        %v535 = vor.u32 %v530, %v534
        %v560 = vcombine.low %v369, %v375
        %v561 = vcombine.low %v434, %v385
        %v563 = vunpack.c.l.s4 1983009808
        %v564 = vunpack.c.0.s8 %v563
        %v565 = vlaneseq
        %v566 = vshrl.u32 %v565, 7
        %v567 = vsub.s32 %v564, %v566
        %v568 = vrot.slane %v560, %v567
        %v570 = vunpack.c.l.s4 1983009808
        %v571 = vunpack.c.0.s8 %v570
        %v572 = vlaneseq
        %v573 = vshrl.u32 %v572, 7
        %v574 = vsub.s32 %v571, %v573
        %v575 = vrot.slane %v561, %v574
        %v576 = vcombine.low %v568, %v575
        %v577 = vcombine.low %v391, %v474
        %v578 = vcombine.low %v402, %v408
        %v580 = vunpack.c.l.s4 1983009808
        %v581 = vunpack.c.0.s8 %v580
        %v582 = vlaneseq
        %v583 = vshrl.u32 %v582, 7
        %v584 = vsub.s32 %v581, %v583
        %v585 = vrot.slane %v577, %v584
        %v587 = vunpack.c.l.s4 1983009808
        %v588 = vunpack.c.0.s8 %v587
        %v589 = vlaneseq
        %v590 = vshrl.u32 %v589, 7
        %v591 = vsub.s32 %v588, %v590
        %v592 = vrot.slane %v578, %v591
        %v593 = vcombine.low %v585, %v592
        %v595 = vunpack.c.l.s4 1983009808
        %v596 = vunpack.c.0.s8 %v595
        %v597 = vlaneseq
        %v598 = vshrl.u32 %v597, 7
        %v599 = vsub.s32 %v596, %v598
        %v600 = vrot.slane %v514, %v599
        %v601 = vcombine.low %v370, %v376
        %v602 = vcombine.low %v441, %v386
        %v604 = vunpack.c.l.s4 1983009808
        %v605 = vunpack.c.0.s8 %v604
        %v606 = vlaneseq
        %v607 = vshrl.u32 %v606, 7
        %v608 = vsub.s32 %v605, %v607
        %v609 = vrot.slane %v601, %v608
        %v611 = vunpack.c.l.s4 1983009808
        %v612 = vunpack.c.0.s8 %v611
        %v613 = vlaneseq
        %v614 = vshrl.u32 %v613, 7
        %v615 = vsub.s32 %v612, %v614
        %v616 = vrot.slane %v602, %v615
        %v617 = vcombine.low %v609, %v616
        %v618 = vcombine.low %v392, %v481
        %v619 = vcombine.low %v403, %v409
        %v621 = vunpack.c.l.s4 1983009808
        %v622 = vunpack.c.0.s8 %v621
        %v623 = vlaneseq
        %v624 = vshrl.u32 %v623, 7
        %v625 = vsub.s32 %v622, %v624
        %v626 = vrot.slane %v618, %v625
        %v628 = vunpack.c.l.s4 1983009808
        %v629 = vunpack.c.0.s8 %v628
        %v630 = vlaneseq
        %v631 = vshrl.u32 %v630, 7
        %v632 = vsub.s32 %v629, %v631
        %v633 = vrot.slane %v619, %v632
        %v634 = vcombine.low %v626, %v633
        %v636 = vunpack.c.l.s4 1983009808
        %v637 = vunpack.c.0.s8 %v636
        %v638 = vlaneseq
        %v639 = vshrl.u32 %v638, 7
        %v640 = vsub.s32 %v637, %v639
        %v641 = vrot.slane %v521, %v640
        %v642 = vcombine.low %v371, %v377
        %v643 = vcombine.low %v448, %v387
        %v645 = vunpack.c.l.s4 1983009808
        %v646 = vunpack.c.0.s8 %v645
        %v647 = vlaneseq
        %v648 = vshrl.u32 %v647, 7
        %v649 = vsub.s32 %v646, %v648
        %v650 = vrot.slane %v642, %v649
        %v652 = vunpack.c.l.s4 1983009808
        %v653 = vunpack.c.0.s8 %v652
        %v654 = vlaneseq
        %v655 = vshrl.u32 %v654, 7
        %v656 = vsub.s32 %v653, %v655
        %v657 = vrot.slane %v643, %v656
        %v658 = vcombine.low %v650, %v657
        %v659 = vcombine.low %v393, %v488
        %v660 = vcombine.low %v404, %v410
        %v662 = vunpack.c.l.s4 1983009808
        %v663 = vunpack.c.0.s8 %v662
        %v664 = vlaneseq
        %v665 = vshrl.u32 %v664, 7
        %v666 = vsub.s32 %v663, %v665
        %v667 = vrot.slane %v659, %v666
        %v669 = vunpack.c.l.s4 1983009808
        %v670 = vunpack.c.0.s8 %v669
        %v671 = vlaneseq
        %v672 = vshrl.u32 %v671, 7
        %v673 = vsub.s32 %v670, %v672
        %v674 = vrot.slane %v660, %v673
        %v675 = vcombine.low %v667, %v674
        %v677 = vunpack.c.l.s4 1983009808
        %v678 = vunpack.c.0.s8 %v677
        %v679 = vlaneseq
        %v680 = vshrl.u32 %v679, 7
        %v681 = vsub.s32 %v678, %v680
        %v682 = vrot.slane %v528, %v681
        %v683 = vcombine.low %v372, %v378
        %v684 = vcombine.low %v455, %v388
        %v686 = vunpack.c.l.s4 1983009808
        %v687 = vunpack.c.0.s8 %v686
        %v688 = vlaneseq
        %v689 = vshrl.u32 %v688, 7
        %v690 = vsub.s32 %v687, %v689
        %v691 = vrot.slane %v683, %v690
        %v693 = vunpack.c.l.s4 1983009808
        %v694 = vunpack.c.0.s8 %v693
        %v695 = vlaneseq
        %v696 = vshrl.u32 %v695, 7
        %v697 = vsub.s32 %v694, %v696
        %v698 = vrot.slane %v684, %v697
        %v699 = vcombine.low %v691, %v698
        %v700 = vcombine.low %v394, %v495
        %v701 = vcombine.low %v405, %v411
        %v703 = vunpack.c.l.s4 1983009808
        %v704 = vunpack.c.0.s8 %v703
        %v705 = vlaneseq
        %v706 = vshrl.u32 %v705, 7
        %v707 = vsub.s32 %v704, %v706
        %v708 = vrot.slane %v700, %v707
        %v710 = vunpack.c.l.s4 1983009808
        %v711 = vunpack.c.0.s8 %v710
        %v712 = vlaneseq
        %v713 = vshrl.u32 %v712, 7
        %v714 = vsub.s32 %v711, %v713
        %v715 = vrot.slane %v701, %v714
        %v716 = vcombine.low %v708, %v715
        %v718 = vunpack.c.l.s4 1983009808
        %v719 = vunpack.c.0.s8 %v718
        %v720 = vlaneseq
        %v721 = vshrl.u32 %v720, 7
        %v722 = vsub.s32 %v719, %v721
        %v723 = vrot.slane %v535, %v722
        %v724 = vld [vmem:[#allocation2] sm:$0xff]
        %v725 = vld [vmem:[#allocation2 + $0x8] sm:$0xff]
        %v726 = vld [vmem:[#allocation2 + $0x10] sm:$0xff]
        %v727 = vld [vmem:[#allocation2 + $0x18] sm:$0xff]
        %v728 = vld [vmem:[#allocation2 + $0x20] sm:$0xff]
        %v729 = vld [vmem:[#allocation2 + $0x28] sm:$0xff]
        %v730 = vld [vmem:[#allocation2 + $0x30] sm:$0xff]
        %v731 = vld [vmem:[#allocation2 + $0x38] sm:$0xff]
        %v732 = vld [vmem:[#allocation2 + $0x40] sm:$0xff]
        %v733 = vld [vmem:[#allocation2 + $0x48] sm:$0xff]
        %v734 = vld [vmem:[#allocation2 + $0x50] sm:$0xff]
        %v735 = vld [vmem:[#allocation2 + $0x58] sm:$0xff]
        %v736 = vld [vmem:[#allocation2 + $0x60] sm:$0xff]
        %v737 = vld [vmem:[#allocation2 + $0x68] sm:$0xff]
        %v738 = vld [vmem:[#allocation2 + $0x70] sm:$0xff]
        %v739 = vld [vmem:[#allocation2 + $0x78] sm:$0xff]
        %v740 = vld [vmem:[#allocation2 + $0x80] sm:$0xff]
        %v741 = vld [vmem:[#allocation2 + $0x88] sm:$0xff]
        %v742 = vld [vmem:[#allocation2 + $0x90] sm:$0xff]
        %v743 = vld [vmem:[#allocation2 + $0x98] sm:$0xff]
        %v744 = vld [vmem:[#allocation2 + $0xa0] sm:$0xff]
        %v745 = vld [vmem:[#allocation2 + $0xa8] sm:$0xff]
        %v746 = vld [vmem:[#allocation2 + $0xb0] sm:$0xff]
        %v747 = vld [vmem:[#allocation2 + $0xb8] sm:$0xff]
        %v748 = vld [vmem:[#allocation2 + $0xc0] sm:$0xff]
        %v749 = vld [vmem:[#allocation2 + $0xc8] sm:$0xff]
        %v750 = vld [vmem:[#allocation2 + $0xd0] sm:$0xff]
        %v751 = vld [vmem:[#allocation2 + $0xd8] sm:$0xff]
        %v752 = vld [vmem:[#allocation2 + $0xe0] sm:$0xff]
        %v753 = vld [vmem:[#allocation2 + $0xe8] sm:$0xff]
        %v754 = vld [vmem:[#allocation2 + $0xf0] sm:$0xff]
        %v755 = vld [vmem:[#allocation2 + $0xf8] sm:$0xff]
        %v756 = vld [vmem:[#allocation2 + $0x100] sm:$0xff]
        %v757 = vld [vmem:[#allocation2 + $0x108] sm:$0xff]
        %v758 = vld [vmem:[#allocation2 + $0x110] sm:$0xff]
        %v759 = vld [vmem:[#allocation2 + $0x118] sm:$0xff]
        %v760 = vld [vmem:[#allocation2 + $0x120] sm:$0xff]
        %v761 = vld [vmem:[#allocation2 + $0x128] sm:$0xff]
        %v762 = vld [vmem:[#allocation2 + $0x130] sm:$0xff]
        %v763 = vld [vmem:[#allocation2 + $0x138] sm:$0xff]
        %v764 = vld [vmem:[#allocation2 + $0x140] sm:$0xff]
        %v765 = vld [vmem:[#allocation2 + $0x148] sm:$0xff]
        %v766 = vld [vmem:[#allocation2 + $0x150] sm:$0xff]
        %v767 = vld [vmem:[#allocation2 + $0x158] sm:$0xff]
        %v768 = vld [vmem:[#allocation2 + $0x160] sm:$0xff]
        %v769 = vld [vmem:[#allocation2 + $0x168] sm:$0xff]
        %v770 = vld [vmem:[#allocation2 + $0x170] sm:$0xff]
        %v771 = vld [vmem:[#allocation2 + $0x178] sm:$0xff]
        %v772 = vld [vmem:[#allocation2 + $0x180] sm:$0xff]
        %v773 = vld [vmem:[#allocation2 + $0x188] sm:$0xff]
        %v774 = vld [vmem:[#allocation2 + $0x190] sm:$0xff]
        %v775 = vld [vmem:[#allocation2 + $0x198] sm:$0xff]
        %v776 = vld [vmem:[#allocation2 + $0x1a0] sm:$0xff]
        %v777 = vld [vmem:[#allocation2 + $0x1a8] sm:$0xff]
        %v778 = vld [vmem:[#allocation2 + $0x1b0] sm:$0xff]
        %v779 = vld [vmem:[#allocation2 + $0x1b8] sm:$0xff]
        %v780 = vld [vmem:[#allocation2 + $0x1c0] sm:$0xff]
        %v781 = vld [vmem:[#allocation2 + $0x1c8] sm:$0xff]
        %v782 = vld [vmem:[#allocation2 + $0x1d0] sm:$0xff]
        %v783 = vld [vmem:[#allocation2 + $0x1d8] sm:$0xff]
        %v784 = vld [vmem:[#allocation2 + $0x1e0] sm:$0xff]
        %v785 = vld [vmem:[#allocation2 + $0x1e8] sm:$0xff]
        %v786 = vld [vmem:[#allocation2 + $0x1f0] sm:$0xff]
        %v787 = vld [vmem:[#allocation2 + $0x1f8] sm:$0xff]
        %v788 = vld [vmem:[#allocation2 + $0x200] sm:$0xff]
        %v789 = vld [vmem:[#allocation2 + $0x208] sm:$0xff]
        %v790 = vld [vmem:[#allocation2 + $0x210] sm:$0xff]
        %v791 = vld [vmem:[#allocation2 + $0x218] sm:$0xff]
        %v792 = vld [vmem:[#allocation2 + $0x220] sm:$0xff]
        %v793 = vld [vmem:[#allocation2 + $0x228] sm:$0xff]
        %v794 = vld [vmem:[#allocation2 + $0x230] sm:$0xff]
        %v795 = vld [vmem:[#allocation2 + $0x238] sm:$0xff]
        %v796 = vld [vmem:[#allocation2 + $0x240] sm:$0xff]
        %v797 = vld [vmem:[#allocation2 + $0x248] sm:$0xff]
        %v798 = vld [vmem:[#allocation2 + $0x250] sm:$0xff]
        %v799 = vld [vmem:[#allocation2 + $0x258] sm:$0xff]
        %v800 = vld [vmem:[#allocation2 + $0x260] sm:$0xff]
        %v801 = vld [vmem:[#allocation2 + $0x268] sm:$0xff]
        %v802 = vld [vmem:[#allocation2 + $0x270] sm:$0xff]
        %v803 = vld [vmem:[#allocation2 + $0x278] sm:$0xff]
        %v804 = vld [vmem:[#allocation2 + $0x280] sm:$0xff]
        %v805 = vld [vmem:[#allocation2 + $0x288] sm:$0xff]
        %v806 = vld [vmem:[#allocation2 + $0x290] sm:$0xff]
        %v807 = vld [vmem:[#allocation2 + $0x298] sm:$0xff]
        %v808 = vld [vmem:[#allocation2 + $0x2a0] sm:$0xff]
        %v809 = vld [vmem:[#allocation2 + $0x2a8] sm:$0xff]
        %v810 = vld [vmem:[#allocation2 + $0x2b0] sm:$0xff]
        %v811 = vld [vmem:[#allocation2 + $0x2b8] sm:$0xff]
        %v812 = vld [vmem:[#allocation2 + $0x2c0] sm:$0xff]
        %v813 = vld [vmem:[#allocation2 + $0x2c8] sm:$0xff]
        %v814 = vld [vmem:[#allocation2 + $0x2d0] sm:$0xff]
        %v815 = vld [vmem:[#allocation2 + $0x2d8] sm:$0xff]
        %v816 = vld [vmem:[#allocation2 + $0x2e0] sm:$0xff]
        %v817 = vld [vmem:[#allocation2 + $0x2e8] sm:$0xff]
        %v818 = vld [vmem:[#allocation2 + $0x2f0] sm:$0xff]
        %v819 = vld [vmem:[#allocation2 + $0x2f8] sm:$0xff]
        %v820 = vld [vmem:[#allocation2 + $0x300] sm:$0xff]
        %v821 = vld [vmem:[#allocation2 + $0x308] sm:$0xff]
        %v822 = vld [vmem:[#allocation2 + $0x310] sm:$0xff]
        %v823 = vld [vmem:[#allocation2 + $0x318] sm:$0xff]
        %v824 = vld [vmem:[#allocation2 + $0x320] sm:$0xff]
        %v825 = vld [vmem:[#allocation2 + $0x328] sm:$0xff]
        %v826 = vld [vmem:[#allocation2 + $0x330] sm:$0xff]
        %v827 = vld [vmem:[#allocation2 + $0x338] sm:$0xff]
        %v828 = vld [vmem:[#allocation2 + $0x340] sm:$0xff]
        %v829 = vld [vmem:[#allocation2 + $0x348] sm:$0xff]
        %v830 = vld [vmem:[#allocation2 + $0x350] sm:$0xff]
        %v831 = vld [vmem:[#allocation2 + $0x358] sm:$0xff]
        %v832 = vld [vmem:[#allocation2 + $0x360] sm:$0xff]
        %v833 = vld [vmem:[#allocation2 + $0x368] sm:$0xff]
        %v834 = vld [vmem:[#allocation2 + $0x370] sm:$0xff]
        %v835 = vld [vmem:[#allocation2 + $0x378] sm:$0xff]
        %v836 = vld [vmem:[#allocation2 + $0x380] sm:$0xff]
        %v837 = vld [vmem:[#allocation2 + $0x388] sm:$0xff]
        %v838 = vld [vmem:[#allocation2 + $0x390] sm:$0xff]
        %v839 = vld [vmem:[#allocation2 + $0x398] sm:$0xff]
        %v840 = vld [vmem:[#allocation2 + $0x3a0] sm:$0xff]
        %v841 = vld [vmem:[#allocation2 + $0x3a8] sm:$0xff]
        %v842 = vld [vmem:[#allocation2 + $0x3b0] sm:$0xff]
        %v843 = vld [vmem:[#allocation2 + $0x3b8] sm:$0xff]
        %v844 = vld [vmem:[#allocation2 + $0x3c0] sm:$0xff]
        %v845 = vld [vmem:[#allocation2 + $0x3c8] sm:$0xff]
        %v846 = vld [vmem:[#allocation2 + $0x3d0] sm:$0xff]
        %v847 = vld [vmem:[#allocation2 + $0x3d8] sm:$0xff]
        %v848 = vld [vmem:[#allocation2 + $0x3e0] sm:$0xff]
        %v849 = vld [vmem:[#allocation2 + $0x3e8] sm:$0xff]
        %v850 = vld [vmem:[#allocation2 + $0x3f0] sm:$0xff]
        %v851 = vld [vmem:[#allocation2 + $0x3f8] sm:$0xff]
        %v852 = vld [vmem:[#allocation2 + $0x400] sm:$0xff]
        %v853 = vld [vmem:[#allocation2 + $0x408] sm:$0xff]
        %v854 = vld [vmem:[#allocation2 + $0x410] sm:$0xff]
        %v855 = vld [vmem:[#allocation2 + $0x418] sm:$0xff]
        %v856 = vld [vmem:[#allocation2 + $0x420] sm:$0xff]
        %v857 = vld [vmem:[#allocation2 + $0x428] sm:$0xff]
        %v858 = vld [vmem:[#allocation2 + $0x430] sm:$0xff]
        %v859 = vld [vmem:[#allocation2 + $0x438] sm:$0xff]
        %v860 = vld [vmem:[#allocation2 + $0x440] sm:$0xff]
        %v861 = vld [vmem:[#allocation2 + $0x448] sm:$0xff]
        %v862 = vld [vmem:[#allocation2 + $0x450] sm:$0xff]
        %v863 = vld [vmem:[#allocation2 + $0x458] sm:$0xff]
        %v864 = vld [vmem:[#allocation2 + $0x460] sm:$0xff]
        %v865 = vld [vmem:[#allocation2 + $0x468] sm:$0xff]
        %v866 = vld [vmem:[#allocation2 + $0x470] sm:$0xff]
        %v867 = vld [vmem:[#allocation2 + $0x478] sm:$0xff]
        %v868 = vld [vmem:[#allocation4] sm:$0x3]
        %v870 = vlaneseq
        %v871 = vshrl.u32 %v870, 7
        %v872 = vsub.s32 0, %v871
        %v873 = vrot.slane %v868, %v872
        %v874 = vlaneseq
        %v875 = vshrl.u32 %v874, 7
        %v876 = vsub.s32 1, %v875
        %v877 = vrot.slane %v868, %v876
        %v880 = vcombine.low %v576, %v617
        %v881 = vcombine.high %v576, %v617
        %v882 = vcombine.low %v658, %v699
        %v883 = vcombine.high %v658, %v699
        %v885 = vunpack.c.l.s4 1983009808
        %v886 = vunpack.c.0.s8 %v885
        %v887 = vlaneseq
        %v888 = vshrl.u32 %v887, 7
        %v889 = vsub.s32 %v886, %v888
        %v890 = vrot.slane %v880, %v889
        %v892 = vunpack.c.l.s4 1983009808
        %v893 = vunpack.c.0.s8 %v892
        %v894 = vlaneseq
        %v895 = vshrl.u32 %v894, 7
        %v896 = vsub.s32 %v893, %v895
        %v897 = vrot.slane %v881, %v896
        %v899 = vunpack.c.l.s4 1983009808
        %v900 = vunpack.c.0.s8 %v899
        %v901 = vlaneseq
        %v902 = vshrl.u32 %v901, 7
        %v903 = vsub.s32 %v900, %v902
        %v904 = vrot.slane %v882, %v903
        %v906 = vunpack.c.l.s4 1983009808
        %v907 = vunpack.c.0.s8 %v906
        %v908 = vlaneseq
        %v909 = vshrl.u32 %v908, 7
        %v910 = vsub.s32 %v907, %v909
        %v911 = vrot.slane %v883, %v910
        %v912 = vcombine.low %v890, %v904
        %v913 = vcombine.high %v890, %v904
        %v914 = vcombine.low %v897, %v911
        %v915 = vcombine.high %v897, %v911
        %v916 = vcombine.low %v593, %v634
        %v917 = vcombine.high %v593, %v634
        %v918 = vcombine.low %v675, %v716
        %v919 = vcombine.high %v675, %v716
        %v921 = vunpack.c.l.s4 1983009808
        %v922 = vunpack.c.0.s8 %v921
        %v923 = vlaneseq
        %v924 = vshrl.u32 %v923, 7
        %v925 = vsub.s32 %v922, %v924
        %v926 = vrot.slane %v916, %v925
        %v928 = vunpack.c.l.s4 1983009808
        %v929 = vunpack.c.0.s8 %v928
        %v930 = vlaneseq
        %v931 = vshrl.u32 %v930, 7
        %v932 = vsub.s32 %v929, %v931
        %v933 = vrot.slane %v917, %v932
        %v935 = vunpack.c.l.s4 1983009808
        %v936 = vunpack.c.0.s8 %v935
        %v937 = vlaneseq
        %v938 = vshrl.u32 %v937, 7
        %v939 = vsub.s32 %v936, %v938
        %v940 = vrot.slane %v918, %v939
        %v942 = vunpack.c.l.s4 1983009808
        %v943 = vunpack.c.0.s8 %v942
        %v944 = vlaneseq
        %v945 = vshrl.u32 %v944, 7
        %v946 = vsub.s32 %v943, %v945
        %v947 = vrot.slane %v919, %v946
        %v948 = vcombine.low %v926, %v940
        %v949 = vcombine.high %v926, %v940
        %v950 = vcombine.low %v933, %v947
        %v951 = vcombine.high %v933, %v947
        %v952 = vcombine.low %v600, %v641
        %v953 = vcombine.low %v682, %v723
        %v955 = vunpack.c.l.s4 1983009808
        %v956 = vunpack.c.0.s8 %v955
        %v957 = vlaneseq
        %v958 = vshrl.u32 %v957, 7
        %v959 = vsub.s32 %v956, %v958
        %v960 = vrot.slane %v952, %v959
        %v962 = vunpack.c.l.s4 1983009808
        %v963 = vunpack.c.0.s8 %v962
        %v964 = vlaneseq
        %v965 = vshrl.u32 %v964, 7
        %v966 = vsub.s32 %v963, %v965
        %v967 = vrot.slane %v953, %v966
        %v968 = vcombine.low %v960, %v967
        %v1122 = vunpack.c.l.b16 %v724
        %v1123 = vunpack.c.h.b16 %v724
        %v1124 = vunpack.c.l.b16 %v725
        %v1125 = vunpack.c.h.b16 %v725
        %v1126 = vunpack.c.l.b16 %v726
        %v1127 = vunpack.c.h.b16 %v726
        %v1128 = vunpack.c.l.b16 %v727
        %v1129 = vunpack.c.h.b16 %v727
        %v1130 = vunpack.c.l.b16 %v728
        %v1131 = vunpack.c.h.b16 %v728
        %v1132 = vunpack.c.l.b16 %v729
        %v1133 = vunpack.c.h.b16 %v729
        %v1134 = vunpack.c.l.b16 %v730
        %v1135 = vunpack.c.h.b16 %v730
        %v1136 = vunpack.c.l.b16 %v731
        %v1137 = vunpack.c.h.b16 %v731
        %v1138 = vunpack.c.l.b16 %v732
        %v1139 = vunpack.c.h.b16 %v732
        %v1140 = vunpack.c.l.b16 %v733
        %v1141 = vunpack.c.h.b16 %v733
        %v1142 = vunpack.c.l.b16 %v734
        %v1143 = vunpack.c.h.b16 %v734
        %v1144 = vunpack.c.l.b16 %v735
        %v1145 = vunpack.c.h.b16 %v735
        %v1146 = vunpack.c.l.b16 %v736
        %v1147 = vunpack.c.h.b16 %v736
        %v1148 = vunpack.c.l.b16 %v737
        %v1149 = vunpack.c.h.b16 %v737
        %v1150 = vunpack.c.l.b16 %v738
        %v1151 = vunpack.c.h.b16 %v738
        %v1152 = vunpack.c.l.b16 %v739
        %v1153 = vunpack.c.h.b16 %v739
        %v1154 = vunpack.c.l.b16 %v740
        %v1155 = vunpack.c.h.b16 %v740
        %v1156 = vunpack.c.l.b16 %v741
        %v1157 = vunpack.c.h.b16 %v741
        %v1158 = vunpack.c.l.b16 %v742
        %v1159 = vunpack.c.h.b16 %v742
        %v1160 = vunpack.c.l.b16 %v743
        %v1161 = vunpack.c.h.b16 %v743
        %v1162 = vunpack.c.l.b16 %v744
        %v1163 = vunpack.c.h.b16 %v744
        %v1164 = vunpack.c.l.b16 %v745
        %v1165 = vunpack.c.h.b16 %v745
        %v1166 = vunpack.c.l.b16 %v746
        %v1167 = vunpack.c.h.b16 %v746
        %v1168 = vunpack.c.l.b16 %v747
        %v1169 = vunpack.c.h.b16 %v747
        %v1170 = vunpack.c.l.b16 %v748
        %v1171 = vunpack.c.h.b16 %v748
        %v1172 = vunpack.c.l.b16 %v749
        %v1173 = vunpack.c.h.b16 %v749
        %v1174 = vunpack.c.l.b16 %v750
        %v1175 = vunpack.c.h.b16 %v750
        %v1176 = vunpack.c.l.b16 %v751
        %v1177 = vunpack.c.h.b16 %v751
        %v1178 = vunpack.c.l.b16 %v752
        %v1179 = vunpack.c.h.b16 %v752
        %v1180 = vunpack.c.l.b16 %v753
        %v1181 = vunpack.c.h.b16 %v753
        %v1182 = vunpack.c.l.b16 %v754
        %v1183 = vunpack.c.h.b16 %v754
        %v1184 = vunpack.c.l.b16 %v755
        %v1185 = vunpack.c.h.b16 %v755
        %v1186 = vunpack.c.l.b16 %v756
        %v1187 = vunpack.c.h.b16 %v756
        %v1188 = vunpack.c.l.b16 %v757
        %v1189 = vunpack.c.h.b16 %v757
        %v1190 = vunpack.c.l.b16 %v758
        %v1191 = vunpack.c.h.b16 %v758
        %v1192 = vunpack.c.l.b16 %v759
        %v1193 = vunpack.c.h.b16 %v759
        %v1194 = vunpack.c.l.b16 %v760
        %v1195 = vunpack.c.h.b16 %v760
        %v1196 = vunpack.c.l.b16 %v761
        %v1197 = vunpack.c.h.b16 %v761
        %v1198 = vunpack.c.l.b16 %v762
        %v1199 = vunpack.c.h.b16 %v762
        %v1200 = vunpack.c.l.b16 %v763
        %v1201 = vunpack.c.h.b16 %v763
        %v1202 = vunpack.c.l.b16 %v764
        %v1203 = vunpack.c.h.b16 %v764
        %v1204 = vunpack.c.l.b16 %v765
        %v1205 = vunpack.c.h.b16 %v765
        %v1206 = vunpack.c.l.b16 %v766
        %v1207 = vunpack.c.h.b16 %v766
        %v1208 = vunpack.c.l.b16 %v767
        %v1209 = vunpack.c.h.b16 %v767
        %v1210 = vunpack.c.l.b16 %v768
        %v1211 = vunpack.c.h.b16 %v768
        %v1212 = vunpack.c.l.b16 %v769
        %v1213 = vunpack.c.h.b16 %v769
        %v1214 = vunpack.c.l.b16 %v770
        %v1215 = vunpack.c.h.b16 %v770
        %v1216 = vunpack.c.l.b16 %v771
        %v1217 = vunpack.c.h.b16 %v771
        %v1218 = vunpack.c.l.b16 %v772
        %v1219 = vunpack.c.h.b16 %v772
        %v1220 = vunpack.c.l.b16 %v773
        %v1221 = vunpack.c.h.b16 %v773
        %v1222 = vunpack.c.l.b16 %v774
        %v1223 = vunpack.c.h.b16 %v774
        %v1224 = vunpack.c.l.b16 %v775
        %v1225 = vunpack.c.h.b16 %v775
        %v1226 = vunpack.c.l.b16 %v776
        %v1227 = vunpack.c.h.b16 %v776
        %v1228 = vunpack.c.l.b16 %v777
        %v1229 = vunpack.c.h.b16 %v777
        %v1230 = vunpack.c.l.b16 %v778
        %v1231 = vunpack.c.h.b16 %v778
        %v1232 = vunpack.c.l.b16 %v779
        %v1233 = vunpack.c.h.b16 %v779
        %v1234 = vunpack.c.l.b16 %v780
        %v1235 = vunpack.c.h.b16 %v780
        %v1236 = vunpack.c.l.b16 %v781
        %v1237 = vunpack.c.h.b16 %v781
        %v1238 = vunpack.c.l.b16 %v782
        %v1239 = vunpack.c.h.b16 %v782
        %v1240 = vunpack.c.l.b16 %v783
        %v1241 = vunpack.c.h.b16 %v783
        %v1242 = vunpack.c.l.b16 %v784
        %v1243 = vunpack.c.h.b16 %v784
        %v1244 = vunpack.c.l.b16 %v785
        %v1245 = vunpack.c.h.b16 %v785
        %v1246 = vunpack.c.l.b16 %v786
        %v1247 = vunpack.c.h.b16 %v786
        %v1248 = vunpack.c.l.b16 %v787
        %v1249 = vunpack.c.h.b16 %v787
        %v1250 = vunpack.c.l.b16 %v788
        %v1251 = vunpack.c.h.b16 %v788
        %v1252 = vunpack.c.l.b16 %v789
        %v1253 = vunpack.c.h.b16 %v789
        %v1254 = vunpack.c.l.b16 %v790
        %v1255 = vunpack.c.h.b16 %v790
        %v1256 = vunpack.c.l.b16 %v791
        %v1257 = vunpack.c.h.b16 %v791
        %v1258 = vunpack.c.l.b16 %v792
        %v1259 = vunpack.c.h.b16 %v792
        %v1260 = vunpack.c.l.b16 %v793
        %v1261 = vunpack.c.h.b16 %v793
        %v1262 = vunpack.c.l.b16 %v794
        %v1263 = vunpack.c.h.b16 %v794
        %v1264 = vunpack.c.l.b16 %v795
        %v1265 = vunpack.c.h.b16 %v795
        %v1266 = vunpack.c.l.b16 %v796
        %v1267 = vunpack.c.h.b16 %v796
        %v1268 = vunpack.c.l.b16 %v797
        %v1269 = vunpack.c.h.b16 %v797
        %v1270 = vunpack.c.l.b16 %v798
        %v1271 = vunpack.c.h.b16 %v798
        %v1272 = vunpack.c.l.b16 %v799
        %v1273 = vunpack.c.h.b16 %v799
        %v1274 = vunpack.c.l.b16 %v800
        %v1275 = vunpack.c.h.b16 %v800
        %v1276 = vunpack.c.l.b16 %v801
        %v1277 = vunpack.c.h.b16 %v801
        %v1278 = vunpack.c.l.b16 %v802
        %v1279 = vunpack.c.h.b16 %v802
        %v1280 = vunpack.c.l.b16 %v803
        %v1281 = vunpack.c.h.b16 %v803
        %v1282 = vunpack.c.l.b16 %v804
        %v1283 = vunpack.c.h.b16 %v804
        %v1284 = vunpack.c.l.b16 %v805
        %v1285 = vunpack.c.h.b16 %v805
        %v1286 = vunpack.c.l.b16 %v806
        %v1287 = vunpack.c.h.b16 %v806
        %v1288 = vunpack.c.l.b16 %v807
        %v1289 = vunpack.c.h.b16 %v807
        %v1290 = vunpack.c.l.b16 %v808
        %v1291 = vunpack.c.h.b16 %v808
        %v1292 = vunpack.c.l.b16 %v809
        %v1293 = vunpack.c.h.b16 %v809
        %v1294 = vunpack.c.l.b16 %v810
        %v1295 = vunpack.c.h.b16 %v810
        %v1296 = vunpack.c.l.b16 %v811
        %v1297 = vunpack.c.h.b16 %v811
        %v1298 = vunpack.c.l.b16 %v812
        %v1299 = vunpack.c.h.b16 %v812
        %v1300 = vunpack.c.l.b16 %v813
        %v1301 = vunpack.c.h.b16 %v813
        %v1302 = vunpack.c.l.b16 %v814
        %v1303 = vunpack.c.h.b16 %v814
        %v1304 = vunpack.c.l.b16 %v815
        %v1305 = vunpack.c.h.b16 %v815
        %v1306 = vunpack.c.l.b16 %v816
        %v1307 = vunpack.c.h.b16 %v816
        %v1308 = vunpack.c.l.b16 %v817
        %v1309 = vunpack.c.h.b16 %v817
        %v1310 = vunpack.c.l.b16 %v818
        %v1311 = vunpack.c.h.b16 %v818
        %v1312 = vunpack.c.l.b16 %v819
        %v1313 = vunpack.c.h.b16 %v819
        %v1314 = vunpack.c.l.b16 %v820
        %v1315 = vunpack.c.h.b16 %v820
        %v1316 = vunpack.c.l.b16 %v821
        %v1317 = vunpack.c.h.b16 %v821
        %v1318 = vunpack.c.l.b16 %v822
        %v1319 = vunpack.c.h.b16 %v822
        %v1320 = vunpack.c.l.b16 %v823
        %v1321 = vunpack.c.h.b16 %v823
        %v1322 = vunpack.c.l.b16 %v824
        %v1323 = vunpack.c.h.b16 %v824
        %v1324 = vunpack.c.l.b16 %v825
        %v1325 = vunpack.c.h.b16 %v825
        %v1326 = vunpack.c.l.b16 %v826
        %v1327 = vunpack.c.h.b16 %v826
        %v1328 = vunpack.c.l.b16 %v827
        %v1329 = vunpack.c.h.b16 %v827
        %v1330 = vunpack.c.l.b16 %v828
        %v1331 = vunpack.c.h.b16 %v828
        %v1332 = vunpack.c.l.b16 %v829
        %v1333 = vunpack.c.h.b16 %v829
        %v1334 = vunpack.c.l.b16 %v830
        %v1335 = vunpack.c.h.b16 %v830
        %v1336 = vunpack.c.l.b16 %v831
        %v1337 = vunpack.c.h.b16 %v831
        %v1338 = vunpack.c.l.b16 %v832
        %v1339 = vunpack.c.h.b16 %v832
        %v1340 = vunpack.c.l.b16 %v833
        %v1341 = vunpack.c.h.b16 %v833
        %v1342 = vunpack.c.l.b16 %v834
        %v1343 = vunpack.c.h.b16 %v834
        %v1344 = vunpack.c.l.b16 %v835
        %v1345 = vunpack.c.h.b16 %v835
        %v1346 = vunpack.c.l.b16 %v836
        %v1347 = vunpack.c.h.b16 %v836
        %v1348 = vunpack.c.l.b16 %v837
        %v1349 = vunpack.c.h.b16 %v837
        %v1350 = vunpack.c.l.b16 %v838
        %v1351 = vunpack.c.h.b16 %v838
        %v1352 = vunpack.c.l.b16 %v839
        %v1353 = vunpack.c.h.b16 %v839
        %v1354 = vunpack.c.l.b16 %v840
        %v1355 = vunpack.c.h.b16 %v840
        %v1356 = vunpack.c.l.b16 %v841
        %v1357 = vunpack.c.h.b16 %v841
        %v1358 = vunpack.c.l.b16 %v842
        %v1359 = vunpack.c.h.b16 %v842
        %v1360 = vunpack.c.l.b16 %v843
        %v1361 = vunpack.c.h.b16 %v843
        %v1362 = vunpack.c.l.b16 %v844
        %v1363 = vunpack.c.h.b16 %v844
        %v1364 = vunpack.c.l.b16 %v845
        %v1365 = vunpack.c.h.b16 %v845
        %v1366 = vunpack.c.l.b16 %v846
        %v1367 = vunpack.c.h.b16 %v846
        %v1368 = vunpack.c.l.b16 %v847
        %v1369 = vunpack.c.h.b16 %v847
        %v1370 = vunpack.c.l.b16 %v848
        %v1371 = vunpack.c.h.b16 %v848
        %v1372 = vunpack.c.l.b16 %v849
        %v1373 = vunpack.c.h.b16 %v849
        %v1374 = vunpack.c.l.b16 %v850
        %v1375 = vunpack.c.h.b16 %v850
        %v1376 = vunpack.c.l.b16 %v851
        %v1377 = vunpack.c.h.b16 %v851
        %v1378 = vunpack.c.l.b16 %v852
        %v1379 = vunpack.c.h.b16 %v852
        %v1380 = vunpack.c.l.b16 %v853
        %v1381 = vunpack.c.h.b16 %v853
        %v1382 = vunpack.c.l.b16 %v854
        %v1383 = vunpack.c.h.b16 %v854
        %v1384 = vunpack.c.l.b16 %v855
        %v1385 = vunpack.c.h.b16 %v855
        %v1386 = vunpack.c.l.b16 %v856
        %v1387 = vunpack.c.h.b16 %v856
        %v1388 = vunpack.c.l.b16 %v857
        %v1389 = vunpack.c.h.b16 %v857
        %v1390 = vunpack.c.l.b16 %v858
        %v1391 = vunpack.c.h.b16 %v858
        %v1392 = vunpack.c.l.b16 %v859
        %v1393 = vunpack.c.h.b16 %v859
        %v1394 = vunpack.c.l.b16 %v860
        %v1395 = vunpack.c.h.b16 %v860
        %v1396 = vunpack.c.l.b16 %v861
        %v1397 = vunpack.c.h.b16 %v861
        %v1398 = vunpack.c.l.b16 %v862
        %v1399 = vunpack.c.h.b16 %v862
        %v1400 = vunpack.c.l.b16 %v863
        %v1401 = vunpack.c.h.b16 %v863
        %v1402 = vunpack.c.l.b16 %v864
        %v1403 = vunpack.c.h.b16 %v864
        %v1404 = vunpack.c.l.b16 %v865
        %v1405 = vunpack.c.h.b16 %v865
        %v1406 = vunpack.c.l.b16 %v866
        %v1407 = vunpack.c.h.b16 %v866
        %v1408 = vunpack.c.l.b16 %v867
        %v1409 = vunpack.c.h.b16 %v867
        %v1410 = vpack.c.b16 %v1124, %v1122
        %v1411 = vpack.c.b16 %v1125, %v1123
        %v1412 = vpack.c.b16 %v1128, %v1126
        %v1413 = vpack.c.b16 %v1129, %v1127
        %v1414 = vpack.c.b16 %v1132, %v1130
        %v1415 = vpack.c.b16 %v1133, %v1131
        %v1416 = vpack.c.b16 %v1136, %v1134
        %v1417 = vpack.c.b16 %v1137, %v1135
        %v1418 = vpack.c.b16 %v1140, %v1138
        %v1419 = vpack.c.b16 %v1141, %v1139
        %v1420 = vpack.c.b16 %v1144, %v1142
        %v1421 = vpack.c.b16 %v1145, %v1143
        %v1422 = vpack.c.b16 %v1148, %v1146
        %v1423 = vpack.c.b16 %v1149, %v1147
        %v1424 = vpack.c.b16 %v1152, %v1150
        %v1425 = vpack.c.b16 %v1153, %v1151
        %v1426 = vpack.c.b16 %v1156, %v1154
        %v1427 = vpack.c.b16 %v1157, %v1155
        %v1428 = vpack.c.b16 %v1160, %v1158
        %v1429 = vpack.c.b16 %v1161, %v1159
        %v1430 = vpack.c.b16 %v1164, %v1162
        %v1431 = vpack.c.b16 %v1165, %v1163
        %v1432 = vpack.c.b16 %v1168, %v1166
        %v1433 = vpack.c.b16 %v1169, %v1167
        %v1434 = vpack.c.b16 %v1172, %v1170
        %v1435 = vpack.c.b16 %v1173, %v1171
        %v1436 = vpack.c.b16 %v1176, %v1174
        %v1437 = vpack.c.b16 %v1177, %v1175
        %v1438 = vpack.c.b16 %v1180, %v1178
        %v1439 = vpack.c.b16 %v1181, %v1179
        %v1440 = vpack.c.b16 %v1184, %v1182
        %v1441 = vpack.c.b16 %v1185, %v1183
        %v1442 = vpack.c.b16 %v1188, %v1186
        %v1443 = vpack.c.b16 %v1189, %v1187
        %v1444 = vpack.c.b16 %v1192, %v1190
        %v1445 = vpack.c.b16 %v1193, %v1191
        %v1446 = vpack.c.b16 %v1196, %v1194
        %v1447 = vpack.c.b16 %v1197, %v1195
        %v1448 = vpack.c.b16 %v1200, %v1198
        %v1449 = vpack.c.b16 %v1201, %v1199
        %v1450 = vpack.c.b16 %v1204, %v1202
        %v1451 = vpack.c.b16 %v1205, %v1203
        %v1452 = vpack.c.b16 %v1208, %v1206
        %v1453 = vpack.c.b16 %v1209, %v1207
        %v1454 = vpack.c.b16 %v1212, %v1210
        %v1455 = vpack.c.b16 %v1213, %v1211
        %v1456 = vpack.c.b16 %v1216, %v1214
        %v1457 = vpack.c.b16 %v1217, %v1215
        %v1458 = vpack.c.b16 %v1220, %v1218
        %v1459 = vpack.c.b16 %v1221, %v1219
        %v1460 = vpack.c.b16 %v1224, %v1222
        %v1461 = vpack.c.b16 %v1225, %v1223
        %v1462 = vpack.c.b16 %v1228, %v1226
        %v1463 = vpack.c.b16 %v1229, %v1227
        %v1464 = vpack.c.b16 %v1232, %v1230
        %v1465 = vpack.c.b16 %v1233, %v1231
        %v1466 = vpack.c.b16 %v1236, %v1234
        %v1467 = vpack.c.b16 %v1237, %v1235
        %v1468 = vpack.c.b16 %v1240, %v1238
        %v1469 = vpack.c.b16 %v1241, %v1239
        %v1470 = vpack.c.b16 %v1244, %v1242
        %v1471 = vpack.c.b16 %v1245, %v1243
        %v1472 = vpack.c.b16 %v1248, %v1246
        %v1473 = vpack.c.b16 %v1249, %v1247
        %v1474 = vpack.c.b16 %v1252, %v1250
        %v1475 = vpack.c.b16 %v1253, %v1251
        %v1476 = vpack.c.b16 %v1256, %v1254
        %v1477 = vpack.c.b16 %v1257, %v1255
        %v1478 = vpack.c.b16 %v1260, %v1258
        %v1479 = vpack.c.b16 %v1261, %v1259
        %v1480 = vpack.c.b16 %v1264, %v1262
        %v1481 = vpack.c.b16 %v1265, %v1263
        %v1482 = vpack.c.b16 %v1268, %v1266
        %v1483 = vpack.c.b16 %v1269, %v1267
        %v1484 = vpack.c.b16 %v1272, %v1270
        %v1485 = vpack.c.b16 %v1273, %v1271
        %v1486 = vpack.c.b16 %v1276, %v1274
        %v1487 = vpack.c.b16 %v1277, %v1275
        %v1488 = vpack.c.b16 %v1280, %v1278
        %v1489 = vpack.c.b16 %v1281, %v1279
        %v1490 = vpack.c.b16 %v1284, %v1282
        %v1491 = vpack.c.b16 %v1285, %v1283
        %v1492 = vpack.c.b16 %v1288, %v1286
        %v1493 = vpack.c.b16 %v1289, %v1287
        %v1494 = vpack.c.b16 %v1292, %v1290
        %v1495 = vpack.c.b16 %v1293, %v1291
        %v1496 = vpack.c.b16 %v1296, %v1294
        %v1497 = vpack.c.b16 %v1297, %v1295
        %v1498 = vpack.c.b16 %v1300, %v1298
        %v1499 = vpack.c.b16 %v1301, %v1299
        %v1500 = vpack.c.b16 %v1304, %v1302
        %v1501 = vpack.c.b16 %v1305, %v1303
        %v1502 = vpack.c.b16 %v1308, %v1306
        %v1503 = vpack.c.b16 %v1309, %v1307
        %v1504 = vpack.c.b16 %v1312, %v1310
        %v1505 = vpack.c.b16 %v1313, %v1311
        %v1506 = vpack.c.b16 %v1316, %v1314
        %v1507 = vpack.c.b16 %v1317, %v1315
        %v1508 = vpack.c.b16 %v1320, %v1318
        %v1509 = vpack.c.b16 %v1321, %v1319
        %v1510 = vpack.c.b16 %v1324, %v1322
        %v1511 = vpack.c.b16 %v1325, %v1323
        %v1512 = vpack.c.b16 %v1328, %v1326
        %v1513 = vpack.c.b16 %v1329, %v1327
        %v1514 = vpack.c.b16 %v1332, %v1330
        %v1515 = vpack.c.b16 %v1333, %v1331
        %v1516 = vpack.c.b16 %v1336, %v1334
        %v1517 = vpack.c.b16 %v1337, %v1335
        %v1518 = vpack.c.b16 %v1340, %v1338
        %v1519 = vpack.c.b16 %v1341, %v1339
        %v1520 = vpack.c.b16 %v1344, %v1342
        %v1521 = vpack.c.b16 %v1345, %v1343
        %v1522 = vpack.c.b16 %v1348, %v1346
        %v1523 = vpack.c.b16 %v1349, %v1347
        %v1524 = vpack.c.b16 %v1352, %v1350
        %v1525 = vpack.c.b16 %v1353, %v1351
        %v1526 = vpack.c.b16 %v1356, %v1354
        %v1527 = vpack.c.b16 %v1357, %v1355
        %v1528 = vpack.c.b16 %v1360, %v1358
        %v1529 = vpack.c.b16 %v1361, %v1359
        %v1530 = vpack.c.b16 %v1364, %v1362
        %v1531 = vpack.c.b16 %v1365, %v1363
        %v1532 = vpack.c.b16 %v1368, %v1366
        %v1533 = vpack.c.b16 %v1369, %v1367
        %v1534 = vpack.c.b16 %v1372, %v1370
        %v1535 = vpack.c.b16 %v1373, %v1371
        %v1536 = vpack.c.b16 %v1376, %v1374
        %v1537 = vpack.c.b16 %v1377, %v1375
        %v1538 = vpack.c.b16 %v1380, %v1378
        %v1539 = vpack.c.b16 %v1381, %v1379
        %v1540 = vpack.c.b16 %v1384, %v1382
        %v1541 = vpack.c.b16 %v1385, %v1383
        %v1542 = vpack.c.b16 %v1388, %v1386
        %v1543 = vpack.c.b16 %v1389, %v1387
        %v1544 = vpack.c.b16 %v1392, %v1390
        %v1545 = vpack.c.b16 %v1393, %v1391
        %v1546 = vpack.c.b16 %v1396, %v1394
        %v1547 = vpack.c.b16 %v1397, %v1395
        %v1548 = vpack.c.b16 %v1400, %v1398
        %v1549 = vpack.c.b16 %v1401, %v1399
        %v1550 = vpack.c.b16 %v1404, %v1402
        %v1551 = vpack.c.b16 %v1405, %v1403
        %v1552 = vpack.c.b16 %v1408, %v1406
        %v1553 = vpack.c.b16 %v1409, %v1407
        %1698 = vmatprep.subr.bf16.mxu0 %v1411
        %1699 = vmatpush1.bf16.msra.mxu0 %v1410
        %1700 = vmatprep.subr.bf16.mxu0 %v1413
        %1701 = vmatpush1.bf16.msra.mxu0 %v1412
        %1702 = vmatprep.subr.bf16.mxu0 %v1415
        %1703 = vmatpush1.bf16.msra.mxu0 %v1414
        %1704 = vmatprep.subr.bf16.mxu0 %v1417
        %1705 = vmatpush1.bf16.msra.mxu0 %v1416
        %1706 = vmatprep.subr.bf16.mxu0 %v1419
        %1707 = vmatpush1.bf16.msra.mxu0 %v1418
        %1708 = vmatprep.subr.bf16.mxu0 %v1421
        %1709 = vmatpush1.bf16.msra.mxu0 %v1420
        %1710 = vmatprep.subr.bf16.mxu0 %v1423
        %1711 = vmatpush1.bf16.msra.mxu0 %v1422
        %1712 = vmatprep.subr.bf16.mxu0 %v1425
        %1713 = vmatpush1.bf16.msra.mxu0 %v1424
        %1714 = vmatprep.subr.bf16.mxu0 %v1427
        %1715 = vmatpush1.bf16.msra.mxu0 %v1426
        %1716 = vmatprep.subr.bf16.mxu0 %v1429
        %1717 = vmatpush1.bf16.msra.mxu0 %v1428
        %1718 = vmatprep.subr.bf16.mxu0 %v1431
        %1719 = vmatpush1.bf16.msra.mxu0 %v1430
        %1720 = vmatprep.subr.bf16.mxu0 %v1433
        %1721 = vmatpush1.bf16.msra.mxu0 %v1432
        %1722 = vmatprep.subr.bf16.mxu0 %v1435
        %1723 = vmatpush1.bf16.msra.mxu0 %v1434
        %1724 = vmatprep.subr.bf16.mxu0 %v1437
        %1725 = vmatpush1.bf16.msra.mxu0 %v1436
        %1726 = vmatprep.subr.bf16.mxu0 %v1439
        %1727 = vmatpush1.bf16.msra.mxu0 %v1438
        %1728 = vmatprep.subr.bf16.mxu0 %v1441
        %1729 = vmatpush1.bf16.msra.mxu0 %v1440
        %1730 = vmatprep.mubr.bf16.mxu0 %v913
        %1731 = vmatmul.mubr.bf16.gmra.mrb[0].mxu0 %v912
        %v1732 = vpop.f32.mrb[0].mxu0
        %v1733 = vadd.f32 %v873, %v1732
        %v1734 = vpop.f32.mrb[0].mxu0
        %v1735 = vadd.f32 %v877, %v1734
        %v1736 = vpop.f32.mrb[0].mxu0
        %v1737 = vadd.f32 %v873, %v1736
        %v1738 = vpop.f32.mrb[0].mxu0
        %v1739 = vadd.f32 %v877, %v1738
        %1740 = vdwg.mxu0
        %1741 = vmatprep.subr.bf16.mxu0 %v1443
        %1742 = vmatpush1.bf16.msra.mxu0 %v1442
        %1743 = vmatprep.subr.bf16.mxu0 %v1445
        %1744 = vmatpush1.bf16.msra.mxu0 %v1444
        %1745 = vmatprep.subr.bf16.mxu0 %v1447
        %1746 = vmatpush1.bf16.msra.mxu0 %v1446
        %1747 = vmatprep.subr.bf16.mxu0 %v1449
        %1748 = vmatpush1.bf16.msra.mxu0 %v1448
        %1749 = vmatprep.subr.bf16.mxu0 %v1451
        %1750 = vmatpush1.bf16.msra.mxu0 %v1450
        %1751 = vmatprep.subr.bf16.mxu0 %v1453
        %1752 = vmatpush1.bf16.msra.mxu0 %v1452
        %1753 = vmatprep.subr.bf16.mxu0 %v1455
        %1754 = vmatpush1.bf16.msra.mxu0 %v1454
        %1755 = vmatprep.subr.bf16.mxu0 %v1457
        %1756 = vmatpush1.bf16.msra.mxu0 %v1456
        %1757 = vmatprep.subr.bf16.mxu0 %v1459
        %1758 = vmatpush1.bf16.msra.mxu0 %v1458
        %1759 = vmatprep.subr.bf16.mxu0 %v1461
        %1760 = vmatpush1.bf16.msra.mxu0 %v1460
        %1761 = vmatprep.subr.bf16.mxu0 %v1463
        %1762 = vmatpush1.bf16.msra.mxu0 %v1462
        %1763 = vmatprep.subr.bf16.mxu0 %v1465
        %1764 = vmatpush1.bf16.msra.mxu0 %v1464
        %1765 = vmatprep.subr.bf16.mxu0 %v1467
        %1766 = vmatpush1.bf16.msra.mxu0 %v1466
        %1767 = vmatprep.subr.bf16.mxu0 %v1469
        %1768 = vmatpush1.bf16.msra.mxu0 %v1468
        %1769 = vmatprep.subr.bf16.mxu0 %v1471
        %1770 = vmatpush1.bf16.msra.mxu0 %v1470
        %1771 = vmatprep.subr.bf16.mxu0 %v1473
        %1772 = vmatpush1.bf16.msra.mxu0 %v1472
        %1773 = vmatprep.mubr.bf16.mxu0 %v915
        %1774 = vmatmul.mubr.bf16.gmra.mrb[0].mxu0 %v914
        %v1775 = vpop.f32.mrb[0].mxu0
        %v1776 = vadd.f32 %v1733, %v1775
        %v1777 = vpop.f32.mrb[0].mxu0
        %v1778 = vadd.f32 %v1735, %v1777
        %v1779 = vpop.f32.mrb[0].mxu0
        %v1780 = vadd.f32 %v1737, %v1779
        %v1781 = vpop.f32.mrb[0].mxu0
        %v1782 = vadd.f32 %v1739, %v1781
        %1783 = vdwg.mxu0
        %1784 = vmatprep.subr.bf16.mxu0 %v1475
        %1785 = vmatpush1.bf16.msra.mxu0 %v1474
        %1786 = vmatprep.subr.bf16.mxu0 %v1477
        %1787 = vmatpush1.bf16.msra.mxu0 %v1476
        %1788 = vmatprep.subr.bf16.mxu0 %v1479
        %1789 = vmatpush1.bf16.msra.mxu0 %v1478
        %1790 = vmatprep.subr.bf16.mxu0 %v1481
        %1791 = vmatpush1.bf16.msra.mxu0 %v1480
        %1792 = vmatprep.subr.bf16.mxu0 %v1483
        %1793 = vmatpush1.bf16.msra.mxu0 %v1482
        %1794 = vmatprep.subr.bf16.mxu0 %v1485
        %1795 = vmatpush1.bf16.msra.mxu0 %v1484
        %1796 = vmatprep.subr.bf16.mxu0 %v1487
        %1797 = vmatpush1.bf16.msra.mxu0 %v1486
        %1798 = vmatprep.subr.bf16.mxu0 %v1489
        %1799 = vmatpush1.bf16.msra.mxu0 %v1488
        %1800 = vmatprep.subr.bf16.mxu0 %v1491
        %1801 = vmatpush1.bf16.msra.mxu0 %v1490
        %1802 = vmatprep.subr.bf16.mxu0 %v1493
        %1803 = vmatpush1.bf16.msra.mxu0 %v1492
        %1804 = vmatprep.subr.bf16.mxu0 %v1495
        %1805 = vmatpush1.bf16.msra.mxu0 %v1494
        %1806 = vmatprep.subr.bf16.mxu0 %v1497
        %1807 = vmatpush1.bf16.msra.mxu0 %v1496
        %1808 = vmatprep.subr.bf16.mxu0 %v1499
        %1809 = vmatpush1.bf16.msra.mxu0 %v1498
        %1810 = vmatprep.subr.bf16.mxu0 %v1501
        %1811 = vmatpush1.bf16.msra.mxu0 %v1500
        %1812 = vmatprep.subr.bf16.mxu0 %v1503
        %1813 = vmatpush1.bf16.msra.mxu0 %v1502
        %1814 = vmatprep.subr.bf16.mxu0 %v1505
        %1815 = vmatpush1.bf16.msra.mxu0 %v1504
        %1816 = vmatprep.mubr.bf16.mxu0 %v949
        %1817 = vmatmul.mubr.bf16.gmra.mrb[0].mxu0 %v948
        %v1818 = vpop.f32.mrb[0].mxu0
        %v1819 = vadd.f32 %v1776, %v1818
        %v1820 = vpop.f32.mrb[0].mxu0
        %v1821 = vadd.f32 %v1778, %v1820
        %v1822 = vpop.f32.mrb[0].mxu0
        %v1823 = vadd.f32 %v1780, %v1822
        %v1824 = vpop.f32.mrb[0].mxu0
        %v1825 = vadd.f32 %v1782, %v1824
        %1826 = vdwg.mxu0
        %1827 = vmatprep.subr.bf16.mxu0 %v1507
        %1828 = vmatpush1.bf16.msra.mxu0 %v1506
        %1829 = vmatprep.subr.bf16.mxu0 %v1509
        %1830 = vmatpush1.bf16.msra.mxu0 %v1508
        %1831 = vmatprep.subr.bf16.mxu0 %v1511
        %1832 = vmatpush1.bf16.msra.mxu0 %v1510
        %1833 = vmatprep.subr.bf16.mxu0 %v1513
        %1834 = vmatpush1.bf16.msra.mxu0 %v1512
        %1835 = vmatprep.subr.bf16.mxu0 %v1515
        %1836 = vmatpush1.bf16.msra.mxu0 %v1514
        %1837 = vmatprep.subr.bf16.mxu0 %v1517
        %1838 = vmatpush1.bf16.msra.mxu0 %v1516
        %1839 = vmatprep.subr.bf16.mxu0 %v1519
        %1840 = vmatpush1.bf16.msra.mxu0 %v1518
        %1841 = vmatprep.subr.bf16.mxu0 %v1521
        %1842 = vmatpush1.bf16.msra.mxu0 %v1520
        %1843 = vmatprep.subr.bf16.mxu0 %v1523
        %1844 = vmatpush1.bf16.msra.mxu0 %v1522
        %1845 = vmatprep.subr.bf16.mxu0 %v1525
        %1846 = vmatpush1.bf16.msra.mxu0 %v1524
        %1847 = vmatprep.subr.bf16.mxu0 %v1527
        %1848 = vmatpush1.bf16.msra.mxu0 %v1526
        %1849 = vmatprep.subr.bf16.mxu0 %v1529
        %1850 = vmatpush1.bf16.msra.mxu0 %v1528
        %1851 = vmatprep.subr.bf16.mxu0 %v1531
        %1852 = vmatpush1.bf16.msra.mxu0 %v1530
        %1853 = vmatprep.subr.bf16.mxu0 %v1533
        %1854 = vmatpush1.bf16.msra.mxu0 %v1532
        %1855 = vmatprep.subr.bf16.mxu0 %v1535
        %1856 = vmatpush1.bf16.msra.mxu0 %v1534
        %1857 = vmatprep.subr.bf16.mxu0 %v1537
        %1858 = vmatpush1.bf16.msra.mxu0 %v1536
        %1859 = vmatprep.mubr.bf16.mxu0 %v951
        %1860 = vmatmul.mubr.bf16.gmra.mrb[0].mxu0 %v950
        %v1861 = vpop.f32.mrb[0].mxu0
        %v1862 = vadd.f32 %v1819, %v1861
        %v1863 = vpop.f32.mrb[0].mxu0
        %v1864 = vadd.f32 %v1821, %v1863
        %v1865 = vpop.f32.mrb[0].mxu0
        %v1866 = vadd.f32 %v1823, %v1865
        %v1867 = vpop.f32.mrb[0].mxu0
        %v1868 = vadd.f32 %v1825, %v1867
        %1869 = vdwg.mxu0
        %1870 = vmatprep.subr.bf16.mxu0 %v1539
        %1871 = vmatpush1.bf16.msra.mxu0 %v1538
        %1872 = vmatprep.subr.bf16.mxu0 %v1541
        %1873 = vmatpush1.bf16.msra.mxu0 %v1540
        %1874 = vmatprep.subr.bf16.mxu0 %v1543
        %1875 = vmatpush1.bf16.msra.mxu0 %v1542
        %1876 = vmatprep.subr.bf16.mxu0 %v1545
        %1877 = vmatpush1.bf16.msra.mxu0 %v1544
        %1878 = vmatprep.subr.bf16.mxu0 %v1547
        %1879 = vmatpush1.bf16.msra.mxu0 %v1546
        %1880 = vmatprep.subr.bf16.mxu0 %v1549
        %1881 = vmatpush1.bf16.msra.mxu0 %v1548
        %1882 = vmatprep.subr.bf16.mxu0 %v1551
        %1883 = vmatpush1.bf16.msra.mxu0 %v1550
        %1884 = vmatprep.subr.bf16.mxu0 %v1553
        %1885 = vmatpush1.bf16.msra.mxu0 %v1552
        %1886 = vmatprep.subr.bf16.mxu0 0
        %1887 = vmatpush1.bf16.msra.mxu0 0
        %1888 = vmatprep.subr.bf16.mxu0 0
        %1889 = vmatpush1.bf16.msra.mxu0 0
        %1890 = vmatprep.subr.bf16.mxu0 0
        %1891 = vmatpush1.bf16.msra.mxu0 0
        %1892 = vmatprep.subr.bf16.mxu0 0
        %1893 = vmatpush1.bf16.msra.mxu0 0
        %1894 = vmatprep.subr.bf16.mxu0 0
        %1895 = vmatpush1.bf16.msra.mxu0 0
        %1896 = vmatprep.subr.bf16.mxu0 0
        %1897 = vmatpush1.bf16.msra.mxu0 0
        %1898 = vmatprep.subr.bf16.mxu0 0
        %1899 = vmatpush1.bf16.msra.mxu0 0
        %1900 = vmatprep.subr.bf16.mxu0 0
        %1901 = vmatpush1.bf16.msra.mxu0 0
        %1902 = vmatprep.mubr.bf16.mxu0 0
        %1903 = vmatmul.mubr.bf16.gmra.mrb[0].mxu0 %v968
        %v1904 = vpop.f32.mrb[0].mxu0
        %v1905 = vadd.f32 %v1862, %v1904
        %v1906 = vpop.f32.mrb[0].mxu0
        %v1907 = vadd.f32 %v1864, %v1906
        %v1908 = vpop.f32.mrb[0].mxu0
        %v1909 = vadd.f32 %v1866, %v1908
        %v1910 = vpop.f32.mrb[0].mxu0
        %v1911 = vadd.f32 %v1868, %v1910
        %1912 = vdwg.mxu0
        %v1913 = vmax.f32 %v1905, 0.0
        %v1914 = vmax.f32 %v1907, 0.0
        %v1915 = vmax.f32 %v1909, 0.0
        %v1916 = vmax.f32 %v1911, 0.0
        %v1917 = vpack.c.bf16 %v1915, %v1913
        %v1918 = vpack.c.bf16 %v1916, %v1914
        %v1921 = vunpack.c.l.b16 %v1917
        %v1922 = vunpack.c.l.b16 %v1918
        %v1923 = vunpack.c.h.b16 %v1917
        %v1924 = vunpack.c.h.b16 %v1918
        %v1925 = vpack.c.b16 %v1922, %v1921
        %v1926 = vpack.c.b16 %v1924, %v1923
        %1929 = vst [vmem:[%s363] sm:$0xff] %v1925
        %1930 = vst [vmem:[%s363 + $0x8] sm:$0xff] %v1926
        %s1931 = smul.u32 2, %s24
        %p1932 = scmp.lt.s32.totalorder %s23, 1
        %s1933 = scalar_select %p1932, %s23, 1
        %p1934 = scmp.lt.s32.totalorder %s1931, 1
        %s1935 = scalar_select %p1934, %s1931, 1
        %s1936 = smul.addr %s1935, 2
        %s1937 = smul.addr %s1933, 4
        %s1938 = sadd.s32 %s1936, %s1937
        %s1939 = smul.addr %s1938, 4
        %s1940 = scalar_lea.vmem %s6, %s1939
        // Predicated region
        $region53: #{dense_encoder_forward.4} parent=43 // pred_check
          %p1941 = pneg %p197
        $region54: #{dense_encoder_forward.4} parent=43 // pred_check_branch
          %1943 = sbr.rel (%p1941) target = $region56
        $region55: #{dense_encoder_forward.4} parent=43 // pred_region
          %s1944 = smul.u32 2, %s24
        $region56: #{dense_encoder_forward.4} parent=43 // pred_fallthru
          _
      $region44: #{dense_encoder_forward.4} parent=5 // pred_fallthru
        _
      %p1945 = scmp.le.s32.totalorder 2, %s14
      // Predicated region
      $region57: #{dense_encoder_forward.4} parent=5 // pred_check
        %p1946 = pneg %p1945
      $region58: #{dense_encoder_forward.4} parent=5 // pred_check_branch
        %1948 = sbr.rel (%p1946) target = $region60
      $region59: #{dense_encoder_forward.4} parent=5 // pred_region
        %s1949 = ssub.s32 %s14, 2
        // Predicated region
        $region61: #{dense_encoder_forward.4} parent=59 // pred_check
          %p1950 = pneg %p203
        $region62: #{dense_encoder_forward.4} parent=59 // pred_check_branch
          %1952 = sbr.rel (%p1950) target = $region64
        $region63: #{dense_encoder_forward.4} parent=59 // pred_region
          %s1953 = smul.u32 2, %s26
          %p1954 = scmp.lt.s32.totalorder %s25, 1
          %s1955 = scalar_select %p1954, %s25, 1
          %p1956 = scmp.lt.s32.totalorder %s1953, 1
          %s1957 = scalar_select %p1956, %s1953, 1
          %s1958 = smul.addr %s1957, 2
          %s1959 = smul.addr %s1955, 4
          %s1960 = sadd.s32 %s1958, %s1959
          %s1961 = smul.addr %s1960, 4
          %s1962 = scalar_lea.vmem %s6, %s1961
        $region64: #{dense_encoder_forward.4} parent=59 // pred_fallthru
          _
      $region60: #{dense_encoder_forward.4} parent=5 // pred_fallthru
        _
    $region6: #{dense_encoder_forward.4} parent=1 // loop_footer
      %s18 = sadd.s32 1, %s14
    $region7: #{dense_encoder_forward.4} parent=1 // loop_footer_branch
      %13 = sbr.rel target = $region3
    $region8: #{dense_encoder_forward.4} parent=1 // loop_exit
      _
    %1963 = vsyncpa [#allocation3], 1
    %s1964 = scalar_lea.sflag [#allocation3], 1
    %1965 = vsyncpa %s1964, 1
    %1966 = vsyncpa [#allocation5], 1

// kernel: dense_encoder_forward.5
$region0: #{dense_encoder_forward.5}
  #allocation0 [shape = 'u32[]', space=smem, size = 0x4, offset = 0x4, fixed_abs, tag = 'smem constant byte address 0x4 - core index']
  #allocation1 [shape = 'u32[144,128]{1,0:T(1,128)}', space=vmem, size = 0x12000, scoped, tag = 'internal scratch']
  %s0 = inlined_call_operand.vmem [shape: bf16[2,3,3,256], index: 0, kind: input, shape index: {}]
  %s1 = inlined_call_operand.vmem [shape: bf16[2,3,3,256], index: 1, kind: input, shape index: {}]
  %s2 = inlined_call_operand.vmem [shape: bf16[2,3,3,256], index: 2, kind: input, shape index: {}]
  %s3 = inlined_call_operand.vmem [shape: bf16[2,3,3,256], index: 3, kind: input, shape index: {}]
  %s4 = inlined_call_operand.vmem [shape: bf16[2304,512], index: 4, kind: input, shape index: {}]
  %s5 = inlined_call_operand.vmem [shape: f32[1,512], index: 5, kind: input, shape index: {}]
  %s6 = inlined_call_operand.vmem [shape: bf16[2,4,512], index: 6, kind: output, shape index: {}]
  %s7 = sld [smem:[#allocation0]]
  $region57: #{dense_encoder_forward.5} parent=0
    _
  %s9 = ssub.s32 1, %s7
  %s10 = scalar_select 0, %s9, %s7
  loop: start=0, step=1, limit=4
  $region2: #{dense_encoder_forward.5} parent=0 // loop_pre_header
    _
  $region3: #{dense_encoder_forward.5} parent=0 // loop_header
    %s12 = sphi 0, %s16
    %p13 = scmp.ge.s32.totalorder %s12, 4
    %s19 = sphi 0, %s31
    %s20 = sphi 0, %s27
    %s21 = sphi 0, %s19
    %s22 = sphi 0, %s20
    %s23 = sphi 0, %s21
    %s24 = sphi 0, %s22
    %s34 = sphi 0, %s36
    %s37 = sphi 0, %s34
    %s38 = sphi 0, %s37
    %s54 = sphi 0, %s38
    %s60 = sphi 0, %s62
    %s63 = sphi 0, %s60
    %s64 = sphi 0, %s63
    %s80 = sphi 0, %s64
    %s86 = sphi 0, %s88
    %s89 = sphi 0, %s86
    %s90 = sphi 0, %s89
    %s106 = sphi 0, %s90
    %s112 = sphi 0, %s114
    %s115 = sphi 0, %s112
    %s116 = sphi 0, %s115
    %s132 = sphi 0, %s116
    %s136 = sphi 0, %s136
    %s138 = sphi 0, %s136
    %s139 = sphi 0, %s138
    %s153 = sphi 0, %s139
    %s157 = sphi 0, %s157
    %s159 = sphi 0, %s157
    %s160 = sphi 0, %s159
    %s174 = sphi 0, %s160
    %s182 = sphi 0, %s184
    %s185 = sphi 0, %s182
    %s186 = sphi 0, %s185
    %s202 = sphi 0, %s186
  $region4: #{dense_encoder_forward.5} parent=0 // loop_header_branch
    %15 = sbr.rel (%p13) target = $region8
  $region5: #{dense_encoder_forward.5} parent=0 // loop_body
    %s17 = ssub.s32 %s12, 1
    %s18 = ssub.s32 %s12, 2
    %s25 = sadd.s32 1, %s20
    %p26 = scmp.ge.s32.totalorder %s25, 1
    %s27 = scalar_select %p26, 0, %s25
    %s28 = sadd.s32 1, %s19
    %s29 = scalar_select %p26, %s28, %s19
    %p30 = scmp.ge.s32.totalorder %s29, 2
    %s31 = scalar_select %p30, 0, %s29
    %s32 = ssub.s32 %s19, %s31
    %p33 = scmp.eq.s32.totalorder %s32, 0
    %s35 = sadd.s32 %s34, 1
    %s36 = scalar_select %p33, %s34, %s35
    %p39 = pneg %p33
    %p40 = scmp.eq.s32.totalorder %s12, 1
    %p41 = por %p39, %p40
    %p42 = scmp.ne.s32.totalorder %s34, %s37
    %p43 = scmp.eq.s32.totalorder %s12, 0
    %p44 = por %p42, %p43
    %p45 = scmp.ne.s32.totalorder %s34, %s37
    %p46 = scmp.eq.s32.totalorder %s17, 1
    %p47 = por %p45, %p46
    %p48 = scmp.ne.s32.totalorder %s37, %s38
    %p49 = scmp.eq.s32.totalorder %s17, 0
    %p50 = por %p48, %p49
    %p51 = scmp.ne.s32.totalorder %s37, %s38
    %p52 = scmp.eq.s32.totalorder %s18, 1
    %p53 = por %p51, %p52
    %p55 = scmp.ne.s32.totalorder %s38, %s54
    %p56 = scmp.eq.s32.totalorder %s18, 0
    %p57 = por %p55, %p56
    %s58 = ssub.s32 %s19, %s31
    %p59 = scmp.eq.s32.totalorder %s58, 0
    %s61 = sadd.s32 %s60, 1
    %s62 = scalar_select %p59, %s60, %s61
    %p65 = pneg %p59
    %p66 = scmp.eq.s32.totalorder %s12, 1
    %p67 = por %p65, %p66
    %p68 = scmp.ne.s32.totalorder %s60, %s63
    %p69 = scmp.eq.s32.totalorder %s12, 0
    %p70 = por %p68, %p69
    %p71 = scmp.ne.s32.totalorder %s60, %s63
    %p72 = scmp.eq.s32.totalorder %s17, 1
    %p73 = por %p71, %p72
    %p74 = scmp.ne.s32.totalorder %s63, %s64
    %p75 = scmp.eq.s32.totalorder %s17, 0
    %p76 = por %p74, %p75
    %p77 = scmp.ne.s32.totalorder %s63, %s64
    %p78 = scmp.eq.s32.totalorder %s18, 1
    %p79 = por %p77, %p78
    %p81 = scmp.ne.s32.totalorder %s64, %s80
    %p82 = scmp.eq.s32.totalorder %s18, 0
    %p83 = por %p81, %p82
    %s84 = ssub.s32 %s19, %s31
    %p85 = scmp.eq.s32.totalorder %s84, 0
    %s87 = sadd.s32 %s86, 1
    %s88 = scalar_select %p85, %s86, %s87
    %p91 = pneg %p85
    %p92 = scmp.eq.s32.totalorder %s12, 1
    %p93 = por %p91, %p92
    %p94 = scmp.ne.s32.totalorder %s86, %s89
    %p95 = scmp.eq.s32.totalorder %s12, 0
    %p96 = por %p94, %p95
    %p97 = scmp.ne.s32.totalorder %s86, %s89
    %p98 = scmp.eq.s32.totalorder %s17, 1
    %p99 = por %p97, %p98
    %p100 = scmp.ne.s32.totalorder %s89, %s90
    %p101 = scmp.eq.s32.totalorder %s17, 0
    %p102 = por %p100, %p101
    %p103 = scmp.ne.s32.totalorder %s89, %s90
    %p104 = scmp.eq.s32.totalorder %s18, 1
    %p105 = por %p103, %p104
    %p107 = scmp.ne.s32.totalorder %s90, %s106
    %p108 = scmp.eq.s32.totalorder %s18, 0
    %p109 = por %p107, %p108
    %s110 = ssub.s32 %s19, %s31
    %p111 = scmp.eq.s32.totalorder %s110, 0
    %s113 = sadd.s32 %s112, 1
    %s114 = scalar_select %p111, %s112, %s113
    %p117 = pneg %p111
    %p118 = scmp.eq.s32.totalorder %s12, 1
    %p119 = por %p117, %p118
    %p120 = scmp.ne.s32.totalorder %s112, %s115
    %p121 = scmp.eq.s32.totalorder %s12, 0
    %p122 = por %p120, %p121
    %p123 = scmp.ne.s32.totalorder %s112, %s115
    %p124 = scmp.eq.s32.totalorder %s17, 1
    %p125 = por %p123, %p124
    %p126 = scmp.ne.s32.totalorder %s115, %s116
    %p127 = scmp.eq.s32.totalorder %s17, 0
    %p128 = por %p126, %p127
    %p129 = scmp.ne.s32.totalorder %s115, %s116
    %p130 = scmp.eq.s32.totalorder %s18, 1
    %p131 = por %p129, %p130
    %p133 = scmp.ne.s32.totalorder %s116, %s132
    %p134 = scmp.eq.s32.totalorder %s18, 0
    %p135 = por %p133, %p134
    %s137 = sadd.s32 %s136, 1
    %p140 = scmp.eq.s32.totalorder %s12, 1
    %p141 = scmp.ne.s32.totalorder %s136, %s138
    %p142 = scmp.eq.s32.totalorder %s12, 0
    %p143 = por %p141, %p142
    %p144 = scmp.ne.s32.totalorder %s136, %s138
    %p145 = scmp.eq.s32.totalorder %s17, 1
    %p146 = por %p144, %p145
    %p147 = scmp.ne.s32.totalorder %s138, %s139
    %p148 = scmp.eq.s32.totalorder %s17, 0
    %p149 = por %p147, %p148
    %p150 = scmp.ne.s32.totalorder %s138, %s139
    %p151 = scmp.eq.s32.totalorder %s18, 1
    %p152 = por %p150, %p151
    %p154 = scmp.ne.s32.totalorder %s139, %s153
    %p155 = scmp.eq.s32.totalorder %s18, 0
    %p156 = por %p154, %p155
    %s158 = sadd.s32 %s157, 1
    %p161 = scmp.eq.s32.totalorder %s12, 1
    %p162 = scmp.ne.s32.totalorder %s157, %s159
    %p163 = scmp.eq.s32.totalorder %s12, 0
    %p164 = por %p162, %p163
    %p165 = scmp.ne.s32.totalorder %s157, %s159
    %p166 = scmp.eq.s32.totalorder %s17, 1
    %p167 = por %p165, %p166
    %p168 = scmp.ne.s32.totalorder %s159, %s160
    %p169 = scmp.eq.s32.totalorder %s17, 0
    %p170 = por %p168, %p169
    %p171 = scmp.ne.s32.totalorder %s159, %s160
    %p172 = scmp.eq.s32.totalorder %s18, 1
    %p173 = por %p171, %p172
    %p175 = scmp.ne.s32.totalorder %s160, %s174
    %p176 = scmp.eq.s32.totalorder %s18, 0
    %p177 = por %p175, %p176
    %s178 = ssub.s32 %s19, %s31
    %s179 = ssub.s32 %s20, %s27
    %s180 = sor.u32 %s178, %s179
    %p181 = scmp.eq.s32.totalorder %s180, 0
    %s183 = sadd.s32 %s182, 1
    %s184 = scalar_select %p181, %s182, %s183
    %p187 = pneg %p181
    %p188 = scmp.eq.s32.totalorder %s12, 1
    %p189 = por %p187, %p188
    %p190 = scmp.ne.s32.totalorder %s182, %s185
    %p191 = scmp.eq.s32.totalorder %s12, 0
    %p192 = por %p190, %p191
    %p193 = scmp.ne.s32.totalorder %s182, %s185
    %p194 = scmp.eq.s32.totalorder %s17, 1
    %p195 = por %p193, %p194
    %p196 = scmp.ne.s32.totalorder %s185, %s186
    %p197 = scmp.eq.s32.totalorder %s17, 0
    %p198 = por %p196, %p197
    %p199 = scmp.ne.s32.totalorder %s185, %s186
    %p200 = scmp.eq.s32.totalorder %s18, 1
    %p201 = por %p199, %p200
    %p203 = scmp.ne.s32.totalorder %s186, %s202
    %p204 = scmp.eq.s32.totalorder %s18, 0
    %p205 = por %p203, %p204
    %p206 = scmp.le.s32.totalorder 1, %s12
    %p207 = scmp.lt.s32.totalorder %s12, 3
    %p208 = pnand %p206, %p207
    %p209 = pneg %p208
    // Predicated region
    $region9: #{dense_encoder_forward.5} parent=5 // pred_check
      _
    $region10: #{dense_encoder_forward.5} parent=5 // pred_check_branch
      %211 = sbr.rel (%p208) target = $region12
    $region11: #{dense_encoder_forward.5} parent=5 // pred_region
      %s212 = ssub.s32 %s12, 1
      // Predicated region
      $region13: #{dense_encoder_forward.5} parent=11 // pred_check
        %p213 = pneg %p50
      $region14: #{dense_encoder_forward.5} parent=11 // pred_check_branch
        %215 = sbr.rel (%p213) target = $region16
      $region15: #{dense_encoder_forward.5} parent=11 // pred_region
        %p216 = scmp.lt.s32.totalorder %s21, 1
        %s217 = scalar_select %p216, %s21, 1
        %s218 = smul.addr %s217, 6
        %s219 = smul.addr %s218, 2
        %s220 = scalar_lea.vmem %s0, %s219
      $region16: #{dense_encoder_forward.5} parent=11 // pred_fallthru
        _
      // Predicated region
      $region17: #{dense_encoder_forward.5} parent=11 // pred_check
        %p221 = pneg %p76
      $region18: #{dense_encoder_forward.5} parent=11 // pred_check_branch
        %223 = sbr.rel (%p221) target = $region20
      $region19: #{dense_encoder_forward.5} parent=11 // pred_region
        %p224 = scmp.lt.s32.totalorder %s21, 1
        %s225 = scalar_select %p224, %s21, 1
        %s226 = smul.addr %s225, 6
        %s227 = smul.addr %s226, 2
        %s228 = scalar_lea.vmem %s1, %s227
      $region20: #{dense_encoder_forward.5} parent=11 // pred_fallthru
        _
      // Predicated region
      $region21: #{dense_encoder_forward.5} parent=11 // pred_check
        %p229 = pneg %p102
      $region22: #{dense_encoder_forward.5} parent=11 // pred_check_branch
        %231 = sbr.rel (%p229) target = $region24
      $region23: #{dense_encoder_forward.5} parent=11 // pred_region
        %p232 = scmp.lt.s32.totalorder %s21, 1
        %s233 = scalar_select %p232, %s21, 1
        %s234 = smul.addr %s233, 6
        %s235 = smul.addr %s234, 2
        %s236 = scalar_lea.vmem %s2, %s235
      $region24: #{dense_encoder_forward.5} parent=11 // pred_fallthru
        _
      // Predicated region
      $region25: #{dense_encoder_forward.5} parent=11 // pred_check
        %p237 = pneg %p128
      $region26: #{dense_encoder_forward.5} parent=11 // pred_check_branch
        %239 = sbr.rel (%p237) target = $region28
      $region27: #{dense_encoder_forward.5} parent=11 // pred_region
        %p240 = scmp.lt.s32.totalorder %s21, 1
        %s241 = scalar_select %p240, %s21, 1
        %s242 = smul.addr %s241, 6
        %s243 = smul.addr %s242, 2
        %s244 = scalar_lea.vmem %s3, %s243
      $region28: #{dense_encoder_forward.5} parent=11 // pred_fallthru
        _
      // Predicated region
      $region29: #{dense_encoder_forward.5} parent=11 // pred_check
        %p245 = pneg %p149
      $region30: #{dense_encoder_forward.5} parent=11 // pred_check_branch
        %247 = sbr.rel (%p245) target = $region32
      $region31: #{dense_encoder_forward.5} parent=11 // pred_region
        _
      $region32: #{dense_encoder_forward.5} parent=11 // pred_fallthru
        _
      // Predicated region
      $region33: #{dense_encoder_forward.5} parent=11 // pred_check
        %p248 = pneg %p170
      $region34: #{dense_encoder_forward.5} parent=11 // pred_check_branch
        %250 = sbr.rel (%p248) target = $region36
      $region35: #{dense_encoder_forward.5} parent=11 // pred_region
        _
      $region36: #{dense_encoder_forward.5} parent=11 // pred_fallthru
        _
    $region12: #{dense_encoder_forward.5} parent=5 // pred_fallthru
      _
    %p251 = scmp.lt.s32.totalorder %s12, 2
    // Predicated region
    $region37: #{dense_encoder_forward.5} parent=5 // pred_check
      %p252 = pneg %p251
    $region38: #{dense_encoder_forward.5} parent=5 // pred_check_branch
      %254 = sbr.rel (%p252) target = $region40
    $region39: #{dense_encoder_forward.5} parent=5 // pred_region
      _
    $region40: #{dense_encoder_forward.5} parent=5 // pred_fallthru
      _
    %p255 = scmp.le.s32.totalorder 1, %s12
    %p256 = scmp.lt.s32.totalorder %s12, 3
    %p257 = pnand %p255, %p256
    %p258 = pneg %p257
    // Predicated region
    $region41: #{dense_encoder_forward.5} parent=5 // pred_check
      _
    $region42: #{dense_encoder_forward.5} parent=5 // pred_check_branch
      %260 = sbr.rel (%p257) target = $region44
    $region43: #{dense_encoder_forward.5} parent=5 // pred_region
      %s261 = ssub.s32 %s12, 1
      %p262 = scmp.lt.s32.totalorder %s21, 1
      %s263 = scalar_select %p262, %s21, 1
      %s264 = smul.addr %s263, 6
      %s265 = smul.addr %s264, 2
      %s266 = scalar_lea.vmem %s0, %s265
      %p267 = pneg %p50
      %p268 = pneg %p47
      %p269 = scmp.lt.s32.totalorder %s21, 1
      %s270 = scalar_select %p269, %s21, 1
      %s271 = smul.addr %s270, 6
      %s272 = smul.addr %s271, 2
      %s273 = scalar_lea.vmem %s1, %s272
      %p274 = pneg %p76
      %p275 = pneg %p73
      %p276 = scmp.lt.s32.totalorder %s21, 1
      %s277 = scalar_select %p276, %s21, 1
      %s278 = smul.addr %s277, 6
      %s279 = smul.addr %s278, 2
      %s280 = scalar_lea.vmem %s2, %s279
      %p281 = pneg %p102
      %p282 = pneg %p99
      %p283 = scmp.lt.s32.totalorder %s21, 1
      %s284 = scalar_select %p283, %s21, 1
      %s285 = smul.addr %s284, 6
      %s286 = smul.addr %s285, 2
      %s287 = scalar_lea.vmem %s3, %s286
      %p288 = pneg %p128
      %p289 = pneg %p125
      %p290 = pneg %p149
      %p291 = pneg %p146
      %p292 = pneg %p170
      %p293 = pneg %p167
      %p294 = pneg %p198
      %p295 = pneg %p195
      %p296 = scmp.lt.s32.totalorder %s21, 1
      %s297 = scalar_select %p296, %s21, 1
      %p298 = scmp.lt.s32.totalorder %s22, 0
      %s299 = scalar_select %p298, %s22, 0
      %s300 = smul.addr %s299, 4
      %s301 = smul.addr %s297, 4
      %s302 = sadd.s32 %s300, %s301
      %s303 = smul.addr %s302, 2
      %s304 = scalar_lea.vmem %s6, %s303
      %p305 = scmp.lt.s32.totalorder %s21, 1
      %s306 = scalar_select %p305, %s21, 1
      %s307 = smul.addr %s306, 6
      %s308 = smul.addr %s307, 2
      %s309 = scalar_lea.vmem %s0, %s308
      %p310 = scmp.lt.s32.totalorder %s21, 1
      %s311 = scalar_select %p310, %s21, 1
      %s312 = smul.addr %s311, 6
      %s313 = smul.addr %s312, 2
      %s314 = scalar_lea.vmem %s1, %s313
      %p315 = scmp.lt.s32.totalorder %s21, 1
      %s316 = scalar_select %p315, %s21, 1
      %s317 = smul.addr %s316, 6
      %s318 = smul.addr %s317, 2
      %s319 = scalar_lea.vmem %s2, %s318
      %p320 = scmp.lt.s32.totalorder %s21, 1
      %s321 = scalar_select %p320, %s21, 1
      %s322 = smul.addr %s321, 6
      %s323 = smul.addr %s322, 2
      %s324 = scalar_lea.vmem %s3, %s323
      %p325 = scmp.lt.s32.totalorder %s21, 1
      %s326 = scalar_select %p325, %s21, 1
      %p327 = scmp.lt.s32.totalorder %s22, 0
      %s328 = scalar_select %p327, %s22, 0
      %s329 = smul.addr %s328, 4
      %s330 = smul.addr %s326, 4
      %s331 = sadd.s32 %s329, %s330
      %s332 = smul.addr %s331, 2
      %s333 = scalar_lea.vmem %s6, %s332
      %s334 = smul.u32 %s22, 2
      %s335 = smul.u32 %s334, 2
      %s336 = smul.addr %s335, 2
      %s337 = scalar_lea.vmem %s309, %s336
      %v338 = vld [vmem:[%s337] sm:$0x5]
      %v339 = vld [vmem:[%s337 + $0x4] sm:$0x5]
      %s340 = smul.addr %s335, 2
      %s341 = scalar_lea.vmem %s314, %s340
      %v342 = vld [vmem:[%s341] sm:$0x5]
      %v343 = vld [vmem:[%s341 + $0x4] sm:$0x5]
      %v344 = vld [vmem:[%s337] sm:$0xf]
      %v345 = vld [vmem:[%s337 + $0x4] sm:$0xf]
      %s346 = smul.addr %s335, 2
      %s347 = scalar_lea.vmem %s319, %s346
      %v348 = vld [vmem:[%s347] sm:$0x5]
      %v349 = vld [vmem:[%s347 + $0x4] sm:$0x5]
      %s350 = smul.addr %s335, 2
      %s351 = scalar_lea.vmem %s324, %s350
      %v352 = vld [vmem:[%s351] sm:$0x5]
      %v353 = vld [vmem:[%s351 + $0x4] sm:$0x5]
      %v354 = vld [vmem:[%s347] sm:$0xf]
      %v355 = vld [vmem:[%s347 + $0x4] sm:$0xf]
      %s356 = sadd.s32 %s334, 1
      %s357 = smul.u32 %s356, 2
      %s358 = smul.addr %s357, 2
      %s359 = scalar_lea.vmem %s309, %s358
      %v360 = vld [vmem:[%s359] sm:$0x5]
      %v361 = vld [vmem:[%s359 + $0x4] sm:$0x5]
      %s362 = smul.addr %s357, 2
      %s363 = scalar_lea.vmem %s314, %s362
      %v364 = vld [vmem:[%s363] sm:$0x5]
      %v365 = vld [vmem:[%s363 + $0x4] sm:$0x5]
      %v366 = vld [vmem:[%s359] sm:$0xf]
      %v367 = vld [vmem:[%s359 + $0x4] sm:$0xf]
      %v371 = vunpack.c.l.s4 1983009808
      %v372 = vunpack.c.0.s8 %v371
      %v373 = vlaneseq
      %v374 = vshrl.u32 %v373, 7
      %v375 = vsub.s32 %v372, %v374
      %v376 = vrot.slane %v338, %v375
      %v377 = vcombine.high %v376, %v376
      %v379 = vunpack.c.l.s4 1983009808
      %v380 = vunpack.c.0.s8 %v379
      %v381 = vlaneseq
      %v382 = vshrl.u32 %v381, 7
      %v383 = vsub.s32 %v380, %v382
      %v384 = vrot.slane %v339, %v383
      %v385 = vcombine.high %v384, %v384
      %v389 = vunpack.c.l.s4 1983009808
      %v390 = vunpack.c.0.s8 %v389
      %v391 = vlaneseq
      %v392 = vshrl.u32 %v391, 7
      %v393 = vsub.s32 %v390, %v392
      %v394 = vrot.slane %v342, %v393
      %v395 = vcombine.high %v394, %v394
      %v397 = vunpack.c.l.s4 1983009808
      %v398 = vunpack.c.0.s8 %v397
      %v399 = vlaneseq
      %v400 = vshrl.u32 %v399, 7
      %v401 = vsub.s32 %v398, %v400
      %v402 = vrot.slane %v343, %v401
      %v403 = vcombine.high %v402, %v402
      %v407 = vunpack.c.l.s4 1983009808
      %v408 = vunpack.c.0.s8 %v407
      %v409 = vlaneseq
      %v410 = vshrl.u32 %v409, 7
      %v411 = vsub.s32 %v408, %v410
      %v412 = vrot.slane %v344, %v411
      %v413 = vcombine.high %v412, %v412
      %v415 = vunpack.c.l.s4 1983009808
      %v416 = vunpack.c.0.s8 %v415
      %v417 = vlaneseq
      %v418 = vshrl.u32 %v417, 7
      %v419 = vsub.s32 %v416, %v418
      %v420 = vrot.slane %v345, %v419
      %v421 = vcombine.high %v420, %v420
      %v423 = vshrl.u32 %v412, 16
      %v425 = vshll.u32 %v412, 16
      %v427 = vrot.slane %v425, 1
      %v428 = vor.u32 %v423, %v427
      %v430 = vshrl.u32 %v413, 16
      %v432 = vshll.u32 %v413, 16
      %v434 = vrot.slane %v432, 1
      %v435 = vor.u32 %v430, %v434
      %v437 = vshrl.u32 %v420, 16
      %v439 = vshll.u32 %v420, 16
      %v441 = vrot.slane %v439, 1
      %v442 = vor.u32 %v437, %v441
      %v444 = vshrl.u32 %v421, 16
      %v446 = vshll.u32 %v421, 16
      %v448 = vrot.slane %v446, 1
      %v449 = vor.u32 %v444, %v448
      %v453 = vunpack.c.l.s4 1983009808
      %v454 = vunpack.c.0.s8 %v453
      %v455 = vlaneseq
      %v456 = vshrl.u32 %v455, 7
      %v457 = vsub.s32 %v454, %v456
      %v458 = vrot.slane %v348, %v457
      %v459 = vcombine.high %v458, %v458
      %v461 = vunpack.c.l.s4 1983009808
      %v462 = vunpack.c.0.s8 %v461
      %v463 = vlaneseq
      %v464 = vshrl.u32 %v463, 7
      %v465 = vsub.s32 %v462, %v464
      %v466 = vrot.slane %v349, %v465
      %v467 = vcombine.high %v466, %v466
      %v471 = vunpack.c.l.s4 1983009808
      %v472 = vunpack.c.0.s8 %v471
      %v473 = vlaneseq
      %v474 = vshrl.u32 %v473, 7
      %v475 = vsub.s32 %v472, %v474
      %v476 = vrot.slane %v352, %v475
      %v477 = vcombine.high %v476, %v476
      %v479 = vunpack.c.l.s4 1983009808
      %v480 = vunpack.c.0.s8 %v479
      %v481 = vlaneseq
      %v482 = vshrl.u32 %v481, 7
      %v483 = vsub.s32 %v480, %v482
      %v484 = vrot.slane %v353, %v483
      %v485 = vcombine.high %v484, %v484
      %v489 = vunpack.c.l.s4 1983009808
      %v490 = vunpack.c.0.s8 %v489
      %v491 = vlaneseq
      %v492 = vshrl.u32 %v491, 7
      %v493 = vsub.s32 %v490, %v492
      %v494 = vrot.slane %v354, %v493
      %v495 = vcombine.high %v494, %v494
      %v497 = vunpack.c.l.s4 1983009808
      %v498 = vunpack.c.0.s8 %v497
      %v499 = vlaneseq
      %v500 = vshrl.u32 %v499, 7
      %v501 = vsub.s32 %v498, %v500
      %v502 = vrot.slane %v355, %v501
      %v503 = vcombine.high %v502, %v502
      %v505 = vshrl.u32 %v494, 16
      %v507 = vshll.u32 %v494, 16
      %v509 = vrot.slane %v507, 1
      %v510 = vor.u32 %v505, %v509
      %v512 = vshrl.u32 %v495, 16
      %v514 = vshll.u32 %v495, 16
      %v516 = vrot.slane %v514, 1
      %v517 = vor.u32 %v512, %v516
      %v519 = vshrl.u32 %v502, 16
      %v521 = vshll.u32 %v502, 16
      %v523 = vrot.slane %v521, 1
      %v524 = vor.u32 %v519, %v523
      %v526 = vshrl.u32 %v503, 16
      %v528 = vshll.u32 %v503, 16
      %v530 = vrot.slane %v528, 1
      %v531 = vor.u32 %v526, %v530
      %v535 = vunpack.c.l.s4 1983009808
      %v536 = vunpack.c.0.s8 %v535
      %v537 = vlaneseq
      %v538 = vshrl.u32 %v537, 7
      %v539 = vsub.s32 %v536, %v538
      %v540 = vrot.slane %v360, %v539
      %v541 = vcombine.high %v540, %v540
      %v543 = vunpack.c.l.s4 1983009808
      %v544 = vunpack.c.0.s8 %v543
      %v545 = vlaneseq
      %v546 = vshrl.u32 %v545, 7
      %v547 = vsub.s32 %v544, %v546
      %v548 = vrot.slane %v361, %v547
      %v549 = vcombine.high %v548, %v548
      %v553 = vunpack.c.l.s4 1983009808
      %v554 = vunpack.c.0.s8 %v553
      %v555 = vlaneseq
      %v556 = vshrl.u32 %v555, 7
      %v557 = vsub.s32 %v554, %v556
      %v558 = vrot.slane %v364, %v557
      %v559 = vcombine.high %v558, %v558
      %v561 = vunpack.c.l.s4 1983009808
      %v562 = vunpack.c.0.s8 %v561
      %v563 = vlaneseq
      %v564 = vshrl.u32 %v563, 7
      %v565 = vsub.s32 %v562, %v564
      %v566 = vrot.slane %v365, %v565
      %v567 = vcombine.high %v566, %v566
      %v571 = vunpack.c.l.s4 1983009808
      %v572 = vunpack.c.0.s8 %v571
      %v573 = vlaneseq
      %v574 = vshrl.u32 %v573, 7
      %v575 = vsub.s32 %v572, %v574
      %v576 = vrot.slane %v366, %v575
      %v577 = vcombine.high %v576, %v576
      %v579 = vunpack.c.l.s4 1983009808
      %v580 = vunpack.c.0.s8 %v579
      %v581 = vlaneseq
      %v582 = vshrl.u32 %v581, 7
      %v583 = vsub.s32 %v580, %v582
      %v584 = vrot.slane %v367, %v583
      %v585 = vcombine.high %v584, %v584
      %v587 = vshrl.u32 %v576, 16
      %v589 = vshll.u32 %v576, 16
      %v591 = vrot.slane %v589, 1
      %v592 = vor.u32 %v587, %v591
      %v594 = vshrl.u32 %v577, 16
      %v596 = vshll.u32 %v577, 16
      %v598 = vrot.slane %v596, 1
      %v599 = vor.u32 %v594, %v598
      %v601 = vshrl.u32 %v584, 16
      %v603 = vshll.u32 %v584, 16
      %v605 = vrot.slane %v603, 1
      %v606 = vor.u32 %v601, %v605
      %v608 = vshrl.u32 %v585, 16
      %v610 = vshll.u32 %v585, 16
      %v612 = vrot.slane %v610, 1
      %v613 = vor.u32 %v608, %v612
      %v614 = vcombine.low %v376, %v377
      %v615 = vcombine.low %v394, %v395
      %v616 = vcombine.low %v428, %v435
      %v617 = vcombine.low %v458, %v459
      %v619 = vunpack.c.l.s4 1966171168
      %v620 = vunpack.c.0.s8 %v619
      %v621 = vlaneseq
      %v622 = vshrl.u32 %v621, 7
      %v623 = vsub.s32 %v620, %v622
      %v624 = vrot.slane %v614, %v623
      %v626 = vunpack.c.l.s4 1966171168
      %v627 = vunpack.c.0.s8 %v626
      %v628 = vlaneseq
      %v629 = vshrl.u32 %v628, 7
      %v630 = vsub.s32 %v627, %v629
      %v631 = vrot.slane %v615, %v630
      %v633 = vunpack.c.l.s4 1966171168
      %v634 = vunpack.c.0.s8 %v633
      %v635 = vlaneseq
      %v636 = vshrl.u32 %v635, 7
      %v637 = vsub.s32 %v634, %v636
      %v638 = vrot.slane %v616, %v637
      %v640 = vunpack.c.l.s4 1966171168
      %v641 = vunpack.c.0.s8 %v640
      %v642 = vlaneseq
      %v643 = vshrl.u32 %v642, 7
      %v644 = vsub.s32 %v641, %v643
      %v645 = vrot.slane %v617, %v644
      %v646 = vcombine.low %v624, %v631
      %v647 = vcombine.low %v638, %v645
      %v649 = vunpack.c.l.s4 1966171168
      %v650 = vunpack.c.0.s8 %v649
      %v651 = vlaneseq
      %v652 = vshrl.u32 %v651, 7
      %v653 = vsub.s32 %v650, %v652
      %v654 = vrot.slane %v646, %v653
      %v656 = vunpack.c.l.s4 1966171168
      %v657 = vunpack.c.0.s8 %v656
      %v658 = vlaneseq
      %v659 = vshrl.u32 %v658, 7
      %v660 = vsub.s32 %v657, %v659
      %v661 = vrot.slane %v647, %v660
      %v662 = vcombine.low %v654, %v661
      %v663 = vcombine.low %v476, %v477
      %v664 = vcombine.low %v510, %v517
      %v665 = vcombine.low %v540, %v541
      %v666 = vcombine.low %v558, %v559
      %v668 = vunpack.c.l.s4 1966171168
      %v669 = vunpack.c.0.s8 %v668
      %v670 = vlaneseq
      %v671 = vshrl.u32 %v670, 7
      %v672 = vsub.s32 %v669, %v671
      %v673 = vrot.slane %v663, %v672
      %v675 = vunpack.c.l.s4 1966171168
      %v676 = vunpack.c.0.s8 %v675
      %v677 = vlaneseq
      %v678 = vshrl.u32 %v677, 7
      %v679 = vsub.s32 %v676, %v678
      %v680 = vrot.slane %v664, %v679
      %v682 = vunpack.c.l.s4 1966171168
      %v683 = vunpack.c.0.s8 %v682
      %v684 = vlaneseq
      %v685 = vshrl.u32 %v684, 7
      %v686 = vsub.s32 %v683, %v685
      %v687 = vrot.slane %v665, %v686
      %v689 = vunpack.c.l.s4 1966171168
      %v690 = vunpack.c.0.s8 %v689
      %v691 = vlaneseq
      %v692 = vshrl.u32 %v691, 7
      %v693 = vsub.s32 %v690, %v692
      %v694 = vrot.slane %v666, %v693
      %v695 = vcombine.low %v673, %v680
      %v696 = vcombine.low %v687, %v694
      %v698 = vunpack.c.l.s4 1966171168
      %v699 = vunpack.c.0.s8 %v698
      %v700 = vlaneseq
      %v701 = vshrl.u32 %v700, 7
      %v702 = vsub.s32 %v699, %v701
      %v703 = vrot.slane %v695, %v702
      %v705 = vunpack.c.l.s4 1966171168
      %v706 = vunpack.c.0.s8 %v705
      %v707 = vlaneseq
      %v708 = vshrl.u32 %v707, 7
      %v709 = vsub.s32 %v706, %v708
      %v710 = vrot.slane %v696, %v709
      %v711 = vcombine.low %v703, %v710
      %v712 = vcombine.low %v592, %v599
      %v714 = vunpack.c.l.s4 1966171168
      %v715 = vunpack.c.0.s8 %v714
      %v716 = vlaneseq
      %v717 = vshrl.u32 %v716, 7
      %v718 = vsub.s32 %v715, %v717
      %v719 = vrot.slane %v712, %v718
      %v721 = vunpack.c.l.s4 1966171168
      %v722 = vunpack.c.0.s8 %v721
      %v723 = vlaneseq
      %v724 = vshrl.u32 %v723, 7
      %v725 = vsub.s32 %v722, %v724
      %v726 = vrot.slane %v719, %v725
      %v727 = vcombine.low %v384, %v385
      %v728 = vcombine.low %v402, %v403
      %v729 = vcombine.low %v442, %v449
      %v730 = vcombine.low %v466, %v467
      %v732 = vunpack.c.l.s4 1966171168
      %v733 = vunpack.c.0.s8 %v732
      %v734 = vlaneseq
      %v735 = vshrl.u32 %v734, 7
      %v736 = vsub.s32 %v733, %v735
      %v737 = vrot.slane %v727, %v736
      %v739 = vunpack.c.l.s4 1966171168
      %v740 = vunpack.c.0.s8 %v739
      %v741 = vlaneseq
      %v742 = vshrl.u32 %v741, 7
      %v743 = vsub.s32 %v740, %v742
      %v744 = vrot.slane %v728, %v743
      %v746 = vunpack.c.l.s4 1966171168
      %v747 = vunpack.c.0.s8 %v746
      %v748 = vlaneseq
      %v749 = vshrl.u32 %v748, 7
      %v750 = vsub.s32 %v747, %v749
      %v751 = vrot.slane %v729, %v750
      %v753 = vunpack.c.l.s4 1966171168
      %v754 = vunpack.c.0.s8 %v753
      %v755 = vlaneseq
      %v756 = vshrl.u32 %v755, 7
      %v757 = vsub.s32 %v754, %v756
      %v758 = vrot.slane %v730, %v757
      %v759 = vcombine.low %v737, %v744
      %v760 = vcombine.low %v751, %v758
      %v762 = vunpack.c.l.s4 1966171168
      %v763 = vunpack.c.0.s8 %v762
      %v764 = vlaneseq
      %v765 = vshrl.u32 %v764, 7
      %v766 = vsub.s32 %v763, %v765
      %v767 = vrot.slane %v759, %v766
      %v769 = vunpack.c.l.s4 1966171168
      %v770 = vunpack.c.0.s8 %v769
      %v771 = vlaneseq
      %v772 = vshrl.u32 %v771, 7
      %v773 = vsub.s32 %v770, %v772
      %v774 = vrot.slane %v760, %v773
      %v775 = vcombine.low %v767, %v774
      %v776 = vcombine.low %v484, %v485
      %v777 = vcombine.low %v524, %v531
      %v778 = vcombine.low %v548, %v549
      %v779 = vcombine.low %v566, %v567
      %v781 = vunpack.c.l.s4 1966171168
      %v782 = vunpack.c.0.s8 %v781
      %v783 = vlaneseq
      %v784 = vshrl.u32 %v783, 7
      %v785 = vsub.s32 %v782, %v784
      %v786 = vrot.slane %v776, %v785
      %v788 = vunpack.c.l.s4 1966171168
      %v789 = vunpack.c.0.s8 %v788
      %v790 = vlaneseq
      %v791 = vshrl.u32 %v790, 7
      %v792 = vsub.s32 %v789, %v791
      %v793 = vrot.slane %v777, %v792
      %v795 = vunpack.c.l.s4 1966171168
      %v796 = vunpack.c.0.s8 %v795
      %v797 = vlaneseq
      %v798 = vshrl.u32 %v797, 7
      %v799 = vsub.s32 %v796, %v798
      %v800 = vrot.slane %v778, %v799
      %v802 = vunpack.c.l.s4 1966171168
      %v803 = vunpack.c.0.s8 %v802
      %v804 = vlaneseq
      %v805 = vshrl.u32 %v804, 7
      %v806 = vsub.s32 %v803, %v805
      %v807 = vrot.slane %v779, %v806
      %v808 = vcombine.low %v786, %v793
      %v809 = vcombine.low %v800, %v807
      %v811 = vunpack.c.l.s4 1966171168
      %v812 = vunpack.c.0.s8 %v811
      %v813 = vlaneseq
      %v814 = vshrl.u32 %v813, 7
      %v815 = vsub.s32 %v812, %v814
      %v816 = vrot.slane %v808, %v815
      %v818 = vunpack.c.l.s4 1966171168
      %v819 = vunpack.c.0.s8 %v818
      %v820 = vlaneseq
      %v821 = vshrl.u32 %v820, 7
      %v822 = vsub.s32 %v819, %v821
      %v823 = vrot.slane %v809, %v822
      %v824 = vcombine.low %v816, %v823
      %v825 = vcombine.low %v606, %v613
      %v827 = vunpack.c.l.s4 1966171168
      %v828 = vunpack.c.0.s8 %v827
      %v829 = vlaneseq
      %v830 = vshrl.u32 %v829, 7
      %v831 = vsub.s32 %v828, %v830
      %v832 = vrot.slane %v825, %v831
      %v834 = vunpack.c.l.s4 1966171168
      %v835 = vunpack.c.0.s8 %v834
      %v836 = vlaneseq
      %v837 = vshrl.u32 %v836, 7
      %v838 = vsub.s32 %v835, %v837
      %v839 = vrot.slane %v832, %v838
      %v840 = vld [vmem:[%s4] sm:$0xff]
      %v841 = vld [vmem:[%s4 + $0x8] sm:$0xff]
      %v842 = vld [vmem:[%s4 + $0x10] sm:$0xff]
      %v843 = vld [vmem:[%s4 + $0x18] sm:$0xff]
      %v844 = vld [vmem:[%s4 + $0x20] sm:$0xff]
      %v845 = vld [vmem:[%s4 + $0x28] sm:$0xff]
      %v846 = vld [vmem:[%s4 + $0x30] sm:$0xff]
      %v847 = vld [vmem:[%s4 + $0x38] sm:$0xff]
      %v848 = vld [vmem:[%s4 + $0x40] sm:$0xff]
      %v849 = vld [vmem:[%s4 + $0x48] sm:$0xff]
      %v850 = vld [vmem:[%s4 + $0x50] sm:$0xff]
      %v851 = vld [vmem:[%s4 + $0x58] sm:$0xff]
      %v852 = vld [vmem:[%s4 + $0x60] sm:$0xff]
      %v853 = vld [vmem:[%s4 + $0x68] sm:$0xff]
      %v854 = vld [vmem:[%s4 + $0x70] sm:$0xff]
      %v855 = vld [vmem:[%s4 + $0x78] sm:$0xff]
      %v856 = vld [vmem:[%s4 + $0x80] sm:$0xff]
      %v857 = vld [vmem:[%s4 + $0x88] sm:$0xff]
      %v858 = vld [vmem:[%s4 + $0x90] sm:$0xff]
      %v859 = vld [vmem:[%s4 + $0x98] sm:$0xff]
      %v860 = vld [vmem:[%s4 + $0xa0] sm:$0xff]
      %v861 = vld [vmem:[%s4 + $0xa8] sm:$0xff]
      %v862 = vld [vmem:[%s4 + $0xb0] sm:$0xff]
      %v863 = vld [vmem:[%s4 + $0xb8] sm:$0xff]
      %v864 = vld [vmem:[%s4 + $0xc0] sm:$0xff]
      %v865 = vld [vmem:[%s4 + $0xc8] sm:$0xff]
      %v866 = vld [vmem:[%s4 + $0xd0] sm:$0xff]
      %v867 = vld [vmem:[%s4 + $0xd8] sm:$0xff]
      %v868 = vld [vmem:[%s4 + $0xe0] sm:$0xff]
      %v869 = vld [vmem:[%s4 + $0xe8] sm:$0xff]
      %v870 = vld [vmem:[%s4 + $0xf0] sm:$0xff]
      %v871 = vld [vmem:[%s4 + $0xf8] sm:$0xff]
      %v872 = vld [vmem:[%s4 + $0x100] sm:$0xff]
      %v873 = vld [vmem:[%s4 + $0x108] sm:$0xff]
      %v874 = vld [vmem:[%s4 + $0x110] sm:$0xff]
      %v875 = vld [vmem:[%s4 + $0x118] sm:$0xff]
      %v876 = vld [vmem:[%s4 + $0x120] sm:$0xff]
      %v877 = vld [vmem:[%s4 + $0x128] sm:$0xff]
      %v878 = vld [vmem:[%s4 + $0x130] sm:$0xff]
      %v879 = vld [vmem:[%s4 + $0x138] sm:$0xff]
      %v880 = vld [vmem:[%s4 + $0x140] sm:$0xff]
      %v881 = vld [vmem:[%s4 + $0x148] sm:$0xff]
      %v882 = vld [vmem:[%s4 + $0x150] sm:$0xff]
      %v883 = vld [vmem:[%s4 + $0x158] sm:$0xff]
      %v884 = vld [vmem:[%s4 + $0x160] sm:$0xff]
      %v885 = vld [vmem:[%s4 + $0x168] sm:$0xff]
      %v886 = vld [vmem:[%s4 + $0x170] sm:$0xff]
      %v887 = vld [vmem:[%s4 + $0x178] sm:$0xff]
      %v888 = vld [vmem:[%s4 + $0x180] sm:$0xff]
      %v889 = vld [vmem:[%s4 + $0x188] sm:$0xff]
      %v890 = vld [vmem:[%s4 + $0x190] sm:$0xff]
      %v891 = vld [vmem:[%s4 + $0x198] sm:$0xff]
      %v892 = vld [vmem:[%s4 + $0x1a0] sm:$0xff]
      %v893 = vld [vmem:[%s4 + $0x1a8] sm:$0xff]
      %v894 = vld [vmem:[%s4 + $0x1b0] sm:$0xff]
      %v895 = vld [vmem:[%s4 + $0x1b8] sm:$0xff]
      %v896 = vld [vmem:[%s4 + $0x1c0] sm:$0xff]
      %v897 = vld [vmem:[%s4 + $0x1c8] sm:$0xff]
      %v898 = vld [vmem:[%s4 + $0x1d0] sm:$0xff]
      %v899 = vld [vmem:[%s4 + $0x1d8] sm:$0xff]
      %v900 = vld [vmem:[%s4 + $0x1e0] sm:$0xff]
      %v901 = vld [vmem:[%s4 + $0x1e8] sm:$0xff]
      %v902 = vld [vmem:[%s4 + $0x1f0] sm:$0xff]
      %v903 = vld [vmem:[%s4 + $0x1f8] sm:$0xff]
      %v904 = vld [vmem:[%s4 + $0x200] sm:$0xff]
      %v905 = vld [vmem:[%s4 + $0x208] sm:$0xff]
      %v906 = vld [vmem:[%s4 + $0x210] sm:$0xff]
      %v907 = vld [vmem:[%s4 + $0x218] sm:$0xff]
      %v908 = vld [vmem:[%s4 + $0x220] sm:$0xff]
      %v909 = vld [vmem:[%s4 + $0x228] sm:$0xff]
      %v910 = vld [vmem:[%s4 + $0x230] sm:$0xff]
      %v911 = vld [vmem:[%s4 + $0x238] sm:$0xff]
      %v912 = vld [vmem:[%s4 + $0x240] sm:$0xff]
      %v913 = vld [vmem:[%s4 + $0x248] sm:$0xff]
      %v914 = vld [vmem:[%s4 + $0x250] sm:$0xff]
      %v915 = vld [vmem:[%s4 + $0x258] sm:$0xff]
      %v916 = vld [vmem:[%s4 + $0x260] sm:$0xff]
      %v917 = vld [vmem:[%s4 + $0x268] sm:$0xff]
      %v918 = vld [vmem:[%s4 + $0x270] sm:$0xff]
      %v919 = vld [vmem:[%s4 + $0x278] sm:$0xff]
      %v920 = vld [vmem:[%s4 + $0x280] sm:$0xff]
      %v921 = vld [vmem:[%s4 + $0x288] sm:$0xff]
      %v922 = vld [vmem:[%s4 + $0x290] sm:$0xff]
      %v923 = vld [vmem:[%s4 + $0x298] sm:$0xff]
      %v924 = vld [vmem:[%s4 + $0x2a0] sm:$0xff]
      %v925 = vld [vmem:[%s4 + $0x2a8] sm:$0xff]
      %v926 = vld [vmem:[%s4 + $0x2b0] sm:$0xff]
      %v927 = vld [vmem:[%s4 + $0x2b8] sm:$0xff]
      %v928 = vld [vmem:[%s4 + $0x2c0] sm:$0xff]
      %v929 = vld [vmem:[%s4 + $0x2c8] sm:$0xff]
      %v930 = vld [vmem:[%s4 + $0x2d0] sm:$0xff]
      %v931 = vld [vmem:[%s4 + $0x2d8] sm:$0xff]
      %v932 = vld [vmem:[%s4 + $0x2e0] sm:$0xff]
      %v933 = vld [vmem:[%s4 + $0x2e8] sm:$0xff]
      %v934 = vld [vmem:[%s4 + $0x2f0] sm:$0xff]
      %v935 = vld [vmem:[%s4 + $0x2f8] sm:$0xff]
      %v936 = vld [vmem:[%s4 + $0x300] sm:$0xff]
      %v937 = vld [vmem:[%s4 + $0x308] sm:$0xff]
      %v938 = vld [vmem:[%s4 + $0x310] sm:$0xff]
      %v939 = vld [vmem:[%s4 + $0x318] sm:$0xff]
      %v940 = vld [vmem:[%s4 + $0x320] sm:$0xff]
      %v941 = vld [vmem:[%s4 + $0x328] sm:$0xff]
      %v942 = vld [vmem:[%s4 + $0x330] sm:$0xff]
      %v943 = vld [vmem:[%s4 + $0x338] sm:$0xff]
      %v944 = vld [vmem:[%s4 + $0x340] sm:$0xff]
      %v945 = vld [vmem:[%s4 + $0x348] sm:$0xff]
      %v946 = vld [vmem:[%s4 + $0x350] sm:$0xff]
      %v947 = vld [vmem:[%s4 + $0x358] sm:$0xff]
      %v948 = vld [vmem:[%s4 + $0x360] sm:$0xff]
      %v949 = vld [vmem:[%s4 + $0x368] sm:$0xff]
      %v950 = vld [vmem:[%s4 + $0x370] sm:$0xff]
      %v951 = vld [vmem:[%s4 + $0x378] sm:$0xff]
      %v952 = vld [vmem:[%s4 + $0x380] sm:$0xff]
      %v953 = vld [vmem:[%s4 + $0x388] sm:$0xff]
      %v954 = vld [vmem:[%s4 + $0x390] sm:$0xff]
      %v955 = vld [vmem:[%s4 + $0x398] sm:$0xff]
      %v956 = vld [vmem:[%s4 + $0x3a0] sm:$0xff]
      %v957 = vld [vmem:[%s4 + $0x3a8] sm:$0xff]
      %v958 = vld [vmem:[%s4 + $0x3b0] sm:$0xff]
      %v959 = vld [vmem:[%s4 + $0x3b8] sm:$0xff]
      %v960 = vld [vmem:[%s4 + $0x3c0] sm:$0xff]
      %v961 = vld [vmem:[%s4 + $0x3c8] sm:$0xff]
      %v962 = vld [vmem:[%s4 + $0x3d0] sm:$0xff]
      %v963 = vld [vmem:[%s4 + $0x3d8] sm:$0xff]
      %v964 = vld [vmem:[%s4 + $0x3e0] sm:$0xff]
      %v965 = vld [vmem:[%s4 + $0x3e8] sm:$0xff]
      %v966 = vld [vmem:[%s4 + $0x3f0] sm:$0xff]
      %v967 = vld [vmem:[%s4 + $0x3f8] sm:$0xff]
      %v968 = vld [vmem:[%s4 + $0x400] sm:$0xff]
      %v969 = vld [vmem:[%s4 + $0x408] sm:$0xff]
      %v970 = vld [vmem:[%s4 + $0x410] sm:$0xff]
      %v971 = vld [vmem:[%s4 + $0x418] sm:$0xff]
      %v972 = vld [vmem:[%s4 + $0x420] sm:$0xff]
      %v973 = vld [vmem:[%s4 + $0x428] sm:$0xff]
      %v974 = vld [vmem:[%s4 + $0x430] sm:$0xff]
      %v975 = vld [vmem:[%s4 + $0x438] sm:$0xff]
      %v976 = vld [vmem:[%s4 + $0x440] sm:$0xff]
      %v977 = vld [vmem:[%s4 + $0x448] sm:$0xff]
      %v978 = vld [vmem:[%s4 + $0x450] sm:$0xff]
      %v979 = vld [vmem:[%s4 + $0x458] sm:$0xff]
      %v980 = vld [vmem:[%s4 + $0x460] sm:$0xff]
      %v981 = vld [vmem:[%s4 + $0x468] sm:$0xff]
      %v982 = vld [vmem:[%s4 + $0x470] sm:$0xff]
      %v983 = vld [vmem:[%s4 + $0x478] sm:$0xff]
      %v984 = vld [vmem:[%s4 + $0x480] sm:$0xff]
      %v985 = vld [vmem:[%s4 + $0x488] sm:$0xff]
      %v986 = vld [vmem:[%s4 + $0x490] sm:$0xff]
      %v987 = vld [vmem:[%s4 + $0x498] sm:$0xff]
      %v988 = vld [vmem:[%s4 + $0x4a0] sm:$0xff]
      %v989 = vld [vmem:[%s4 + $0x4a8] sm:$0xff]
      %v990 = vld [vmem:[%s4 + $0x4b0] sm:$0xff]
      %v991 = vld [vmem:[%s4 + $0x4b8] sm:$0xff]
      %v992 = vld [vmem:[%s4 + $0x4c0] sm:$0xff]
      %v993 = vld [vmem:[%s4 + $0x4c8] sm:$0xff]
      %v994 = vld [vmem:[%s4 + $0x4d0] sm:$0xff]
      %v995 = vld [vmem:[%s4 + $0x4d8] sm:$0xff]
      %v996 = vld [vmem:[%s4 + $0x4e0] sm:$0xff]
      %v997 = vld [vmem:[%s4 + $0x4e8] sm:$0xff]
      %v998 = vld [vmem:[%s4 + $0x4f0] sm:$0xff]
      %v999 = vld [vmem:[%s4 + $0x4f8] sm:$0xff]
      %v1000 = vld [vmem:[%s4 + $0x500] sm:$0xff]
      %v1001 = vld [vmem:[%s4 + $0x508] sm:$0xff]
      %v1002 = vld [vmem:[%s4 + $0x510] sm:$0xff]
      %v1003 = vld [vmem:[%s4 + $0x518] sm:$0xff]
      %v1004 = vld [vmem:[%s4 + $0x520] sm:$0xff]
      %v1005 = vld [vmem:[%s4 + $0x528] sm:$0xff]
      %v1006 = vld [vmem:[%s4 + $0x530] sm:$0xff]
      %v1007 = vld [vmem:[%s4 + $0x538] sm:$0xff]
      %v1008 = vld [vmem:[%s4 + $0x540] sm:$0xff]
      %v1009 = vld [vmem:[%s4 + $0x548] sm:$0xff]
      %v1010 = vld [vmem:[%s4 + $0x550] sm:$0xff]
      %v1011 = vld [vmem:[%s4 + $0x558] sm:$0xff]
      %v1012 = vld [vmem:[%s4 + $0x560] sm:$0xff]
      %v1013 = vld [vmem:[%s4 + $0x568] sm:$0xff]
      %v1014 = vld [vmem:[%s4 + $0x570] sm:$0xff]
      %v1015 = vld [vmem:[%s4 + $0x578] sm:$0xff]
      %v1016 = vld [vmem:[%s4 + $0x580] sm:$0xff]
      %v1017 = vld [vmem:[%s4 + $0x588] sm:$0xff]
      %v1018 = vld [vmem:[%s4 + $0x590] sm:$0xff]
      %v1019 = vld [vmem:[%s4 + $0x598] sm:$0xff]
      %v1020 = vld [vmem:[%s4 + $0x5a0] sm:$0xff]
      %v1021 = vld [vmem:[%s4 + $0x5a8] sm:$0xff]
      %v1022 = vld [vmem:[%s4 + $0x5b0] sm:$0xff]
      %v1023 = vld [vmem:[%s4 + $0x5b8] sm:$0xff]
      %v1024 = vld [vmem:[%s4 + $0x5c0] sm:$0xff]
      %v1025 = vld [vmem:[%s4 + $0x5c8] sm:$0xff]
      %v1026 = vld [vmem:[%s4 + $0x5d0] sm:$0xff]
      %v1027 = vld [vmem:[%s4 + $0x5d8] sm:$0xff]
      %v1028 = vld [vmem:[%s4 + $0x5e0] sm:$0xff]
      %v1029 = vld [vmem:[%s4 + $0x5e8] sm:$0xff]
      %v1030 = vld [vmem:[%s4 + $0x5f0] sm:$0xff]
      %v1031 = vld [vmem:[%s4 + $0x5f8] sm:$0xff]
      %v1032 = vld [vmem:[%s4 + $0x600] sm:$0xff]
      %v1033 = vld [vmem:[%s4 + $0x608] sm:$0xff]
      %v1034 = vld [vmem:[%s4 + $0x610] sm:$0xff]
      %v1035 = vld [vmem:[%s4 + $0x618] sm:$0xff]
      %v1036 = vld [vmem:[%s4 + $0x620] sm:$0xff]
      %v1037 = vld [vmem:[%s4 + $0x628] sm:$0xff]
      %v1038 = vld [vmem:[%s4 + $0x630] sm:$0xff]
      %v1039 = vld [vmem:[%s4 + $0x638] sm:$0xff]
      %v1040 = vld [vmem:[%s4 + $0x640] sm:$0xff]
      %v1041 = vld [vmem:[%s4 + $0x648] sm:$0xff]
      %v1042 = vld [vmem:[%s4 + $0x650] sm:$0xff]
      %v1043 = vld [vmem:[%s4 + $0x658] sm:$0xff]
      %v1044 = vld [vmem:[%s4 + $0x660] sm:$0xff]
      %v1045 = vld [vmem:[%s4 + $0x668] sm:$0xff]
      %v1046 = vld [vmem:[%s4 + $0x670] sm:$0xff]
      %v1047 = vld [vmem:[%s4 + $0x678] sm:$0xff]
      %v1048 = vld [vmem:[%s4 + $0x680] sm:$0xff]
      %v1049 = vld [vmem:[%s4 + $0x688] sm:$0xff]
      %v1050 = vld [vmem:[%s4 + $0x690] sm:$0xff]
      %v1051 = vld [vmem:[%s4 + $0x698] sm:$0xff]
      %v1052 = vld [vmem:[%s4 + $0x6a0] sm:$0xff]
      %v1053 = vld [vmem:[%s4 + $0x6a8] sm:$0xff]
      %v1054 = vld [vmem:[%s4 + $0x6b0] sm:$0xff]
      %v1055 = vld [vmem:[%s4 + $0x6b8] sm:$0xff]
      %v1056 = vld [vmem:[%s4 + $0x6c0] sm:$0xff]
      %v1057 = vld [vmem:[%s4 + $0x6c8] sm:$0xff]
      %v1058 = vld [vmem:[%s4 + $0x6d0] sm:$0xff]
      %v1059 = vld [vmem:[%s4 + $0x6d8] sm:$0xff]
      %v1060 = vld [vmem:[%s4 + $0x6e0] sm:$0xff]
      %v1061 = vld [vmem:[%s4 + $0x6e8] sm:$0xff]
      %v1062 = vld [vmem:[%s4 + $0x6f0] sm:$0xff]
      %v1063 = vld [vmem:[%s4 + $0x6f8] sm:$0xff]
      %v1064 = vld [vmem:[%s4 + $0x700] sm:$0xff]
      %v1065 = vld [vmem:[%s4 + $0x708] sm:$0xff]
      %v1066 = vld [vmem:[%s4 + $0x710] sm:$0xff]
      %v1067 = vld [vmem:[%s4 + $0x718] sm:$0xff]
      %v1068 = vld [vmem:[%s4 + $0x720] sm:$0xff]
      %v1069 = vld [vmem:[%s4 + $0x728] sm:$0xff]
      %v1070 = vld [vmem:[%s4 + $0x730] sm:$0xff]
      %v1071 = vld [vmem:[%s4 + $0x738] sm:$0xff]
      %v1072 = vld [vmem:[%s4 + $0x740] sm:$0xff]
      %v1073 = vld [vmem:[%s4 + $0x748] sm:$0xff]
      %v1074 = vld [vmem:[%s4 + $0x750] sm:$0xff]
      %v1075 = vld [vmem:[%s4 + $0x758] sm:$0xff]
      %v1076 = vld [vmem:[%s4 + $0x760] sm:$0xff]
      %v1077 = vld [vmem:[%s4 + $0x768] sm:$0xff]
      %v1078 = vld [vmem:[%s4 + $0x770] sm:$0xff]
      %v1079 = vld [vmem:[%s4 + $0x778] sm:$0xff]
      %v1080 = vld [vmem:[%s4 + $0x780] sm:$0xff]
      %v1081 = vld [vmem:[%s4 + $0x788] sm:$0xff]
      %v1082 = vld [vmem:[%s4 + $0x790] sm:$0xff]
      %v1083 = vld [vmem:[%s4 + $0x798] sm:$0xff]
      %v1084 = vld [vmem:[%s4 + $0x7a0] sm:$0xff]
      %v1085 = vld [vmem:[%s4 + $0x7a8] sm:$0xff]
      %v1086 = vld [vmem:[%s4 + $0x7b0] sm:$0xff]
      %v1087 = vld [vmem:[%s4 + $0x7b8] sm:$0xff]
      %v1088 = vld [vmem:[%s4 + $0x7c0] sm:$0xff]
      %v1089 = vld [vmem:[%s4 + $0x7c8] sm:$0xff]
      %v1090 = vld [vmem:[%s4 + $0x7d0] sm:$0xff]
      %v1091 = vld [vmem:[%s4 + $0x7d8] sm:$0xff]
      %v1092 = vld [vmem:[%s4 + $0x7e0] sm:$0xff]
      %v1093 = vld [vmem:[%s4 + $0x7e8] sm:$0xff]
      %v1094 = vld [vmem:[%s4 + $0x7f0] sm:$0xff]
      %v1095 = vld [vmem:[%s4 + $0x7f8] sm:$0xff]
      %v1096 = vld [vmem:[%s4 + $0x800] sm:$0xff]
      %v1097 = vld [vmem:[%s4 + $0x808] sm:$0xff]
      %v1098 = vld [vmem:[%s4 + $0x810] sm:$0xff]
      %v1099 = vld [vmem:[%s4 + $0x818] sm:$0xff]
      %v1100 = vld [vmem:[%s4 + $0x820] sm:$0xff]
      %v1101 = vld [vmem:[%s4 + $0x828] sm:$0xff]
      %v1102 = vld [vmem:[%s4 + $0x830] sm:$0xff]
      %v1103 = vld [vmem:[%s4 + $0x838] sm:$0xff]
      %v1104 = vld [vmem:[%s4 + $0x840] sm:$0xff]
      %v1105 = vld [vmem:[%s4 + $0x848] sm:$0xff]
      %v1106 = vld [vmem:[%s4 + $0x850] sm:$0xff]
      %v1107 = vld [vmem:[%s4 + $0x858] sm:$0xff]
      %v1108 = vld [vmem:[%s4 + $0x860] sm:$0xff]
      %v1109 = vld [vmem:[%s4 + $0x868] sm:$0xff]
      %v1110 = vld [vmem:[%s4 + $0x870] sm:$0xff]
      %v1111 = vld [vmem:[%s4 + $0x878] sm:$0xff]
      %v1112 = vld [vmem:[%s4 + $0x880] sm:$0xff]
      %v1113 = vld [vmem:[%s4 + $0x888] sm:$0xff]
      %v1114 = vld [vmem:[%s4 + $0x890] sm:$0xff]
      %v1115 = vld [vmem:[%s4 + $0x898] sm:$0xff]
      %v1116 = vld [vmem:[%s4 + $0x8a0] sm:$0xff]
      %v1117 = vld [vmem:[%s4 + $0x8a8] sm:$0xff]
      %v1118 = vld [vmem:[%s4 + $0x8b0] sm:$0xff]
      %v1119 = vld [vmem:[%s4 + $0x8b8] sm:$0xff]
      %v1120 = vld [vmem:[%s4 + $0x8c0] sm:$0xff]
      %v1121 = vld [vmem:[%s4 + $0x8c8] sm:$0xff]
      %v1122 = vld [vmem:[%s4 + $0x8d0] sm:$0xff]
      %v1123 = vld [vmem:[%s4 + $0x8d8] sm:$0xff]
      %v1124 = vld [vmem:[%s4 + $0x8e0] sm:$0xff]
      %v1125 = vld [vmem:[%s4 + $0x8e8] sm:$0xff]
      %v1126 = vld [vmem:[%s4 + $0x8f0] sm:$0xff]
      %v1127 = vld [vmem:[%s4 + $0x8f8] sm:$0xff]
      %v1128 = vld [vmem:[%s4 + $0x900] sm:$0xff]
      %v1129 = vld [vmem:[%s4 + $0x908] sm:$0xff]
      %v1130 = vld [vmem:[%s4 + $0x910] sm:$0xff]
      %v1131 = vld [vmem:[%s4 + $0x918] sm:$0xff]
      %v1132 = vld [vmem:[%s4 + $0x920] sm:$0xff]
      %v1133 = vld [vmem:[%s4 + $0x928] sm:$0xff]
      %v1134 = vld [vmem:[%s4 + $0x930] sm:$0xff]
      %v1135 = vld [vmem:[%s4 + $0x938] sm:$0xff]
      %v1136 = vld [vmem:[%s4 + $0x940] sm:$0xff]
      %v1137 = vld [vmem:[%s4 + $0x948] sm:$0xff]
      %v1138 = vld [vmem:[%s4 + $0x950] sm:$0xff]
      %v1139 = vld [vmem:[%s4 + $0x958] sm:$0xff]
      %v1140 = vld [vmem:[%s4 + $0x960] sm:$0xff]
      %v1141 = vld [vmem:[%s4 + $0x968] sm:$0xff]
      %v1142 = vld [vmem:[%s4 + $0x970] sm:$0xff]
      %v1143 = vld [vmem:[%s4 + $0x978] sm:$0xff]
      %v1144 = vld [vmem:[%s4 + $0x980] sm:$0xff]
      %v1145 = vld [vmem:[%s4 + $0x988] sm:$0xff]
      %v1146 = vld [vmem:[%s4 + $0x990] sm:$0xff]
      %v1147 = vld [vmem:[%s4 + $0x998] sm:$0xff]
      %v1148 = vld [vmem:[%s4 + $0x9a0] sm:$0xff]
      %v1149 = vld [vmem:[%s4 + $0x9a8] sm:$0xff]
      %v1150 = vld [vmem:[%s4 + $0x9b0] sm:$0xff]
      %v1151 = vld [vmem:[%s4 + $0x9b8] sm:$0xff]
      %v1152 = vld [vmem:[%s4 + $0x9c0] sm:$0xff]
      %v1153 = vld [vmem:[%s4 + $0x9c8] sm:$0xff]
      %v1154 = vld [vmem:[%s4 + $0x9d0] sm:$0xff]
      %v1155 = vld [vmem:[%s4 + $0x9d8] sm:$0xff]
      %v1156 = vld [vmem:[%s4 + $0x9e0] sm:$0xff]
      %v1157 = vld [vmem:[%s4 + $0x9e8] sm:$0xff]
      %v1158 = vld [vmem:[%s4 + $0x9f0] sm:$0xff]
      %v1159 = vld [vmem:[%s4 + $0x9f8] sm:$0xff]
      %v1160 = vld [vmem:[%s4 + $0xa00] sm:$0xff]
      %v1161 = vld [vmem:[%s4 + $0xa08] sm:$0xff]
      %v1162 = vld [vmem:[%s4 + $0xa10] sm:$0xff]
      %v1163 = vld [vmem:[%s4 + $0xa18] sm:$0xff]
      %v1164 = vld [vmem:[%s4 + $0xa20] sm:$0xff]
      %v1165 = vld [vmem:[%s4 + $0xa28] sm:$0xff]
      %v1166 = vld [vmem:[%s4 + $0xa30] sm:$0xff]
      %v1167 = vld [vmem:[%s4 + $0xa38] sm:$0xff]
      %v1168 = vld [vmem:[%s4 + $0xa40] sm:$0xff]
      %v1169 = vld [vmem:[%s4 + $0xa48] sm:$0xff]
      %v1170 = vld [vmem:[%s4 + $0xa50] sm:$0xff]
      %v1171 = vld [vmem:[%s4 + $0xa58] sm:$0xff]
      %v1172 = vld [vmem:[%s4 + $0xa60] sm:$0xff]
      %v1173 = vld [vmem:[%s4 + $0xa68] sm:$0xff]
      %v1174 = vld [vmem:[%s4 + $0xa70] sm:$0xff]
      %v1175 = vld [vmem:[%s4 + $0xa78] sm:$0xff]
      %v1176 = vld [vmem:[%s4 + $0xa80] sm:$0xff]
      %v1177 = vld [vmem:[%s4 + $0xa88] sm:$0xff]
      %v1178 = vld [vmem:[%s4 + $0xa90] sm:$0xff]
      %v1179 = vld [vmem:[%s4 + $0xa98] sm:$0xff]
      %v1180 = vld [vmem:[%s4 + $0xaa0] sm:$0xff]
      %v1181 = vld [vmem:[%s4 + $0xaa8] sm:$0xff]
      %v1182 = vld [vmem:[%s4 + $0xab0] sm:$0xff]
      %v1183 = vld [vmem:[%s4 + $0xab8] sm:$0xff]
      %v1184 = vld [vmem:[%s4 + $0xac0] sm:$0xff]
      %v1185 = vld [vmem:[%s4 + $0xac8] sm:$0xff]
      %v1186 = vld [vmem:[%s4 + $0xad0] sm:$0xff]
      %v1187 = vld [vmem:[%s4 + $0xad8] sm:$0xff]
      %v1188 = vld [vmem:[%s4 + $0xae0] sm:$0xff]
      %v1189 = vld [vmem:[%s4 + $0xae8] sm:$0xff]
      %v1190 = vld [vmem:[%s4 + $0xaf0] sm:$0xff]
      %v1191 = vld [vmem:[%s4 + $0xaf8] sm:$0xff]
      %v1192 = vld [vmem:[%s4 + $0xb00] sm:$0xff]
      %v1193 = vld [vmem:[%s4 + $0xb08] sm:$0xff]
      %v1194 = vld [vmem:[%s4 + $0xb10] sm:$0xff]
      %v1195 = vld [vmem:[%s4 + $0xb18] sm:$0xff]
      %v1196 = vld [vmem:[%s4 + $0xb20] sm:$0xff]
      %v1197 = vld [vmem:[%s4 + $0xb28] sm:$0xff]
      %v1198 = vld [vmem:[%s4 + $0xb30] sm:$0xff]
      %v1199 = vld [vmem:[%s4 + $0xb38] sm:$0xff]
      %v1200 = vld [vmem:[%s4 + $0xb40] sm:$0xff]
      %v1201 = vld [vmem:[%s4 + $0xb48] sm:$0xff]
      %v1202 = vld [vmem:[%s4 + $0xb50] sm:$0xff]
      %v1203 = vld [vmem:[%s4 + $0xb58] sm:$0xff]
      %v1204 = vld [vmem:[%s4 + $0xb60] sm:$0xff]
      %v1205 = vld [vmem:[%s4 + $0xb68] sm:$0xff]
      %v1206 = vld [vmem:[%s4 + $0xb70] sm:$0xff]
      %v1207 = vld [vmem:[%s4 + $0xb78] sm:$0xff]
      %v1208 = vld [vmem:[%s4 + $0xb80] sm:$0xff]
      %v1209 = vld [vmem:[%s4 + $0xb88] sm:$0xff]
      %v1210 = vld [vmem:[%s4 + $0xb90] sm:$0xff]
      %v1211 = vld [vmem:[%s4 + $0xb98] sm:$0xff]
      %v1212 = vld [vmem:[%s4 + $0xba0] sm:$0xff]
      %v1213 = vld [vmem:[%s4 + $0xba8] sm:$0xff]
      %v1214 = vld [vmem:[%s4 + $0xbb0] sm:$0xff]
      %v1215 = vld [vmem:[%s4 + $0xbb8] sm:$0xff]
      %v1216 = vld [vmem:[%s4 + $0xbc0] sm:$0xff]
      %v1217 = vld [vmem:[%s4 + $0xbc8] sm:$0xff]
      %v1218 = vld [vmem:[%s4 + $0xbd0] sm:$0xff]
      %v1219 = vld [vmem:[%s4 + $0xbd8] sm:$0xff]
      %v1220 = vld [vmem:[%s4 + $0xbe0] sm:$0xff]
      %v1221 = vld [vmem:[%s4 + $0xbe8] sm:$0xff]
      %v1222 = vld [vmem:[%s4 + $0xbf0] sm:$0xff]
      %v1223 = vld [vmem:[%s4 + $0xbf8] sm:$0xff]
      %v1224 = vld [vmem:[%s4 + $0xc00] sm:$0xff]
      %v1225 = vld [vmem:[%s4 + $0xc08] sm:$0xff]
      %v1226 = vld [vmem:[%s4 + $0xc10] sm:$0xff]
      %v1227 = vld [vmem:[%s4 + $0xc18] sm:$0xff]
      %v1228 = vld [vmem:[%s4 + $0xc20] sm:$0xff]
      %v1229 = vld [vmem:[%s4 + $0xc28] sm:$0xff]
      %v1230 = vld [vmem:[%s4 + $0xc30] sm:$0xff]
      %v1231 = vld [vmem:[%s4 + $0xc38] sm:$0xff]
      %v1232 = vld [vmem:[%s4 + $0xc40] sm:$0xff]
      %v1233 = vld [vmem:[%s4 + $0xc48] sm:$0xff]
      %v1234 = vld [vmem:[%s4 + $0xc50] sm:$0xff]
      %v1235 = vld [vmem:[%s4 + $0xc58] sm:$0xff]
      %v1236 = vld [vmem:[%s4 + $0xc60] sm:$0xff]
      %v1237 = vld [vmem:[%s4 + $0xc68] sm:$0xff]
      %v1238 = vld [vmem:[%s4 + $0xc70] sm:$0xff]
      %v1239 = vld [vmem:[%s4 + $0xc78] sm:$0xff]
      %v1240 = vld [vmem:[%s4 + $0xc80] sm:$0xff]
      %v1241 = vld [vmem:[%s4 + $0xc88] sm:$0xff]
      %v1242 = vld [vmem:[%s4 + $0xc90] sm:$0xff]
      %v1243 = vld [vmem:[%s4 + $0xc98] sm:$0xff]
      %v1244 = vld [vmem:[%s4 + $0xca0] sm:$0xff]
      %v1245 = vld [vmem:[%s4 + $0xca8] sm:$0xff]
      %v1246 = vld [vmem:[%s4 + $0xcb0] sm:$0xff]
      %v1247 = vld [vmem:[%s4 + $0xcb8] sm:$0xff]
      %v1248 = vld [vmem:[%s4 + $0xcc0] sm:$0xff]
      %v1249 = vld [vmem:[%s4 + $0xcc8] sm:$0xff]
      %v1250 = vld [vmem:[%s4 + $0xcd0] sm:$0xff]
      %v1251 = vld [vmem:[%s4 + $0xcd8] sm:$0xff]
      %v1252 = vld [vmem:[%s4 + $0xce0] sm:$0xff]
      %v1253 = vld [vmem:[%s4 + $0xce8] sm:$0xff]
      %v1254 = vld [vmem:[%s4 + $0xcf0] sm:$0xff]
      %v1255 = vld [vmem:[%s4 + $0xcf8] sm:$0xff]
      %v1256 = vld [vmem:[%s4 + $0xd00] sm:$0xff]
      %v1257 = vld [vmem:[%s4 + $0xd08] sm:$0xff]
      %v1258 = vld [vmem:[%s4 + $0xd10] sm:$0xff]
      %v1259 = vld [vmem:[%s4 + $0xd18] sm:$0xff]
      %v1260 = vld [vmem:[%s4 + $0xd20] sm:$0xff]
      %v1261 = vld [vmem:[%s4 + $0xd28] sm:$0xff]
      %v1262 = vld [vmem:[%s4 + $0xd30] sm:$0xff]
      %v1263 = vld [vmem:[%s4 + $0xd38] sm:$0xff]
      %v1264 = vld [vmem:[%s4 + $0xd40] sm:$0xff]
      %v1265 = vld [vmem:[%s4 + $0xd48] sm:$0xff]
      %v1266 = vld [vmem:[%s4 + $0xd50] sm:$0xff]
      %v1267 = vld [vmem:[%s4 + $0xd58] sm:$0xff]
      %v1268 = vld [vmem:[%s4 + $0xd60] sm:$0xff]
      %v1269 = vld [vmem:[%s4 + $0xd68] sm:$0xff]
      %v1270 = vld [vmem:[%s4 + $0xd70] sm:$0xff]
      %v1271 = vld [vmem:[%s4 + $0xd78] sm:$0xff]
      %v1272 = vld [vmem:[%s4 + $0xd80] sm:$0xff]
      %v1273 = vld [vmem:[%s4 + $0xd88] sm:$0xff]
      %v1274 = vld [vmem:[%s4 + $0xd90] sm:$0xff]
      %v1275 = vld [vmem:[%s4 + $0xd98] sm:$0xff]
      %v1276 = vld [vmem:[%s4 + $0xda0] sm:$0xff]
      %v1277 = vld [vmem:[%s4 + $0xda8] sm:$0xff]
      %v1278 = vld [vmem:[%s4 + $0xdb0] sm:$0xff]
      %v1279 = vld [vmem:[%s4 + $0xdb8] sm:$0xff]
      %v1280 = vld [vmem:[%s4 + $0xdc0] sm:$0xff]
      %v1281 = vld [vmem:[%s4 + $0xdc8] sm:$0xff]
      %v1282 = vld [vmem:[%s4 + $0xdd0] sm:$0xff]
      %v1283 = vld [vmem:[%s4 + $0xdd8] sm:$0xff]
      %v1284 = vld [vmem:[%s4 + $0xde0] sm:$0xff]
      %v1285 = vld [vmem:[%s4 + $0xde8] sm:$0xff]
      %v1286 = vld [vmem:[%s4 + $0xdf0] sm:$0xff]
      %v1287 = vld [vmem:[%s4 + $0xdf8] sm:$0xff]
      %v1288 = vld [vmem:[%s4 + $0xe00] sm:$0xff]
      %v1289 = vld [vmem:[%s4 + $0xe08] sm:$0xff]
      %v1290 = vld [vmem:[%s4 + $0xe10] sm:$0xff]
      %v1291 = vld [vmem:[%s4 + $0xe18] sm:$0xff]
      %v1292 = vld [vmem:[%s4 + $0xe20] sm:$0xff]
      %v1293 = vld [vmem:[%s4 + $0xe28] sm:$0xff]
      %v1294 = vld [vmem:[%s4 + $0xe30] sm:$0xff]
      %v1295 = vld [vmem:[%s4 + $0xe38] sm:$0xff]
      %v1296 = vld [vmem:[%s4 + $0xe40] sm:$0xff]
      %v1297 = vld [vmem:[%s4 + $0xe48] sm:$0xff]
      %v1298 = vld [vmem:[%s4 + $0xe50] sm:$0xff]
      %v1299 = vld [vmem:[%s4 + $0xe58] sm:$0xff]
      %v1300 = vld [vmem:[%s4 + $0xe60] sm:$0xff]
      %v1301 = vld [vmem:[%s4 + $0xe68] sm:$0xff]
      %v1302 = vld [vmem:[%s4 + $0xe70] sm:$0xff]
      %v1303 = vld [vmem:[%s4 + $0xe78] sm:$0xff]
      %v1304 = vld [vmem:[%s4 + $0xe80] sm:$0xff]
      %v1305 = vld [vmem:[%s4 + $0xe88] sm:$0xff]
      %v1306 = vld [vmem:[%s4 + $0xe90] sm:$0xff]
      %v1307 = vld [vmem:[%s4 + $0xe98] sm:$0xff]
      %v1308 = vld [vmem:[%s4 + $0xea0] sm:$0xff]
      %v1309 = vld [vmem:[%s4 + $0xea8] sm:$0xff]
      %v1310 = vld [vmem:[%s4 + $0xeb0] sm:$0xff]
      %v1311 = vld [vmem:[%s4 + $0xeb8] sm:$0xff]
      %v1312 = vld [vmem:[%s4 + $0xec0] sm:$0xff]
      %v1313 = vld [vmem:[%s4 + $0xec8] sm:$0xff]
      %v1314 = vld [vmem:[%s4 + $0xed0] sm:$0xff]
      %v1315 = vld [vmem:[%s4 + $0xed8] sm:$0xff]
      %v1316 = vld [vmem:[%s4 + $0xee0] sm:$0xff]
      %v1317 = vld [vmem:[%s4 + $0xee8] sm:$0xff]
      %v1318 = vld [vmem:[%s4 + $0xef0] sm:$0xff]
      %v1319 = vld [vmem:[%s4 + $0xef8] sm:$0xff]
      %v1320 = vld [vmem:[%s4 + $0xf00] sm:$0xff]
      %v1321 = vld [vmem:[%s4 + $0xf08] sm:$0xff]
      %v1322 = vld [vmem:[%s4 + $0xf10] sm:$0xff]
      %v1323 = vld [vmem:[%s4 + $0xf18] sm:$0xff]
      %v1324 = vld [vmem:[%s4 + $0xf20] sm:$0xff]
      %v1325 = vld [vmem:[%s4 + $0xf28] sm:$0xff]
      %v1326 = vld [vmem:[%s4 + $0xf30] sm:$0xff]
      %v1327 = vld [vmem:[%s4 + $0xf38] sm:$0xff]
      %v1328 = vld [vmem:[%s4 + $0xf40] sm:$0xff]
      %v1329 = vld [vmem:[%s4 + $0xf48] sm:$0xff]
      %v1330 = vld [vmem:[%s4 + $0xf50] sm:$0xff]
      %v1331 = vld [vmem:[%s4 + $0xf58] sm:$0xff]
      %v1332 = vld [vmem:[%s4 + $0xf60] sm:$0xff]
      %v1333 = vld [vmem:[%s4 + $0xf68] sm:$0xff]
      %v1334 = vld [vmem:[%s4 + $0xf70] sm:$0xff]
      %v1335 = vld [vmem:[%s4 + $0xf78] sm:$0xff]
      %v1336 = vld [vmem:[%s4 + $0xf80] sm:$0xff]
      %v1337 = vld [vmem:[%s4 + $0xf88] sm:$0xff]
      %v1338 = vld [vmem:[%s4 + $0xf90] sm:$0xff]
      %v1339 = vld [vmem:[%s4 + $0xf98] sm:$0xff]
      %v1340 = vld [vmem:[%s4 + $0xfa0] sm:$0xff]
      %v1341 = vld [vmem:[%s4 + $0xfa8] sm:$0xff]
      %v1342 = vld [vmem:[%s4 + $0xfb0] sm:$0xff]
      %v1343 = vld [vmem:[%s4 + $0xfb8] sm:$0xff]
      %v1344 = vld [vmem:[%s4 + $0xfc0] sm:$0xff]
      %v1345 = vld [vmem:[%s4 + $0xfc8] sm:$0xff]
      %v1346 = vld [vmem:[%s4 + $0xfd0] sm:$0xff]
      %v1347 = vld [vmem:[%s4 + $0xfd8] sm:$0xff]
      %v1348 = vld [vmem:[%s4 + $0xfe0] sm:$0xff]
      %v1349 = vld [vmem:[%s4 + $0xfe8] sm:$0xff]
      %v1350 = vld [vmem:[%s4 + $0xff0] sm:$0xff]
      %v1351 = vld [vmem:[%s4 + $0xff8] sm:$0xff]
      %v1352 = vld [vmem:[%s4 + $0x1000] sm:$0xff]
      %v1353 = vld [vmem:[%s4 + $0x1008] sm:$0xff]
      %v1354 = vld [vmem:[%s4 + $0x1010] sm:$0xff]
      %v1355 = vld [vmem:[%s4 + $0x1018] sm:$0xff]
      %v1356 = vld [vmem:[%s4 + $0x1020] sm:$0xff]
      %v1357 = vld [vmem:[%s4 + $0x1028] sm:$0xff]
      %v1358 = vld [vmem:[%s4 + $0x1030] sm:$0xff]
      %v1359 = vld [vmem:[%s4 + $0x1038] sm:$0xff]
      %v1360 = vld [vmem:[%s4 + $0x1040] sm:$0xff]
      %v1361 = vld [vmem:[%s4 + $0x1048] sm:$0xff]
      %v1362 = vld [vmem:[%s4 + $0x1050] sm:$0xff]
      %v1363 = vld [vmem:[%s4 + $0x1058] sm:$0xff]
      %v1364 = vld [vmem:[%s4 + $0x1060] sm:$0xff]
      %v1365 = vld [vmem:[%s4 + $0x1068] sm:$0xff]
      %v1366 = vld [vmem:[%s4 + $0x1070] sm:$0xff]
      %v1367 = vld [vmem:[%s4 + $0x1078] sm:$0xff]
      %v1368 = vld [vmem:[%s4 + $0x1080] sm:$0xff]
      %v1369 = vld [vmem:[%s4 + $0x1088] sm:$0xff]
      %v1370 = vld [vmem:[%s4 + $0x1090] sm:$0xff]
      %v1371 = vld [vmem:[%s4 + $0x1098] sm:$0xff]
      %v1372 = vld [vmem:[%s4 + $0x10a0] sm:$0xff]
      %v1373 = vld [vmem:[%s4 + $0x10a8] sm:$0xff]
      %v1374 = vld [vmem:[%s4 + $0x10b0] sm:$0xff]
      %v1375 = vld [vmem:[%s4 + $0x10b8] sm:$0xff]
      %v1376 = vld [vmem:[%s4 + $0x10c0] sm:$0xff]
      %v1377 = vld [vmem:[%s4 + $0x10c8] sm:$0xff]
      %v1378 = vld [vmem:[%s4 + $0x10d0] sm:$0xff]
      %v1379 = vld [vmem:[%s4 + $0x10d8] sm:$0xff]
      %v1380 = vld [vmem:[%s4 + $0x10e0] sm:$0xff]
      %v1381 = vld [vmem:[%s4 + $0x10e8] sm:$0xff]
      %v1382 = vld [vmem:[%s4 + $0x10f0] sm:$0xff]
      %v1383 = vld [vmem:[%s4 + $0x10f8] sm:$0xff]
      %v1384 = vld [vmem:[%s4 + $0x1100] sm:$0xff]
      %v1385 = vld [vmem:[%s4 + $0x1108] sm:$0xff]
      %v1386 = vld [vmem:[%s4 + $0x1110] sm:$0xff]
      %v1387 = vld [vmem:[%s4 + $0x1118] sm:$0xff]
      %v1388 = vld [vmem:[%s4 + $0x1120] sm:$0xff]
      %v1389 = vld [vmem:[%s4 + $0x1128] sm:$0xff]
      %v1390 = vld [vmem:[%s4 + $0x1130] sm:$0xff]
      %v1391 = vld [vmem:[%s4 + $0x1138] sm:$0xff]
      %v1392 = vld [vmem:[%s4 + $0x1140] sm:$0xff]
      %v1393 = vld [vmem:[%s4 + $0x1148] sm:$0xff]
      %v1394 = vld [vmem:[%s4 + $0x1150] sm:$0xff]
      %v1395 = vld [vmem:[%s4 + $0x1158] sm:$0xff]
      %v1396 = vld [vmem:[%s4 + $0x1160] sm:$0xff]
      %v1397 = vld [vmem:[%s4 + $0x1168] sm:$0xff]
      %v1398 = vld [vmem:[%s4 + $0x1170] sm:$0xff]
      %v1399 = vld [vmem:[%s4 + $0x1178] sm:$0xff]
      %v1400 = vld [vmem:[%s4 + $0x1180] sm:$0xff]
      %v1401 = vld [vmem:[%s4 + $0x1188] sm:$0xff]
      %v1402 = vld [vmem:[%s4 + $0x1190] sm:$0xff]
      %v1403 = vld [vmem:[%s4 + $0x1198] sm:$0xff]
      %v1404 = vld [vmem:[%s4 + $0x11a0] sm:$0xff]
      %v1405 = vld [vmem:[%s4 + $0x11a8] sm:$0xff]
      %v1406 = vld [vmem:[%s4 + $0x11b0] sm:$0xff]
      %v1407 = vld [vmem:[%s4 + $0x11b8] sm:$0xff]
      %v1408 = vld [vmem:[%s4 + $0x11c0] sm:$0xff]
      %v1409 = vld [vmem:[%s4 + $0x11c8] sm:$0xff]
      %v1410 = vld [vmem:[%s4 + $0x11d0] sm:$0xff]
      %v1411 = vld [vmem:[%s4 + $0x11d8] sm:$0xff]
      %v1412 = vld [vmem:[%s4 + $0x11e0] sm:$0xff]
      %v1413 = vld [vmem:[%s4 + $0x11e8] sm:$0xff]
      %v1414 = vld [vmem:[%s4 + $0x11f0] sm:$0xff]
      %v1415 = vld [vmem:[%s4 + $0x11f8] sm:$0xff]
      %v1416 = vld [vmem:[%s5] sm:$0xf]
      %v1418 = vlaneseq
      %v1419 = vshrl.u32 %v1418, 7
      %v1420 = vsub.s32 0, %v1419
      %v1421 = vrot.slane %v1416, %v1420
      %v1422 = vlaneseq
      %v1423 = vshrl.u32 %v1422, 7
      %v1424 = vsub.s32 1, %v1423
      %v1425 = vrot.slane %v1416, %v1424
      %v1426 = vlaneseq
      %v1427 = vshrl.u32 %v1426, 7
      %v1428 = vsub.s32 2, %v1427
      %v1429 = vrot.slane %v1416, %v1428
      %v1430 = vlaneseq
      %v1431 = vshrl.u32 %v1430, 7
      %v1432 = vsub.s32 3, %v1431
      %v1433 = vrot.slane %v1416, %v1432
      %v1438 = vcombine.low %v662, %v775
      %v1439 = vcombine.high %v662, %v775
      %v1441 = vunpack.c.l.s4 1966171168
      %v1442 = vunpack.c.0.s8 %v1441
      %v1443 = vlaneseq
      %v1444 = vshrl.u32 %v1443, 7
      %v1445 = vsub.s32 %v1442, %v1444
      %v1446 = vrot.slane %v1438, %v1445
      %v1448 = vunpack.c.l.s4 1966171168
      %v1449 = vunpack.c.0.s8 %v1448
      %v1450 = vlaneseq
      %v1451 = vshrl.u32 %v1450, 7
      %v1452 = vsub.s32 %v1449, %v1451
      %v1453 = vrot.slane %v1439, %v1452
      %v1454 = vcombine.high %v1446, %v1446
      %v1455 = vcombine.high %v1453, %v1453
      %v1457 = vunpack.c.l.s4 1966171168
      %v1458 = vunpack.c.0.s8 %v1457
      %v1459 = vlaneseq
      %v1460 = vshrl.u32 %v1459, 7
      %v1461 = vsub.s32 %v1458, %v1460
      %v1462 = vrot.slane %v1446, %v1461
      %v1464 = vunpack.c.l.s4 1966171168
      %v1465 = vunpack.c.0.s8 %v1464
      %v1466 = vlaneseq
      %v1467 = vshrl.u32 %v1466, 7
      %v1468 = vsub.s32 %v1465, %v1467
      %v1469 = vrot.slane %v1453, %v1468
      %v1471 = vunpack.c.l.s4 1966171168
      %v1472 = vunpack.c.0.s8 %v1471
      %v1473 = vlaneseq
      %v1474 = vshrl.u32 %v1473, 7
      %v1475 = vsub.s32 %v1472, %v1474
      %v1476 = vrot.slane %v1454, %v1475
      %v1478 = vunpack.c.l.s4 1966171168
      %v1479 = vunpack.c.0.s8 %v1478
      %v1480 = vlaneseq
      %v1481 = vshrl.u32 %v1480, 7
      %v1482 = vsub.s32 %v1479, %v1481
      %v1483 = vrot.slane %v1455, %v1482
      %v1484 = vcombine.high %v1462, %v1462
      %v1485 = vcombine.high %v1469, %v1469
      %v1486 = vcombine.high %v1476, %v1476
      %v1487 = vcombine.high %v1483, %v1483
      %v1488 = vcombine.low %v711, %v824
      %v1489 = vcombine.high %v711, %v824
      %v1491 = vunpack.c.l.s4 1966171168
      %v1492 = vunpack.c.0.s8 %v1491
      %v1493 = vlaneseq
      %v1494 = vshrl.u32 %v1493, 7
      %v1495 = vsub.s32 %v1492, %v1494
      %v1496 = vrot.slane %v1488, %v1495
      %v1498 = vunpack.c.l.s4 1966171168
      %v1499 = vunpack.c.0.s8 %v1498
      %v1500 = vlaneseq
      %v1501 = vshrl.u32 %v1500, 7
      %v1502 = vsub.s32 %v1499, %v1501
      %v1503 = vrot.slane %v1489, %v1502
      %v1504 = vcombine.high %v1496, %v1496
      %v1505 = vcombine.high %v1503, %v1503
      %v1507 = vunpack.c.l.s4 1966171168
      %v1508 = vunpack.c.0.s8 %v1507
      %v1509 = vlaneseq
      %v1510 = vshrl.u32 %v1509, 7
      %v1511 = vsub.s32 %v1508, %v1510
      %v1512 = vrot.slane %v1496, %v1511
      %v1514 = vunpack.c.l.s4 1966171168
      %v1515 = vunpack.c.0.s8 %v1514
      %v1516 = vlaneseq
      %v1517 = vshrl.u32 %v1516, 7
      %v1518 = vsub.s32 %v1515, %v1517
      %v1519 = vrot.slane %v1503, %v1518
      %v1521 = vunpack.c.l.s4 1966171168
      %v1522 = vunpack.c.0.s8 %v1521
      %v1523 = vlaneseq
      %v1524 = vshrl.u32 %v1523, 7
      %v1525 = vsub.s32 %v1522, %v1524
      %v1526 = vrot.slane %v1504, %v1525
      %v1528 = vunpack.c.l.s4 1966171168
      %v1529 = vunpack.c.0.s8 %v1528
      %v1530 = vlaneseq
      %v1531 = vshrl.u32 %v1530, 7
      %v1532 = vsub.s32 %v1529, %v1531
      %v1533 = vrot.slane %v1505, %v1532
      %v1534 = vcombine.high %v1512, %v1512
      %v1535 = vcombine.high %v1519, %v1519
      %v1536 = vcombine.high %v1526, %v1526
      %v1537 = vcombine.high %v1533, %v1533
      %v1538 = vcombine.low %v726, %v839
      %v1540 = vunpack.c.l.s4 1966171168
      %v1541 = vunpack.c.0.s8 %v1540
      %v1542 = vlaneseq
      %v1543 = vshrl.u32 %v1542, 7
      %v1544 = vsub.s32 %v1541, %v1543
      %v1545 = vrot.slane %v1538, %v1544
      %v1546 = vcombine.high %v1545, %v1545
      %v1548 = vunpack.c.l.s4 1966171168
      %v1549 = vunpack.c.0.s8 %v1548
      %v1550 = vlaneseq
      %v1551 = vshrl.u32 %v1550, 7
      %v1552 = vsub.s32 %v1549, %v1551
      %v1553 = vrot.slane %v1545, %v1552
      %v1555 = vunpack.c.l.s4 1966171168
      %v1556 = vunpack.c.0.s8 %v1555
      %v1557 = vlaneseq
      %v1558 = vshrl.u32 %v1557, 7
      %v1559 = vsub.s32 %v1556, %v1558
      %v1560 = vrot.slane %v1546, %v1559
      %v2155 = vunpack.c.l.b16 %v840
      %v2156 = vunpack.c.h.b16 %v840
      %v2157 = vunpack.c.l.b16 %v841
      %v2158 = vunpack.c.h.b16 %v841
      %v2159 = vunpack.c.l.b16 %v842
      %v2160 = vunpack.c.h.b16 %v842
      %v2161 = vunpack.c.l.b16 %v843
      %v2162 = vunpack.c.h.b16 %v843
      %v2163 = vunpack.c.l.b16 %v844
      %v2164 = vunpack.c.h.b16 %v844
      %v2165 = vunpack.c.l.b16 %v845
      %v2166 = vunpack.c.h.b16 %v845
      %v2167 = vunpack.c.l.b16 %v846
      %v2168 = vunpack.c.h.b16 %v846
      %v2169 = vunpack.c.l.b16 %v847
      %v2170 = vunpack.c.h.b16 %v847
      %v2171 = vunpack.c.l.b16 %v848
      %v2172 = vunpack.c.h.b16 %v848
      %v2173 = vunpack.c.l.b16 %v849
      %v2174 = vunpack.c.h.b16 %v849
      %v2175 = vunpack.c.l.b16 %v850
      %v2176 = vunpack.c.h.b16 %v850
      %v2177 = vunpack.c.l.b16 %v851
      %v2178 = vunpack.c.h.b16 %v851
      %v2179 = vunpack.c.l.b16 %v852
      %v2180 = vunpack.c.h.b16 %v852
      %v2181 = vunpack.c.l.b16 %v853
      %v2182 = vunpack.c.h.b16 %v853
      %v2183 = vunpack.c.l.b16 %v854
      %v2184 = vunpack.c.h.b16 %v854
      %v2185 = vunpack.c.l.b16 %v855
      %v2186 = vunpack.c.h.b16 %v855
      %v2187 = vunpack.c.l.b16 %v856
      %v2188 = vunpack.c.h.b16 %v856
      %v2189 = vunpack.c.l.b16 %v857
      %v2190 = vunpack.c.h.b16 %v857
      %v2191 = vunpack.c.l.b16 %v858
      %v2192 = vunpack.c.h.b16 %v858
      %v2193 = vunpack.c.l.b16 %v859
      %v2194 = vunpack.c.h.b16 %v859
      %v2195 = vunpack.c.l.b16 %v860
      %v2196 = vunpack.c.h.b16 %v860
      %v2197 = vunpack.c.l.b16 %v861
      %v2198 = vunpack.c.h.b16 %v861
      %v2199 = vunpack.c.l.b16 %v862
      %v2200 = vunpack.c.h.b16 %v862
      %v2201 = vunpack.c.l.b16 %v863
      %v2202 = vunpack.c.h.b16 %v863
      %v2203 = vunpack.c.l.b16 %v864
      %v2204 = vunpack.c.h.b16 %v864
      %v2205 = vunpack.c.l.b16 %v865
      %v2206 = vunpack.c.h.b16 %v865
      %v2207 = vunpack.c.l.b16 %v866
      %v2208 = vunpack.c.h.b16 %v866
      %v2209 = vunpack.c.l.b16 %v867
      %v2210 = vunpack.c.h.b16 %v867
      %v2211 = vunpack.c.l.b16 %v868
      %v2212 = vunpack.c.h.b16 %v868
      %v2213 = vunpack.c.l.b16 %v869
      %v2214 = vunpack.c.h.b16 %v869
      %v2215 = vunpack.c.l.b16 %v870
      %v2216 = vunpack.c.h.b16 %v870
      %v2217 = vunpack.c.l.b16 %v871
      %v2218 = vunpack.c.h.b16 %v871
      %v2219 = vunpack.c.l.b16 %v872
      %v2220 = vunpack.c.h.b16 %v872
      %v2221 = vunpack.c.l.b16 %v873
      %v2222 = vunpack.c.h.b16 %v873
      %v2223 = vunpack.c.l.b16 %v874
      %v2224 = vunpack.c.h.b16 %v874
      %v2225 = vunpack.c.l.b16 %v875
      %v2226 = vunpack.c.h.b16 %v875
      %v2227 = vunpack.c.l.b16 %v876
      %v2228 = vunpack.c.h.b16 %v876
      %v2229 = vunpack.c.l.b16 %v877
      %v2230 = vunpack.c.h.b16 %v877
      %v2231 = vunpack.c.l.b16 %v878
      %v2232 = vunpack.c.h.b16 %v878
      %v2233 = vunpack.c.l.b16 %v879
      %v2234 = vunpack.c.h.b16 %v879
      %v2235 = vunpack.c.l.b16 %v880
      %v2236 = vunpack.c.h.b16 %v880
      %v2237 = vunpack.c.l.b16 %v881
      %v2238 = vunpack.c.h.b16 %v881
      %v2239 = vunpack.c.l.b16 %v882
      %v2240 = vunpack.c.h.b16 %v882
      %v2241 = vunpack.c.l.b16 %v883
      %v2242 = vunpack.c.h.b16 %v883
      %v2243 = vunpack.c.l.b16 %v884
      %v2244 = vunpack.c.h.b16 %v884
      %v2245 = vunpack.c.l.b16 %v885
      %v2246 = vunpack.c.h.b16 %v885
      %v2247 = vunpack.c.l.b16 %v886
      %v2248 = vunpack.c.h.b16 %v886
      %v2249 = vunpack.c.l.b16 %v887
      %v2250 = vunpack.c.h.b16 %v887
      %v2251 = vunpack.c.l.b16 %v888
      %v2252 = vunpack.c.h.b16 %v888
      %v2253 = vunpack.c.l.b16 %v889
      %v2254 = vunpack.c.h.b16 %v889
      %v2255 = vunpack.c.l.b16 %v890
      %v2256 = vunpack.c.h.b16 %v890
      %v2257 = vunpack.c.l.b16 %v891
      %v2258 = vunpack.c.h.b16 %v891
      %v2259 = vunpack.c.l.b16 %v892
      %v2260 = vunpack.c.h.b16 %v892
      %v2261 = vunpack.c.l.b16 %v893
      %v2262 = vunpack.c.h.b16 %v893
      %v2263 = vunpack.c.l.b16 %v894
      %v2264 = vunpack.c.h.b16 %v894
      %v2265 = vunpack.c.l.b16 %v895
      %v2266 = vunpack.c.h.b16 %v895
      %v2267 = vunpack.c.l.b16 %v896
      %v2268 = vunpack.c.h.b16 %v896
      %v2269 = vunpack.c.l.b16 %v897
      %v2270 = vunpack.c.h.b16 %v897
      %v2271 = vunpack.c.l.b16 %v898
      %v2272 = vunpack.c.h.b16 %v898
      %v2273 = vunpack.c.l.b16 %v899
      %v2274 = vunpack.c.h.b16 %v899
      %v2275 = vunpack.c.l.b16 %v900
      %v2276 = vunpack.c.h.b16 %v900
      %v2277 = vunpack.c.l.b16 %v901
      %v2278 = vunpack.c.h.b16 %v901
      %v2279 = vunpack.c.l.b16 %v902
      %v2280 = vunpack.c.h.b16 %v902
      %v2281 = vunpack.c.l.b16 %v903
      %v2282 = vunpack.c.h.b16 %v903
      %v2283 = vunpack.c.l.b16 %v904
      %v2284 = vunpack.c.h.b16 %v904
      %v2285 = vunpack.c.l.b16 %v905
      %v2286 = vunpack.c.h.b16 %v905
      %v2287 = vunpack.c.l.b16 %v906
      %v2288 = vunpack.c.h.b16 %v906
      %v2289 = vunpack.c.l.b16 %v907
      %v2290 = vunpack.c.h.b16 %v907
      %v2291 = vunpack.c.l.b16 %v908
      %v2292 = vunpack.c.h.b16 %v908
      %v2293 = vunpack.c.l.b16 %v909
      %v2294 = vunpack.c.h.b16 %v909
      %v2295 = vunpack.c.l.b16 %v910
      %v2296 = vunpack.c.h.b16 %v910
      %v2297 = vunpack.c.l.b16 %v911
      %v2298 = vunpack.c.h.b16 %v911
      %v2299 = vunpack.c.l.b16 %v912
      %v2300 = vunpack.c.h.b16 %v912
      %v2301 = vunpack.c.l.b16 %v913
      %v2302 = vunpack.c.h.b16 %v913
      %v2303 = vunpack.c.l.b16 %v914
      %v2304 = vunpack.c.h.b16 %v914
      %v2305 = vunpack.c.l.b16 %v915
      %v2306 = vunpack.c.h.b16 %v915
      %v2307 = vunpack.c.l.b16 %v916
      %v2308 = vunpack.c.h.b16 %v916
      %v2309 = vunpack.c.l.b16 %v917
      %v2310 = vunpack.c.h.b16 %v917
      %v2311 = vunpack.c.l.b16 %v918
      %v2312 = vunpack.c.h.b16 %v918
      %v2313 = vunpack.c.l.b16 %v919
      %v2314 = vunpack.c.h.b16 %v919
      %v2315 = vunpack.c.l.b16 %v920
      %v2316 = vunpack.c.h.b16 %v920
      %v2317 = vunpack.c.l.b16 %v921
      %v2318 = vunpack.c.h.b16 %v921
      %v2319 = vunpack.c.l.b16 %v922
      %v2320 = vunpack.c.h.b16 %v922
      %v2321 = vunpack.c.l.b16 %v923
      %v2322 = vunpack.c.h.b16 %v923
      %v2323 = vunpack.c.l.b16 %v924
      %v2324 = vunpack.c.h.b16 %v924
      %v2325 = vunpack.c.l.b16 %v925
      %v2326 = vunpack.c.h.b16 %v925
      %v2327 = vunpack.c.l.b16 %v926
      %v2328 = vunpack.c.h.b16 %v926
      %v2329 = vunpack.c.l.b16 %v927
      %v2330 = vunpack.c.h.b16 %v927
      %v2331 = vunpack.c.l.b16 %v928
      %v2332 = vunpack.c.h.b16 %v928
      %v2333 = vunpack.c.l.b16 %v929
      %v2334 = vunpack.c.h.b16 %v929
      %v2335 = vunpack.c.l.b16 %v930
      %v2336 = vunpack.c.h.b16 %v930
      %v2337 = vunpack.c.l.b16 %v931
      %v2338 = vunpack.c.h.b16 %v931
      %v2339 = vunpack.c.l.b16 %v932
      %v2340 = vunpack.c.h.b16 %v932
      %v2341 = vunpack.c.l.b16 %v933
      %v2342 = vunpack.c.h.b16 %v933
      %v2343 = vunpack.c.l.b16 %v934
      %v2344 = vunpack.c.h.b16 %v934
      %v2345 = vunpack.c.l.b16 %v935
      %v2346 = vunpack.c.h.b16 %v935
      %v2347 = vunpack.c.l.b16 %v936
      %v2348 = vunpack.c.h.b16 %v936
      %v2349 = vunpack.c.l.b16 %v937
      %v2350 = vunpack.c.h.b16 %v937
      %v2351 = vunpack.c.l.b16 %v938
      %v2352 = vunpack.c.h.b16 %v938
      %v2353 = vunpack.c.l.b16 %v939
      %v2354 = vunpack.c.h.b16 %v939
      %v2355 = vunpack.c.l.b16 %v940
      %v2356 = vunpack.c.h.b16 %v940
      %v2357 = vunpack.c.l.b16 %v941
      %v2358 = vunpack.c.h.b16 %v941
      %v2359 = vunpack.c.l.b16 %v942
      %v2360 = vunpack.c.h.b16 %v942
      %v2361 = vunpack.c.l.b16 %v943
      %v2362 = vunpack.c.h.b16 %v943
      %v2363 = vunpack.c.l.b16 %v944
      %v2364 = vunpack.c.h.b16 %v944
      %v2365 = vunpack.c.l.b16 %v945
      %v2366 = vunpack.c.h.b16 %v945
      %v2367 = vunpack.c.l.b16 %v946
      %v2368 = vunpack.c.h.b16 %v946
      %v2369 = vunpack.c.l.b16 %v947
      %v2370 = vunpack.c.h.b16 %v947
      %v2371 = vunpack.c.l.b16 %v948
      %v2372 = vunpack.c.h.b16 %v948
      %v2373 = vunpack.c.l.b16 %v949
      %v2374 = vunpack.c.h.b16 %v949
      %v2375 = vunpack.c.l.b16 %v950
      %v2376 = vunpack.c.h.b16 %v950
      %v2377 = vunpack.c.l.b16 %v951
      %v2378 = vunpack.c.h.b16 %v951
      %v2379 = vunpack.c.l.b16 %v952
      %v2380 = vunpack.c.h.b16 %v952
      %v2381 = vunpack.c.l.b16 %v953
      %v2382 = vunpack.c.h.b16 %v953
      %v2383 = vunpack.c.l.b16 %v954
      %v2384 = vunpack.c.h.b16 %v954
      %v2385 = vunpack.c.l.b16 %v955
      %v2386 = vunpack.c.h.b16 %v955
      %v2387 = vunpack.c.l.b16 %v956
      %v2388 = vunpack.c.h.b16 %v956
      %v2389 = vunpack.c.l.b16 %v957
      %v2390 = vunpack.c.h.b16 %v957
      %v2391 = vunpack.c.l.b16 %v958
      %v2392 = vunpack.c.h.b16 %v958
      %v2393 = vunpack.c.l.b16 %v959
      %v2394 = vunpack.c.h.b16 %v959
      %v2395 = vunpack.c.l.b16 %v960
      %v2396 = vunpack.c.h.b16 %v960
      %v2397 = vunpack.c.l.b16 %v961
      %v2398 = vunpack.c.h.b16 %v961
      %v2399 = vunpack.c.l.b16 %v962
      %v2400 = vunpack.c.h.b16 %v962
      %v2401 = vunpack.c.l.b16 %v963
      %v2402 = vunpack.c.h.b16 %v963
      %v2403 = vunpack.c.l.b16 %v964
      %v2404 = vunpack.c.h.b16 %v964
      %v2405 = vunpack.c.l.b16 %v965
      %v2406 = vunpack.c.h.b16 %v965
      %v2407 = vunpack.c.l.b16 %v966
      %v2408 = vunpack.c.h.b16 %v966
      %v2409 = vunpack.c.l.b16 %v967
      %v2410 = vunpack.c.h.b16 %v967
      %v2411 = vunpack.c.l.b16 %v968
      %v2412 = vunpack.c.h.b16 %v968
      %v2413 = vunpack.c.l.b16 %v969
      %v2414 = vunpack.c.h.b16 %v969
      %v2415 = vunpack.c.l.b16 %v970
      %v2416 = vunpack.c.h.b16 %v970
      %v2417 = vunpack.c.l.b16 %v971
      %v2418 = vunpack.c.h.b16 %v971
      %v2419 = vunpack.c.l.b16 %v972
      %v2420 = vunpack.c.h.b16 %v972
      %v2421 = vunpack.c.l.b16 %v973
      %v2422 = vunpack.c.h.b16 %v973
      %v2423 = vunpack.c.l.b16 %v974
      %v2424 = vunpack.c.h.b16 %v974
      %v2425 = vunpack.c.l.b16 %v975
      %v2426 = vunpack.c.h.b16 %v975
      %v2427 = vunpack.c.l.b16 %v976
      %v2428 = vunpack.c.h.b16 %v976
      %v2429 = vunpack.c.l.b16 %v977
      %v2430 = vunpack.c.h.b16 %v977
      %v2431 = vunpack.c.l.b16 %v978
      %v2432 = vunpack.c.h.b16 %v978
      %v2433 = vunpack.c.l.b16 %v979
      %v2434 = vunpack.c.h.b16 %v979
      %v2435 = vunpack.c.l.b16 %v980
      %v2436 = vunpack.c.h.b16 %v980
      %v2437 = vunpack.c.l.b16 %v981
      %v2438 = vunpack.c.h.b16 %v981
      %v2439 = vunpack.c.l.b16 %v982
      %v2440 = vunpack.c.h.b16 %v982
      %v2441 = vunpack.c.l.b16 %v983
      %v2442 = vunpack.c.h.b16 %v983
      %v2443 = vunpack.c.l.b16 %v984
      %v2444 = vunpack.c.h.b16 %v984
      %v2445 = vunpack.c.l.b16 %v985
      %v2446 = vunpack.c.h.b16 %v985
      %v2447 = vunpack.c.l.b16 %v986
      %v2448 = vunpack.c.h.b16 %v986
      %v2449 = vunpack.c.l.b16 %v987
      %v2450 = vunpack.c.h.b16 %v987
      %v2451 = vunpack.c.l.b16 %v988
      %v2452 = vunpack.c.h.b16 %v988
      %v2453 = vunpack.c.l.b16 %v989
      %v2454 = vunpack.c.h.b16 %v989
      %v2455 = vunpack.c.l.b16 %v990
      %v2456 = vunpack.c.h.b16 %v990
      %v2457 = vunpack.c.l.b16 %v991
      %v2458 = vunpack.c.h.b16 %v991
      %v2459 = vunpack.c.l.b16 %v992
      %v2460 = vunpack.c.h.b16 %v992
      %v2461 = vunpack.c.l.b16 %v993
      %v2462 = vunpack.c.h.b16 %v993
      %v2463 = vunpack.c.l.b16 %v994
      %v2464 = vunpack.c.h.b16 %v994
      %v2465 = vunpack.c.l.b16 %v995
      %v2466 = vunpack.c.h.b16 %v995
      %v2467 = vunpack.c.l.b16 %v996
      %v2468 = vunpack.c.h.b16 %v996
      %v2469 = vunpack.c.l.b16 %v997
      %v2470 = vunpack.c.h.b16 %v997
      %v2471 = vunpack.c.l.b16 %v998
      %v2472 = vunpack.c.h.b16 %v998
      %v2473 = vunpack.c.l.b16 %v999
      %v2474 = vunpack.c.h.b16 %v999
      %v2475 = vunpack.c.l.b16 %v1000
      %v2476 = vunpack.c.h.b16 %v1000
      %v2477 = vunpack.c.l.b16 %v1001
      %v2478 = vunpack.c.h.b16 %v1001
      %v2479 = vunpack.c.l.b16 %v1002
      %v2480 = vunpack.c.h.b16 %v1002
      %v2481 = vunpack.c.l.b16 %v1003
      %v2482 = vunpack.c.h.b16 %v1003
      %v2483 = vunpack.c.l.b16 %v1004
      %v2484 = vunpack.c.h.b16 %v1004
      %v2485 = vunpack.c.l.b16 %v1005
      %v2486 = vunpack.c.h.b16 %v1005
      %v2487 = vunpack.c.l.b16 %v1006
      %v2488 = vunpack.c.h.b16 %v1006
      %v2489 = vunpack.c.l.b16 %v1007
      %v2490 = vunpack.c.h.b16 %v1007
      %v2491 = vunpack.c.l.b16 %v1008
      %v2492 = vunpack.c.h.b16 %v1008
      %v2493 = vunpack.c.l.b16 %v1009
      %v2494 = vunpack.c.h.b16 %v1009
      %v2495 = vunpack.c.l.b16 %v1010
      %v2496 = vunpack.c.h.b16 %v1010
      %v2497 = vunpack.c.l.b16 %v1011
      %v2498 = vunpack.c.h.b16 %v1011
      %v2499 = vunpack.c.l.b16 %v1012
      %v2500 = vunpack.c.h.b16 %v1012
      %v2501 = vunpack.c.l.b16 %v1013
      %v2502 = vunpack.c.h.b16 %v1013
      %v2503 = vunpack.c.l.b16 %v1014
      %v2504 = vunpack.c.h.b16 %v1014
      %v2505 = vunpack.c.l.b16 %v1015
      %v2506 = vunpack.c.h.b16 %v1015
      %v2507 = vunpack.c.l.b16 %v1016
      %v2508 = vunpack.c.h.b16 %v1016
      %v2509 = vunpack.c.l.b16 %v1017
      %v2510 = vunpack.c.h.b16 %v1017
      %v2511 = vunpack.c.l.b16 %v1018
      %v2512 = vunpack.c.h.b16 %v1018
      %v2513 = vunpack.c.l.b16 %v1019
      %v2514 = vunpack.c.h.b16 %v1019
      %v2515 = vunpack.c.l.b16 %v1020
      %v2516 = vunpack.c.h.b16 %v1020
      %v2517 = vunpack.c.l.b16 %v1021
      %v2518 = vunpack.c.h.b16 %v1021
      %v2519 = vunpack.c.l.b16 %v1022
      %v2520 = vunpack.c.h.b16 %v1022
      %v2521 = vunpack.c.l.b16 %v1023
      %v2522 = vunpack.c.h.b16 %v1023
      %v2523 = vunpack.c.l.b16 %v1024
      %v2524 = vunpack.c.h.b16 %v1024
      %v2525 = vunpack.c.l.b16 %v1025
      %v2526 = vunpack.c.h.b16 %v1025
      %v2527 = vunpack.c.l.b16 %v1026
      %v2528 = vunpack.c.h.b16 %v1026
      %v2529 = vunpack.c.l.b16 %v1027
      %v2530 = vunpack.c.h.b16 %v1027
      %v2531 = vunpack.c.l.b16 %v1028
      %v2532 = vunpack.c.h.b16 %v1028
      %v2533 = vunpack.c.l.b16 %v1029
      %v2534 = vunpack.c.h.b16 %v1029
      %v2535 = vunpack.c.l.b16 %v1030
      %v2536 = vunpack.c.h.b16 %v1030
      %v2537 = vunpack.c.l.b16 %v1031
      %v2538 = vunpack.c.h.b16 %v1031
      %v2539 = vunpack.c.l.b16 %v1032
      %v2540 = vunpack.c.h.b16 %v1032
      %v2541 = vunpack.c.l.b16 %v1033
      %v2542 = vunpack.c.h.b16 %v1033
      %v2543 = vunpack.c.l.b16 %v1034
      %v2544 = vunpack.c.h.b16 %v1034
      %v2545 = vunpack.c.l.b16 %v1035
      %v2546 = vunpack.c.h.b16 %v1035
      %v2547 = vunpack.c.l.b16 %v1036
      %v2548 = vunpack.c.h.b16 %v1036
      %v2549 = vunpack.c.l.b16 %v1037
      %v2550 = vunpack.c.h.b16 %v1037
      %v2551 = vunpack.c.l.b16 %v1038
      %v2552 = vunpack.c.h.b16 %v1038
      %v2553 = vunpack.c.l.b16 %v1039
      %v2554 = vunpack.c.h.b16 %v1039
      %v2555 = vunpack.c.l.b16 %v1040
      %v2556 = vunpack.c.h.b16 %v1040
      %v2557 = vunpack.c.l.b16 %v1041
      %v2558 = vunpack.c.h.b16 %v1041
      %v2559 = vunpack.c.l.b16 %v1042
      %v2560 = vunpack.c.h.b16 %v1042
      %v2561 = vunpack.c.l.b16 %v1043
      %v2562 = vunpack.c.h.b16 %v1043
      %v2563 = vunpack.c.l.b16 %v1044
      %v2564 = vunpack.c.h.b16 %v1044
      %v2565 = vunpack.c.l.b16 %v1045
      %v2566 = vunpack.c.h.b16 %v1045
      %v2567 = vunpack.c.l.b16 %v1046
      %v2568 = vunpack.c.h.b16 %v1046
      %v2569 = vunpack.c.l.b16 %v1047
      %v2570 = vunpack.c.h.b16 %v1047
      %v2571 = vunpack.c.l.b16 %v1048
      %v2572 = vunpack.c.h.b16 %v1048
      %v2573 = vunpack.c.l.b16 %v1049
      %v2574 = vunpack.c.h.b16 %v1049
      %v2575 = vunpack.c.l.b16 %v1050
      %v2576 = vunpack.c.h.b16 %v1050
      %v2577 = vunpack.c.l.b16 %v1051
      %v2578 = vunpack.c.h.b16 %v1051
      %v2579 = vunpack.c.l.b16 %v1052
      %v2580 = vunpack.c.h.b16 %v1052
      %v2581 = vunpack.c.l.b16 %v1053
      %v2582 = vunpack.c.h.b16 %v1053
      %v2583 = vunpack.c.l.b16 %v1054
      %v2584 = vunpack.c.h.b16 %v1054
      %v2585 = vunpack.c.l.b16 %v1055
      %v2586 = vunpack.c.h.b16 %v1055
      %v2587 = vunpack.c.l.b16 %v1056
      %v2588 = vunpack.c.h.b16 %v1056
      %v2589 = vunpack.c.l.b16 %v1057
      %v2590 = vunpack.c.h.b16 %v1057
      %v2591 = vunpack.c.l.b16 %v1058
      %v2592 = vunpack.c.h.b16 %v1058
      %v2593 = vunpack.c.l.b16 %v1059
      %v2594 = vunpack.c.h.b16 %v1059
      %v2595 = vunpack.c.l.b16 %v1060
      %v2596 = vunpack.c.h.b16 %v1060
      %v2597 = vunpack.c.l.b16 %v1061
      %v2598 = vunpack.c.h.b16 %v1061
      %v2599 = vunpack.c.l.b16 %v1062
      %v2600 = vunpack.c.h.b16 %v1062
      %v2601 = vunpack.c.l.b16 %v1063
      %v2602 = vunpack.c.h.b16 %v1063
      %v2603 = vunpack.c.l.b16 %v1064
      %v2604 = vunpack.c.h.b16 %v1064
      %v2605 = vunpack.c.l.b16 %v1065
      %v2606 = vunpack.c.h.b16 %v1065
      %v2607 = vunpack.c.l.b16 %v1066
      %v2608 = vunpack.c.h.b16 %v1066
      %v2609 = vunpack.c.l.b16 %v1067
      %v2610 = vunpack.c.h.b16 %v1067
      %v2611 = vunpack.c.l.b16 %v1068
      %v2612 = vunpack.c.h.b16 %v1068
      %v2613 = vunpack.c.l.b16 %v1069
      %v2614 = vunpack.c.h.b16 %v1069
      %v2615 = vunpack.c.l.b16 %v1070
      %v2616 = vunpack.c.h.b16 %v1070
      %v2617 = vunpack.c.l.b16 %v1071
      %v2618 = vunpack.c.h.b16 %v1071
      %v2619 = vunpack.c.l.b16 %v1072
      %v2620 = vunpack.c.h.b16 %v1072
      %v2621 = vunpack.c.l.b16 %v1073
      %v2622 = vunpack.c.h.b16 %v1073
      %v2623 = vunpack.c.l.b16 %v1074
      %v2624 = vunpack.c.h.b16 %v1074
      %v2625 = vunpack.c.l.b16 %v1075
      %v2626 = vunpack.c.h.b16 %v1075
      %v2627 = vunpack.c.l.b16 %v1076
      %v2628 = vunpack.c.h.b16 %v1076
      %v2629 = vunpack.c.l.b16 %v1077
      %v2630 = vunpack.c.h.b16 %v1077
      %v2631 = vunpack.c.l.b16 %v1078
      %v2632 = vunpack.c.h.b16 %v1078
      %v2633 = vunpack.c.l.b16 %v1079
      %v2634 = vunpack.c.h.b16 %v1079
      %v2635 = vunpack.c.l.b16 %v1080
      %v2636 = vunpack.c.h.b16 %v1080
      %v2637 = vunpack.c.l.b16 %v1081
      %v2638 = vunpack.c.h.b16 %v1081
      %v2639 = vunpack.c.l.b16 %v1082
      %v2640 = vunpack.c.h.b16 %v1082
      %v2641 = vunpack.c.l.b16 %v1083
      %v2642 = vunpack.c.h.b16 %v1083
      %v2643 = vunpack.c.l.b16 %v1084
      %v2644 = vunpack.c.h.b16 %v1084
      %v2645 = vunpack.c.l.b16 %v1085
      %v2646 = vunpack.c.h.b16 %v1085
      %v2647 = vunpack.c.l.b16 %v1086
      %v2648 = vunpack.c.h.b16 %v1086
      %v2649 = vunpack.c.l.b16 %v1087
      %v2650 = vunpack.c.h.b16 %v1087
      %v2651 = vunpack.c.l.b16 %v1088
      %v2652 = vunpack.c.h.b16 %v1088
      %v2653 = vunpack.c.l.b16 %v1089
      %v2654 = vunpack.c.h.b16 %v1089
      %v2655 = vunpack.c.l.b16 %v1090
      %v2656 = vunpack.c.h.b16 %v1090
      %v2657 = vunpack.c.l.b16 %v1091
      %v2658 = vunpack.c.h.b16 %v1091
      %v2659 = vunpack.c.l.b16 %v1092
      %v2660 = vunpack.c.h.b16 %v1092
      %v2661 = vunpack.c.l.b16 %v1093
      %v2662 = vunpack.c.h.b16 %v1093
      %v2663 = vunpack.c.l.b16 %v1094
      %v2664 = vunpack.c.h.b16 %v1094
      %v2665 = vunpack.c.l.b16 %v1095
      %v2666 = vunpack.c.h.b16 %v1095
      %v2667 = vunpack.c.l.b16 %v1096
      %v2668 = vunpack.c.h.b16 %v1096
      %v2669 = vunpack.c.l.b16 %v1097
      %v2670 = vunpack.c.h.b16 %v1097
      %v2671 = vunpack.c.l.b16 %v1098
      %v2672 = vunpack.c.h.b16 %v1098
      %v2673 = vunpack.c.l.b16 %v1099
      %v2674 = vunpack.c.h.b16 %v1099
      %v2675 = vunpack.c.l.b16 %v1100
      %v2676 = vunpack.c.h.b16 %v1100
      %v2677 = vunpack.c.l.b16 %v1101
      %v2678 = vunpack.c.h.b16 %v1101
      %v2679 = vunpack.c.l.b16 %v1102
      %v2680 = vunpack.c.h.b16 %v1102
      %v2681 = vunpack.c.l.b16 %v1103
      %v2682 = vunpack.c.h.b16 %v1103
      %v2683 = vunpack.c.l.b16 %v1104
      %v2684 = vunpack.c.h.b16 %v1104
      %v2685 = vunpack.c.l.b16 %v1105
      %v2686 = vunpack.c.h.b16 %v1105
      %v2687 = vunpack.c.l.b16 %v1106
      %v2688 = vunpack.c.h.b16 %v1106
      %v2689 = vunpack.c.l.b16 %v1107
      %v2690 = vunpack.c.h.b16 %v1107
      %v2691 = vunpack.c.l.b16 %v1108
      %v2692 = vunpack.c.h.b16 %v1108
      %v2693 = vunpack.c.l.b16 %v1109
      %v2694 = vunpack.c.h.b16 %v1109
      %v2695 = vunpack.c.l.b16 %v1110
      %v2696 = vunpack.c.h.b16 %v1110
      %v2697 = vunpack.c.l.b16 %v1111
      %v2698 = vunpack.c.h.b16 %v1111
      %v2699 = vunpack.c.l.b16 %v1112
      %v2700 = vunpack.c.h.b16 %v1112
      %v2701 = vunpack.c.l.b16 %v1113
      %v2702 = vunpack.c.h.b16 %v1113
      %v2703 = vunpack.c.l.b16 %v1114
      %v2704 = vunpack.c.h.b16 %v1114
      %v2705 = vunpack.c.l.b16 %v1115
      %v2706 = vunpack.c.h.b16 %v1115
      %v2707 = vunpack.c.l.b16 %v1116
      %v2708 = vunpack.c.h.b16 %v1116
      %v2709 = vunpack.c.l.b16 %v1117
      %v2710 = vunpack.c.h.b16 %v1117
      %v2711 = vunpack.c.l.b16 %v1118
      %v2712 = vunpack.c.h.b16 %v1118
      %v2713 = vunpack.c.l.b16 %v1119
      %v2714 = vunpack.c.h.b16 %v1119
      %v2715 = vunpack.c.l.b16 %v1120
      %v2716 = vunpack.c.h.b16 %v1120
      %v2717 = vunpack.c.l.b16 %v1121
      %v2718 = vunpack.c.h.b16 %v1121
      %v2719 = vunpack.c.l.b16 %v1122
      %v2720 = vunpack.c.h.b16 %v1122
      %v2721 = vunpack.c.l.b16 %v1123
      %v2722 = vunpack.c.h.b16 %v1123
      %v2723 = vunpack.c.l.b16 %v1124
      %v2724 = vunpack.c.h.b16 %v1124
      %v2725 = vunpack.c.l.b16 %v1125
      %v2726 = vunpack.c.h.b16 %v1125
      %v2727 = vunpack.c.l.b16 %v1126
      %v2728 = vunpack.c.h.b16 %v1126
      %v2729 = vunpack.c.l.b16 %v1127
      %v2730 = vunpack.c.h.b16 %v1127
      %v2731 = vunpack.c.l.b16 %v1128
      %v2732 = vunpack.c.h.b16 %v1128
      %v2733 = vunpack.c.l.b16 %v1129
      %v2734 = vunpack.c.h.b16 %v1129
      %v2735 = vunpack.c.l.b16 %v1130
      %v2736 = vunpack.c.h.b16 %v1130
      %v2737 = vunpack.c.l.b16 %v1131
      %v2738 = vunpack.c.h.b16 %v1131
      %v2739 = vunpack.c.l.b16 %v1132
      %v2740 = vunpack.c.h.b16 %v1132
      %v2741 = vunpack.c.l.b16 %v1133
      %v2742 = vunpack.c.h.b16 %v1133
      %v2743 = vunpack.c.l.b16 %v1134
      %v2744 = vunpack.c.h.b16 %v1134
      %v2745 = vunpack.c.l.b16 %v1135
      %v2746 = vunpack.c.h.b16 %v1135
      %v2747 = vunpack.c.l.b16 %v1136
      %v2748 = vunpack.c.h.b16 %v1136
      %v2749 = vunpack.c.l.b16 %v1137
      %v2750 = vunpack.c.h.b16 %v1137
      %v2751 = vunpack.c.l.b16 %v1138
      %v2752 = vunpack.c.h.b16 %v1138
      %v2753 = vunpack.c.l.b16 %v1139
      %v2754 = vunpack.c.h.b16 %v1139
      %v2755 = vunpack.c.l.b16 %v1140
      %v2756 = vunpack.c.h.b16 %v1140
      %v2757 = vunpack.c.l.b16 %v1141
      %v2758 = vunpack.c.h.b16 %v1141
      %v2759 = vunpack.c.l.b16 %v1142
      %v2760 = vunpack.c.h.b16 %v1142
      %v2761 = vunpack.c.l.b16 %v1143
      %v2762 = vunpack.c.h.b16 %v1143
      %v2763 = vunpack.c.l.b16 %v1144
      %v2764 = vunpack.c.h.b16 %v1144
      %v2765 = vunpack.c.l.b16 %v1145
      %v2766 = vunpack.c.h.b16 %v1145
      %v2767 = vunpack.c.l.b16 %v1146
      %v2768 = vunpack.c.h.b16 %v1146
      %v2769 = vunpack.c.l.b16 %v1147
      %v2770 = vunpack.c.h.b16 %v1147
      %v2771 = vunpack.c.l.b16 %v1148
      %v2772 = vunpack.c.h.b16 %v1148
      %v2773 = vunpack.c.l.b16 %v1149
      %v2774 = vunpack.c.h.b16 %v1149
      %v2775 = vunpack.c.l.b16 %v1150
      %v2776 = vunpack.c.h.b16 %v1150
      %v2777 = vunpack.c.l.b16 %v1151
      %v2778 = vunpack.c.h.b16 %v1151
      %v2779 = vunpack.c.l.b16 %v1152
      %v2780 = vunpack.c.h.b16 %v1152
      %v2781 = vunpack.c.l.b16 %v1153
      %v2782 = vunpack.c.h.b16 %v1153
      %v2783 = vunpack.c.l.b16 %v1154
      %v2784 = vunpack.c.h.b16 %v1154
      %v2785 = vunpack.c.l.b16 %v1155
      %v2786 = vunpack.c.h.b16 %v1155
      %v2787 = vunpack.c.l.b16 %v1156
      %v2788 = vunpack.c.h.b16 %v1156
      %v2789 = vunpack.c.l.b16 %v1157
      %v2790 = vunpack.c.h.b16 %v1157
      %v2791 = vunpack.c.l.b16 %v1158
      %v2792 = vunpack.c.h.b16 %v1158
      %v2793 = vunpack.c.l.b16 %v1159
      %v2794 = vunpack.c.h.b16 %v1159
      %v2795 = vunpack.c.l.b16 %v1160
      %v2796 = vunpack.c.h.b16 %v1160
      %v2797 = vunpack.c.l.b16 %v1161
      %v2798 = vunpack.c.h.b16 %v1161
      %v2799 = vunpack.c.l.b16 %v1162
      %v2800 = vunpack.c.h.b16 %v1162
      %v2801 = vunpack.c.l.b16 %v1163
      %v2802 = vunpack.c.h.b16 %v1163
      %v2803 = vunpack.c.l.b16 %v1164
      %v2804 = vunpack.c.h.b16 %v1164
      %v2805 = vunpack.c.l.b16 %v1165
      %v2806 = vunpack.c.h.b16 %v1165
      %v2807 = vunpack.c.l.b16 %v1166
      %v2808 = vunpack.c.h.b16 %v1166
      %v2809 = vunpack.c.l.b16 %v1167
      %v2810 = vunpack.c.h.b16 %v1167
      %v2811 = vunpack.c.l.b16 %v1168
      %v2812 = vunpack.c.h.b16 %v1168
      %v2813 = vunpack.c.l.b16 %v1169
      %v2814 = vunpack.c.h.b16 %v1169
      %v2815 = vunpack.c.l.b16 %v1170
      %v2816 = vunpack.c.h.b16 %v1170
      %v2817 = vunpack.c.l.b16 %v1171
      %v2818 = vunpack.c.h.b16 %v1171
      %v2819 = vunpack.c.l.b16 %v1172
      %v2820 = vunpack.c.h.b16 %v1172
      %v2821 = vunpack.c.l.b16 %v1173
      %v2822 = vunpack.c.h.b16 %v1173
      %v2823 = vunpack.c.l.b16 %v1174
      %v2824 = vunpack.c.h.b16 %v1174
      %v2825 = vunpack.c.l.b16 %v1175
      %v2826 = vunpack.c.h.b16 %v1175
      %v2827 = vunpack.c.l.b16 %v1176
      %v2828 = vunpack.c.h.b16 %v1176
      %v2829 = vunpack.c.l.b16 %v1177
      %v2830 = vunpack.c.h.b16 %v1177
      %v2831 = vunpack.c.l.b16 %v1178
      %v2832 = vunpack.c.h.b16 %v1178
      %v2833 = vunpack.c.l.b16 %v1179
      %v2834 = vunpack.c.h.b16 %v1179
      %v2835 = vunpack.c.l.b16 %v1180
      %v2836 = vunpack.c.h.b16 %v1180
      %v2837 = vunpack.c.l.b16 %v1181
      %v2838 = vunpack.c.h.b16 %v1181
      %v2839 = vunpack.c.l.b16 %v1182
      %v2840 = vunpack.c.h.b16 %v1182
      %v2841 = vunpack.c.l.b16 %v1183
      %v2842 = vunpack.c.h.b16 %v1183
      %v2843 = vunpack.c.l.b16 %v1184
      %v2844 = vunpack.c.h.b16 %v1184
      %v2845 = vunpack.c.l.b16 %v1185
      %v2846 = vunpack.c.h.b16 %v1185
      %v2847 = vunpack.c.l.b16 %v1186
      %v2848 = vunpack.c.h.b16 %v1186
      %v2849 = vunpack.c.l.b16 %v1187
      %v2850 = vunpack.c.h.b16 %v1187
      %v2851 = vunpack.c.l.b16 %v1188
      %v2852 = vunpack.c.h.b16 %v1188
      %v2853 = vunpack.c.l.b16 %v1189
      %v2854 = vunpack.c.h.b16 %v1189
      %v2855 = vunpack.c.l.b16 %v1190
      %v2856 = vunpack.c.h.b16 %v1190
      %v2857 = vunpack.c.l.b16 %v1191
      %v2858 = vunpack.c.h.b16 %v1191
      %v2859 = vunpack.c.l.b16 %v1192
      %v2860 = vunpack.c.h.b16 %v1192
      %v2861 = vunpack.c.l.b16 %v1193
      %v2862 = vunpack.c.h.b16 %v1193
      %v2863 = vunpack.c.l.b16 %v1194
      %v2864 = vunpack.c.h.b16 %v1194
      %v2865 = vunpack.c.l.b16 %v1195
      %v2866 = vunpack.c.h.b16 %v1195
      %v2867 = vunpack.c.l.b16 %v1196
      %v2868 = vunpack.c.h.b16 %v1196
      %v2869 = vunpack.c.l.b16 %v1197
      %v2870 = vunpack.c.h.b16 %v1197
      %v2871 = vunpack.c.l.b16 %v1198
      %v2872 = vunpack.c.h.b16 %v1198
      %v2873 = vunpack.c.l.b16 %v1199
      %v2874 = vunpack.c.h.b16 %v1199
      %v2875 = vunpack.c.l.b16 %v1200
      %v2876 = vunpack.c.h.b16 %v1200
      %v2877 = vunpack.c.l.b16 %v1201
      %v2878 = vunpack.c.h.b16 %v1201
      %v2879 = vunpack.c.l.b16 %v1202
      %v2880 = vunpack.c.h.b16 %v1202
      %v2881 = vunpack.c.l.b16 %v1203
      %v2882 = vunpack.c.h.b16 %v1203
      %v2883 = vunpack.c.l.b16 %v1204
      %v2884 = vunpack.c.h.b16 %v1204
      %v2885 = vunpack.c.l.b16 %v1205
      %v2886 = vunpack.c.h.b16 %v1205
      %v2887 = vunpack.c.l.b16 %v1206
      %v2888 = vunpack.c.h.b16 %v1206
      %v2889 = vunpack.c.l.b16 %v1207
      %v2890 = vunpack.c.h.b16 %v1207
      %v2891 = vunpack.c.l.b16 %v1208
      %v2892 = vunpack.c.h.b16 %v1208
      %v2893 = vunpack.c.l.b16 %v1209
      %v2894 = vunpack.c.h.b16 %v1209
      %v2895 = vunpack.c.l.b16 %v1210
      %v2896 = vunpack.c.h.b16 %v1210
      %v2897 = vunpack.c.l.b16 %v1211
      %v2898 = vunpack.c.h.b16 %v1211
      %v2899 = vunpack.c.l.b16 %v1212
      %v2900 = vunpack.c.h.b16 %v1212
      %v2901 = vunpack.c.l.b16 %v1213
      %v2902 = vunpack.c.h.b16 %v1213
      %v2903 = vunpack.c.l.b16 %v1214
      %v2904 = vunpack.c.h.b16 %v1214
      %v2905 = vunpack.c.l.b16 %v1215
      %v2906 = vunpack.c.h.b16 %v1215
      %v2907 = vunpack.c.l.b16 %v1216
      %v2908 = vunpack.c.h.b16 %v1216
      %v2909 = vunpack.c.l.b16 %v1217
      %v2910 = vunpack.c.h.b16 %v1217
      %v2911 = vunpack.c.l.b16 %v1218
      %v2912 = vunpack.c.h.b16 %v1218
      %v2913 = vunpack.c.l.b16 %v1219
      %v2914 = vunpack.c.h.b16 %v1219
      %v2915 = vunpack.c.l.b16 %v1220
      %v2916 = vunpack.c.h.b16 %v1220
      %v2917 = vunpack.c.l.b16 %v1221
      %v2918 = vunpack.c.h.b16 %v1221
      %v2919 = vunpack.c.l.b16 %v1222
      %v2920 = vunpack.c.h.b16 %v1222
      %v2921 = vunpack.c.l.b16 %v1223
      %v2922 = vunpack.c.h.b16 %v1223
      %v2923 = vunpack.c.l.b16 %v1224
      %v2924 = vunpack.c.h.b16 %v1224
      %v2925 = vunpack.c.l.b16 %v1225
      %v2926 = vunpack.c.h.b16 %v1225
      %v2927 = vunpack.c.l.b16 %v1226
      %v2928 = vunpack.c.h.b16 %v1226
      %v2929 = vunpack.c.l.b16 %v1227
      %v2930 = vunpack.c.h.b16 %v1227
      %v2931 = vunpack.c.l.b16 %v1228
      %v2932 = vunpack.c.h.b16 %v1228
      %v2933 = vunpack.c.l.b16 %v1229
      %v2934 = vunpack.c.h.b16 %v1229
      %v2935 = vunpack.c.l.b16 %v1230
      %v2936 = vunpack.c.h.b16 %v1230
      %v2937 = vunpack.c.l.b16 %v1231
      %v2938 = vunpack.c.h.b16 %v1231
      %v2939 = vunpack.c.l.b16 %v1232
      %v2940 = vunpack.c.h.b16 %v1232
      %v2941 = vunpack.c.l.b16 %v1233
      %v2942 = vunpack.c.h.b16 %v1233
      %v2943 = vunpack.c.l.b16 %v1234
      %v2944 = vunpack.c.h.b16 %v1234
      %v2945 = vunpack.c.l.b16 %v1235
      %v2946 = vunpack.c.h.b16 %v1235
      %v2947 = vunpack.c.l.b16 %v1236
      %v2948 = vunpack.c.h.b16 %v1236
      %v2949 = vunpack.c.l.b16 %v1237
      %v2950 = vunpack.c.h.b16 %v1237
      %v2951 = vunpack.c.l.b16 %v1238
      %v2952 = vunpack.c.h.b16 %v1238
      %v2953 = vunpack.c.l.b16 %v1239
      %v2954 = vunpack.c.h.b16 %v1239
      %v2955 = vunpack.c.l.b16 %v1240
      %v2956 = vunpack.c.h.b16 %v1240
      %v2957 = vunpack.c.l.b16 %v1241
      %v2958 = vunpack.c.h.b16 %v1241
      %v2959 = vunpack.c.l.b16 %v1242
      %v2960 = vunpack.c.h.b16 %v1242
      %v2961 = vunpack.c.l.b16 %v1243
      %v2962 = vunpack.c.h.b16 %v1243
      %v2963 = vunpack.c.l.b16 %v1244
      %v2964 = vunpack.c.h.b16 %v1244
      %v2965 = vunpack.c.l.b16 %v1245
      %v2966 = vunpack.c.h.b16 %v1245
      %v2967 = vunpack.c.l.b16 %v1246
      %v2968 = vunpack.c.h.b16 %v1246
      %v2969 = vunpack.c.l.b16 %v1247
      %v2970 = vunpack.c.h.b16 %v1247
      %v2971 = vunpack.c.l.b16 %v1248
      %v2972 = vunpack.c.h.b16 %v1248
      %v2973 = vunpack.c.l.b16 %v1249
      %v2974 = vunpack.c.h.b16 %v1249
      %v2975 = vunpack.c.l.b16 %v1250
      %v2976 = vunpack.c.h.b16 %v1250
      %v2977 = vunpack.c.l.b16 %v1251
      %v2978 = vunpack.c.h.b16 %v1251
      %v2979 = vunpack.c.l.b16 %v1252
      %v2980 = vunpack.c.h.b16 %v1252
      %v2981 = vunpack.c.l.b16 %v1253
      %v2982 = vunpack.c.h.b16 %v1253
      %v2983 = vunpack.c.l.b16 %v1254
      %v2984 = vunpack.c.h.b16 %v1254
      %v2985 = vunpack.c.l.b16 %v1255
      %v2986 = vunpack.c.h.b16 %v1255
      %v2987 = vunpack.c.l.b16 %v1256
      %v2988 = vunpack.c.h.b16 %v1256
      %v2989 = vunpack.c.l.b16 %v1257
      %v2990 = vunpack.c.h.b16 %v1257
      %v2991 = vunpack.c.l.b16 %v1258
      %v2992 = vunpack.c.h.b16 %v1258
      %v2993 = vunpack.c.l.b16 %v1259
      %v2994 = vunpack.c.h.b16 %v1259
      %v2995 = vunpack.c.l.b16 %v1260
      %v2996 = vunpack.c.h.b16 %v1260
      %v2997 = vunpack.c.l.b16 %v1261
      %v2998 = vunpack.c.h.b16 %v1261
      %v2999 = vunpack.c.l.b16 %v1262
      %v3000 = vunpack.c.h.b16 %v1262
      %v3001 = vunpack.c.l.b16 %v1263
      %v3002 = vunpack.c.h.b16 %v1263
      %v3003 = vunpack.c.l.b16 %v1264
      %v3004 = vunpack.c.h.b16 %v1264
      %v3005 = vunpack.c.l.b16 %v1265
      %v3006 = vunpack.c.h.b16 %v1265
      %v3007 = vunpack.c.l.b16 %v1266
      %v3008 = vunpack.c.h.b16 %v1266
      %v3009 = vunpack.c.l.b16 %v1267
      %v3010 = vunpack.c.h.b16 %v1267
      %v3011 = vunpack.c.l.b16 %v1268
      %v3012 = vunpack.c.h.b16 %v1268
      %v3013 = vunpack.c.l.b16 %v1269
      %v3014 = vunpack.c.h.b16 %v1269
      %v3015 = vunpack.c.l.b16 %v1270
      %v3016 = vunpack.c.h.b16 %v1270
      %v3017 = vunpack.c.l.b16 %v1271
      %v3018 = vunpack.c.h.b16 %v1271
      %v3019 = vunpack.c.l.b16 %v1272
      %v3020 = vunpack.c.h.b16 %v1272
      %v3021 = vunpack.c.l.b16 %v1273
      %v3022 = vunpack.c.h.b16 %v1273
      %v3023 = vunpack.c.l.b16 %v1274
      %v3024 = vunpack.c.h.b16 %v1274
      %v3025 = vunpack.c.l.b16 %v1275
      %v3026 = vunpack.c.h.b16 %v1275
      %v3027 = vunpack.c.l.b16 %v1276
      %v3028 = vunpack.c.h.b16 %v1276
      %v3029 = vunpack.c.l.b16 %v1277
      %v3030 = vunpack.c.h.b16 %v1277
      %v3031 = vunpack.c.l.b16 %v1278
      %v3032 = vunpack.c.h.b16 %v1278
      %v3033 = vunpack.c.l.b16 %v1279
      %v3034 = vunpack.c.h.b16 %v1279
      %v3035 = vunpack.c.l.b16 %v1280
      %v3036 = vunpack.c.h.b16 %v1280
      %v3037 = vunpack.c.l.b16 %v1281
      %v3038 = vunpack.c.h.b16 %v1281
      %v3039 = vunpack.c.l.b16 %v1282
      %v3040 = vunpack.c.h.b16 %v1282
      %v3041 = vunpack.c.l.b16 %v1283
      %v3042 = vunpack.c.h.b16 %v1283
      %v3043 = vunpack.c.l.b16 %v1284
      %v3044 = vunpack.c.h.b16 %v1284
      %v3045 = vunpack.c.l.b16 %v1285
      %v3046 = vunpack.c.h.b16 %v1285
      %v3047 = vunpack.c.l.b16 %v1286
      %v3048 = vunpack.c.h.b16 %v1286
      %v3049 = vunpack.c.l.b16 %v1287
      %v3050 = vunpack.c.h.b16 %v1287
      %v3051 = vunpack.c.l.b16 %v1288
      %v3052 = vunpack.c.h.b16 %v1288
      %v3053 = vunpack.c.l.b16 %v1289
      %v3054 = vunpack.c.h.b16 %v1289
      %v3055 = vunpack.c.l.b16 %v1290
      %v3056 = vunpack.c.h.b16 %v1290
      %v3057 = vunpack.c.l.b16 %v1291
      %v3058 = vunpack.c.h.b16 %v1291
      %v3059 = vunpack.c.l.b16 %v1292
      %v3060 = vunpack.c.h.b16 %v1292
      %v3061 = vunpack.c.l.b16 %v1293
      %v3062 = vunpack.c.h.b16 %v1293
      %v3063 = vunpack.c.l.b16 %v1294
      %v3064 = vunpack.c.h.b16 %v1294
      %v3065 = vunpack.c.l.b16 %v1295
      %v3066 = vunpack.c.h.b16 %v1295
      %v3067 = vunpack.c.l.b16 %v1296
      %v3068 = vunpack.c.h.b16 %v1296
      %v3069 = vunpack.c.l.b16 %v1297
      %v3070 = vunpack.c.h.b16 %v1297
      %v3071 = vunpack.c.l.b16 %v1298
      %v3072 = vunpack.c.h.b16 %v1298
      %v3073 = vunpack.c.l.b16 %v1299
      %v3074 = vunpack.c.h.b16 %v1299
      %v3075 = vunpack.c.l.b16 %v1300
      %v3076 = vunpack.c.h.b16 %v1300
      %v3077 = vunpack.c.l.b16 %v1301
      %v3078 = vunpack.c.h.b16 %v1301
      %v3079 = vunpack.c.l.b16 %v1302
      %v3080 = vunpack.c.h.b16 %v1302
      %v3081 = vunpack.c.l.b16 %v1303
      %v3082 = vunpack.c.h.b16 %v1303
      %v3083 = vunpack.c.l.b16 %v1304
      %v3084 = vunpack.c.h.b16 %v1304
      %v3085 = vunpack.c.l.b16 %v1305
      %v3086 = vunpack.c.h.b16 %v1305
      %v3087 = vunpack.c.l.b16 %v1306
      %v3088 = vunpack.c.h.b16 %v1306
      %v3089 = vunpack.c.l.b16 %v1307
      %v3090 = vunpack.c.h.b16 %v1307
      %v3091 = vunpack.c.l.b16 %v1308
      %v3092 = vunpack.c.h.b16 %v1308
      %v3093 = vunpack.c.l.b16 %v1309
      %v3094 = vunpack.c.h.b16 %v1309
      %v3095 = vunpack.c.l.b16 %v1310
      %v3096 = vunpack.c.h.b16 %v1310
      %v3097 = vunpack.c.l.b16 %v1311
      %v3098 = vunpack.c.h.b16 %v1311
      %v3099 = vunpack.c.l.b16 %v1312
      %v3100 = vunpack.c.h.b16 %v1312
      %v3101 = vunpack.c.l.b16 %v1313
      %v3102 = vunpack.c.h.b16 %v1313
      %v3103 = vunpack.c.l.b16 %v1314
      %v3104 = vunpack.c.h.b16 %v1314
      %v3105 = vunpack.c.l.b16 %v1315
      %v3106 = vunpack.c.h.b16 %v1315
      %v3107 = vunpack.c.l.b16 %v1316
      %v3108 = vunpack.c.h.b16 %v1316
      %v3109 = vunpack.c.l.b16 %v1317
      %v3110 = vunpack.c.h.b16 %v1317
      %v3111 = vunpack.c.l.b16 %v1318
      %v3112 = vunpack.c.h.b16 %v1318
      %v3113 = vunpack.c.l.b16 %v1319
      %v3114 = vunpack.c.h.b16 %v1319
      %v3115 = vunpack.c.l.b16 %v1320
      %v3116 = vunpack.c.h.b16 %v1320
      %v3117 = vunpack.c.l.b16 %v1321
      %v3118 = vunpack.c.h.b16 %v1321
      %v3119 = vunpack.c.l.b16 %v1322
      %v3120 = vunpack.c.h.b16 %v1322
      %v3121 = vunpack.c.l.b16 %v1323
      %v3122 = vunpack.c.h.b16 %v1323
      %v3123 = vunpack.c.l.b16 %v1324
      %v3124 = vunpack.c.h.b16 %v1324
      %v3125 = vunpack.c.l.b16 %v1325
      %v3126 = vunpack.c.h.b16 %v1325
      %v3127 = vunpack.c.l.b16 %v1326
      %v3128 = vunpack.c.h.b16 %v1326
      %v3129 = vunpack.c.l.b16 %v1327
      %v3130 = vunpack.c.h.b16 %v1327
      %v3131 = vunpack.c.l.b16 %v1328
      %v3132 = vunpack.c.h.b16 %v1328
      %v3133 = vunpack.c.l.b16 %v1329
      %v3134 = vunpack.c.h.b16 %v1329
      %v3135 = vunpack.c.l.b16 %v1330
      %v3136 = vunpack.c.h.b16 %v1330
      %v3137 = vunpack.c.l.b16 %v1331
      %v3138 = vunpack.c.h.b16 %v1331
      %v3139 = vunpack.c.l.b16 %v1332
      %v3140 = vunpack.c.h.b16 %v1332
      %v3141 = vunpack.c.l.b16 %v1333
      %v3142 = vunpack.c.h.b16 %v1333
      %v3143 = vunpack.c.l.b16 %v1334
      %v3144 = vunpack.c.h.b16 %v1334
      %v3145 = vunpack.c.l.b16 %v1335
      %v3146 = vunpack.c.h.b16 %v1335
      %v3147 = vunpack.c.l.b16 %v1336
      %v3148 = vunpack.c.h.b16 %v1336
      %v3149 = vunpack.c.l.b16 %v1337
      %v3150 = vunpack.c.h.b16 %v1337
      %v3151 = vunpack.c.l.b16 %v1338
      %v3152 = vunpack.c.h.b16 %v1338
      %v3153 = vunpack.c.l.b16 %v1339
      %v3154 = vunpack.c.h.b16 %v1339
      %v3155 = vunpack.c.l.b16 %v1340
      %v3156 = vunpack.c.h.b16 %v1340
      %v3157 = vunpack.c.l.b16 %v1341
      %v3158 = vunpack.c.h.b16 %v1341
      %v3159 = vunpack.c.l.b16 %v1342
      %v3160 = vunpack.c.h.b16 %v1342
      %v3161 = vunpack.c.l.b16 %v1343
      %v3162 = vunpack.c.h.b16 %v1343
      %v3163 = vunpack.c.l.b16 %v1344
      %v3164 = vunpack.c.h.b16 %v1344
      %v3165 = vunpack.c.l.b16 %v1345
      %v3166 = vunpack.c.h.b16 %v1345
      %v3167 = vunpack.c.l.b16 %v1346
      %v3168 = vunpack.c.h.b16 %v1346
      %v3169 = vunpack.c.l.b16 %v1347
      %v3170 = vunpack.c.h.b16 %v1347
      %v3171 = vunpack.c.l.b16 %v1348
      %v3172 = vunpack.c.h.b16 %v1348
      %v3173 = vunpack.c.l.b16 %v1349
      %v3174 = vunpack.c.h.b16 %v1349
      %v3175 = vunpack.c.l.b16 %v1350
      %v3176 = vunpack.c.h.b16 %v1350
      %v3177 = vunpack.c.l.b16 %v1351
      %v3178 = vunpack.c.h.b16 %v1351
      %v3179 = vunpack.c.l.b16 %v1352
      %v3180 = vunpack.c.h.b16 %v1352
      %v3181 = vunpack.c.l.b16 %v1353
      %v3182 = vunpack.c.h.b16 %v1353
      %v3183 = vunpack.c.l.b16 %v1354
      %v3184 = vunpack.c.h.b16 %v1354
      %v3185 = vunpack.c.l.b16 %v1355
      %v3186 = vunpack.c.h.b16 %v1355
      %v3187 = vunpack.c.l.b16 %v1356
      %v3188 = vunpack.c.h.b16 %v1356
      %v3189 = vunpack.c.l.b16 %v1357
      %v3190 = vunpack.c.h.b16 %v1357
      %v3191 = vunpack.c.l.b16 %v1358
      %v3192 = vunpack.c.h.b16 %v1358
      %v3193 = vunpack.c.l.b16 %v1359
      %v3194 = vunpack.c.h.b16 %v1359
      %v3195 = vunpack.c.l.b16 %v1360
      %v3196 = vunpack.c.h.b16 %v1360
      %v3197 = vunpack.c.l.b16 %v1361
      %v3198 = vunpack.c.h.b16 %v1361
      %v3199 = vunpack.c.l.b16 %v1362
      %v3200 = vunpack.c.h.b16 %v1362
      %v3201 = vunpack.c.l.b16 %v1363
      %v3202 = vunpack.c.h.b16 %v1363
      %v3203 = vunpack.c.l.b16 %v1364
      %v3204 = vunpack.c.h.b16 %v1364
      %v3205 = vunpack.c.l.b16 %v1365
      %v3206 = vunpack.c.h.b16 %v1365
      %v3207 = vunpack.c.l.b16 %v1366
      %v3208 = vunpack.c.h.b16 %v1366
      %v3209 = vunpack.c.l.b16 %v1367
      %v3210 = vunpack.c.h.b16 %v1367
      %v3211 = vunpack.c.l.b16 %v1368
      %v3212 = vunpack.c.h.b16 %v1368
      %v3213 = vunpack.c.l.b16 %v1369
      %v3214 = vunpack.c.h.b16 %v1369
      %v3215 = vunpack.c.l.b16 %v1370
      %v3216 = vunpack.c.h.b16 %v1370
      %v3217 = vunpack.c.l.b16 %v1371
      %v3218 = vunpack.c.h.b16 %v1371
      %v3219 = vunpack.c.l.b16 %v1372
      %v3220 = vunpack.c.h.b16 %v1372
      %v3221 = vunpack.c.l.b16 %v1373
      %v3222 = vunpack.c.h.b16 %v1373
      %v3223 = vunpack.c.l.b16 %v1374
      %v3224 = vunpack.c.h.b16 %v1374
      %v3225 = vunpack.c.l.b16 %v1375
      %v3226 = vunpack.c.h.b16 %v1375
      %v3227 = vunpack.c.l.b16 %v1376
      %v3228 = vunpack.c.h.b16 %v1376
      %v3229 = vunpack.c.l.b16 %v1377
      %v3230 = vunpack.c.h.b16 %v1377
      %v3231 = vunpack.c.l.b16 %v1378
      %v3232 = vunpack.c.h.b16 %v1378
      %v3233 = vunpack.c.l.b16 %v1379
      %v3234 = vunpack.c.h.b16 %v1379
      %v3235 = vunpack.c.l.b16 %v1380
      %v3236 = vunpack.c.h.b16 %v1380
      %v3237 = vunpack.c.l.b16 %v1381
      %v3238 = vunpack.c.h.b16 %v1381
      %v3239 = vunpack.c.l.b16 %v1382
      %v3240 = vunpack.c.h.b16 %v1382
      %v3241 = vunpack.c.l.b16 %v1383
      %v3242 = vunpack.c.h.b16 %v1383
      %v3243 = vunpack.c.l.b16 %v1384
      %v3244 = vunpack.c.h.b16 %v1384
      %v3245 = vunpack.c.l.b16 %v1385
      %v3246 = vunpack.c.h.b16 %v1385
      %v3247 = vunpack.c.l.b16 %v1386
      %v3248 = vunpack.c.h.b16 %v1386
      %v3249 = vunpack.c.l.b16 %v1387
      %v3250 = vunpack.c.h.b16 %v1387
      %v3251 = vunpack.c.l.b16 %v1388
      %v3252 = vunpack.c.h.b16 %v1388
      %v3253 = vunpack.c.l.b16 %v1389
      %v3254 = vunpack.c.h.b16 %v1389
      %v3255 = vunpack.c.l.b16 %v1390
      %v3256 = vunpack.c.h.b16 %v1390
      %v3257 = vunpack.c.l.b16 %v1391
      %v3258 = vunpack.c.h.b16 %v1391
      %v3259 = vunpack.c.l.b16 %v1392
      %v3260 = vunpack.c.h.b16 %v1392
      %v3261 = vunpack.c.l.b16 %v1393
      %v3262 = vunpack.c.h.b16 %v1393
      %v3263 = vunpack.c.l.b16 %v1394
      %v3264 = vunpack.c.h.b16 %v1394
      %v3265 = vunpack.c.l.b16 %v1395
      %v3266 = vunpack.c.h.b16 %v1395
      %v3267 = vunpack.c.l.b16 %v1396
      %v3268 = vunpack.c.h.b16 %v1396
      %v3269 = vunpack.c.l.b16 %v1397
      %v3270 = vunpack.c.h.b16 %v1397
      %v3271 = vunpack.c.l.b16 %v1398
      %v3272 = vunpack.c.h.b16 %v1398
      %v3273 = vunpack.c.l.b16 %v1399
      %v3274 = vunpack.c.h.b16 %v1399
      %v3275 = vunpack.c.l.b16 %v1400
      %v3276 = vunpack.c.h.b16 %v1400
      %v3277 = vunpack.c.l.b16 %v1401
      %v3278 = vunpack.c.h.b16 %v1401
      %v3279 = vunpack.c.l.b16 %v1402
      %v3280 = vunpack.c.h.b16 %v1402
      %v3281 = vunpack.c.l.b16 %v1403
      %v3282 = vunpack.c.h.b16 %v1403
      %v3283 = vunpack.c.l.b16 %v1404
      %v3284 = vunpack.c.h.b16 %v1404
      %v3285 = vunpack.c.l.b16 %v1405
      %v3286 = vunpack.c.h.b16 %v1405
      %v3287 = vunpack.c.l.b16 %v1406
      %v3288 = vunpack.c.h.b16 %v1406
      %v3289 = vunpack.c.l.b16 %v1407
      %v3290 = vunpack.c.h.b16 %v1407
      %v3291 = vunpack.c.l.b16 %v1408
      %v3292 = vunpack.c.h.b16 %v1408
      %v3293 = vunpack.c.l.b16 %v1409
      %v3294 = vunpack.c.h.b16 %v1409
      %v3295 = vunpack.c.l.b16 %v1410
      %v3296 = vunpack.c.h.b16 %v1410
      %v3297 = vunpack.c.l.b16 %v1411
      %v3298 = vunpack.c.h.b16 %v1411
      %v3299 = vunpack.c.l.b16 %v1412
      %v3300 = vunpack.c.h.b16 %v1412
      %v3301 = vunpack.c.l.b16 %v1413
      %v3302 = vunpack.c.h.b16 %v1413
      %v3303 = vunpack.c.l.b16 %v1414
      %v3304 = vunpack.c.h.b16 %v1414
      %v3305 = vunpack.c.l.b16 %v1415
      %v3306 = vunpack.c.h.b16 %v1415
      %v3307 = vpack.c.b16 %v2159, %v2155
      %v3308 = vpack.c.b16 %v2160, %v2156
      %v3309 = vpack.c.b16 %v2161, %v2157
      %v3310 = vpack.c.b16 %v2162, %v2158
      %v3311 = vpack.c.b16 %v2167, %v2163
      %v3312 = vpack.c.b16 %v2168, %v2164
      %v3313 = vpack.c.b16 %v2169, %v2165
      %v3314 = vpack.c.b16 %v2170, %v2166
      %v3315 = vpack.c.b16 %v2175, %v2171
      %v3316 = vpack.c.b16 %v2176, %v2172
      %v3317 = vpack.c.b16 %v2177, %v2173
      %v3318 = vpack.c.b16 %v2178, %v2174
      %v3319 = vpack.c.b16 %v2183, %v2179
      %v3320 = vpack.c.b16 %v2184, %v2180
      %v3321 = vpack.c.b16 %v2185, %v2181
      %v3322 = vpack.c.b16 %v2186, %v2182
      %v3323 = vpack.c.b16 %v2191, %v2187
      %v3324 = vpack.c.b16 %v2192, %v2188
      %v3325 = vpack.c.b16 %v2193, %v2189
      %v3326 = vpack.c.b16 %v2194, %v2190
      %v3327 = vpack.c.b16 %v2199, %v2195
      %v3328 = vpack.c.b16 %v2200, %v2196
      %v3329 = vpack.c.b16 %v2201, %v2197
      %v3330 = vpack.c.b16 %v2202, %v2198
      %v3331 = vpack.c.b16 %v2207, %v2203
      %v3332 = vpack.c.b16 %v2208, %v2204
      %v3333 = vpack.c.b16 %v2209, %v2205
      %v3334 = vpack.c.b16 %v2210, %v2206
      %v3335 = vpack.c.b16 %v2215, %v2211
      %v3336 = vpack.c.b16 %v2216, %v2212
      %v3337 = vpack.c.b16 %v2217, %v2213
      %v3338 = vpack.c.b16 %v2218, %v2214
      %v3339 = vpack.c.b16 %v2223, %v2219
      %v3340 = vpack.c.b16 %v2224, %v2220
      %v3341 = vpack.c.b16 %v2225, %v2221
      %v3342 = vpack.c.b16 %v2226, %v2222
      %v3343 = vpack.c.b16 %v2231, %v2227
      %v3344 = vpack.c.b16 %v2232, %v2228
      %v3345 = vpack.c.b16 %v2233, %v2229
      %v3346 = vpack.c.b16 %v2234, %v2230
      %v3347 = vpack.c.b16 %v2239, %v2235
      %v3348 = vpack.c.b16 %v2240, %v2236
      %v3349 = vpack.c.b16 %v2241, %v2237
      %v3350 = vpack.c.b16 %v2242, %v2238
      %v3351 = vpack.c.b16 %v2247, %v2243
      %v3352 = vpack.c.b16 %v2248, %v2244
      %v3353 = vpack.c.b16 %v2249, %v2245
      %v3354 = vpack.c.b16 %v2250, %v2246
      %v3355 = vpack.c.b16 %v2255, %v2251
      %v3356 = vpack.c.b16 %v2256, %v2252
      %v3357 = vpack.c.b16 %v2257, %v2253
      %v3358 = vpack.c.b16 %v2258, %v2254
      %v3359 = vpack.c.b16 %v2263, %v2259
      %v3360 = vpack.c.b16 %v2264, %v2260
      %v3361 = vpack.c.b16 %v2265, %v2261
      %v3362 = vpack.c.b16 %v2266, %v2262
      %v3363 = vpack.c.b16 %v2271, %v2267
      %v3364 = vpack.c.b16 %v2272, %v2268
      %v3365 = vpack.c.b16 %v2273, %v2269
      %v3366 = vpack.c.b16 %v2274, %v2270
      %v3367 = vpack.c.b16 %v2279, %v2275
      %v3368 = vpack.c.b16 %v2280, %v2276
      %v3369 = vpack.c.b16 %v2281, %v2277
      %v3370 = vpack.c.b16 %v2282, %v2278
      %v3371 = vpack.c.b16 %v2287, %v2283
      %v3372 = vpack.c.b16 %v2288, %v2284
      %v3373 = vpack.c.b16 %v2289, %v2285
      %v3374 = vpack.c.b16 %v2290, %v2286
      %v3375 = vpack.c.b16 %v2295, %v2291
      %v3376 = vpack.c.b16 %v2296, %v2292
      %v3377 = vpack.c.b16 %v2297, %v2293
      %v3378 = vpack.c.b16 %v2298, %v2294
      %v3379 = vpack.c.b16 %v2303, %v2299
      %v3380 = vpack.c.b16 %v2304, %v2300
      %v3381 = vpack.c.b16 %v2305, %v2301
      %v3382 = vpack.c.b16 %v2306, %v2302
      %v3383 = vpack.c.b16 %v2311, %v2307
      %v3384 = vpack.c.b16 %v2312, %v2308
      %v3385 = vpack.c.b16 %v2313, %v2309
      %v3386 = vpack.c.b16 %v2314, %v2310
      %v3387 = vpack.c.b16 %v2319, %v2315
      %v3388 = vpack.c.b16 %v2320, %v2316
      %v3389 = vpack.c.b16 %v2321, %v2317
      %v3390 = vpack.c.b16 %v2322, %v2318
      %v3391 = vpack.c.b16 %v2327, %v2323
      %v3392 = vpack.c.b16 %v2328, %v2324
      %v3393 = vpack.c.b16 %v2329, %v2325
      %v3394 = vpack.c.b16 %v2330, %v2326
      %v3395 = vpack.c.b16 %v2335, %v2331
      %v3396 = vpack.c.b16 %v2336, %v2332
      %v3397 = vpack.c.b16 %v2337, %v2333
      %v3398 = vpack.c.b16 %v2338, %v2334
      %v3399 = vpack.c.b16 %v2343, %v2339
      %v3400 = vpack.c.b16 %v2344, %v2340
      %v3401 = vpack.c.b16 %v2345, %v2341
      %v3402 = vpack.c.b16 %v2346, %v2342
      %v3403 = vpack.c.b16 %v2351, %v2347
      %v3404 = vpack.c.b16 %v2352, %v2348
      %v3405 = vpack.c.b16 %v2353, %v2349
      %v3406 = vpack.c.b16 %v2354, %v2350
      %v3407 = vpack.c.b16 %v2359, %v2355
      %v3408 = vpack.c.b16 %v2360, %v2356
      %v3409 = vpack.c.b16 %v2361, %v2357
      %v3410 = vpack.c.b16 %v2362, %v2358
      %v3411 = vpack.c.b16 %v2367, %v2363
      %v3412 = vpack.c.b16 %v2368, %v2364
      %v3413 = vpack.c.b16 %v2369, %v2365
      %v3414 = vpack.c.b16 %v2370, %v2366
      %v3415 = vpack.c.b16 %v2375, %v2371
      %v3416 = vpack.c.b16 %v2376, %v2372
      %v3417 = vpack.c.b16 %v2377, %v2373
      %v3418 = vpack.c.b16 %v2378, %v2374
      %v3419 = vpack.c.b16 %v2383, %v2379
      %v3420 = vpack.c.b16 %v2384, %v2380
      %v3421 = vpack.c.b16 %v2385, %v2381
      %v3422 = vpack.c.b16 %v2386, %v2382
      %v3423 = vpack.c.b16 %v2391, %v2387
      %v3424 = vpack.c.b16 %v2392, %v2388
      %v3425 = vpack.c.b16 %v2393, %v2389
      %v3426 = vpack.c.b16 %v2394, %v2390
      %v3427 = vpack.c.b16 %v2399, %v2395
      %v3428 = vpack.c.b16 %v2400, %v2396
      %v3429 = vpack.c.b16 %v2401, %v2397
      %v3430 = vpack.c.b16 %v2402, %v2398
      %v3431 = vpack.c.b16 %v2407, %v2403
      %v3432 = vpack.c.b16 %v2408, %v2404
      %v3433 = vpack.c.b16 %v2409, %v2405
      %v3434 = vpack.c.b16 %v2410, %v2406
      %v3435 = vpack.c.b16 %v2415, %v2411
      %v3436 = vpack.c.b16 %v2416, %v2412
      %v3437 = vpack.c.b16 %v2417, %v2413
      %v3438 = vpack.c.b16 %v2418, %v2414
      %v3439 = vpack.c.b16 %v2423, %v2419
      %v3440 = vpack.c.b16 %v2424, %v2420
      %v3441 = vpack.c.b16 %v2425, %v2421
      %v3442 = vpack.c.b16 %v2426, %v2422
      %v3443 = vpack.c.b16 %v2431, %v2427
      %v3444 = vpack.c.b16 %v2432, %v2428
      %v3445 = vpack.c.b16 %v2433, %v2429
      %v3446 = vpack.c.b16 %v2434, %v2430
      %v3447 = vpack.c.b16 %v2439, %v2435
      %v3448 = vpack.c.b16 %v2440, %v2436
      %v3449 = vpack.c.b16 %v2441, %v2437
      %v3450 = vpack.c.b16 %v2442, %v2438
      %v3451 = vpack.c.b16 %v2447, %v2443
      %v3452 = vpack.c.b16 %v2448, %v2444
      %v3453 = vpack.c.b16 %v2449, %v2445
      %v3454 = vpack.c.b16 %v2450, %v2446
      %v3455 = vpack.c.b16 %v2455, %v2451
      %v3456 = vpack.c.b16 %v2456, %v2452
      %v3457 = vpack.c.b16 %v2457, %v2453
      %v3458 = vpack.c.b16 %v2458, %v2454
      %v3459 = vpack.c.b16 %v2463, %v2459
      %v3460 = vpack.c.b16 %v2464, %v2460
      %v3461 = vpack.c.b16 %v2465, %v2461
      %v3462 = vpack.c.b16 %v2466, %v2462
      %v3463 = vpack.c.b16 %v2471, %v2467
      %v3464 = vpack.c.b16 %v2472, %v2468
      %v3465 = vpack.c.b16 %v2473, %v2469
      %v3466 = vpack.c.b16 %v2474, %v2470
      %v3467 = vpack.c.b16 %v2479, %v2475
      %v3468 = vpack.c.b16 %v2480, %v2476
      %v3469 = vpack.c.b16 %v2481, %v2477
      %v3470 = vpack.c.b16 %v2482, %v2478
      %v3471 = vpack.c.b16 %v2487, %v2483
      %v3472 = vpack.c.b16 %v2488, %v2484
      %v3473 = vpack.c.b16 %v2489, %v2485
      %v3474 = vpack.c.b16 %v2490, %v2486
      %v3475 = vpack.c.b16 %v2495, %v2491
      %v3476 = vpack.c.b16 %v2496, %v2492
      %v3477 = vpack.c.b16 %v2497, %v2493
      %v3478 = vpack.c.b16 %v2498, %v2494
      %v3479 = vpack.c.b16 %v2503, %v2499
      %v3480 = vpack.c.b16 %v2504, %v2500
      %v3481 = vpack.c.b16 %v2505, %v2501
      %v3482 = vpack.c.b16 %v2506, %v2502
      %v3483 = vpack.c.b16 %v2511, %v2507
      %v3484 = vpack.c.b16 %v2512, %v2508
      %v3485 = vpack.c.b16 %v2513, %v2509
      %v3486 = vpack.c.b16 %v2514, %v2510
      %v3487 = vpack.c.b16 %v2519, %v2515
      %v3488 = vpack.c.b16 %v2520, %v2516
      %v3489 = vpack.c.b16 %v2521, %v2517
      %v3490 = vpack.c.b16 %v2522, %v2518
      %v3491 = vpack.c.b16 %v2527, %v2523
      %v3492 = vpack.c.b16 %v2528, %v2524
      %v3493 = vpack.c.b16 %v2529, %v2525
      %v3494 = vpack.c.b16 %v2530, %v2526
      %v3495 = vpack.c.b16 %v2535, %v2531
      %v3496 = vpack.c.b16 %v2536, %v2532
      %v3497 = vpack.c.b16 %v2537, %v2533
      %v3498 = vpack.c.b16 %v2538, %v2534
      %v3499 = vpack.c.b16 %v2543, %v2539
      %v3500 = vpack.c.b16 %v2544, %v2540
      %v3501 = vpack.c.b16 %v2545, %v2541
      %v3502 = vpack.c.b16 %v2546, %v2542
      %v3503 = vpack.c.b16 %v2551, %v2547
      %v3504 = vpack.c.b16 %v2552, %v2548
      %v3505 = vpack.c.b16 %v2553, %v2549
      %v3506 = vpack.c.b16 %v2554, %v2550
      %v3507 = vpack.c.b16 %v2559, %v2555
      %v3508 = vpack.c.b16 %v2560, %v2556
      %v3509 = vpack.c.b16 %v2561, %v2557
      %v3510 = vpack.c.b16 %v2562, %v2558
      %v3511 = vpack.c.b16 %v2567, %v2563
      %v3512 = vpack.c.b16 %v2568, %v2564
      %v3513 = vpack.c.b16 %v2569, %v2565
      %v3514 = vpack.c.b16 %v2570, %v2566
      %v3515 = vpack.c.b16 %v2575, %v2571
      %v3516 = vpack.c.b16 %v2576, %v2572
      %v3517 = vpack.c.b16 %v2577, %v2573
      %v3518 = vpack.c.b16 %v2578, %v2574
      %v3519 = vpack.c.b16 %v2583, %v2579
      %v3520 = vpack.c.b16 %v2584, %v2580
      %v3521 = vpack.c.b16 %v2585, %v2581
      %v3522 = vpack.c.b16 %v2586, %v2582
      %v3523 = vpack.c.b16 %v2591, %v2587
      %v3524 = vpack.c.b16 %v2592, %v2588
      %v3525 = vpack.c.b16 %v2593, %v2589
      %v3526 = vpack.c.b16 %v2594, %v2590
      %v3527 = vpack.c.b16 %v2599, %v2595
      %v3528 = vpack.c.b16 %v2600, %v2596
      %v3529 = vpack.c.b16 %v2601, %v2597
      %v3530 = vpack.c.b16 %v2602, %v2598
      %v3531 = vpack.c.b16 %v2607, %v2603
      %v3532 = vpack.c.b16 %v2608, %v2604
      %v3533 = vpack.c.b16 %v2609, %v2605
      %v3534 = vpack.c.b16 %v2610, %v2606
      %v3535 = vpack.c.b16 %v2615, %v2611
      %v3536 = vpack.c.b16 %v2616, %v2612
      %v3537 = vpack.c.b16 %v2617, %v2613
      %v3538 = vpack.c.b16 %v2618, %v2614
      %v3539 = vpack.c.b16 %v2623, %v2619
      %v3540 = vpack.c.b16 %v2624, %v2620
      %v3541 = vpack.c.b16 %v2625, %v2621
      %v3542 = vpack.c.b16 %v2626, %v2622
      %v3543 = vpack.c.b16 %v2631, %v2627
      %v3544 = vpack.c.b16 %v2632, %v2628
      %v3545 = vpack.c.b16 %v2633, %v2629
      %v3546 = vpack.c.b16 %v2634, %v2630
      %v3547 = vpack.c.b16 %v2639, %v2635
      %v3548 = vpack.c.b16 %v2640, %v2636
      %v3549 = vpack.c.b16 %v2641, %v2637
      %v3550 = vpack.c.b16 %v2642, %v2638
      %v3551 = vpack.c.b16 %v2647, %v2643
      %v3552 = vpack.c.b16 %v2648, %v2644
      %v3553 = vpack.c.b16 %v2649, %v2645
      %v3554 = vpack.c.b16 %v2650, %v2646
      %v3555 = vpack.c.b16 %v2655, %v2651
      %v3556 = vpack.c.b16 %v2656, %v2652
      %v3557 = vpack.c.b16 %v2657, %v2653
      %v3558 = vpack.c.b16 %v2658, %v2654
      %v3559 = vpack.c.b16 %v2663, %v2659
      %v3560 = vpack.c.b16 %v2664, %v2660
      %v3561 = vpack.c.b16 %v2665, %v2661
      %v3562 = vpack.c.b16 %v2666, %v2662
      %v3563 = vpack.c.b16 %v2671, %v2667
      %v3564 = vpack.c.b16 %v2672, %v2668
      %v3565 = vpack.c.b16 %v2673, %v2669
      %v3566 = vpack.c.b16 %v2674, %v2670
      %v3567 = vpack.c.b16 %v2679, %v2675
      %v3568 = vpack.c.b16 %v2680, %v2676
      %v3569 = vpack.c.b16 %v2681, %v2677
      %v3570 = vpack.c.b16 %v2682, %v2678
      %v3571 = vpack.c.b16 %v2687, %v2683
      %v3572 = vpack.c.b16 %v2688, %v2684
      %v3573 = vpack.c.b16 %v2689, %v2685
      %v3574 = vpack.c.b16 %v2690, %v2686
      %v3575 = vpack.c.b16 %v2695, %v2691
      %v3576 = vpack.c.b16 %v2696, %v2692
      %v3577 = vpack.c.b16 %v2697, %v2693
      %v3578 = vpack.c.b16 %v2698, %v2694
      %v3579 = vpack.c.b16 %v2703, %v2699
      %v3580 = vpack.c.b16 %v2704, %v2700
      %v3581 = vpack.c.b16 %v2705, %v2701
      %v3582 = vpack.c.b16 %v2706, %v2702
      %v3583 = vpack.c.b16 %v2711, %v2707
      %v3584 = vpack.c.b16 %v2712, %v2708
      %v3585 = vpack.c.b16 %v2713, %v2709
      %v3586 = vpack.c.b16 %v2714, %v2710
      %v3587 = vpack.c.b16 %v2719, %v2715
      %v3588 = vpack.c.b16 %v2720, %v2716
      %v3589 = vpack.c.b16 %v2721, %v2717
      %v3590 = vpack.c.b16 %v2722, %v2718
      %v3591 = vpack.c.b16 %v2727, %v2723
      %v3592 = vpack.c.b16 %v2728, %v2724
      %v3593 = vpack.c.b16 %v2729, %v2725
      %v3594 = vpack.c.b16 %v2730, %v2726
      %v3595 = vpack.c.b16 %v2735, %v2731
      %v3596 = vpack.c.b16 %v2736, %v2732
      %v3597 = vpack.c.b16 %v2737, %v2733
      %v3598 = vpack.c.b16 %v2738, %v2734
      %v3599 = vpack.c.b16 %v2743, %v2739
      %v3600 = vpack.c.b16 %v2744, %v2740
      %v3601 = vpack.c.b16 %v2745, %v2741
      %v3602 = vpack.c.b16 %v2746, %v2742
      %v3603 = vpack.c.b16 %v2751, %v2747
      %v3604 = vpack.c.b16 %v2752, %v2748
      %v3605 = vpack.c.b16 %v2753, %v2749
      %v3606 = vpack.c.b16 %v2754, %v2750
      %v3607 = vpack.c.b16 %v2759, %v2755
      %v3608 = vpack.c.b16 %v2760, %v2756
      %v3609 = vpack.c.b16 %v2761, %v2757
      %v3610 = vpack.c.b16 %v2762, %v2758
      %v3611 = vpack.c.b16 %v2767, %v2763
      %v3612 = vpack.c.b16 %v2768, %v2764
      %v3613 = vpack.c.b16 %v2769, %v2765
      %v3614 = vpack.c.b16 %v2770, %v2766
      %v3615 = vpack.c.b16 %v2775, %v2771
      %v3616 = vpack.c.b16 %v2776, %v2772
      %v3617 = vpack.c.b16 %v2777, %v2773
      %v3618 = vpack.c.b16 %v2778, %v2774
      %v3619 = vpack.c.b16 %v2783, %v2779
      %v3620 = vpack.c.b16 %v2784, %v2780
      %v3621 = vpack.c.b16 %v2785, %v2781
      %v3622 = vpack.c.b16 %v2786, %v2782
      %v3623 = vpack.c.b16 %v2791, %v2787
      %v3624 = vpack.c.b16 %v2792, %v2788
      %v3625 = vpack.c.b16 %v2793, %v2789
      %v3626 = vpack.c.b16 %v2794, %v2790
      %v3627 = vpack.c.b16 %v2799, %v2795
      %v3628 = vpack.c.b16 %v2800, %v2796
      %v3629 = vpack.c.b16 %v2801, %v2797
      %v3630 = vpack.c.b16 %v2802, %v2798
      %v3631 = vpack.c.b16 %v2807, %v2803
      %v3632 = vpack.c.b16 %v2808, %v2804
      %v3633 = vpack.c.b16 %v2809, %v2805
      %v3634 = vpack.c.b16 %v2810, %v2806
      %v3635 = vpack.c.b16 %v2815, %v2811
      %v3636 = vpack.c.b16 %v2816, %v2812
      %v3637 = vpack.c.b16 %v2817, %v2813
      %v3638 = vpack.c.b16 %v2818, %v2814
      %v3639 = vpack.c.b16 %v2823, %v2819
      %v3640 = vpack.c.b16 %v2824, %v2820
      %v3641 = vpack.c.b16 %v2825, %v2821
      %v3642 = vpack.c.b16 %v2826, %v2822
      %v3643 = vpack.c.b16 %v2831, %v2827
      %v3644 = vpack.c.b16 %v2832, %v2828
      %v3645 = vpack.c.b16 %v2833, %v2829
      %v3646 = vpack.c.b16 %v2834, %v2830
      %v3647 = vpack.c.b16 %v2839, %v2835
      %v3648 = vpack.c.b16 %v2840, %v2836
      %v3649 = vpack.c.b16 %v2841, %v2837
      %v3650 = vpack.c.b16 %v2842, %v2838
      %v3651 = vpack.c.b16 %v2847, %v2843
      %v3652 = vpack.c.b16 %v2848, %v2844
      %v3653 = vpack.c.b16 %v2849, %v2845
      %v3654 = vpack.c.b16 %v2850, %v2846
      %v3655 = vpack.c.b16 %v2855, %v2851
      %v3656 = vpack.c.b16 %v2856, %v2852
      %v3657 = vpack.c.b16 %v2857, %v2853
      %v3658 = vpack.c.b16 %v2858, %v2854
      %v3659 = vpack.c.b16 %v2863, %v2859
      %v3660 = vpack.c.b16 %v2864, %v2860
      %v3661 = vpack.c.b16 %v2865, %v2861
      %v3662 = vpack.c.b16 %v2866, %v2862
      %v3663 = vpack.c.b16 %v2871, %v2867
      %v3664 = vpack.c.b16 %v2872, %v2868
      %v3665 = vpack.c.b16 %v2873, %v2869
      %v3666 = vpack.c.b16 %v2874, %v2870
      %v3667 = vpack.c.b16 %v2879, %v2875
      %v3668 = vpack.c.b16 %v2880, %v2876
      %v3669 = vpack.c.b16 %v2881, %v2877
      %v3670 = vpack.c.b16 %v2882, %v2878
      %v3671 = vpack.c.b16 %v2887, %v2883
      %v3672 = vpack.c.b16 %v2888, %v2884
      %v3673 = vpack.c.b16 %v2889, %v2885
      %v3674 = vpack.c.b16 %v2890, %v2886
      %v3675 = vpack.c.b16 %v2895, %v2891
      %v3676 = vpack.c.b16 %v2896, %v2892
      %v3677 = vpack.c.b16 %v2897, %v2893
      %v3678 = vpack.c.b16 %v2898, %v2894
      %v3679 = vpack.c.b16 %v2903, %v2899
      %v3680 = vpack.c.b16 %v2904, %v2900
      %v3681 = vpack.c.b16 %v2905, %v2901
      %v3682 = vpack.c.b16 %v2906, %v2902
      %v3683 = vpack.c.b16 %v2911, %v2907
      %v3684 = vpack.c.b16 %v2912, %v2908
      %v3685 = vpack.c.b16 %v2913, %v2909
      %v3686 = vpack.c.b16 %v2914, %v2910
      %v3687 = vpack.c.b16 %v2919, %v2915
      %v3688 = vpack.c.b16 %v2920, %v2916
      %v3689 = vpack.c.b16 %v2921, %v2917
      %v3690 = vpack.c.b16 %v2922, %v2918
      %v3691 = vpack.c.b16 %v2927, %v2923
      %v3692 = vpack.c.b16 %v2928, %v2924
      %v3693 = vpack.c.b16 %v2929, %v2925
      %v3694 = vpack.c.b16 %v2930, %v2926
      %v3695 = vpack.c.b16 %v2935, %v2931
      %v3696 = vpack.c.b16 %v2936, %v2932
      %v3697 = vpack.c.b16 %v2937, %v2933
      %v3698 = vpack.c.b16 %v2938, %v2934
      %v3699 = vpack.c.b16 %v2943, %v2939
      %v3700 = vpack.c.b16 %v2944, %v2940
      %v3701 = vpack.c.b16 %v2945, %v2941
      %v3702 = vpack.c.b16 %v2946, %v2942
      %v3703 = vpack.c.b16 %v2951, %v2947
      %v3704 = vpack.c.b16 %v2952, %v2948
      %v3705 = vpack.c.b16 %v2953, %v2949
      %v3706 = vpack.c.b16 %v2954, %v2950
      %v3707 = vpack.c.b16 %v2959, %v2955
      %v3708 = vpack.c.b16 %v2960, %v2956
      %v3709 = vpack.c.b16 %v2961, %v2957
      %v3710 = vpack.c.b16 %v2962, %v2958
      %v3711 = vpack.c.b16 %v2967, %v2963
      %v3712 = vpack.c.b16 %v2968, %v2964
      %v3713 = vpack.c.b16 %v2969, %v2965
      %v3714 = vpack.c.b16 %v2970, %v2966
      %v3715 = vpack.c.b16 %v2975, %v2971
      %v3716 = vpack.c.b16 %v2976, %v2972
      %v3717 = vpack.c.b16 %v2977, %v2973
      %v3718 = vpack.c.b16 %v2978, %v2974
      %v3719 = vpack.c.b16 %v2983, %v2979
      %v3720 = vpack.c.b16 %v2984, %v2980
      %v3721 = vpack.c.b16 %v2985, %v2981
      %v3722 = vpack.c.b16 %v2986, %v2982
      %v3723 = vpack.c.b16 %v2991, %v2987
      %v3724 = vpack.c.b16 %v2992, %v2988
      %v3725 = vpack.c.b16 %v2993, %v2989
      %v3726 = vpack.c.b16 %v2994, %v2990
      %v3727 = vpack.c.b16 %v2999, %v2995
      %v3728 = vpack.c.b16 %v3000, %v2996
      %v3729 = vpack.c.b16 %v3001, %v2997
      %v3730 = vpack.c.b16 %v3002, %v2998
      %v3731 = vpack.c.b16 %v3007, %v3003
      %v3732 = vpack.c.b16 %v3008, %v3004
      %v3733 = vpack.c.b16 %v3009, %v3005
      %v3734 = vpack.c.b16 %v3010, %v3006
      %v3735 = vpack.c.b16 %v3015, %v3011
      %v3736 = vpack.c.b16 %v3016, %v3012
      %v3737 = vpack.c.b16 %v3017, %v3013
      %v3738 = vpack.c.b16 %v3018, %v3014
      %v3739 = vpack.c.b16 %v3023, %v3019
      %v3740 = vpack.c.b16 %v3024, %v3020
      %v3741 = vpack.c.b16 %v3025, %v3021
      %v3742 = vpack.c.b16 %v3026, %v3022
      %v3743 = vpack.c.b16 %v3031, %v3027
      %v3744 = vpack.c.b16 %v3032, %v3028
      %v3745 = vpack.c.b16 %v3033, %v3029
      %v3746 = vpack.c.b16 %v3034, %v3030
      %v3747 = vpack.c.b16 %v3039, %v3035
      %v3748 = vpack.c.b16 %v3040, %v3036
      %v3749 = vpack.c.b16 %v3041, %v3037
      %v3750 = vpack.c.b16 %v3042, %v3038
      %v3751 = vpack.c.b16 %v3047, %v3043
      %v3752 = vpack.c.b16 %v3048, %v3044
      %v3753 = vpack.c.b16 %v3049, %v3045
      %v3754 = vpack.c.b16 %v3050, %v3046
      %v3755 = vpack.c.b16 %v3055, %v3051
      %v3756 = vpack.c.b16 %v3056, %v3052
      %v3757 = vpack.c.b16 %v3057, %v3053
      %v3758 = vpack.c.b16 %v3058, %v3054
      %v3759 = vpack.c.b16 %v3063, %v3059
      %v3760 = vpack.c.b16 %v3064, %v3060
      %v3761 = vpack.c.b16 %v3065, %v3061
      %v3762 = vpack.c.b16 %v3066, %v3062
      %v3763 = vpack.c.b16 %v3071, %v3067
      %v3764 = vpack.c.b16 %v3072, %v3068
      %v3765 = vpack.c.b16 %v3073, %v3069
      %v3766 = vpack.c.b16 %v3074, %v3070
      %v3767 = vpack.c.b16 %v3079, %v3075
      %v3768 = vpack.c.b16 %v3080, %v3076
      %v3769 = vpack.c.b16 %v3081, %v3077
      %v3770 = vpack.c.b16 %v3082, %v3078
      %v3771 = vpack.c.b16 %v3087, %v3083
      %v3772 = vpack.c.b16 %v3088, %v3084
      %v3773 = vpack.c.b16 %v3089, %v3085
      %v3774 = vpack.c.b16 %v3090, %v3086
      %v3775 = vpack.c.b16 %v3095, %v3091
      %v3776 = vpack.c.b16 %v3096, %v3092
      %v3777 = vpack.c.b16 %v3097, %v3093
      %v3778 = vpack.c.b16 %v3098, %v3094
      %v3779 = vpack.c.b16 %v3103, %v3099
      %v3780 = vpack.c.b16 %v3104, %v3100
      %v3781 = vpack.c.b16 %v3105, %v3101
      %v3782 = vpack.c.b16 %v3106, %v3102
      %v3783 = vpack.c.b16 %v3111, %v3107
      %v3784 = vpack.c.b16 %v3112, %v3108
      %v3785 = vpack.c.b16 %v3113, %v3109
      %v3786 = vpack.c.b16 %v3114, %v3110
      %v3787 = vpack.c.b16 %v3119, %v3115
      %v3788 = vpack.c.b16 %v3120, %v3116
      %v3789 = vpack.c.b16 %v3121, %v3117
      %v3790 = vpack.c.b16 %v3122, %v3118
      %v3791 = vpack.c.b16 %v3127, %v3123
      %v3792 = vpack.c.b16 %v3128, %v3124
      %v3793 = vpack.c.b16 %v3129, %v3125
      %v3794 = vpack.c.b16 %v3130, %v3126
      %v3795 = vpack.c.b16 %v3135, %v3131
      %v3796 = vpack.c.b16 %v3136, %v3132
      %v3797 = vpack.c.b16 %v3137, %v3133
      %v3798 = vpack.c.b16 %v3138, %v3134
      %v3799 = vpack.c.b16 %v3143, %v3139
      %v3800 = vpack.c.b16 %v3144, %v3140
      %v3801 = vpack.c.b16 %v3145, %v3141
      %v3802 = vpack.c.b16 %v3146, %v3142
      %v3803 = vpack.c.b16 %v3151, %v3147
      %v3804 = vpack.c.b16 %v3152, %v3148
      %v3805 = vpack.c.b16 %v3153, %v3149
      %v3806 = vpack.c.b16 %v3154, %v3150
      %v3807 = vpack.c.b16 %v3159, %v3155
      %v3808 = vpack.c.b16 %v3160, %v3156
      %v3809 = vpack.c.b16 %v3161, %v3157
      %v3810 = vpack.c.b16 %v3162, %v3158
      %v3811 = vpack.c.b16 %v3167, %v3163
      %v3812 = vpack.c.b16 %v3168, %v3164
      %v3813 = vpack.c.b16 %v3169, %v3165
      %v3814 = vpack.c.b16 %v3170, %v3166
      %v3815 = vpack.c.b16 %v3175, %v3171
      %v3816 = vpack.c.b16 %v3176, %v3172
      %v3817 = vpack.c.b16 %v3177, %v3173
      %v3818 = vpack.c.b16 %v3178, %v3174
      %v3819 = vpack.c.b16 %v3183, %v3179
      %v3820 = vpack.c.b16 %v3184, %v3180
      %v3821 = vpack.c.b16 %v3185, %v3181
      %v3822 = vpack.c.b16 %v3186, %v3182
      %v3823 = vpack.c.b16 %v3191, %v3187
      %v3824 = vpack.c.b16 %v3192, %v3188
      %v3825 = vpack.c.b16 %v3193, %v3189
      %v3826 = vpack.c.b16 %v3194, %v3190
      %v3827 = vpack.c.b16 %v3199, %v3195
      %v3828 = vpack.c.b16 %v3200, %v3196
      %v3829 = vpack.c.b16 %v3201, %v3197
      %v3830 = vpack.c.b16 %v3202, %v3198
      %v3831 = vpack.c.b16 %v3207, %v3203
      %v3832 = vpack.c.b16 %v3208, %v3204
      %v3833 = vpack.c.b16 %v3209, %v3205
      %v3834 = vpack.c.b16 %v3210, %v3206
      %v3835 = vpack.c.b16 %v3215, %v3211
      %v3836 = vpack.c.b16 %v3216, %v3212
      %v3837 = vpack.c.b16 %v3217, %v3213
      %v3838 = vpack.c.b16 %v3218, %v3214
      %v3839 = vpack.c.b16 %v3223, %v3219
      %v3840 = vpack.c.b16 %v3224, %v3220
      %v3841 = vpack.c.b16 %v3225, %v3221
      %v3842 = vpack.c.b16 %v3226, %v3222
      %v3843 = vpack.c.b16 %v3231, %v3227
      %v3844 = vpack.c.b16 %v3232, %v3228
      %v3845 = vpack.c.b16 %v3233, %v3229
      %v3846 = vpack.c.b16 %v3234, %v3230
      %v3847 = vpack.c.b16 %v3239, %v3235
      %v3848 = vpack.c.b16 %v3240, %v3236
      %v3849 = vpack.c.b16 %v3241, %v3237
      %v3850 = vpack.c.b16 %v3242, %v3238
      %v3851 = vpack.c.b16 %v3247, %v3243
      %v3852 = vpack.c.b16 %v3248, %v3244
      %v3853 = vpack.c.b16 %v3249, %v3245
      %v3854 = vpack.c.b16 %v3250, %v3246
      %v3855 = vpack.c.b16 %v3255, %v3251
      %v3856 = vpack.c.b16 %v3256, %v3252
      %v3857 = vpack.c.b16 %v3257, %v3253
      %v3858 = vpack.c.b16 %v3258, %v3254
      %v3859 = vpack.c.b16 %v3263, %v3259
      %v3860 = vpack.c.b16 %v3264, %v3260
      %v3861 = vpack.c.b16 %v3265, %v3261
      %v3862 = vpack.c.b16 %v3266, %v3262
      %v3863 = vpack.c.b16 %v3271, %v3267
      %v3864 = vpack.c.b16 %v3272, %v3268
      %v3865 = vpack.c.b16 %v3273, %v3269
      %v3866 = vpack.c.b16 %v3274, %v3270
      %v3867 = vpack.c.b16 %v3279, %v3275
      %v3868 = vpack.c.b16 %v3280, %v3276
      %v3869 = vpack.c.b16 %v3281, %v3277
      %v3870 = vpack.c.b16 %v3282, %v3278
      %v3871 = vpack.c.b16 %v3287, %v3283
      %v3872 = vpack.c.b16 %v3288, %v3284
      %v3873 = vpack.c.b16 %v3289, %v3285
      %v3874 = vpack.c.b16 %v3290, %v3286
      %v3875 = vpack.c.b16 %v3295, %v3291
      %v3876 = vpack.c.b16 %v3296, %v3292
      %v3877 = vpack.c.b16 %v3297, %v3293
      %v3878 = vpack.c.b16 %v3298, %v3294
      %v3879 = vpack.c.b16 %v3303, %v3299
      %v3880 = vpack.c.b16 %v3304, %v3300
      %v3881 = vpack.c.b16 %v3305, %v3301
      %v3882 = vpack.c.b16 %v3306, %v3302
      %4459 = vmatprep.subr.bf16.mxu0 %v3308
      %4460 = vmatpush1.bf16.msra.mxu0 %v3307
      %4461 = vmatprep.subr.bf16.mxu0 %v3312
      %4462 = vmatpush1.bf16.msra.mxu0 %v3311
      %4463 = vmatprep.subr.bf16.mxu0 %v3316
      %4464 = vmatpush1.bf16.msra.mxu0 %v3315
      %4465 = vmatprep.subr.bf16.mxu0 %v3320
      %4466 = vmatpush1.bf16.msra.mxu0 %v3319
      %4467 = vmatprep.subr.bf16.mxu0 %v3324
      %4468 = vmatpush1.bf16.msra.mxu0 %v3323
      %4469 = vmatprep.subr.bf16.mxu0 %v3328
      %4470 = vmatpush1.bf16.msra.mxu0 %v3327
      %4471 = vmatprep.subr.bf16.mxu0 %v3332
      %4472 = vmatpush1.bf16.msra.mxu0 %v3331
      %4473 = vmatprep.subr.bf16.mxu0 %v3336
      %4474 = vmatpush1.bf16.msra.mxu0 %v3335
      %4475 = vmatprep.subr.bf16.mxu0 %v3340
      %4476 = vmatpush1.bf16.msra.mxu0 %v3339
      %4477 = vmatprep.subr.bf16.mxu0 %v3344
      %4478 = vmatpush1.bf16.msra.mxu0 %v3343
      %4479 = vmatprep.subr.bf16.mxu0 %v3348
      %4480 = vmatpush1.bf16.msra.mxu0 %v3347
      %4481 = vmatprep.subr.bf16.mxu0 %v3352
      %4482 = vmatpush1.bf16.msra.mxu0 %v3351
      %4483 = vmatprep.subr.bf16.mxu0 %v3356
      %4484 = vmatpush1.bf16.msra.mxu0 %v3355
      %4485 = vmatprep.subr.bf16.mxu0 %v3360
      %4486 = vmatpush1.bf16.msra.mxu0 %v3359
      %4487 = vmatprep.subr.bf16.mxu0 %v3364
      %4488 = vmatpush1.bf16.msra.mxu0 %v3363
      %4489 = vmatprep.subr.bf16.mxu0 %v3368
      %4490 = vmatpush1.bf16.msra.mxu0 %v3367
      %4491 = vmatprep.mubr.bf16.mxu0 %v1476
      %4492 = vmatmul.mubr.bf16.gmra.mrb[0].mxu0 %v1462
      %v4493 = vpop.f32.mrb[0].mxu0
      %v4494 = vadd.f32 %v1421, %v4493
      %v4495 = vpop.f32.mrb[0].mxu0
      %v4496 = vadd.f32 %v1425, %v4495
      %v4497 = vpop.f32.mrb[0].mxu0
      %v4498 = vpop.f32.mrb[0].mxu0
      %4499 = vdwg.mxu0
      %4500 = vmatprep.subr.bf16.mxu0 %v3372
      %4501 = vmatpush1.bf16.msra.mxu0 %v3371
      %4502 = vmatprep.subr.bf16.mxu0 %v3376
      %4503 = vmatpush1.bf16.msra.mxu0 %v3375
      %4504 = vmatprep.subr.bf16.mxu0 %v3380
      %4505 = vmatpush1.bf16.msra.mxu0 %v3379
      %4506 = vmatprep.subr.bf16.mxu0 %v3384
      %4507 = vmatpush1.bf16.msra.mxu0 %v3383
      %4508 = vmatprep.subr.bf16.mxu0 %v3388
      %4509 = vmatpush1.bf16.msra.mxu0 %v3387
      %4510 = vmatprep.subr.bf16.mxu0 %v3392
      %4511 = vmatpush1.bf16.msra.mxu0 %v3391
      %4512 = vmatprep.subr.bf16.mxu0 %v3396
      %4513 = vmatpush1.bf16.msra.mxu0 %v3395
      %4514 = vmatprep.subr.bf16.mxu0 %v3400
      %4515 = vmatpush1.bf16.msra.mxu0 %v3399
      %4516 = vmatprep.subr.bf16.mxu0 %v3404
      %4517 = vmatpush1.bf16.msra.mxu0 %v3403
      %4518 = vmatprep.subr.bf16.mxu0 %v3408
      %4519 = vmatpush1.bf16.msra.mxu0 %v3407
      %4520 = vmatprep.subr.bf16.mxu0 %v3412
      %4521 = vmatpush1.bf16.msra.mxu0 %v3411
      %4522 = vmatprep.subr.bf16.mxu0 %v3416
      %4523 = vmatpush1.bf16.msra.mxu0 %v3415
      %4524 = vmatprep.subr.bf16.mxu0 %v3420
      %4525 = vmatpush1.bf16.msra.mxu0 %v3419
      %4526 = vmatprep.subr.bf16.mxu0 %v3424
      %4527 = vmatpush1.bf16.msra.mxu0 %v3423
      %4528 = vmatprep.subr.bf16.mxu0 %v3428
      %4529 = vmatpush1.bf16.msra.mxu0 %v3427
      %4530 = vmatprep.subr.bf16.mxu0 %v3432
      %4531 = vmatpush1.bf16.msra.mxu0 %v3431
      %4532 = vmatprep.mubr.bf16.mxu0 %v1486
      %4533 = vmatmul.mubr.bf16.gmra.mrb[0].mxu0 %v1484
      %v4534 = vpop.f32.mrb[0].mxu0
      %v4535 = vadd.f32 %v4494, %v4534
      %v4536 = vpop.f32.mrb[0].mxu0
      %v4537 = vadd.f32 %v4496, %v4536
      %v4538 = vpop.f32.mrb[0].mxu0
      %v4539 = vpop.f32.mrb[0].mxu0
      %4540 = vdwg.mxu0
      %4541 = vmatprep.subr.bf16.mxu0 %v3436
      %4542 = vmatpush1.bf16.msra.mxu0 %v3435
      %4543 = vmatprep.subr.bf16.mxu0 %v3440
      %4544 = vmatpush1.bf16.msra.mxu0 %v3439
      %4545 = vmatprep.subr.bf16.mxu0 %v3444
      %4546 = vmatpush1.bf16.msra.mxu0 %v3443
      %4547 = vmatprep.subr.bf16.mxu0 %v3448
      %4548 = vmatpush1.bf16.msra.mxu0 %v3447
      %4549 = vmatprep.subr.bf16.mxu0 %v3452
      %4550 = vmatpush1.bf16.msra.mxu0 %v3451
      %4551 = vmatprep.subr.bf16.mxu0 %v3456
      %4552 = vmatpush1.bf16.msra.mxu0 %v3455
      %4553 = vmatprep.subr.bf16.mxu0 %v3460
      %4554 = vmatpush1.bf16.msra.mxu0 %v3459
      %4555 = vmatprep.subr.bf16.mxu0 %v3464
      %4556 = vmatpush1.bf16.msra.mxu0 %v3463
      %4557 = vmatprep.subr.bf16.mxu0 %v3468
      %4558 = vmatpush1.bf16.msra.mxu0 %v3467
      %4559 = vmatprep.subr.bf16.mxu0 %v3472
      %4560 = vmatpush1.bf16.msra.mxu0 %v3471
      %4561 = vmatprep.subr.bf16.mxu0 %v3476
      %4562 = vmatpush1.bf16.msra.mxu0 %v3475
      %4563 = vmatprep.subr.bf16.mxu0 %v3480
      %4564 = vmatpush1.bf16.msra.mxu0 %v3479
      %4565 = vmatprep.subr.bf16.mxu0 %v3484
      %4566 = vmatpush1.bf16.msra.mxu0 %v3483
      %4567 = vmatprep.subr.bf16.mxu0 %v3488
      %4568 = vmatpush1.bf16.msra.mxu0 %v3487
      %4569 = vmatprep.subr.bf16.mxu0 %v3492
      %4570 = vmatpush1.bf16.msra.mxu0 %v3491
      %4571 = vmatprep.subr.bf16.mxu0 %v3496
      %4572 = vmatpush1.bf16.msra.mxu0 %v3495
      %4573 = vmatprep.mubr.bf16.mxu0 %v1483
      %4574 = vmatmul.mubr.bf16.gmra.mrb[0].mxu0 %v1469
      %v4575 = vpop.f32.mrb[0].mxu0
      %v4576 = vadd.f32 %v4535, %v4575
      %v4577 = vpop.f32.mrb[0].mxu0
      %v4578 = vadd.f32 %v4537, %v4577
      %v4579 = vpop.f32.mrb[0].mxu0
      %v4580 = vpop.f32.mrb[0].mxu0
      %4581 = vdwg.mxu0
      %4582 = vmatprep.subr.bf16.mxu0 %v3500
      %4583 = vmatpush1.bf16.msra.mxu0 %v3499
      %4584 = vmatprep.subr.bf16.mxu0 %v3504
      %4585 = vmatpush1.bf16.msra.mxu0 %v3503
      %4586 = vmatprep.subr.bf16.mxu0 %v3508
      %4587 = vmatpush1.bf16.msra.mxu0 %v3507
      %4588 = vmatprep.subr.bf16.mxu0 %v3512
      %4589 = vmatpush1.bf16.msra.mxu0 %v3511
      %4590 = vmatprep.subr.bf16.mxu0 %v3516
      %4591 = vmatpush1.bf16.msra.mxu0 %v3515
      %4592 = vmatprep.subr.bf16.mxu0 %v3520
      %4593 = vmatpush1.bf16.msra.mxu0 %v3519
      %4594 = vmatprep.subr.bf16.mxu0 %v3524
      %4595 = vmatpush1.bf16.msra.mxu0 %v3523
      %4596 = vmatprep.subr.bf16.mxu0 %v3528
      %4597 = vmatpush1.bf16.msra.mxu0 %v3527
      %4598 = vmatprep.subr.bf16.mxu0 %v3532
      %4599 = vmatpush1.bf16.msra.mxu0 %v3531
      %4600 = vmatprep.subr.bf16.mxu0 %v3536
      %4601 = vmatpush1.bf16.msra.mxu0 %v3535
      %4602 = vmatprep.subr.bf16.mxu0 %v3540
      %4603 = vmatpush1.bf16.msra.mxu0 %v3539
      %4604 = vmatprep.subr.bf16.mxu0 %v3544
      %4605 = vmatpush1.bf16.msra.mxu0 %v3543
      %4606 = vmatprep.subr.bf16.mxu0 %v3548
      %4607 = vmatpush1.bf16.msra.mxu0 %v3547
      %4608 = vmatprep.subr.bf16.mxu0 %v3552
      %4609 = vmatpush1.bf16.msra.mxu0 %v3551
      %4610 = vmatprep.subr.bf16.mxu0 %v3556
      %4611 = vmatpush1.bf16.msra.mxu0 %v3555
      %4612 = vmatprep.subr.bf16.mxu0 %v3560
      %4613 = vmatpush1.bf16.msra.mxu0 %v3559
      %4614 = vmatprep.mubr.bf16.mxu0 %v1487
      %4615 = vmatmul.mubr.bf16.gmra.mrb[0].mxu0 %v1485
      %v4616 = vpop.f32.mrb[0].mxu0
      %v4617 = vadd.f32 %v4576, %v4616
      %v4618 = vpop.f32.mrb[0].mxu0
      %v4619 = vadd.f32 %v4578, %v4618
      %v4620 = vpop.f32.mrb[0].mxu0
      %v4621 = vpop.f32.mrb[0].mxu0
      %4622 = vdwg.mxu0
      %4623 = vmatprep.subr.bf16.mxu0 %v3564
      %4624 = vmatpush1.bf16.msra.mxu0 %v3563
      %4625 = vmatprep.subr.bf16.mxu0 %v3568
      %4626 = vmatpush1.bf16.msra.mxu0 %v3567
      %4627 = vmatprep.subr.bf16.mxu0 %v3572
      %4628 = vmatpush1.bf16.msra.mxu0 %v3571
      %4629 = vmatprep.subr.bf16.mxu0 %v3576
      %4630 = vmatpush1.bf16.msra.mxu0 %v3575
      %4631 = vmatprep.subr.bf16.mxu0 %v3580
      %4632 = vmatpush1.bf16.msra.mxu0 %v3579
      %4633 = vmatprep.subr.bf16.mxu0 %v3584
      %4634 = vmatpush1.bf16.msra.mxu0 %v3583
      %4635 = vmatprep.subr.bf16.mxu0 %v3588
      %4636 = vmatpush1.bf16.msra.mxu0 %v3587
      %4637 = vmatprep.subr.bf16.mxu0 %v3592
      %4638 = vmatpush1.bf16.msra.mxu0 %v3591
      %4639 = vmatprep.subr.bf16.mxu0 %v3596
      %4640 = vmatpush1.bf16.msra.mxu0 %v3595
      %4641 = vmatprep.subr.bf16.mxu0 %v3600
      %4642 = vmatpush1.bf16.msra.mxu0 %v3599
      %4643 = vmatprep.subr.bf16.mxu0 %v3604
      %4644 = vmatpush1.bf16.msra.mxu0 %v3603
      %4645 = vmatprep.subr.bf16.mxu0 %v3608
      %4646 = vmatpush1.bf16.msra.mxu0 %v3607
      %4647 = vmatprep.subr.bf16.mxu0 %v3612
      %4648 = vmatpush1.bf16.msra.mxu0 %v3611
      %4649 = vmatprep.subr.bf16.mxu0 %v3616
      %4650 = vmatpush1.bf16.msra.mxu0 %v3615
      %4651 = vmatprep.subr.bf16.mxu0 %v3620
      %4652 = vmatpush1.bf16.msra.mxu0 %v3619
      %4653 = vmatprep.subr.bf16.mxu0 %v3624
      %4654 = vmatpush1.bf16.msra.mxu0 %v3623
      %4655 = vmatprep.mubr.bf16.mxu0 %v1526
      %4656 = vmatmul.mubr.bf16.gmra.mrb[0].mxu0 %v1512
      %v4657 = vpop.f32.mrb[0].mxu0
      %v4658 = vadd.f32 %v4617, %v4657
      %v4659 = vpop.f32.mrb[0].mxu0
      %v4660 = vadd.f32 %v4619, %v4659
      %v4661 = vpop.f32.mrb[0].mxu0
      %v4662 = vpop.f32.mrb[0].mxu0
      %4663 = vdwg.mxu0
      %4664 = vmatprep.subr.bf16.mxu0 %v3628
      %4665 = vmatpush1.bf16.msra.mxu0 %v3627
      %4666 = vmatprep.subr.bf16.mxu0 %v3632
      %4667 = vmatpush1.bf16.msra.mxu0 %v3631
      %4668 = vmatprep.subr.bf16.mxu0 %v3636
      %4669 = vmatpush1.bf16.msra.mxu0 %v3635
      %4670 = vmatprep.subr.bf16.mxu0 %v3640
      %4671 = vmatpush1.bf16.msra.mxu0 %v3639
      %4672 = vmatprep.subr.bf16.mxu0 %v3644
      %4673 = vmatpush1.bf16.msra.mxu0 %v3643
      %4674 = vmatprep.subr.bf16.mxu0 %v3648
      %4675 = vmatpush1.bf16.msra.mxu0 %v3647
      %4676 = vmatprep.subr.bf16.mxu0 %v3652
      %4677 = vmatpush1.bf16.msra.mxu0 %v3651
      %4678 = vmatprep.subr.bf16.mxu0 %v3656
      %4679 = vmatpush1.bf16.msra.mxu0 %v3655
      %4680 = vmatprep.subr.bf16.mxu0 %v3660
      %4681 = vmatpush1.bf16.msra.mxu0 %v3659
      %4682 = vmatprep.subr.bf16.mxu0 %v3664
      %4683 = vmatpush1.bf16.msra.mxu0 %v3663
      %4684 = vmatprep.subr.bf16.mxu0 %v3668
      %4685 = vmatpush1.bf16.msra.mxu0 %v3667
      %4686 = vmatprep.subr.bf16.mxu0 %v3672
      %4687 = vmatpush1.bf16.msra.mxu0 %v3671
      %4688 = vmatprep.subr.bf16.mxu0 %v3676
      %4689 = vmatpush1.bf16.msra.mxu0 %v3675
      %4690 = vmatprep.subr.bf16.mxu0 %v3680
      %4691 = vmatpush1.bf16.msra.mxu0 %v3679
      %4692 = vmatprep.subr.bf16.mxu0 %v3684
      %4693 = vmatpush1.bf16.msra.mxu0 %v3683
      %4694 = vmatprep.subr.bf16.mxu0 %v3688
      %4695 = vmatpush1.bf16.msra.mxu0 %v3687
      %4696 = vmatprep.mubr.bf16.mxu0 %v1536
      %4697 = vmatmul.mubr.bf16.gmra.mrb[0].mxu0 %v1534
      %v4698 = vpop.f32.mrb[0].mxu0
      %v4699 = vadd.f32 %v4658, %v4698
      %v4700 = vpop.f32.mrb[0].mxu0
      %v4701 = vadd.f32 %v4660, %v4700
      %v4702 = vpop.f32.mrb[0].mxu0
      %v4703 = vpop.f32.mrb[0].mxu0
      %4704 = vdwg.mxu0
      %4705 = vmatprep.subr.bf16.mxu0 %v3692
      %4706 = vmatpush1.bf16.msra.mxu0 %v3691
      %4707 = vmatprep.subr.bf16.mxu0 %v3696
      %4708 = vmatpush1.bf16.msra.mxu0 %v3695
      %4709 = vmatprep.subr.bf16.mxu0 %v3700
      %4710 = vmatpush1.bf16.msra.mxu0 %v3699
      %4711 = vmatprep.subr.bf16.mxu0 %v3704
      %4712 = vmatpush1.bf16.msra.mxu0 %v3703
      %4713 = vmatprep.subr.bf16.mxu0 %v3708
      %4714 = vmatpush1.bf16.msra.mxu0 %v3707
      %4715 = vmatprep.subr.bf16.mxu0 %v3712
      %4716 = vmatpush1.bf16.msra.mxu0 %v3711
      %4717 = vmatprep.subr.bf16.mxu0 %v3716
      %4718 = vmatpush1.bf16.msra.mxu0 %v3715
      %4719 = vmatprep.subr.bf16.mxu0 %v3720
      %4720 = vmatpush1.bf16.msra.mxu0 %v3719
      %4721 = vmatprep.subr.bf16.mxu0 %v3724
      %4722 = vmatpush1.bf16.msra.mxu0 %v3723
      %4723 = vmatprep.subr.bf16.mxu0 %v3728
      %4724 = vmatpush1.bf16.msra.mxu0 %v3727
      %4725 = vmatprep.subr.bf16.mxu0 %v3732
      %4726 = vmatpush1.bf16.msra.mxu0 %v3731
      %4727 = vmatprep.subr.bf16.mxu0 %v3736
      %4728 = vmatpush1.bf16.msra.mxu0 %v3735
      %4729 = vmatprep.subr.bf16.mxu0 %v3740
      %4730 = vmatpush1.bf16.msra.mxu0 %v3739
      %4731 = vmatprep.subr.bf16.mxu0 %v3744
      %4732 = vmatpush1.bf16.msra.mxu0 %v3743
      %4733 = vmatprep.subr.bf16.mxu0 %v3748
      %4734 = vmatpush1.bf16.msra.mxu0 %v3747
      %4735 = vmatprep.subr.bf16.mxu0 %v3752
      %4736 = vmatpush1.bf16.msra.mxu0 %v3751
      %4737 = vmatprep.mubr.bf16.mxu0 %v1533
      %4738 = vmatmul.mubr.bf16.gmra.mrb[0].mxu0 %v1519
      %v4739 = vpop.f32.mrb[0].mxu0
      %v4740 = vadd.f32 %v4699, %v4739
      %v4741 = vpop.f32.mrb[0].mxu0
      %v4742 = vadd.f32 %v4701, %v4741
      %v4743 = vpop.f32.mrb[0].mxu0
      %v4744 = vpop.f32.mrb[0].mxu0
      %4745 = vdwg.mxu0
      %4746 = vmatprep.subr.bf16.mxu0 %v3756
      %4747 = vmatpush1.bf16.msra.mxu0 %v3755
      %4748 = vmatprep.subr.bf16.mxu0 %v3760
      %4749 = vmatpush1.bf16.msra.mxu0 %v3759
      %4750 = vmatprep.subr.bf16.mxu0 %v3764
      %4751 = vmatpush1.bf16.msra.mxu0 %v3763
      %4752 = vmatprep.subr.bf16.mxu0 %v3768
      %4753 = vmatpush1.bf16.msra.mxu0 %v3767
      %4754 = vmatprep.subr.bf16.mxu0 %v3772
      %4755 = vmatpush1.bf16.msra.mxu0 %v3771
      %4756 = vmatprep.subr.bf16.mxu0 %v3776
      %4757 = vmatpush1.bf16.msra.mxu0 %v3775
      %4758 = vmatprep.subr.bf16.mxu0 %v3780
      %4759 = vmatpush1.bf16.msra.mxu0 %v3779
      %4760 = vmatprep.subr.bf16.mxu0 %v3784
      %4761 = vmatpush1.bf16.msra.mxu0 %v3783
      %4762 = vmatprep.subr.bf16.mxu0 %v3788
      %4763 = vmatpush1.bf16.msra.mxu0 %v3787
      %4764 = vmatprep.subr.bf16.mxu0 %v3792
      %4765 = vmatpush1.bf16.msra.mxu0 %v3791
      %4766 = vmatprep.subr.bf16.mxu0 %v3796
      %4767 = vmatpush1.bf16.msra.mxu0 %v3795
      %4768 = vmatprep.subr.bf16.mxu0 %v3800
      %4769 = vmatpush1.bf16.msra.mxu0 %v3799
      %4770 = vmatprep.subr.bf16.mxu0 %v3804
      %4771 = vmatpush1.bf16.msra.mxu0 %v3803
      %4772 = vmatprep.subr.bf16.mxu0 %v3808
      %4773 = vmatpush1.bf16.msra.mxu0 %v3807
      %4774 = vmatprep.subr.bf16.mxu0 %v3812
      %4775 = vmatpush1.bf16.msra.mxu0 %v3811
      %4776 = vmatprep.subr.bf16.mxu0 %v3816
      %4777 = vmatpush1.bf16.msra.mxu0 %v3815
      %4778 = vmatprep.mubr.bf16.mxu0 %v1537
      %4779 = vmatmul.mubr.bf16.gmra.mrb[0].mxu0 %v1535
      %v4780 = vpop.f32.mrb[0].mxu0
      %v4781 = vadd.f32 %v4740, %v4780
      %v4782 = vpop.f32.mrb[0].mxu0
      %v4783 = vadd.f32 %v4742, %v4782
      %v4784 = vpop.f32.mrb[0].mxu0
      %v4785 = vpop.f32.mrb[0].mxu0
      %4786 = vdwg.mxu0
      %4787 = vmatprep.subr.bf16.mxu0 %v3820
      %4788 = vmatpush1.bf16.msra.mxu0 %v3819
      %4789 = vmatprep.subr.bf16.mxu0 %v3824
      %4790 = vmatpush1.bf16.msra.mxu0 %v3823
      %4791 = vmatprep.subr.bf16.mxu0 %v3828
      %4792 = vmatpush1.bf16.msra.mxu0 %v3827
      %4793 = vmatprep.subr.bf16.mxu0 %v3832
      %4794 = vmatpush1.bf16.msra.mxu0 %v3831
      %4795 = vmatprep.subr.bf16.mxu0 %v3836
      %4796 = vmatpush1.bf16.msra.mxu0 %v3835
      %4797 = vmatprep.subr.bf16.mxu0 %v3840
      %4798 = vmatpush1.bf16.msra.mxu0 %v3839
      %4799 = vmatprep.subr.bf16.mxu0 %v3844
      %4800 = vmatpush1.bf16.msra.mxu0 %v3843
      %4801 = vmatprep.subr.bf16.mxu0 %v3848
      %4802 = vmatpush1.bf16.msra.mxu0 %v3847
      %4803 = vmatprep.subr.bf16.mxu0 %v3852
      %4804 = vmatpush1.bf16.msra.mxu0 %v3851
      %4805 = vmatprep.subr.bf16.mxu0 %v3856
      %4806 = vmatpush1.bf16.msra.mxu0 %v3855
      %4807 = vmatprep.subr.bf16.mxu0 %v3860
      %4808 = vmatpush1.bf16.msra.mxu0 %v3859
      %4809 = vmatprep.subr.bf16.mxu0 %v3864
      %4810 = vmatpush1.bf16.msra.mxu0 %v3863
      %4811 = vmatprep.subr.bf16.mxu0 %v3868
      %4812 = vmatpush1.bf16.msra.mxu0 %v3867
      %4813 = vmatprep.subr.bf16.mxu0 %v3872
      %4814 = vmatpush1.bf16.msra.mxu0 %v3871
      %4815 = vmatprep.subr.bf16.mxu0 %v3876
      %4816 = vmatpush1.bf16.msra.mxu0 %v3875
      %4817 = vmatprep.subr.bf16.mxu0 %v3880
      %4818 = vmatpush1.bf16.msra.mxu0 %v3879
      %4819 = vmatprep.mubr.bf16.mxu0 %v1560
      %4820 = vmatmul.mubr.bf16.gmra.mrb[0].mxu0 %v1553
      %v4821 = vpop.f32.mrb[0].mxu0
      %v4822 = vadd.f32 %v4781, %v4821
      %v4823 = vpop.f32.mrb[0].mxu0
      %v4824 = vadd.f32 %v4783, %v4823
      %v4825 = vpop.f32.mrb[0].mxu0
      %v4826 = vpop.f32.mrb[0].mxu0
      %4827 = vdwg.mxu0
      %4828 = vmatprep.subr.bf16.mxu0 %v3310
      %4829 = vmatpush1.bf16.msra.mxu0 %v3309
      %4830 = vmatprep.subr.bf16.mxu0 %v3314
      %4831 = vmatpush1.bf16.msra.mxu0 %v3313
      %4832 = vmatprep.subr.bf16.mxu0 %v3318
      %4833 = vmatpush1.bf16.msra.mxu0 %v3317
      %4834 = vmatprep.subr.bf16.mxu0 %v3322
      %4835 = vmatpush1.bf16.msra.mxu0 %v3321
      %4836 = vmatprep.subr.bf16.mxu0 %v3326
      %4837 = vmatpush1.bf16.msra.mxu0 %v3325
      %4838 = vmatprep.subr.bf16.mxu0 %v3330
      %4839 = vmatpush1.bf16.msra.mxu0 %v3329
      %4840 = vmatprep.subr.bf16.mxu0 %v3334
      %4841 = vmatpush1.bf16.msra.mxu0 %v3333
      %4842 = vmatprep.subr.bf16.mxu0 %v3338
      %4843 = vmatpush1.bf16.msra.mxu0 %v3337
      %4844 = vmatprep.subr.bf16.mxu0 %v3342
      %4845 = vmatpush1.bf16.msra.mxu0 %v3341
      %4846 = vmatprep.subr.bf16.mxu0 %v3346
      %4847 = vmatpush1.bf16.msra.mxu0 %v3345
      %4848 = vmatprep.subr.bf16.mxu0 %v3350
      %4849 = vmatpush1.bf16.msra.mxu0 %v3349
      %4850 = vmatprep.subr.bf16.mxu0 %v3354
      %4851 = vmatpush1.bf16.msra.mxu0 %v3353
      %4852 = vmatprep.subr.bf16.mxu0 %v3358
      %4853 = vmatpush1.bf16.msra.mxu0 %v3357
      %4854 = vmatprep.subr.bf16.mxu0 %v3362
      %4855 = vmatpush1.bf16.msra.mxu0 %v3361
      %4856 = vmatprep.subr.bf16.mxu0 %v3366
      %4857 = vmatpush1.bf16.msra.mxu0 %v3365
      %4858 = vmatprep.subr.bf16.mxu0 %v3370
      %4859 = vmatpush1.bf16.msra.mxu0 %v3369
      %4860 = vmatprep.mubr.bf16.mxu0 %v1476
      %4861 = vmatmul.mubr.bf16.gmra.mrb[0].mxu0 %v1462
      %v4862 = vpop.f32.mrb[0].mxu0
      %v4863 = vadd.f32 %v1429, %v4862
      %v4864 = vpop.f32.mrb[0].mxu0
      %v4865 = vadd.f32 %v1433, %v4864
      %v4866 = vpop.f32.mrb[0].mxu0
      %v4867 = vpop.f32.mrb[0].mxu0
      %4868 = vdwg.mxu0
      %4869 = vmatprep.subr.bf16.mxu0 %v3374
      %4870 = vmatpush1.bf16.msra.mxu0 %v3373
      %4871 = vmatprep.subr.bf16.mxu0 %v3378
      %4872 = vmatpush1.bf16.msra.mxu0 %v3377
      %4873 = vmatprep.subr.bf16.mxu0 %v3382
      %4874 = vmatpush1.bf16.msra.mxu0 %v3381
      %4875 = vmatprep.subr.bf16.mxu0 %v3386
      %4876 = vmatpush1.bf16.msra.mxu0 %v3385
      %4877 = vmatprep.subr.bf16.mxu0 %v3390
      %4878 = vmatpush1.bf16.msra.mxu0 %v3389
      %4879 = vmatprep.subr.bf16.mxu0 %v3394
      %4880 = vmatpush1.bf16.msra.mxu0 %v3393
      %4881 = vmatprep.subr.bf16.mxu0 %v3398
      %4882 = vmatpush1.bf16.msra.mxu0 %v3397
      %4883 = vmatprep.subr.bf16.mxu0 %v3402
      %4884 = vmatpush1.bf16.msra.mxu0 %v3401
      %4885 = vmatprep.subr.bf16.mxu0 %v3406
      %4886 = vmatpush1.bf16.msra.mxu0 %v3405
      %4887 = vmatprep.subr.bf16.mxu0 %v3410
      %4888 = vmatpush1.bf16.msra.mxu0 %v3409
      %4889 = vmatprep.subr.bf16.mxu0 %v3414
      %4890 = vmatpush1.bf16.msra.mxu0 %v3413
      %4891 = vmatprep.subr.bf16.mxu0 %v3418
      %4892 = vmatpush1.bf16.msra.mxu0 %v3417
      %4893 = vmatprep.subr.bf16.mxu0 %v3422
      %4894 = vmatpush1.bf16.msra.mxu0 %v3421
      %4895 = vmatprep.subr.bf16.mxu0 %v3426
      %4896 = vmatpush1.bf16.msra.mxu0 %v3425
      %4897 = vmatprep.subr.bf16.mxu0 %v3430
      %4898 = vmatpush1.bf16.msra.mxu0 %v3429
      %4899 = vmatprep.subr.bf16.mxu0 %v3434
      %4900 = vmatpush1.bf16.msra.mxu0 %v3433
      %4901 = vmatprep.mubr.bf16.mxu0 %v1486
      %4902 = vmatmul.mubr.bf16.gmra.mrb[0].mxu0 %v1484
      %v4903 = vpop.f32.mrb[0].mxu0
      %v4904 = vadd.f32 %v4863, %v4903
      %v4905 = vpop.f32.mrb[0].mxu0
      %v4906 = vadd.f32 %v4865, %v4905
      %v4907 = vpop.f32.mrb[0].mxu0
      %v4908 = vpop.f32.mrb[0].mxu0
      %4909 = vdwg.mxu0
      %4910 = vmatprep.subr.bf16.mxu0 %v3438
      %4911 = vmatpush1.bf16.msra.mxu0 %v3437
      %4912 = vmatprep.subr.bf16.mxu0 %v3442
      %4913 = vmatpush1.bf16.msra.mxu0 %v3441
      %4914 = vmatprep.subr.bf16.mxu0 %v3446
      %4915 = vmatpush1.bf16.msra.mxu0 %v3445
      %4916 = vmatprep.subr.bf16.mxu0 %v3450
      %4917 = vmatpush1.bf16.msra.mxu0 %v3449
      %4918 = vmatprep.subr.bf16.mxu0 %v3454
      %4919 = vmatpush1.bf16.msra.mxu0 %v3453
      %4920 = vmatprep.subr.bf16.mxu0 %v3458
      %4921 = vmatpush1.bf16.msra.mxu0 %v3457
      %4922 = vmatprep.subr.bf16.mxu0 %v3462
      %4923 = vmatpush1.bf16.msra.mxu0 %v3461
      %4924 = vmatprep.subr.bf16.mxu0 %v3466
      %4925 = vmatpush1.bf16.msra.mxu0 %v3465
      %4926 = vmatprep.subr.bf16.mxu0 %v3470
      %4927 = vmatpush1.bf16.msra.mxu0 %v3469
      %4928 = vmatprep.subr.bf16.mxu0 %v3474
      %4929 = vmatpush1.bf16.msra.mxu0 %v3473
      %4930 = vmatprep.subr.bf16.mxu0 %v3478
      %4931 = vmatpush1.bf16.msra.mxu0 %v3477
      %4932 = vmatprep.subr.bf16.mxu0 %v3482
      %4933 = vmatpush1.bf16.msra.mxu0 %v3481
      %4934 = vmatprep.subr.bf16.mxu0 %v3486
      %4935 = vmatpush1.bf16.msra.mxu0 %v3485
      %4936 = vmatprep.subr.bf16.mxu0 %v3490
      %4937 = vmatpush1.bf16.msra.mxu0 %v3489
      %4938 = vmatprep.subr.bf16.mxu0 %v3494
      %4939 = vmatpush1.bf16.msra.mxu0 %v3493
      %4940 = vmatprep.subr.bf16.mxu0 %v3498
      %4941 = vmatpush1.bf16.msra.mxu0 %v3497
      %4942 = vmatprep.mubr.bf16.mxu0 %v1483
      %4943 = vmatmul.mubr.bf16.gmra.mrb[0].mxu0 %v1469
      %v4944 = vpop.f32.mrb[0].mxu0
      %v4945 = vadd.f32 %v4904, %v4944
      %v4946 = vpop.f32.mrb[0].mxu0
      %v4947 = vadd.f32 %v4906, %v4946
      %v4948 = vpop.f32.mrb[0].mxu0
      %v4949 = vpop.f32.mrb[0].mxu0
      %4950 = vdwg.mxu0
      %4951 = vmatprep.subr.bf16.mxu0 %v3502
      %4952 = vmatpush1.bf16.msra.mxu0 %v3501
      %4953 = vmatprep.subr.bf16.mxu0 %v3506
      %4954 = vmatpush1.bf16.msra.mxu0 %v3505
      %4955 = vmatprep.subr.bf16.mxu0 %v3510
      %4956 = vmatpush1.bf16.msra.mxu0 %v3509
      %4957 = vmatprep.subr.bf16.mxu0 %v3514
      %4958 = vmatpush1.bf16.msra.mxu0 %v3513
      %4959 = vmatprep.subr.bf16.mxu0 %v3518
      %4960 = vmatpush1.bf16.msra.mxu0 %v3517
      %4961 = vmatprep.subr.bf16.mxu0 %v3522
      %4962 = vmatpush1.bf16.msra.mxu0 %v3521
      %4963 = vmatprep.subr.bf16.mxu0 %v3526
      %4964 = vmatpush1.bf16.msra.mxu0 %v3525
      %4965 = vmatprep.subr.bf16.mxu0 %v3530
      %4966 = vmatpush1.bf16.msra.mxu0 %v3529
      %4967 = vmatprep.subr.bf16.mxu0 %v3534
      %4968 = vmatpush1.bf16.msra.mxu0 %v3533
      %4969 = vmatprep.subr.bf16.mxu0 %v3538
      %4970 = vmatpush1.bf16.msra.mxu0 %v3537
      %4971 = vmatprep.subr.bf16.mxu0 %v3542
      %4972 = vmatpush1.bf16.msra.mxu0 %v3541
      %4973 = vmatprep.subr.bf16.mxu0 %v3546
      %4974 = vmatpush1.bf16.msra.mxu0 %v3545
      %4975 = vmatprep.subr.bf16.mxu0 %v3550
      %4976 = vmatpush1.bf16.msra.mxu0 %v3549
      %4977 = vmatprep.subr.bf16.mxu0 %v3554
      %4978 = vmatpush1.bf16.msra.mxu0 %v3553
      %4979 = vmatprep.subr.bf16.mxu0 %v3558
      %4980 = vmatpush1.bf16.msra.mxu0 %v3557
      %4981 = vmatprep.subr.bf16.mxu0 %v3562
      %4982 = vmatpush1.bf16.msra.mxu0 %v3561
      %4983 = vmatprep.mubr.bf16.mxu0 %v1487
      %4984 = vmatmul.mubr.bf16.gmra.mrb[0].mxu0 %v1485
      %v4985 = vpop.f32.mrb[0].mxu0
      %v4986 = vadd.f32 %v4945, %v4985
      %v4987 = vpop.f32.mrb[0].mxu0
      %v4988 = vadd.f32 %v4947, %v4987
      %v4989 = vpop.f32.mrb[0].mxu0
      %v4990 = vpop.f32.mrb[0].mxu0
      %4991 = vdwg.mxu0
      %4992 = vmatprep.subr.bf16.mxu0 %v3566
      %4993 = vmatpush1.bf16.msra.mxu0 %v3565
      %4994 = vmatprep.subr.bf16.mxu0 %v3570
      %4995 = vmatpush1.bf16.msra.mxu0 %v3569
      %4996 = vmatprep.subr.bf16.mxu0 %v3574
      %4997 = vmatpush1.bf16.msra.mxu0 %v3573
      %4998 = vmatprep.subr.bf16.mxu0 %v3578
      %4999 = vmatpush1.bf16.msra.mxu0 %v3577
      %5000 = vmatprep.subr.bf16.mxu0 %v3582
      %5001 = vmatpush1.bf16.msra.mxu0 %v3581
      %5002 = vmatprep.subr.bf16.mxu0 %v3586
      %5003 = vmatpush1.bf16.msra.mxu0 %v3585
      %5004 = vmatprep.subr.bf16.mxu0 %v3590
      %5005 = vmatpush1.bf16.msra.mxu0 %v3589
      %5006 = vmatprep.subr.bf16.mxu0 %v3594
      %5007 = vmatpush1.bf16.msra.mxu0 %v3593
      %5008 = vmatprep.subr.bf16.mxu0 %v3598
      %5009 = vmatpush1.bf16.msra.mxu0 %v3597
      %5010 = vmatprep.subr.bf16.mxu0 %v3602
      %5011 = vmatpush1.bf16.msra.mxu0 %v3601
      %5012 = vmatprep.subr.bf16.mxu0 %v3606
      %5013 = vmatpush1.bf16.msra.mxu0 %v3605
      %5014 = vmatprep.subr.bf16.mxu0 %v3610
      %5015 = vmatpush1.bf16.msra.mxu0 %v3609
      %5016 = vmatprep.subr.bf16.mxu0 %v3614
      %5017 = vmatpush1.bf16.msra.mxu0 %v3613
      %5018 = vmatprep.subr.bf16.mxu0 %v3618
      %5019 = vmatpush1.bf16.msra.mxu0 %v3617
      %5020 = vmatprep.subr.bf16.mxu0 %v3622
      %5021 = vmatpush1.bf16.msra.mxu0 %v3621
      %5022 = vmatprep.subr.bf16.mxu0 %v3626
      %5023 = vmatpush1.bf16.msra.mxu0 %v3625
      %5024 = vmatprep.mubr.bf16.mxu0 %v1526
      %5025 = vmatmul.mubr.bf16.gmra.mrb[0].mxu0 %v1512
      %v5026 = vpop.f32.mrb[0].mxu0
      %v5027 = vadd.f32 %v4986, %v5026
      %v5028 = vpop.f32.mrb[0].mxu0
      %v5029 = vadd.f32 %v4988, %v5028
      %v5030 = vpop.f32.mrb[0].mxu0
      %v5031 = vpop.f32.mrb[0].mxu0
      %5032 = vdwg.mxu0
      %5033 = vmatprep.subr.bf16.mxu0 %v3630
      %5034 = vmatpush1.bf16.msra.mxu0 %v3629
      %5035 = vmatprep.subr.bf16.mxu0 %v3634
      %5036 = vmatpush1.bf16.msra.mxu0 %v3633
      %5037 = vmatprep.subr.bf16.mxu0 %v3638
      %5038 = vmatpush1.bf16.msra.mxu0 %v3637
      %5039 = vmatprep.subr.bf16.mxu0 %v3642
      %5040 = vmatpush1.bf16.msra.mxu0 %v3641
      %5041 = vmatprep.subr.bf16.mxu0 %v3646
      %5042 = vmatpush1.bf16.msra.mxu0 %v3645
      %5043 = vmatprep.subr.bf16.mxu0 %v3650
      %5044 = vmatpush1.bf16.msra.mxu0 %v3649
      %5045 = vmatprep.subr.bf16.mxu0 %v3654
      %5046 = vmatpush1.bf16.msra.mxu0 %v3653
      %5047 = vmatprep.subr.bf16.mxu0 %v3658
      %5048 = vmatpush1.bf16.msra.mxu0 %v3657
      %5049 = vmatprep.subr.bf16.mxu0 %v3662
      %5050 = vmatpush1.bf16.msra.mxu0 %v3661
      %5051 = vmatprep.subr.bf16.mxu0 %v3666
      %5052 = vmatpush1.bf16.msra.mxu0 %v3665
      %5053 = vmatprep.subr.bf16.mxu0 %v3670
      %5054 = vmatpush1.bf16.msra.mxu0 %v3669
      %5055 = vmatprep.subr.bf16.mxu0 %v3674
      %5056 = vmatpush1.bf16.msra.mxu0 %v3673
      %5057 = vmatprep.subr.bf16.mxu0 %v3678
      %5058 = vmatpush1.bf16.msra.mxu0 %v3677
      %5059 = vmatprep.subr.bf16.mxu0 %v3682
      %5060 = vmatpush1.bf16.msra.mxu0 %v3681
      %5061 = vmatprep.subr.bf16.mxu0 %v3686
      %5062 = vmatpush1.bf16.msra.mxu0 %v3685
      %5063 = vmatprep.subr.bf16.mxu0 %v3690
      %5064 = vmatpush1.bf16.msra.mxu0 %v3689
      %5065 = vmatprep.mubr.bf16.mxu0 %v1536
      %5066 = vmatmul.mubr.bf16.gmra.mrb[0].mxu0 %v1534
      %v5067 = vpop.f32.mrb[0].mxu0
      %v5068 = vadd.f32 %v5027, %v5067
      %v5069 = vpop.f32.mrb[0].mxu0
      %v5070 = vadd.f32 %v5029, %v5069
      %v5071 = vpop.f32.mrb[0].mxu0
      %v5072 = vpop.f32.mrb[0].mxu0
      %5073 = vdwg.mxu0
      %5074 = vmatprep.subr.bf16.mxu0 %v3694
      %5075 = vmatpush1.bf16.msra.mxu0 %v3693
      %5076 = vmatprep.subr.bf16.mxu0 %v3698
      %5077 = vmatpush1.bf16.msra.mxu0 %v3697
      %5078 = vmatprep.subr.bf16.mxu0 %v3702
      %5079 = vmatpush1.bf16.msra.mxu0 %v3701
      %5080 = vmatprep.subr.bf16.mxu0 %v3706
      %5081 = vmatpush1.bf16.msra.mxu0 %v3705
      %5082 = vmatprep.subr.bf16.mxu0 %v3710
      %5083 = vmatpush1.bf16.msra.mxu0 %v3709
      %5084 = vmatprep.subr.bf16.mxu0 %v3714
      %5085 = vmatpush1.bf16.msra.mxu0 %v3713
      %5086 = vmatprep.subr.bf16.mxu0 %v3718
      %5087 = vmatpush1.bf16.msra.mxu0 %v3717
      %5088 = vmatprep.subr.bf16.mxu0 %v3722
      %5089 = vmatpush1.bf16.msra.mxu0 %v3721
      %5090 = vmatprep.subr.bf16.mxu0 %v3726
      %5091 = vmatpush1.bf16.msra.mxu0 %v3725
      %5092 = vmatprep.subr.bf16.mxu0 %v3730
      %5093 = vmatpush1.bf16.msra.mxu0 %v3729
      %5094 = vmatprep.subr.bf16.mxu0 %v3734
      %5095 = vmatpush1.bf16.msra.mxu0 %v3733
      %5096 = vmatprep.subr.bf16.mxu0 %v3738
      %5097 = vmatpush1.bf16.msra.mxu0 %v3737
      %5098 = vmatprep.subr.bf16.mxu0 %v3742
      %5099 = vmatpush1.bf16.msra.mxu0 %v3741
      %5100 = vmatprep.subr.bf16.mxu0 %v3746
      %5101 = vmatpush1.bf16.msra.mxu0 %v3745
      %5102 = vmatprep.subr.bf16.mxu0 %v3750
      %5103 = vmatpush1.bf16.msra.mxu0 %v3749
      %5104 = vmatprep.subr.bf16.mxu0 %v3754
      %5105 = vmatpush1.bf16.msra.mxu0 %v3753
      %5106 = vmatprep.mubr.bf16.mxu0 %v1533
      %5107 = vmatmul.mubr.bf16.gmra.mrb[0].mxu0 %v1519
      %v5108 = vpop.f32.mrb[0].mxu0
      %v5109 = vadd.f32 %v5068, %v5108
      %v5110 = vpop.f32.mrb[0].mxu0
      %v5111 = vadd.f32 %v5070, %v5110
      %v5112 = vpop.f32.mrb[0].mxu0
      %v5113 = vpop.f32.mrb[0].mxu0
      %5114 = vdwg.mxu0
      %5115 = vmatprep.subr.bf16.mxu0 %v3758
      %5116 = vmatpush1.bf16.msra.mxu0 %v3757
      %5117 = vmatprep.subr.bf16.mxu0 %v3762
      %5118 = vmatpush1.bf16.msra.mxu0 %v3761
      %5119 = vmatprep.subr.bf16.mxu0 %v3766
      %5120 = vmatpush1.bf16.msra.mxu0 %v3765
      %5121 = vmatprep.subr.bf16.mxu0 %v3770
      %5122 = vmatpush1.bf16.msra.mxu0 %v3769
      %5123 = vmatprep.subr.bf16.mxu0 %v3774
      %5124 = vmatpush1.bf16.msra.mxu0 %v3773
      %5125 = vmatprep.subr.bf16.mxu0 %v3778
      %5126 = vmatpush1.bf16.msra.mxu0 %v3777
      %5127 = vmatprep.subr.bf16.mxu0 %v3782
      %5128 = vmatpush1.bf16.msra.mxu0 %v3781
      %5129 = vmatprep.subr.bf16.mxu0 %v3786
      %5130 = vmatpush1.bf16.msra.mxu0 %v3785
      %5131 = vmatprep.subr.bf16.mxu0 %v3790
      %5132 = vmatpush1.bf16.msra.mxu0 %v3789
      %5133 = vmatprep.subr.bf16.mxu0 %v3794
      %5134 = vmatpush1.bf16.msra.mxu0 %v3793
      %5135 = vmatprep.subr.bf16.mxu0 %v3798
      %5136 = vmatpush1.bf16.msra.mxu0 %v3797
      %5137 = vmatprep.subr.bf16.mxu0 %v3802
      %5138 = vmatpush1.bf16.msra.mxu0 %v3801
      %5139 = vmatprep.subr.bf16.mxu0 %v3806
      %5140 = vmatpush1.bf16.msra.mxu0 %v3805
      %5141 = vmatprep.subr.bf16.mxu0 %v3810
      %5142 = vmatpush1.bf16.msra.mxu0 %v3809
      %5143 = vmatprep.subr.bf16.mxu0 %v3814
      %5144 = vmatpush1.bf16.msra.mxu0 %v3813
      %5145 = vmatprep.subr.bf16.mxu0 %v3818
      %5146 = vmatpush1.bf16.msra.mxu0 %v3817
      %5147 = vmatprep.mubr.bf16.mxu0 %v1537
      %5148 = vmatmul.mubr.bf16.gmra.mrb[0].mxu0 %v1535
      %v5149 = vpop.f32.mrb[0].mxu0
      %v5150 = vadd.f32 %v5109, %v5149
      %v5151 = vpop.f32.mrb[0].mxu0
      %v5152 = vadd.f32 %v5111, %v5151
      %v5153 = vpop.f32.mrb[0].mxu0
      %v5154 = vpop.f32.mrb[0].mxu0
      %5155 = vdwg.mxu0
      %5156 = vmatprep.subr.bf16.mxu0 %v3822
      %5157 = vmatpush1.bf16.msra.mxu0 %v3821
      %5158 = vmatprep.subr.bf16.mxu0 %v3826
      %5159 = vmatpush1.bf16.msra.mxu0 %v3825
      %5160 = vmatprep.subr.bf16.mxu0 %v3830
      %5161 = vmatpush1.bf16.msra.mxu0 %v3829
      %5162 = vmatprep.subr.bf16.mxu0 %v3834
      %5163 = vmatpush1.bf16.msra.mxu0 %v3833
      %5164 = vmatprep.subr.bf16.mxu0 %v3838
      %5165 = vmatpush1.bf16.msra.mxu0 %v3837
      %5166 = vmatprep.subr.bf16.mxu0 %v3842
      %5167 = vmatpush1.bf16.msra.mxu0 %v3841
      %5168 = vmatprep.subr.bf16.mxu0 %v3846
      %5169 = vmatpush1.bf16.msra.mxu0 %v3845
      %5170 = vmatprep.subr.bf16.mxu0 %v3850
      %5171 = vmatpush1.bf16.msra.mxu0 %v3849
      %5172 = vmatprep.subr.bf16.mxu0 %v3854
      %5173 = vmatpush1.bf16.msra.mxu0 %v3853
      %5174 = vmatprep.subr.bf16.mxu0 %v3858
      %5175 = vmatpush1.bf16.msra.mxu0 %v3857
      %5176 = vmatprep.subr.bf16.mxu0 %v3862
      %5177 = vmatpush1.bf16.msra.mxu0 %v3861
      %5178 = vmatprep.subr.bf16.mxu0 %v3866
      %5179 = vmatpush1.bf16.msra.mxu0 %v3865
      %5180 = vmatprep.subr.bf16.mxu0 %v3870
      %5181 = vmatpush1.bf16.msra.mxu0 %v3869
      %5182 = vmatprep.subr.bf16.mxu0 %v3874
      %5183 = vmatpush1.bf16.msra.mxu0 %v3873
      %5184 = vmatprep.subr.bf16.mxu0 %v3878
      %5185 = vmatpush1.bf16.msra.mxu0 %v3877
      %5186 = vmatprep.subr.bf16.mxu0 %v3882
      %5187 = vmatpush1.bf16.msra.mxu0 %v3881
      %5188 = vmatprep.mubr.bf16.mxu0 %v1560
      %5189 = vmatmul.mubr.bf16.gmra.mrb[0].mxu0 %v1553
      %v5190 = vpop.f32.mrb[0].mxu0
      %v5191 = vadd.f32 %v5150, %v5190
      %v5192 = vpop.f32.mrb[0].mxu0
      %v5193 = vadd.f32 %v5152, %v5192
      %v5194 = vpop.f32.mrb[0].mxu0
      %v5195 = vpop.f32.mrb[0].mxu0
      %5196 = vdwg.mxu0
      %v5197 = vmax.f32 %v4822, 0.0
      %v5198 = vmax.f32 %v4824, 0.0
      %v5199 = vmax.f32 %v5191, 0.0
      %v5200 = vmax.f32 %v5193, 0.0
      %v5201 = vpack.c.bf16 %v5197, %v5197
      %v5202 = vpack.c.bf16 %v5198, %v5198
      %v5203 = vpack.c.bf16 %v5199, %v5199
      %v5204 = vpack.c.bf16 %v5200, %v5200
      %v5209 = vcombine.low %v5201, %v5202
      %v5210 = vcombine.low %v5203, %v5204
      %v5212 = vunpack.c.l.s4 1983009808
      %v5213 = vunpack.c.0.s8 %v5212
      %v5214 = vlaneseq
      %v5215 = vshrl.u32 %v5214, 7
      %v5216 = vsub.s32 %v5213, %v5215
      %v5217 = vrot.slane %v5209, %v5216
      %v5219 = vunpack.c.l.s4 1983009808
      %v5220 = vunpack.c.0.s8 %v5219
      %v5221 = vlaneseq
      %v5222 = vshrl.u32 %v5221, 7
      %v5223 = vsub.s32 %v5220, %v5222
      %v5224 = vrot.slane %v5210, %v5223
      %v5225 = vcombine.low %v5217, %v5224
      %5227 = vst [vmem:[%s333] sm:$0xff] %v5225
      %p5228 = scmp.lt.s32.totalorder %s21, 1
      %s5229 = scalar_select %p5228, %s21, 1
      %p5230 = scmp.lt.s32.totalorder %s22, 0
      %s5231 = scalar_select %p5230, %s22, 0
      %s5232 = smul.addr %s5231, 4
      %s5233 = smul.addr %s5229, 4
      %s5234 = sadd.s32 %s5232, %s5233
      %s5235 = smul.addr %s5234, 2
      %s5236 = scalar_lea.vmem %s6, %s5235
      // Predicated region
      $region45: #{dense_encoder_forward.5} parent=43 // pred_check
        %p5237 = pneg %p195
      $region46: #{dense_encoder_forward.5} parent=43 // pred_check_branch
        %5239 = sbr.rel (%p5237) target = $region48
      $region47: #{dense_encoder_forward.5} parent=43 // pred_region
        _
      $region48: #{dense_encoder_forward.5} parent=43 // pred_fallthru
        _
    $region44: #{dense_encoder_forward.5} parent=5 // pred_fallthru
      _
    %p5240 = scmp.le.s32.totalorder 2, %s12
    // Predicated region
    $region49: #{dense_encoder_forward.5} parent=5 // pred_check
      %p5241 = pneg %p5240
    $region50: #{dense_encoder_forward.5} parent=5 // pred_check_branch
      %5243 = sbr.rel (%p5241) target = $region52
    $region51: #{dense_encoder_forward.5} parent=5 // pred_region
      %s5244 = ssub.s32 %s12, 2
      // Predicated region
      $region53: #{dense_encoder_forward.5} parent=51 // pred_check
        %p5245 = pneg %p201
      $region54: #{dense_encoder_forward.5} parent=51 // pred_check_branch
        %5247 = sbr.rel (%p5245) target = $region56
      $region55: #{dense_encoder_forward.5} parent=51 // pred_region
        %p5248 = scmp.lt.s32.totalorder %s23, 1
        %s5249 = scalar_select %p5248, %s23, 1
        %p5250 = scmp.lt.s32.totalorder %s24, 0
        %s5251 = scalar_select %p5250, %s24, 0
        %s5252 = smul.addr %s5251, 4
        %s5253 = smul.addr %s5249, 4
        %s5254 = sadd.s32 %s5252, %s5253
        %s5255 = smul.addr %s5254, 2
        %s5256 = scalar_lea.vmem %s6, %s5255
      $region56: #{dense_encoder_forward.5} parent=51 // pred_fallthru
        _
    $region52: #{dense_encoder_forward.5} parent=5 // pred_fallthru
      _
  $region6: #{dense_encoder_forward.5} parent=0 // loop_footer
    %s16 = sadd.s32 1, %s12
  $region7: #{dense_encoder_forward.5} parent=0 // loop_footer_branch
    %11 = sbr.rel target = $region3
  $region8: #{dense_encoder_forward.5} parent=0 // loop_exit
    _

</llo_original>
